<compile_context>
chip_gen: v7x
topology: tpu7x:2x2x1
jax: 0.10.0
libtpu: 0.0.40
codegen_flags: <defaults>
</compile_context>

<pallas_src>
import jax
import jax.numpy as jnp
from jax import lax
from jax.experimental import pallas as pl
from jax.experimental.pallas import tpu as pltpu


# ----------------------------- Pallas kernels ------------------------------


def _conv_pool_kernel(p1_ref, w1_ref, b1_ref, w2_ref, b2_ref, o_ref, hm_ref):
    """Per-image conv1+ReLU -> conv2+ReLU -> 2x2 maxpool, all in VMEM.

    p1_ref : [1, 676, 9]   conv1 im2col patches (oh*26+ow, i*3+j), Cin = 1
    w1_ref : [9, 32]       conv1 weight, rows ordered (i*3+j)
    w2_ref : [9, 32, 64]   conv2 weight, leading dim ordered (i*3+j)
    o_ref  : [1, 144, 64]  pooled features, rows ordered ph*12+pw (NHWC flatten)
    hm_ref : [595, 64]     VMEM scratch holding 2x2-window maxima
    """
    OW1 = 26                       # conv1 output width (and height)
    OW2 = 24                       # conv2 output width (and height)
    L = (OW2 - 1) * OW1 + OW2      # 622 "wide-frame" rows cover every valid output

    # conv1: a single MXU matmul over the 3x3x1 window (K=9, unpadded) + bias + ReLU.
    h1 = jnp.dot(p1_ref[0], w1_ref[...], preferred_element_type=jnp.float32)  # [676, 32]
    h1 = jnp.maximum(h1 + b1_ref[...], 0.0)

    # conv2 as 9 shifted matmuls in the wide 26-column row frame:
    #   acc[p] = sum_{i,j} h1[p + i*26 + j] @ w2[i*3+j],  p = oh*26 + ow.
    # Rows with ow in {24,25} are junk but are never consumed by the pool below.
    acc = jnp.dot(h1[0:L, :], w2_ref[0], preferred_element_type=jnp.float32)  # [622, 64]
    for idx in range(1, 9):
        d = (idx // 3) * OW1 + (idx % 3)
        acc = acc + jnp.dot(h1[d:d + L, :], w2_ref[idx],
                            preferred_element_type=jnp.float32)
    y = jnp.maximum(acc + b2_ref[...], 0.0)                                    # [622, 64]

    # Fused 2x2/stride-2 max pool: vertical pair max, horizontal pair max
    # (both contiguous slices), then pick every other row with a strided load.
    v = jnp.maximum(y[0:L - OW1, :], y[OW1:L, :])                              # [596, 64]
    hm_ref[...] = jnp.maximum(v[0:L - OW1 - 1, :], v[1:L - OW1, :])            # [595, 64]
    for ph in range(12):
        o_ref[0, ph * 12:(ph + 1) * 12, :] = \
            hm_ref[pl.ds(2 * OW1 * ph, 12, stride=2), :]


def _fc_head_kernel(z_ref, w1_ref, b1_ref, w2_ref, b2_ref, o_ref, acc_ref):
    """fc1 (K streamed over the grid) + ReLU + fc2 + log_softmax."""
    k = pl.program_id(0)

    @pl.when(k == 0)
    def _():
        acc_ref[...] = jnp.zeros_like(acc_ref)

    acc_ref[...] += jnp.dot(z_ref[...], w1_ref[...],
                            preferred_element_type=jnp.float32)

    @pl.when(k == pl.num_programs(0) - 1)
    def _():
        h = jnp.maximum(acc_ref[...] + b1_ref[...], 0.0)                 # [B, 100]
        logits = jnp.dot(h, w2_ref[...],
                         preferred_element_type=jnp.float32) + b2_ref[...]
        m = jnp.max(logits, axis=-1, keepdims=True)
        s = logits - m
        lse = jnp.log(jnp.sum(jnp.exp(s), axis=-1, keepdims=True))
        o_ref[...] = (s - lse).astype(o_ref.dtype)


# ----------------------------- Pallas wrappers ------------------------------

_VMEM_LIMIT = 32 * 1024 * 1024


def conv_pool_block(patches1, w1, b1, w2, b2):
    """[B, 676, 9] conv1-patches -> [B, 144, 64] pooled features (NHWC flatten)."""
    B = patches1.shape[0]
    return pl.pallas_call(
        _conv_pool_kernel,
        out_shape=jax.ShapeDtypeStruct((B, 144, 64), jnp.float32),
        grid=(B,),
        in_specs=[
            pl.BlockSpec((1, 676, 9), lambda b: (b, 0, 0)),
            pl.BlockSpec((9, 32), lambda b: (0, 0)),
            pl.BlockSpec((1, 32), lambda b: (0, 0)),
            pl.BlockSpec((9, 32, 64), lambda b: (0, 0, 0)),
            pl.BlockSpec((1, 64), lambda b: (0, 0)),
        ],
        out_specs=pl.BlockSpec((1, 144, 64), lambda b: (b, 0, 0)),
        scratch_shapes=[pltpu.VMEM((595, 64), jnp.float32)],
        compiler_params=pltpu.CompilerParams(
            dimension_semantics=("parallel",),
            vmem_limit_bytes=_VMEM_LIMIT),
    )(patches1, w1, b1, w2, b2)


def fc_head(z, w_fc1, b_fc1, w_fc2, b_fc2, *, tk=1152):
    """log_softmax(relu(z @ w_fc1 + b_fc1) @ w_fc2 + b_fc2), K streamed in chunks."""
    B, K = z.shape
    assert K % tk == 0
    N1 = w_fc1.shape[1]
    N2 = w_fc2.shape[1]
    return pl.pallas_call(
        _fc_head_kernel,
        out_shape=jax.ShapeDtypeStruct((B, N2), jnp.float32),
        grid=(K // tk,),
        in_specs=[
            pl.BlockSpec((B, tk), lambda k: (0, k)),
            pl.BlockSpec((tk, N1), lambda k: (k, 0)),
            pl.BlockSpec((1, N1), lambda k: (0, 0)),
            pl.BlockSpec((N1, N2), lambda k: (0, 0)),
            pl.BlockSpec((1, N2), lambda k: (0, 0)),
        ],
        out_specs=pl.BlockSpec((B, N2), lambda k: (0, 0)),
        scratch_shapes=[pltpu.VMEM((B, N1), jnp.float32)],
        compiler_params=pltpu.CompilerParams(
            dimension_semantics=("arbitrary",),
            vmem_limit_bytes=_VMEM_LIMIT),
    )(z, w_fc1, b_fc1, w_fc2, b_fc2)


# ------------------------- one-time parameter packing ------------------------


def prepare_params(p):
    """Pack PyTorch-layout weights once, outside the jitted forward."""
    # conv1 [32,1,3,3] -> [9, 32] with rows ordered (i*3 + j).
    w1 = jnp.transpose(p["conv1_w"], (2, 3, 1, 0)).reshape(9, 32)
    b1 = p["conv1_b"].reshape(1, 32)
    # conv2 [64,32,3,3] -> [9, 32, 64] with leading dim ordered (i*3 + j).
    w2 = jnp.transpose(p["conv2_w"], (2, 3, 1, 0)).reshape(9, 32, 64)
    b2 = p["conv2_b"].reshape(1, 64)
    # fc1 [100, 9216]: torch flattens NCHW (c*144 + h*12 + w); the conv kernel
    # emits NHWC order (h*768 + w*64 + c), so permute the columns once and
    # pre-transpose to [9216, 100].
    w_fc1 = (p["fc1_w"].reshape(100, 64, 12, 12)
             .transpose(0, 2, 3, 1).reshape(100, 9216).T)
    b_fc1 = p["fc1_b"].reshape(1, 100)
    w_fc2 = p["fc2_w"].T                       # [100, 10]
    b_fc2 = p["fc2_b"].reshape(1, 10)
    return {"w1": w1, "b1": b1, "w2": w2, "b2": b2,
            "w_fc1": w_fc1, "b_fc1": b_fc1, "w_fc2": w_fc2, "b_fc2": b_fc2}


# --------------------------------- forward -----------------------------------


@jax.jit
def net_forward(x_nchw, pp):
    B = x_nchw.shape[0]
    x = x_nchw.reshape(B, 28, 28).astype(jnp.float32)        # Cin = 1
    # conv1's unpadded im2col is tiny (676*9*4 B ~ 24 KB per image); building it
    # here keeps the fused kernel free of awkward single-channel relayouts.
    cols = [x[:, i:i + 26, j:j + 26] for i in range(3) for j in range(3)]
    patches1 = jnp.stack(cols, axis=-1).reshape(B, 676, 9)
    feat = conv_pool_block(patches1, pp["w1"], pp["b1"], pp["w2"], pp["b2"])
    # dropout1: identity in eval mode
    z = feat.reshape(B, 9216)                                 # NHWC-ordered features
    # dropout2: identity in eval mode (inside fc_head after ReLU)
    return fc_head(z, pp["w_fc1"], pp["b_fc1"], pp["w_fc2"], pp["b_fc2"])


# --------------------------- pure-JAX reference -----------------------------


@jax.jit
def reference_forward(x_nchw, p):
    dn = ("NCHW", "OIHW", "NCHW")
    hp = lax.Precision.HIGHEST
    y = lax.conv_general_dilated(x_nchw, p["conv1_w"], (1, 1), "VALID",
                                 dimension_numbers=dn, precision=hp)
    y = jnp.maximum(y + p["conv1_b"][None, :, None, None], 0.0)
    y = lax.conv_general_dilated(y, p["conv2_w"], (1, 1), "VALID",
                                 dimension_numbers=dn, precision=hp)
    y = jnp.maximum(y + p["conv2_b"][None, :, None, None], 0.0)
    B, C, H, W = y.shape
    y = y.reshape(B, C, H // 2, 2, W // 2, 2).max(axis=(3, 5))
    z = y.reshape(B, -1)
    h = jnp.maximum(jnp.dot(z, p["fc1_w"].T, precision=hp) + p["fc1_b"], 0.0)
    logits = jnp.dot(h, p["fc2_w"].T, precision=hp) + p["fc2_b"]
    return jax.nn.log_softmax(logits, axis=-1)


# ---------------------------------- main -------------------------------------


if __name__ == "__main__":
    key = jax.random.PRNGKey(0)
    ks = jax.random.split(key, 9)
    params = {
        "conv1_w": jax.random.normal(ks[0], (32, 1, 3, 3), jnp.float32) / 3.0,
        "conv1_b": jax.random.normal(ks[1], (32,), jnp.float32) * 0.1,
        "conv2_w": jax.random.normal(ks[2], (64, 32, 3, 3), jnp.float32) / (288.0 ** 0.5),
        "conv2_b": jax.random.normal(ks[3], (64,), jnp.float32) * 0.1,
        "fc1_w": jax.random.normal(ks[4], (100, 9216), jnp.float32) / (9216.0 ** 0.5),
        "fc1_b": jax.random.normal(ks[5], (100,), jnp.float32) * 0.1,
        "fc2_w": jax.random.normal(ks[6], (10, 100), jnp.float32) / 10.0,
        "fc2_b": jax.random.normal(ks[7], (10,), jnp.float32) * 0.1,
    }
    # MNIST geometry: fc1's 9216 = 64*12*12 requires 28x28 input; batch kept small.
    x = jax.random.normal(ks[8], (2, 1, 28, 28), jnp.float32)  # NCHW

    packed = prepare_params(params)
    out = jax.block_until_ready(net_forward(x, packed))
    ref = jax.block_until_ready(reference_forward(x, params))

    assert out.shape == (2, 10), out.shape
    assert bool(jnp.all(jnp.isfinite(out)))
    assert bool(jnp.allclose(out, ref, atol=2e-2, rtol=2e-3)), (out, ref)
    print("KERNEL_OK")
</pallas_src>

<mosaic_0001>
module attributes {stable_mosaic.version = 11 : i64} {
  func.func @_conv_pool_kernel(%arg0: i32, %arg1: memref<1x676x9xf32, #tpu.memory_space<vmem>>, %arg2: memref<9x32xf32, #tpu.memory_space<vmem>>, %arg3: memref<1x32xf32, #tpu.memory_space<vmem>>, %arg4: memref<9x32x64xf32, #tpu.memory_space<vmem>>, %arg5: memref<1x64xf32, #tpu.memory_space<vmem>>, %arg6: memref<1x144x64xf32, #tpu.memory_space<vmem>>, %arg7: memref<595x64xf32, #tpu.memory_space<vmem>>) attributes {dimension_semantics = [#tpu.dimension_semantics<parallel>], iteration_bounds = array<i64: 2>, scalar_prefetch = 0 : i64, scratch_operands = 1 : i64, tpu.core_type = #tpu.core_type<tc>, window_params = [{transform_indices = @transform_0, window_bounds = array<i64: 1, 676, 9>}, {pipeline_mode = #tpu.pipeline_mode<synchronous>, transform_indices = @transform_1, window_bounds = array<i64: 9, 32>}, {pipeline_mode = #tpu.pipeline_mode<synchronous>, transform_indices = @transform_2, window_bounds = array<i64: 1, 32>}, {pipeline_mode = #tpu.pipeline_mode<synchronous>, transform_indices = @transform_3, window_bounds = array<i64: 9, 32, 64>}, {pipeline_mode = #tpu.pipeline_mode<synchronous>, transform_indices = @transform_4, window_bounds = array<i64: 1, 64>}, {transform_indices = @transform_5, window_bounds = array<i64: 1, 144, 64>}]} {
    %c0 = arith.constant 0 : index
    %c0_0 = arith.constant 0 : index
    %c0_1 = arith.constant 0 : index
    %0 = vector.load %arg1[%c0, %c0_0, %c0_1] : memref<1x676x9xf32, #tpu.memory_space<vmem>>, vector<1x676x9xf32>
    %1 = vector.shape_cast %0 : vector<1x676x9xf32> to vector<676x9xf32>
    %c0_2 = arith.constant 0 : index
    %c0_3 = arith.constant 0 : index
    %2 = vector.load %arg2[%c0_2, %c0_3] : memref<9x32xf32, #tpu.memory_space<vmem>>, vector<9x32xf32>
    %cst = arith.constant dense<0.000000e+00> : vector<676x32xf32>
    %3 = tpu.matmul %1, %2, %cst {dimension_numbers = #tpu.dot_dimension_numbers<[1], [0], [0], [1], [0, 0, 1, 1], [], []>} : vector<676x9xf32>, vector<9x32xf32>, vector<676x32xf32> -> vector<676x32xf32>
    %c0_4 = arith.constant 0 : index
    %c0_5 = arith.constant 0 : index
    %4 = vector.load %arg3[%c0_4, %c0_5] : memref<1x32xf32, #tpu.memory_space<vmem>>, vector<1x32xf32>
    %5 = vector.broadcast %4 : vector<1x32xf32> to vector<676x32xf32>
    %6 = arith.addf %3, %5 : vector<676x32xf32>
    %cst_6 = arith.constant 0.000000e+00 : f32
    %7 = vector.broadcast %cst_6 : f32 to vector<676x32xf32>
    %8 = arith.maximumf %6, %7 : vector<676x32xf32>
    %9 = vector.extract_strided_slice %8 {offsets = [0, 0], sizes = [622, 32], strides = [1, 1]} : vector<676x32xf32> to vector<622x32xf32>
    %c0_7 = arith.constant 0 : index
    %c0_8 = arith.constant 0 : index
    %c0_9 = arith.constant 0 : index
    %10 = vector.load %arg4[%c0_7, %c0_8, %c0_9] : memref<9x32x64xf32, #tpu.memory_space<vmem>>, vector<1x32x64xf32>
    %11 = vector.shape_cast %10 : vector<1x32x64xf32> to vector<32x64xf32>
    %cst_10 = arith.constant dense<0.000000e+00> : vector<622x64xf32>
    %12 = tpu.matmul %9, %11, %cst_10 {dimension_numbers = #tpu.dot_dimension_numbers<[1], [0], [0], [1], [0, 0, 1, 1], [], []>} : vector<622x32xf32>, vector<32x64xf32>, vector<622x64xf32> -> vector<622x64xf32>
    %13 = vector.extract_strided_slice %8 {offsets = [1, 0], sizes = [622, 32], strides = [1, 1]} : vector<676x32xf32> to vector<622x32xf32>
    %c1 = arith.constant 1 : index
    %c0_11 = arith.constant 0 : index
    %c0_12 = arith.constant 0 : index
    %14 = vector.load %arg4[%c1, %c0_11, %c0_12] : memref<9x32x64xf32, #tpu.memory_space<vmem>>, vector<1x32x64xf32>
    %15 = vector.shape_cast %14 : vector<1x32x64xf32> to vector<32x64xf32>
    %cst_13 = arith.constant dense<0.000000e+00> : vector<622x64xf32>
    %16 = tpu.matmul %13, %15, %cst_13 {dimension_numbers = #tpu.dot_dimension_numbers<[1], [0], [0], [1], [0, 0, 1, 1], [], []>} : vector<622x32xf32>, vector<32x64xf32>, vector<622x64xf32> -> vector<622x64xf32>
    %17 = arith.addf %12, %16 : vector<622x64xf32>
    %18 = vector.extract_strided_slice %8 {offsets = [2, 0], sizes = [622, 32], strides = [1, 1]} : vector<676x32xf32> to vector<622x32xf32>
    %c2 = arith.constant 2 : index
    %c0_14 = arith.constant 0 : index
    %c0_15 = arith.constant 0 : index
    %19 = vector.load %arg4[%c2, %c0_14, %c0_15] : memref<9x32x64xf32, #tpu.memory_space<vmem>>, vector<1x32x64xf32>
    %20 = vector.shape_cast %19 : vector<1x32x64xf32> to vector<32x64xf32>
    %cst_16 = arith.constant dense<0.000000e+00> : vector<622x64xf32>
    %21 = tpu.matmul %18, %20, %cst_16 {dimension_numbers = #tpu.dot_dimension_numbers<[1], [0], [0], [1], [0, 0, 1, 1], [], []>} : vector<622x32xf32>, vector<32x64xf32>, vector<622x64xf32> -> vector<622x64xf32>
    %22 = arith.addf %17, %21 : vector<622x64xf32>
    %23 = vector.extract_strided_slice %8 {offsets = [26, 0], sizes = [622, 32], strides = [1, 1]} : vector<676x32xf32> to vector<622x32xf32>
    %c3 = arith.constant 3 : index
    %c0_17 = arith.constant 0 : index
    %c0_18 = arith.constant 0 : index
    %24 = vector.load %arg4[%c3, %c0_17, %c0_18] : memref<9x32x64xf32, #tpu.memory_space<vmem>>, vector<1x32x64xf32>
    %25 = vector.shape_cast %24 : vector<1x32x64xf32> to vector<32x64xf32>
    %cst_19 = arith.constant dense<0.000000e+00> : vector<622x64xf32>
    %26 = tpu.matmul %23, %25, %cst_19 {dimension_numbers = #tpu.dot_dimension_numbers<[1], [0], [0], [1], [0, 0, 1, 1], [], []>} : vector<622x32xf32>, vector<32x64xf32>, vector<622x64xf32> -> vector<622x64xf32>
    %27 = arith.addf %22, %26 : vector<622x64xf32>
    %28 = vector.extract_strided_slice %8 {offsets = [27, 0], sizes = [622, 32], strides = [1, 1]} : vector<676x32xf32> to vector<622x32xf32>
    %c4 = arith.constant 4 : index
    %c0_20 = arith.constant 0 : index
    %c0_21 = arith.constant 0 : index
    %29 = vector.load %arg4[%c4, %c0_20, %c0_21] : memref<9x32x64xf32, #tpu.memory_space<vmem>>, vector<1x32x64xf32>
    %30 = vector.shape_cast %29 : vector<1x32x64xf32> to vector<32x64xf32>
    %cst_22 = arith.constant dense<0.000000e+00> : vector<622x64xf32>
    %31 = tpu.matmul %28, %30, %cst_22 {dimension_numbers = #tpu.dot_dimension_numbers<[1], [0], [0], [1], [0, 0, 1, 1], [], []>} : vector<622x32xf32>, vector<32x64xf32>, vector<622x64xf32> -> vector<622x64xf32>
    %32 = arith.addf %27, %31 : vector<622x64xf32>
    %33 = vector.extract_strided_slice %8 {offsets = [28, 0], sizes = [622, 32], strides = [1, 1]} : vector<676x32xf32> to vector<622x32xf32>
    %c5 = arith.constant 5 : index
    %c0_23 = arith.constant 0 : index
    %c0_24 = arith.constant 0 : index
    %34 = vector.load %arg4[%c5, %c0_23, %c0_24] : memref<9x32x64xf32, #tpu.memory_space<vmem>>, vector<1x32x64xf32>
    %35 = vector.shape_cast %34 : vector<1x32x64xf32> to vector<32x64xf32>
    %cst_25 = arith.constant dense<0.000000e+00> : vector<622x64xf32>
    %36 = tpu.matmul %33, %35, %cst_25 {dimension_numbers = #tpu.dot_dimension_numbers<[1], [0], [0], [1], [0, 0, 1, 1], [], []>} : vector<622x32xf32>, vector<32x64xf32>, vector<622x64xf32> -> vector<622x64xf32>
    %37 = arith.addf %32, %36 : vector<622x64xf32>
    %38 = vector.extract_strided_slice %8 {offsets = [52, 0], sizes = [622, 32], strides = [1, 1]} : vector<676x32xf32> to vector<622x32xf32>
    %c6 = arith.constant 6 : index
    %c0_26 = arith.constant 0 : index
    %c0_27 = arith.constant 0 : index
    %39 = vector.load %arg4[%c6, %c0_26, %c0_27] : memref<9x32x64xf32, #tpu.memory_space<vmem>>, vector<1x32x64xf32>
    %40 = vector.shape_cast %39 : vector<1x32x64xf32> to vector<32x64xf32>
    %cst_28 = arith.constant dense<0.000000e+00> : vector<622x64xf32>
    %41 = tpu.matmul %38, %40, %cst_28 {dimension_numbers = #tpu.dot_dimension_numbers<[1], [0], [0], [1], [0, 0, 1, 1], [], []>} : vector<622x32xf32>, vector<32x64xf32>, vector<622x64xf32> -> vector<622x64xf32>
    %42 = arith.addf %37, %41 : vector<622x64xf32>
    %43 = vector.extract_strided_slice %8 {offsets = [53, 0], sizes = [622, 32], strides = [1, 1]} : vector<676x32xf32> to vector<622x32xf32>
    %c7 = arith.constant 7 : index
    %c0_29 = arith.constant 0 : index
    %c0_30 = arith.constant 0 : index
    %44 = vector.load %arg4[%c7, %c0_29, %c0_30] : memref<9x32x64xf32, #tpu.memory_space<vmem>>, vector<1x32x64xf32>
    %45 = vector.shape_cast %44 : vector<1x32x64xf32> to vector<32x64xf32>
    %cst_31 = arith.constant dense<0.000000e+00> : vector<622x64xf32>
    %46 = tpu.matmul %43, %45, %cst_31 {dimension_numbers = #tpu.dot_dimension_numbers<[1], [0], [0], [1], [0, 0, 1, 1], [], []>} : vector<622x32xf32>, vector<32x64xf32>, vector<622x64xf32> -> vector<622x64xf32>
    %47 = arith.addf %42, %46 : vector<622x64xf32>
    %48 = vector.extract_strided_slice %8 {offsets = [54, 0], sizes = [622, 32], strides = [1, 1]} : vector<676x32xf32> to vector<622x32xf32>
    %c8 = arith.constant 8 : index
    %c0_32 = arith.constant 0 : index
    %c0_33 = arith.constant 0 : index
    %49 = vector.load %arg4[%c8, %c0_32, %c0_33] : memref<9x32x64xf32, #tpu.memory_space<vmem>>, vector<1x32x64xf32>
    %50 = vector.shape_cast %49 : vector<1x32x64xf32> to vector<32x64xf32>
    %cst_34 = arith.constant dense<0.000000e+00> : vector<622x64xf32>
    %51 = tpu.matmul %48, %50, %cst_34 {dimension_numbers = #tpu.dot_dimension_numbers<[1], [0], [0], [1], [0, 0, 1, 1], [], []>} : vector<622x32xf32>, vector<32x64xf32>, vector<622x64xf32> -> vector<622x64xf32>
    %52 = arith.addf %47, %51 : vector<622x64xf32>
    %c0_35 = arith.constant 0 : index
    %c0_36 = arith.constant 0 : index
    %53 = vector.load %arg5[%c0_35, %c0_36] : memref<1x64xf32, #tpu.memory_space<vmem>>, vector<1x64xf32>
    %54 = vector.broadcast %53 : vector<1x64xf32> to vector<622x64xf32>
    %55 = arith.addf %52, %54 : vector<622x64xf32>
    %cst_37 = arith.constant 0.000000e+00 : f32
    %56 = vector.broadcast %cst_37 : f32 to vector<622x64xf32>
    %57 = arith.maximumf %55, %56 : vector<622x64xf32>
    %58 = vector.extract_strided_slice %57 {offsets = [0, 0], sizes = [596, 64], strides = [1, 1]} : vector<622x64xf32> to vector<596x64xf32>
    %59 = vector.extract_strided_slice %57 {offsets = [26, 0], sizes = [596, 64], strides = [1, 1]} : vector<622x64xf32> to vector<596x64xf32>
    %60 = arith.maximumf %58, %59 : vector<596x64xf32>
    %61 = vector.extract_strided_slice %60 {offsets = [0, 0], sizes = [595, 64], strides = [1, 1]} : vector<596x64xf32> to vector<595x64xf32>
    %62 = vector.extract_strided_slice %60 {offsets = [1, 0], sizes = [595, 64], strides = [1, 1]} : vector<596x64xf32> to vector<595x64xf32>
    %63 = arith.maximumf %61, %62 : vector<595x64xf32>
    %c0_38 = arith.constant 0 : index
    %c0_39 = arith.constant 0 : index
    %64 = vector.load %arg7[%c0_38, %c0_39] : memref<595x64xf32, #tpu.memory_space<vmem>>, vector<595x64xf32>
    tpu.vector_store %arg7[%c0_38, %c0_39], %63 {strides = array<i32>} : memref<595x64xf32, #tpu.memory_space<vmem>>, vector<595x64xf32>,
    %c0_40 = arith.constant 0 : index
    %c0_41 = arith.constant 0 : index
    %65 = tpu.strided_load %arg7[%c0_40, %c0_41] {strides = array<i32: 2, 1>} : memref<595x64xf32, #tpu.memory_space<vmem>>, vector<12x64xf32>
    %c0_42 = arith.constant 0 : index
    %c0_43 = arith.constant 0 : index
    %c0_44 = arith.constant 0 : index
    %66 = vector.load %arg6[%c0_42, %c0_43, %c0_44] : memref<1x144x64xf32, #tpu.memory_space<vmem>>, vector<1x12x64xf32>
    %67 = vector.shape_cast %66 : vector<1x12x64xf32> to vector<12x64xf32>
    %68 = vector.shape_cast %65 : vector<12x64xf32> to vector<1x12x64xf32>
    tpu.vector_store %arg6[%c0_42, %c0_43, %c0_44], %68 {strides = array<i32>} : memref<1x144x64xf32, #tpu.memory_space<vmem>>, vector<1x12x64xf32>,
    %c52 = arith.constant 52 : index
    %c0_45 = arith.constant 0 : index
    %69 = tpu.strided_load %arg7[%c52, %c0_45] {strides = array<i32: 2, 1>} : memref<595x64xf32, #tpu.memory_space<vmem>>, vector<12x64xf32>
    %c0_46 = arith.constant 0 : index
    %c12 = arith.constant 12 : index
    %c0_47 = arith.constant 0 : index
    %70 = vector.load %arg6[%c0_46, %c12, %c0_47] : memref<1x144x64xf32, #tpu.memory_space<vmem>>, vector<1x12x64xf32>
    %71 = vector.shape_cast %70 : vector<1x12x64xf32> to vector<12x64xf32>
    %72 = vector.shape_cast %69 : vector<12x64xf32> to vector<1x12x64xf32>
    tpu.vector_store %arg6[%c0_46, %c12, %c0_47], %72 {strides = array<i32>} : memref<1x144x64xf32, #tpu.memory_space<vmem>>, vector<1x12x64xf32>,
    %c104 = arith.constant 104 : index
    %c0_48 = arith.constant 0 : index
    %73 = tpu.strided_load %arg7[%c104, %c0_48] {strides = array<i32: 2, 1>} : memref<595x64xf32, #tpu.memory_space<vmem>>, vector<12x64xf32>
    %c0_49 = arith.constant 0 : index
    %c24 = arith.constant 24 : index
    %c0_50 = arith.constant 0 : index
    %74 = vector.load %arg6[%c0_49, %c24, %c0_50] : memref<1x144x64xf32, #tpu.memory_space<vmem>>, vector<1x12x64xf32>
    %75 = vector.shape_cast %74 : vector<1x12x64xf32> to vector<12x64xf32>
    %76 = vector.shape_cast %73 : vector<12x64xf32> to vector<1x12x64xf32>
    tpu.vector_store %arg6[%c0_49, %c24, %c0_50], %76 {strides = array<i32>} : memref<1x144x64xf32, #tpu.memory_space<vmem>>, vector<1x12x64xf32>,
    %c156 = arith.constant 156 : index
    %c0_51 = arith.constant 0 : index
    %77 = tpu.strided_load %arg7[%c156, %c0_51] {strides = array<i32: 2, 1>} : memref<595x64xf32, #tpu.memory_space<vmem>>, vector<12x64xf32>
    %c0_52 = arith.constant 0 : index
    %c36 = arith.constant 36 : index
    %c0_53 = arith.constant 0 : index
    %78 = vector.load %arg6[%c0_52, %c36, %c0_53] : memref<1x144x64xf32, #tpu.memory_space<vmem>>, vector<1x12x64xf32>
    %79 = vector.shape_cast %78 : vector<1x12x64xf32> to vector<12x64xf32>
    %80 = vector.shape_cast %77 : vector<12x64xf32> to vector<1x12x64xf32>
    tpu.vector_store %arg6[%c0_52, %c36, %c0_53], %80 {strides = array<i32>} : memref<1x144x64xf32, #tpu.memory_space<vmem>>, vector<1x12x64xf32>,
    %c208 = arith.constant 208 : index
    %c0_54 = arith.constant 0 : index
    %81 = tpu.strided_load %arg7[%c208, %c0_54] {strides = array<i32: 2, 1>} : memref<595x64xf32, #tpu.memory_space<vmem>>, vector<12x64xf32>
    %c0_55 = arith.constant 0 : index
    %c48 = arith.constant 48 : index
    %c0_56 = arith.constant 0 : index
    %82 = vector.load %arg6[%c0_55, %c48, %c0_56] : memref<1x144x64xf32, #tpu.memory_space<vmem>>, vector<1x12x64xf32>
    %83 = vector.shape_cast %82 : vector<1x12x64xf32> to vector<12x64xf32>
    %84 = vector.shape_cast %81 : vector<12x64xf32> to vector<1x12x64xf32>
    tpu.vector_store %arg6[%c0_55, %c48, %c0_56], %84 {strides = array<i32>} : memref<1x144x64xf32, #tpu.memory_space<vmem>>, vector<1x12x64xf32>,
    %c260 = arith.constant 260 : index
    %c0_57 = arith.constant 0 : index
    %85 = tpu.strided_load %arg7[%c260, %c0_57] {strides = array<i32: 2, 1>} : memref<595x64xf32, #tpu.memory_space<vmem>>, vector<12x64xf32>
    %c0_58 = arith.constant 0 : index
    %c60 = arith.constant 60 : index
    %c0_59 = arith.constant 0 : index
    %86 = vector.load %arg6[%c0_58, %c60, %c0_59] : memref<1x144x64xf32, #tpu.memory_space<vmem>>, vector<1x12x64xf32>
    %87 = vector.shape_cast %86 : vector<1x12x64xf32> to vector<12x64xf32>
    %88 = vector.shape_cast %85 : vector<12x64xf32> to vector<1x12x64xf32>
    tpu.vector_store %arg6[%c0_58, %c60, %c0_59], %88 {strides = array<i32>} : memref<1x144x64xf32, #tpu.memory_space<vmem>>, vector<1x12x64xf32>,
    %c312 = arith.constant 312 : index
    %c0_60 = arith.constant 0 : index
    %89 = tpu.strided_load %arg7[%c312, %c0_60] {strides = array<i32: 2, 1>} : memref<595x64xf32, #tpu.memory_space<vmem>>, vector<12x64xf32>
    %c0_61 = arith.constant 0 : index
    %c72 = arith.constant 72 : index
    %c0_62 = arith.constant 0 : index
    %90 = vector.load %arg6[%c0_61, %c72, %c0_62] : memref<1x144x64xf32, #tpu.memory_space<vmem>>, vector<1x12x64xf32>
    %91 = vector.shape_cast %90 : vector<1x12x64xf32> to vector<12x64xf32>
    %92 = vector.shape_cast %89 : vector<12x64xf32> to vector<1x12x64xf32>
    tpu.vector_store %arg6[%c0_61, %c72, %c0_62], %92 {strides = array<i32>} : memref<1x144x64xf32, #tpu.memory_space<vmem>>, vector<1x12x64xf32>,
    %c364 = arith.constant 364 : index
    %c0_63 = arith.constant 0 : index
    %93 = tpu.strided_load %arg7[%c364, %c0_63] {strides = array<i32: 2, 1>} : memref<595x64xf32, #tpu.memory_space<vmem>>, vector<12x64xf32>
    %c0_64 = arith.constant 0 : index
    %c84 = arith.constant 84 : index
    %c0_65 = arith.constant 0 : index
    %94 = vector.load %arg6[%c0_64, %c84, %c0_65] : memref<1x144x64xf32, #tpu.memory_space<vmem>>, vector<1x12x64xf32>
    %95 = vector.shape_cast %94 : vector<1x12x64xf32> to vector<12x64xf32>
    %96 = vector.shape_cast %93 : vector<12x64xf32> to vector<1x12x64xf32>
    tpu.vector_store %arg6[%c0_64, %c84, %c0_65], %96 {strides = array<i32>} : memref<1x144x64xf32, #tpu.memory_space<vmem>>, vector<1x12x64xf32>,
    %c416 = arith.constant 416 : index
    %c0_66 = arith.constant 0 : index
    %97 = tpu.strided_load %arg7[%c416, %c0_66] {strides = array<i32: 2, 1>} : memref<595x64xf32, #tpu.memory_space<vmem>>, vector<12x64xf32>
    %c0_67 = arith.constant 0 : index
    %c96 = arith.constant 96 : index
    %c0_68 = arith.constant 0 : index
    %98 = vector.load %arg6[%c0_67, %c96, %c0_68] : memref<1x144x64xf32, #tpu.memory_space<vmem>>, vector<1x12x64xf32>
    %99 = vector.shape_cast %98 : vector<1x12x64xf32> to vector<12x64xf32>
    %100 = vector.shape_cast %97 : vector<12x64xf32> to vector<1x12x64xf32>
    tpu.vector_store %arg6[%c0_67, %c96, %c0_68], %100 {strides = array<i32>} : memref<1x144x64xf32, #tpu.memory_space<vmem>>, vector<1x12x64xf32>,
    %c468 = arith.constant 468 : index
    %c0_69 = arith.constant 0 : index
    %101 = tpu.strided_load %arg7[%c468, %c0_69] {strides = array<i32: 2, 1>} : memref<595x64xf32, #tpu.memory_space<vmem>>, vector<12x64xf32>
    %c0_70 = arith.constant 0 : index
    %c108 = arith.constant 108 : index
    %c0_71 = arith.constant 0 : index
    %102 = vector.load %arg6[%c0_70, %c108, %c0_71] : memref<1x144x64xf32, #tpu.memory_space<vmem>>, vector<1x12x64xf32>
    %103 = vector.shape_cast %102 : vector<1x12x64xf32> to vector<12x64xf32>
    %104 = vector.shape_cast %101 : vector<12x64xf32> to vector<1x12x64xf32>
    tpu.vector_store %arg6[%c0_70, %c108, %c0_71], %104 {strides = array<i32>} : memref<1x144x64xf32, #tpu.memory_space<vmem>>, vector<1x12x64xf32>,
    %c520 = arith.constant 520 : index
    %c0_72 = arith.constant 0 : index
    %105 = tpu.strided_load %arg7[%c520, %c0_72] {strides = array<i32: 2, 1>} : memref<595x64xf32, #tpu.memory_space<vmem>>, vector<12x64xf32>
    %c0_73 = arith.constant 0 : index
    %c120 = arith.constant 120 : index
    %c0_74 = arith.constant 0 : index
    %106 = vector.load %arg6[%c0_73, %c120, %c0_74] : memref<1x144x64xf32, #tpu.memory_space<vmem>>, vector<1x12x64xf32>
    %107 = vector.shape_cast %106 : vector<1x12x64xf32> to vector<12x64xf32>
    %108 = vector.shape_cast %105 : vector<12x64xf32> to vector<1x12x64xf32>
    tpu.vector_store %arg6[%c0_73, %c120, %c0_74], %108 {strides = array<i32>} : memref<1x144x64xf32, #tpu.memory_space<vmem>>, vector<1x12x64xf32>,
    %c572 = arith.constant 572 : index
    %c0_75 = arith.constant 0 : index
    %109 = tpu.strided_load %arg7[%c572, %c0_75] {strides = array<i32: 2, 1>} : memref<595x64xf32, #tpu.memory_space<vmem>>, vector<12x64xf32>
    %c0_76 = arith.constant 0 : index
    %c132 = arith.constant 132 : index
    %c0_77 = arith.constant 0 : index
    %110 = vector.load %arg6[%c0_76, %c132, %c0_77] : memref<1x144x64xf32, #tpu.memory_space<vmem>>, vector<1x12x64xf32>
    %111 = vector.shape_cast %110 : vector<1x12x64xf32> to vector<12x64xf32>
    %112 = vector.shape_cast %109 : vector<12x64xf32> to vector<1x12x64xf32>
    tpu.vector_store %arg6[%c0_76, %c132, %c0_77], %112 {strides = array<i32>} : memref<1x144x64xf32, #tpu.memory_space<vmem>>, vector<1x12x64xf32>,
    return
  }
  func.func @transform_0(%arg0: i32) -> (i32, i32, i32) {
    %c0_i32 = arith.constant 0 : i32
    %c0_i32_0 = arith.constant 0 : i32
    %c0_i32_1 = arith.constant 0 : i32
    return %arg0, %c0_i32, %c0_i32_0 : i32, i32, i32
  }
  func.func @transform_1(%arg0: i32) -> (i32, i32) {
    %c0_i32 = arith.constant 0 : i32
    %c0_i32_0 = arith.constant 0 : i32
    %c0_i32_1 = arith.constant 0 : i32
    return %c0_i32, %c0_i32_0 : i32, i32
  }
  func.func @transform_2(%arg0: i32) -> (i32, i32) {
    %c0_i32 = arith.constant 0 : i32
    %c0_i32_0 = arith.constant 0 : i32
    %c0_i32_1 = arith.constant 0 : i32
    return %c0_i32, %c0_i32_0 : i32, i32
  }
  func.func @transform_3(%arg0: i32) -> (i32, i32, i32) {
    %c0_i32 = arith.constant 0 : i32
    %c0_i32_0 = arith.constant 0 : i32
    %c0_i32_1 = arith.constant 0 : i32
    %c0_i32_2 = arith.constant 0 : i32
    return %c0_i32, %c0_i32_0, %c0_i32_1 : i32, i32, i32
  }
  func.func @transform_4(%arg0: i32) -> (i32, i32) {
    %c0_i32 = arith.constant 0 : i32
    %c0_i32_0 = arith.constant 0 : i32
    %c0_i32_1 = arith.constant 0 : i32
    return %c0_i32, %c0_i32_0 : i32, i32
  }
  func.func @transform_5(%arg0: i32) -> (i32, i32, i32) {
    %c0_i32 = arith.constant 0 : i32
    %c0_i32_0 = arith.constant 0 : i32
    %c0_i32_1 = arith.constant 0 : i32
    return %arg0, %c0_i32, %c0_i32_0 : i32, i32, i32
  }
}

module attributes {stable_mosaic.version = 11 : i64} {
  func.func @_fc_head_kernel(%arg0: i32, %arg1: memref<2x1152xf32, #tpu.memory_space<vmem>>, %arg2: memref<1152x100xf32, #tpu.memory_space<vmem>>, %arg3: memref<1x100xf32, #tpu.memory_space<vmem>>, %arg4: memref<100x10xf32, #tpu.memory_space<vmem>>, %arg5: memref<1x10xf32, #tpu.memory_space<vmem>>, %arg6: memref<2x10xf32, #tpu.memory_space<vmem>>, %arg7: memref<2x100xf32, #tpu.memory_space<vmem>>) attributes {dimension_semantics = [#tpu.dimension_semantics<arbitrary>], iteration_bounds = array<i64: 8>, scalar_prefetch = 0 : i64, scratch_operands = 1 : i64, tpu.core_type = #tpu.core_type<tc>, window_params = [{transform_indices = @transform_0, window_bounds = array<i64: 2, 1152>}, {transform_indices = @transform_1, window_bounds = array<i64: 1152, 100>}, {pipeline_mode = #tpu.pipeline_mode<synchronous>, transform_indices = @transform_2, window_bounds = array<i64: 1, 100>}, {pipeline_mode = #tpu.pipeline_mode<synchronous>, transform_indices = @transform_3, window_bounds = array<i64: 100, 10>}, {pipeline_mode = #tpu.pipeline_mode<synchronous>, transform_indices = @transform_4, window_bounds = array<i64: 1, 10>}, {pipeline_mode = #tpu.pipeline_mode<synchronous>, transform_indices = @transform_5, window_bounds = array<i64: 2, 10>}]} {
    %c0_i32 = arith.constant 0 : i32
    %0 = arith.cmpi eq, %arg0, %c0_i32 : i32
    %1 = arith.extui %0 : i1 to i32
    %c0_i32_0 = arith.constant 0 : i32
    %2 = arith.cmpi ne, %1, %c0_i32_0 : i32
    scf.if %2 {
      %cst_9 = arith.constant 0.000000e+00 : f32
      %12 = vector.broadcast %cst_9 : f32 to vector<2x100xf32>
      %c0_10 = arith.constant 0 : index
      %c0_11 = arith.constant 0 : index
      %13 = vector.load %arg7[%c0_10, %c0_11] : memref<2x100xf32, #tpu.memory_space<vmem>>, vector<2x100xf32>
      tpu.vector_store %arg7[%c0_10, %c0_11], %12 {strides = array<i32>} : memref<2x100xf32, #tpu.memory_space<vmem>>, vector<2x100xf32>,
    } else {
    }
    %c0 = arith.constant 0 : index
    %c0_1 = arith.constant 0 : index
    %3 = vector.load %arg7[%c0, %c0_1] : memref<2x100xf32, #tpu.memory_space<vmem>>, vector<2x100xf32>
    %c0_2 = arith.constant 0 : index
    %c0_3 = arith.constant 0 : index
    %4 = vector.load %arg1[%c0_2, %c0_3] : memref<2x1152xf32, #tpu.memory_space<vmem>>, vector<2x1152xf32>
    %c0_4 = arith.constant 0 : index
    %c0_5 = arith.constant 0 : index
    %5 = vector.load %arg2[%c0_4, %c0_5] : memref<1152x100xf32, #tpu.memory_space<vmem>>, vector<1152x100xf32>
    %cst = arith.constant dense<0.000000e+00> : vector<2x100xf32>
    %6 = tpu.matmul %4, %5, %cst {dimension_numbers = #tpu.dot_dimension_numbers<[1], [0], [0], [1], [0, 0, 1, 1], [], []>} : vector<2x1152xf32>, vector<1152x100xf32>, vector<2x100xf32> -> vector<2x100xf32>
    %7 = arith.addf %3, %6 : vector<2x100xf32>
    %c0_6 = arith.constant 0 : index
    %c0_7 = arith.constant 0 : index
    %8 = vector.load %arg7[%c0_6, %c0_7] : memref<2x100xf32, #tpu.memory_space<vmem>>, vector<2x100xf32>
    tpu.vector_store %arg7[%c0_6, %c0_7], %7 {strides = array<i32>} : memref<2x100xf32, #tpu.memory_space<vmem>>, vector<2x100xf32>,
    %c7_i32 = arith.constant 7 : i32
    %9 = arith.cmpi eq, %arg0, %c7_i32 : i32
    %10 = arith.extui %9 : i1 to i32
    %c0_i32_8 = arith.constant 0 : i32
    %11 = arith.cmpi ne, %10, %c0_i32_8 : i32
    scf.if %11 {
      %c0_9 = arith.constant 0 : index
      %c0_10 = arith.constant 0 : index
      %12 = vector.load %arg7[%c0_9, %c0_10] : memref<2x100xf32, #tpu.memory_space<vmem>>, vector<2x100xf32>
      %c0_11 = arith.constant 0 : index
      %c0_12 = arith.constant 0 : index
      %13 = vector.load %arg3[%c0_11, %c0_12] : memref<1x100xf32, #tpu.memory_space<vmem>>, vector<1x100xf32>
      %14 = vector.broadcast %13 : vector<1x100xf32> to vector<2x100xf32>
      %15 = arith.addf %12, %14 : vector<2x100xf32>
      %cst_13 = arith.constant 0.000000e+00 : f32
      %16 = vector.broadcast %cst_13 : f32 to vector<2x100xf32>
      %17 = arith.maximumf %15, %16 : vector<2x100xf32>
      %c0_14 = arith.constant 0 : index
      %c0_15 = arith.constant 0 : index
      %18 = vector.load %arg4[%c0_14, %c0_15] : memref<100x10xf32, #tpu.memory_space<vmem>>, vector<100x10xf32>
      %cst_16 = arith.constant dense<0.000000e+00> : vector<2x10xf32>
      %19 = tpu.matmul %17, %18, %cst_16 {dimension_numbers = #tpu.dot_dimension_numbers<[1], [0], [0], [1], [0, 0, 1, 1], [], []>} : vector<2x100xf32>, vector<100x10xf32>, vector<2x10xf32> -> vector<2x10xf32>
      %c0_17 = arith.constant 0 : index
      %c0_18 = arith.constant 0 : index
      %20 = vector.load %arg5[%c0_17, %c0_18] : memref<1x10xf32, #tpu.memory_space<vmem>>, vector<1x10xf32>
      %21 = vector.broadcast %20 : vector<1x10xf32> to vector<2x10xf32>
      %22 = arith.addf %19, %21 : vector<2x10xf32>
      %cst_19 = arith.constant dense<0xFF800000> : vector<2xf32>
      %23 = vector.multi_reduction <maximumf>, %22, %cst_19 [1] : vector<2x10xf32> to vector<2xf32>
      %24 = vector.shape_cast %23 : vector<2xf32> to vector<2x1xf32>
      %25 = vector.broadcast %24 : vector<2x1xf32> to vector<2x10xf32>
      %26 = arith.subf %22, %25 : vector<2x10xf32>
      %27 = math.exp %26 : vector<2x10xf32>
      %cst_20 = arith.constant dense<0.000000e+00> : vector<2xf32>
      %28 = vector.multi_reduction <add>, %27, %cst_20 [1] : vector<2x10xf32> to vector<2xf32>
      %29 = vector.shape_cast %28 : vector<2xf32> to vector<2x1xf32>
      %30 = math.log %29 : vector<2x1xf32>
      %31 = vector.broadcast %30 : vector<2x1xf32> to vector<2x10xf32>
      %32 = arith.subf %26, %31 : vector<2x10xf32>
      %c0_21 = arith.constant 0 : index
      %c0_22 = arith.constant 0 : index
      %33 = vector.load %arg6[%c0_21, %c0_22] : memref<2x10xf32, #tpu.memory_space<vmem>>, vector<2x10xf32>
      tpu.vector_store %arg6[%c0_21, %c0_22], %32 {strides = array<i32>} : memref<2x10xf32, #tpu.memory_space<vmem>>, vector<2x10xf32>,
    } else {
    }
    return
  }
  func.func @transform_0(%arg0: i32) -> (i32, i32) {
    %c0_i32 = arith.constant 0 : i32
    %c0_i32_0 = arith.constant 0 : i32
    return %c0_i32, %arg0 : i32, i32
  }
  func.func @transform_1(%arg0: i32) -> (i32, i32) {
    %c0_i32 = arith.constant 0 : i32
    %c0_i32_0 = arith.constant 0 : i32
    return %arg0, %c0_i32 : i32, i32
  }
  func.func @transform_2(%arg0: i32) -> (i32, i32) {
    %c0_i32 = arith.constant 0 : i32
    %c0_i32_0 = arith.constant 0 : i32
    %c0_i32_1 = arith.constant 0 : i32
    return %c0_i32, %c0_i32_0 : i32, i32
  }
  func.func @transform_3(%arg0: i32) -> (i32, i32) {
    %c0_i32 = arith.constant 0 : i32
    %c0_i32_0 = arith.constant 0 : i32
    %c0_i32_1 = arith.constant 0 : i32
    return %c0_i32, %c0_i32_0 : i32, i32
  }
  func.func @transform_4(%arg0: i32) -> (i32, i32) {
    %c0_i32 = arith.constant 0 : i32
    %c0_i32_0 = arith.constant 0 : i32
    %c0_i32_1 = arith.constant 0 : i32
    return %c0_i32, %c0_i32_0 : i32, i32
  }
  func.func @transform_5(%arg0: i32) -> (i32, i32) {
    %c0_i32 = arith.constant 0 : i32
    %c0_i32_0 = arith.constant 0 : i32
    %c0_i32_1 = arith.constant 0 : i32
    return %c0_i32, %c0_i32_0 : i32, i32
  }
}

</mosaic_0001>

<llo_original>
// kernel: net_forward.3
$region0: #{net_forward.3}
  #allocation0 [shape = 'u32[]', space=smem, size = 0x4, offset = 0x4, fixed_abs, tag = 'smem constant byte address 0x4 - core index']
  #allocation1 [shape = 'u32[144,128]{1,0:T(1,128)}', space=vmem, size = 0x12000, scoped, tag = 'internal scratch']
  #allocation2 [shape = 'f32[2,100]{1,0:T(2,128)}', space=vmem, size = 0x400, scoped, tag = 'scratch operand']
  %s0 = inlined_call_operand.vmem [shape: f32[2,9216], index: 0, kind: input, shape index: {}]
  %s1 = inlined_call_operand.vmem [shape: f32[9216,100], index: 1, kind: input, shape index: {}]
  %s2 = inlined_call_operand.vmem [shape: f32[1,100], index: 2, kind: input, shape index: {}]
  %s3 = inlined_call_operand.vmem [shape: f32[100,10], index: 3, kind: input, shape index: {}]
  %s4 = inlined_call_operand.vmem [shape: f32[1,10], index: 4, kind: input, shape index: {}]
  %s5 = inlined_call_operand.hbm [shape: f32[2,10], index: 5, kind: output, shape index: {}]
  %s6 = sld [smem:[#allocation0]]
  $region61: #{net_forward.3} parent=0
    _
  %s8 = ssub.s32 1, %s6
  %s9 = scalar_select 0, %s8, %s6
  $region1: #{net_forward.3} parent=0
    #allocation3 [shape = 'u8[1024]{0}', space=vmem, size = 0x400, scoped, tag = 'output window, operand 0, single buffered']
    #allocation4 [shape = 's32[2]{0}', space=sflag, size = 0x8, scoped, tag = 'scoped memory for net_forward.3']
    %10 = vsyncpa [#allocation4], 0
    loop: start=0, step=1, limit=10
    $region2: #{net_forward.3} parent=1 // loop_pre_header
      _
    $region3: #{net_forward.3} parent=1 // loop_header
      %s12 = sphi 0, %s16
      %p13 = scmp.ge.s32.totalorder %s12, 10
      %s22 = sphi 0, %s24
      %s25 = sphi 0, %s22
      %s26 = sphi 0, %s25
      %s42 = sphi 0, %s26
      %s48 = sphi 0, %s50
      %s51 = sphi 0, %s48
      %s52 = sphi 0, %s51
      %s68 = sphi 0, %s52
      %s72 = sphi 0, %s72
      %s74 = sphi 0, %s72
      %s75 = sphi 0, %s74
      %s89 = sphi 0, %s75
      %s93 = sphi 0, %s93
      %s95 = sphi 0, %s93
      %s96 = sphi 0, %s95
      %s110 = sphi 0, %s96
      %s114 = sphi 0, %s114
      %s116 = sphi 0, %s114
      %s117 = sphi 0, %s116
      %s131 = sphi 0, %s117
      %s135 = sphi 0, %s135
      %s137 = sphi 0, %s135
      %s138 = sphi 0, %s137
      %s152 = sphi 0, %s138
    $region4: #{net_forward.3} parent=1 // loop_header_branch
      %15 = sbr.rel (%p13) target = $region8
    $region5: #{net_forward.3} parent=1 // loop_body
      %s17 = ssub.s32 %s12, 1
      %s18 = ssub.s32 %s12, 2
      %s19 = sadd.s32 %s12, 1
      %s20 = ssub.s32 %s12, %s19
      %p21 = scmp.eq.s32.totalorder %s20, 0
      %s23 = sadd.s32 %s22, 1
      %s24 = scalar_select %p21, %s22, %s23
      %p27 = pneg %p21
      %p28 = scmp.eq.s32.totalorder %s12, 7
      %p29 = por %p27, %p28
      %p30 = scmp.ne.s32.totalorder %s22, %s25
      %p31 = scmp.eq.s32.totalorder %s12, 0
      %p32 = por %p30, %p31
      %p33 = scmp.ne.s32.totalorder %s22, %s25
      %p34 = scmp.eq.s32.totalorder %s17, 7
      %p35 = por %p33, %p34
      %p36 = scmp.ne.s32.totalorder %s25, %s26
      %p37 = scmp.eq.s32.totalorder %s17, 0
      %p38 = por %p36, %p37
      %p39 = scmp.ne.s32.totalorder %s25, %s26
      %p40 = scmp.eq.s32.totalorder %s18, 7
      %p41 = por %p39, %p40
      %p43 = scmp.ne.s32.totalorder %s26, %s42
      %p44 = scmp.eq.s32.totalorder %s18, 0
      %p45 = por %p43, %p44
      %s46 = ssub.s32 %s12, %s19
      %p47 = scmp.eq.s32.totalorder %s46, 0
      %s49 = sadd.s32 %s48, 1
      %s50 = scalar_select %p47, %s48, %s49
      %p53 = pneg %p47
      %p54 = scmp.eq.s32.totalorder %s12, 7
      %p55 = por %p53, %p54
      %p56 = scmp.ne.s32.totalorder %s48, %s51
      %p57 = scmp.eq.s32.totalorder %s12, 0
      %p58 = por %p56, %p57
      %p59 = scmp.ne.s32.totalorder %s48, %s51
      %p60 = scmp.eq.s32.totalorder %s17, 7
      %p61 = por %p59, %p60
      %p62 = scmp.ne.s32.totalorder %s51, %s52
      %p63 = scmp.eq.s32.totalorder %s17, 0
      %p64 = por %p62, %p63
      %p65 = scmp.ne.s32.totalorder %s51, %s52
      %p66 = scmp.eq.s32.totalorder %s18, 7
      %p67 = por %p65, %p66
      %p69 = scmp.ne.s32.totalorder %s52, %s68
      %p70 = scmp.eq.s32.totalorder %s18, 0
      %p71 = por %p69, %p70
      %s73 = sadd.s32 %s72, 1
      %p76 = scmp.eq.s32.totalorder %s12, 7
      %p77 = scmp.ne.s32.totalorder %s72, %s74
      %p78 = scmp.eq.s32.totalorder %s12, 0
      %p79 = por %p77, %p78
      %p80 = scmp.ne.s32.totalorder %s72, %s74
      %p81 = scmp.eq.s32.totalorder %s17, 7
      %p82 = por %p80, %p81
      %p83 = scmp.ne.s32.totalorder %s74, %s75
      %p84 = scmp.eq.s32.totalorder %s17, 0
      %p85 = por %p83, %p84
      %p86 = scmp.ne.s32.totalorder %s74, %s75
      %p87 = scmp.eq.s32.totalorder %s18, 7
      %p88 = por %p86, %p87
      %p90 = scmp.ne.s32.totalorder %s75, %s89
      %p91 = scmp.eq.s32.totalorder %s18, 0
      %p92 = por %p90, %p91
      %s94 = sadd.s32 %s93, 1
      %p97 = scmp.eq.s32.totalorder %s12, 7
      %p98 = scmp.ne.s32.totalorder %s93, %s95
      %p99 = scmp.eq.s32.totalorder %s12, 0
      %p100 = por %p98, %p99
      %p101 = scmp.ne.s32.totalorder %s93, %s95
      %p102 = scmp.eq.s32.totalorder %s17, 7
      %p103 = por %p101, %p102
      %p104 = scmp.ne.s32.totalorder %s95, %s96
      %p105 = scmp.eq.s32.totalorder %s17, 0
      %p106 = por %p104, %p105
      %p107 = scmp.ne.s32.totalorder %s95, %s96
      %p108 = scmp.eq.s32.totalorder %s18, 7
      %p109 = por %p107, %p108
      %p111 = scmp.ne.s32.totalorder %s96, %s110
      %p112 = scmp.eq.s32.totalorder %s18, 0
      %p113 = por %p111, %p112
      %s115 = sadd.s32 %s114, 1
      %p118 = scmp.eq.s32.totalorder %s12, 7
      %p119 = scmp.ne.s32.totalorder %s114, %s116
      %p120 = scmp.eq.s32.totalorder %s12, 0
      %p121 = por %p119, %p120
      %p122 = scmp.ne.s32.totalorder %s114, %s116
      %p123 = scmp.eq.s32.totalorder %s17, 7
      %p124 = por %p122, %p123
      %p125 = scmp.ne.s32.totalorder %s116, %s117
      %p126 = scmp.eq.s32.totalorder %s17, 0
      %p127 = por %p125, %p126
      %p128 = scmp.ne.s32.totalorder %s116, %s117
      %p129 = scmp.eq.s32.totalorder %s18, 7
      %p130 = por %p128, %p129
      %p132 = scmp.ne.s32.totalorder %s117, %s131
      %p133 = scmp.eq.s32.totalorder %s18, 0
      %p134 = por %p132, %p133
      %s136 = sadd.s32 %s135, 1
      %p139 = scmp.eq.s32.totalorder %s12, 7
      %p140 = scmp.ne.s32.totalorder %s135, %s137
      %p141 = scmp.eq.s32.totalorder %s12, 0
      %p142 = por %p140, %p141
      %p143 = scmp.ne.s32.totalorder %s135, %s137
      %p144 = scmp.eq.s32.totalorder %s17, 7
      %p145 = por %p143, %p144
      %p146 = scmp.ne.s32.totalorder %s137, %s138
      %p147 = scmp.eq.s32.totalorder %s17, 0
      %p148 = por %p146, %p147
      %p149 = scmp.ne.s32.totalorder %s137, %s138
      %p150 = scmp.eq.s32.totalorder %s18, 7
      %p151 = por %p149, %p150
      %p153 = scmp.ne.s32.totalorder %s138, %s152
      %p154 = scmp.eq.s32.totalorder %s18, 0
      %p155 = por %p153, %p154
      %p156 = scmp.le.s32.totalorder 1, %s12
      %p157 = scmp.lt.s32.totalorder %s12, 9
      %p158 = pnand %p156, %p157
      %p159 = pneg %p158
      // Predicated region
      $region9: #{net_forward.3} parent=5 // pred_check
        _
      $region10: #{net_forward.3} parent=5 // pred_check_branch
        %161 = sbr.rel (%p158) target = $region12
      $region11: #{net_forward.3} parent=5 // pred_region
        %s162 = ssub.s32 %s12, 1
        // Predicated region
        $region13: #{net_forward.3} parent=11 // pred_check
          %p163 = pneg %p85
        $region14: #{net_forward.3} parent=11 // pred_check_branch
          %165 = sbr.rel (%p163) target = $region16
        $region15: #{net_forward.3} parent=11 // pred_region
          _
        $region16: #{net_forward.3} parent=11 // pred_fallthru
          _
        // Predicated region
        $region17: #{net_forward.3} parent=11 // pred_check
          %p166 = pneg %p106
        $region18: #{net_forward.3} parent=11 // pred_check_branch
          %168 = sbr.rel (%p166) target = $region20
        $region19: #{net_forward.3} parent=11 // pred_region
          _
        $region20: #{net_forward.3} parent=11 // pred_fallthru
          _
        // Predicated region
        $region21: #{net_forward.3} parent=11 // pred_check
          %p169 = pneg %p127
        $region22: #{net_forward.3} parent=11 // pred_check_branch
          %171 = sbr.rel (%p169) target = $region24
        $region23: #{net_forward.3} parent=11 // pred_region
          _
        $region24: #{net_forward.3} parent=11 // pred_fallthru
          _
      $region12: #{net_forward.3} parent=5 // pred_fallthru
        _
      %p172 = scmp.lt.s32.totalorder %s12, 8
      // Predicated region
      $region25: #{net_forward.3} parent=5 // pred_check
        %p173 = pneg %p172
      $region26: #{net_forward.3} parent=5 // pred_check_branch
        %175 = sbr.rel (%p173) target = $region28
      $region27: #{net_forward.3} parent=5 // pred_region
        // Predicated region
        $region29: #{net_forward.3} parent=27 // pred_check
          %p176 = pneg %p32
        $region30: #{net_forward.3} parent=27 // pred_check_branch
          %178 = sbr.rel (%p176) target = $region32
        $region31: #{net_forward.3} parent=27 // pred_region
          %s179 = smul.u32 9, %s12
          %p180 = scmp.lt.s32.totalorder %s179, 71
          %s181 = scalar_select %p180, %s179, 71
          %s182 = smul.addr %s181, 2
          %s183 = scalar_lea.vmem %s0, %s182
          %s184 = smul.u32 9, %s12
        $region32: #{net_forward.3} parent=27 // pred_fallthru
          _
        // Predicated region
        $region33: #{net_forward.3} parent=27 // pred_check
          %p185 = pneg %p58
        $region34: #{net_forward.3} parent=27 // pred_check_branch
          %187 = sbr.rel (%p185) target = $region36
        $region35: #{net_forward.3} parent=27 // pred_region
          %s188 = smul.u32 144, %s12
          %p189 = scmp.lt.s32.totalorder %s188, 1151
          %s190 = scalar_select %p189, %s188, 1151
          %s191 = smul.addr %s190, 8
          %s192 = scalar_lea.vmem %s1, %s191
          %s193 = smul.u32 144, %s12
        $region36: #{net_forward.3} parent=27 // pred_fallthru
          _
      $region28: #{net_forward.3} parent=5 // pred_fallthru
        _
      %p194 = scmp.le.s32.totalorder 1, %s12
      %p195 = scmp.lt.s32.totalorder %s12, 9
      %p196 = pnand %p194, %p195
      %p197 = pneg %p196
      // Predicated region
      $region37: #{net_forward.3} parent=5 // pred_check
        _
      $region38: #{net_forward.3} parent=5 // pred_check_branch
        %199 = sbr.rel (%p196) target = $region40
      $region39: #{net_forward.3} parent=5 // pred_region
        %s200 = ssub.s32 %s12, 1
        %s201 = smul.u32 9, %s17
        %p202 = scmp.lt.s32.totalorder %s201, 71
        %s203 = scalar_select %p202, %s201, 71
        %s204 = smul.addr %s203, 2
        %s205 = scalar_lea.vmem %s0, %s204
        %p206 = pneg %p38
        %p207 = pneg %p35
        %s208 = smul.u32 144, %s17
        %p209 = scmp.lt.s32.totalorder %s208, 1151
        %s210 = scalar_select %p209, %s208, 1151
        %s211 = smul.addr %s210, 8
        %s212 = scalar_lea.vmem %s1, %s211
        %p213 = pneg %p64
        %p214 = pneg %p61
        %p215 = pneg %p85
        %p216 = pneg %p82
        %p217 = pneg %p106
        %p218 = pneg %p103
        %p219 = pneg %p127
        %p220 = pneg %p124
        %p221 = pneg %p148
        %p222 = pneg %p145
        %s223 = smul.u32 9, %s17
        %p224 = scmp.lt.s32.totalorder %s223, 71
        %s225 = scalar_select %p224, %s223, 71
        %s226 = smul.addr %s225, 2
        %s227 = scalar_lea.vmem %s0, %s226
        %s228 = smul.u32 9, %s17
        %s229 = smul.u32 144, %s17
        %p230 = scmp.lt.s32.totalorder %s229, 1151
        %s231 = scalar_select %p230, %s229, 1151
        %s232 = smul.addr %s231, 8
        %s233 = scalar_lea.vmem %s1, %s232
        %s234 = smul.u32 144, %s17
        %p235 = scmp.eq.s32.totalorder %s17, 0
        // Predicated region
        $region41: #{net_forward.3} parent=39 // pred_check
          %p236 = pneg %p235
        $region42: #{net_forward.3} parent=39 // pred_check_branch
          %238 = sbr.rel (%p236) target = $region44
        $region43: #{net_forward.3} parent=39 // pred_region
          %vm239 = vcmask 812032
          %240 = vst.msk [vmem:[#allocation2] sm:$0x3] %vm239, 0.0
        $region44: #{net_forward.3} parent=39 // pred_fallthru
          _
        %v241 = vld [vmem:[#allocation2] sm:$0x3]
        %v242 = vld [vmem:[%s227] sm:$0xff]
        %v243 = vld [vmem:[%s227 + $0x8] sm:$0xff]
        %v244 = vld [vmem:[%s227 + $0x10] sm:$0x3]
        %v245 = vld [vmem:[%s233] sm:$0xff]
        %v246 = vld [vmem:[%s233 + $0x8] sm:$0xff]
        %v247 = vld [vmem:[%s233 + $0x10] sm:$0xff]
        %v248 = vld [vmem:[%s233 + $0x18] sm:$0xff]
        %v249 = vld [vmem:[%s233 + $0x20] sm:$0xff]
        %v250 = vld [vmem:[%s233 + $0x28] sm:$0xff]
        %v251 = vld [vmem:[%s233 + $0x30] sm:$0xff]
        %v252 = vld [vmem:[%s233 + $0x38] sm:$0xff]
        %v253 = vld [vmem:[%s233 + $0x40] sm:$0xff]
        %v254 = vld [vmem:[%s233 + $0x48] sm:$0xff]
        %v255 = vld [vmem:[%s233 + $0x50] sm:$0xff]
        %v256 = vld [vmem:[%s233 + $0x58] sm:$0xff]
        %v257 = vld [vmem:[%s233 + $0x60] sm:$0xff]
        %v258 = vld [vmem:[%s233 + $0x68] sm:$0xff]
        %v259 = vld [vmem:[%s233 + $0x70] sm:$0xff]
        %v260 = vld [vmem:[%s233 + $0x78] sm:$0xff]
        %v261 = vld [vmem:[%s233 + $0x80] sm:$0xff]
        %v262 = vld [vmem:[%s233 + $0x88] sm:$0xff]
        %v263 = vld [vmem:[%s233 + $0x90] sm:$0xff]
        %v264 = vld [vmem:[%s233 + $0x98] sm:$0xff]
        %v265 = vld [vmem:[%s233 + $0xa0] sm:$0xff]
        %v266 = vld [vmem:[%s233 + $0xa8] sm:$0xff]
        %v267 = vld [vmem:[%s233 + $0xb0] sm:$0xff]
        %v268 = vld [vmem:[%s233 + $0xb8] sm:$0xff]
        %v269 = vld [vmem:[%s233 + $0xc0] sm:$0xff]
        %v270 = vld [vmem:[%s233 + $0xc8] sm:$0xff]
        %v271 = vld [vmem:[%s233 + $0xd0] sm:$0xff]
        %v272 = vld [vmem:[%s233 + $0xd8] sm:$0xff]
        %v273 = vld [vmem:[%s233 + $0xe0] sm:$0xff]
        %v274 = vld [vmem:[%s233 + $0xe8] sm:$0xff]
        %v275 = vld [vmem:[%s233 + $0xf0] sm:$0xff]
        %v276 = vld [vmem:[%s233 + $0xf8] sm:$0xff]
        %v277 = vld [vmem:[%s233 + $0x100] sm:$0xff]
        %v278 = vld [vmem:[%s233 + $0x108] sm:$0xff]
        %v279 = vld [vmem:[%s233 + $0x110] sm:$0xff]
        %v280 = vld [vmem:[%s233 + $0x118] sm:$0xff]
        %v281 = vld [vmem:[%s233 + $0x120] sm:$0xff]
        %v282 = vld [vmem:[%s233 + $0x128] sm:$0xff]
        %v283 = vld [vmem:[%s233 + $0x130] sm:$0xff]
        %v284 = vld [vmem:[%s233 + $0x138] sm:$0xff]
        %v285 = vld [vmem:[%s233 + $0x140] sm:$0xff]
        %v286 = vld [vmem:[%s233 + $0x148] sm:$0xff]
        %v287 = vld [vmem:[%s233 + $0x150] sm:$0xff]
        %v288 = vld [vmem:[%s233 + $0x158] sm:$0xff]
        %v289 = vld [vmem:[%s233 + $0x160] sm:$0xff]
        %v290 = vld [vmem:[%s233 + $0x168] sm:$0xff]
        %v291 = vld [vmem:[%s233 + $0x170] sm:$0xff]
        %v292 = vld [vmem:[%s233 + $0x178] sm:$0xff]
        %v293 = vld [vmem:[%s233 + $0x180] sm:$0xff]
        %v294 = vld [vmem:[%s233 + $0x188] sm:$0xff]
        %v295 = vld [vmem:[%s233 + $0x190] sm:$0xff]
        %v296 = vld [vmem:[%s233 + $0x198] sm:$0xff]
        %v297 = vld [vmem:[%s233 + $0x1a0] sm:$0xff]
        %v298 = vld [vmem:[%s233 + $0x1a8] sm:$0xff]
        %v299 = vld [vmem:[%s233 + $0x1b0] sm:$0xff]
        %v300 = vld [vmem:[%s233 + $0x1b8] sm:$0xff]
        %v301 = vld [vmem:[%s233 + $0x1c0] sm:$0xff]
        %v302 = vld [vmem:[%s233 + $0x1c8] sm:$0xff]
        %v303 = vld [vmem:[%s233 + $0x1d0] sm:$0xff]
        %v304 = vld [vmem:[%s233 + $0x1d8] sm:$0xff]
        %v305 = vld [vmem:[%s233 + $0x1e0] sm:$0xff]
        %v306 = vld [vmem:[%s233 + $0x1e8] sm:$0xff]
        %v307 = vld [vmem:[%s233 + $0x1f0] sm:$0xff]
        %v308 = vld [vmem:[%s233 + $0x1f8] sm:$0xff]
        %v309 = vld [vmem:[%s233 + $0x200] sm:$0xff]
        %v310 = vld [vmem:[%s233 + $0x208] sm:$0xff]
        %v311 = vld [vmem:[%s233 + $0x210] sm:$0xff]
        %v312 = vld [vmem:[%s233 + $0x218] sm:$0xff]
        %v313 = vld [vmem:[%s233 + $0x220] sm:$0xff]
        %v314 = vld [vmem:[%s233 + $0x228] sm:$0xff]
        %v315 = vld [vmem:[%s233 + $0x230] sm:$0xff]
        %v316 = vld [vmem:[%s233 + $0x238] sm:$0xff]
        %v317 = vld [vmem:[%s233 + $0x240] sm:$0xff]
        %v318 = vld [vmem:[%s233 + $0x248] sm:$0xff]
        %v319 = vld [vmem:[%s233 + $0x250] sm:$0xff]
        %v320 = vld [vmem:[%s233 + $0x258] sm:$0xff]
        %v321 = vld [vmem:[%s233 + $0x260] sm:$0xff]
        %v322 = vld [vmem:[%s233 + $0x268] sm:$0xff]
        %v323 = vld [vmem:[%s233 + $0x270] sm:$0xff]
        %v324 = vld [vmem:[%s233 + $0x278] sm:$0xff]
        %v325 = vld [vmem:[%s233 + $0x280] sm:$0xff]
        %v326 = vld [vmem:[%s233 + $0x288] sm:$0xff]
        %v327 = vld [vmem:[%s233 + $0x290] sm:$0xff]
        %v328 = vld [vmem:[%s233 + $0x298] sm:$0xff]
        %v329 = vld [vmem:[%s233 + $0x2a0] sm:$0xff]
        %v330 = vld [vmem:[%s233 + $0x2a8] sm:$0xff]
        %v331 = vld [vmem:[%s233 + $0x2b0] sm:$0xff]
        %v332 = vld [vmem:[%s233 + $0x2b8] sm:$0xff]
        %v333 = vld [vmem:[%s233 + $0x2c0] sm:$0xff]
        %v334 = vld [vmem:[%s233 + $0x2c8] sm:$0xff]
        %v335 = vld [vmem:[%s233 + $0x2d0] sm:$0xff]
        %v336 = vld [vmem:[%s233 + $0x2d8] sm:$0xff]
        %v337 = vld [vmem:[%s233 + $0x2e0] sm:$0xff]
        %v338 = vld [vmem:[%s233 + $0x2e8] sm:$0xff]
        %v339 = vld [vmem:[%s233 + $0x2f0] sm:$0xff]
        %v340 = vld [vmem:[%s233 + $0x2f8] sm:$0xff]
        %v341 = vld [vmem:[%s233 + $0x300] sm:$0xff]
        %v342 = vld [vmem:[%s233 + $0x308] sm:$0xff]
        %v343 = vld [vmem:[%s233 + $0x310] sm:$0xff]
        %v344 = vld [vmem:[%s233 + $0x318] sm:$0xff]
        %v345 = vld [vmem:[%s233 + $0x320] sm:$0xff]
        %v346 = vld [vmem:[%s233 + $0x328] sm:$0xff]
        %v347 = vld [vmem:[%s233 + $0x330] sm:$0xff]
        %v348 = vld [vmem:[%s233 + $0x338] sm:$0xff]
        %v349 = vld [vmem:[%s233 + $0x340] sm:$0xff]
        %v350 = vld [vmem:[%s233 + $0x348] sm:$0xff]
        %v351 = vld [vmem:[%s233 + $0x350] sm:$0xff]
        %v352 = vld [vmem:[%s233 + $0x358] sm:$0xff]
        %v353 = vld [vmem:[%s233 + $0x360] sm:$0xff]
        %v354 = vld [vmem:[%s233 + $0x368] sm:$0xff]
        %v355 = vld [vmem:[%s233 + $0x370] sm:$0xff]
        %v356 = vld [vmem:[%s233 + $0x378] sm:$0xff]
        %v357 = vld [vmem:[%s233 + $0x380] sm:$0xff]
        %v358 = vld [vmem:[%s233 + $0x388] sm:$0xff]
        %v359 = vld [vmem:[%s233 + $0x390] sm:$0xff]
        %v360 = vld [vmem:[%s233 + $0x398] sm:$0xff]
        %v361 = vld [vmem:[%s233 + $0x3a0] sm:$0xff]
        %v362 = vld [vmem:[%s233 + $0x3a8] sm:$0xff]
        %v363 = vld [vmem:[%s233 + $0x3b0] sm:$0xff]
        %v364 = vld [vmem:[%s233 + $0x3b8] sm:$0xff]
        %v365 = vld [vmem:[%s233 + $0x3c0] sm:$0xff]
        %v366 = vld [vmem:[%s233 + $0x3c8] sm:$0xff]
        %v367 = vld [vmem:[%s233 + $0x3d0] sm:$0xff]
        %v368 = vld [vmem:[%s233 + $0x3d8] sm:$0xff]
        %v369 = vld [vmem:[%s233 + $0x3e0] sm:$0xff]
        %v370 = vld [vmem:[%s233 + $0x3e8] sm:$0xff]
        %v371 = vld [vmem:[%s233 + $0x3f0] sm:$0xff]
        %v372 = vld [vmem:[%s233 + $0x3f8] sm:$0xff]
        %v373 = vld [vmem:[%s233 + $0x400] sm:$0xff]
        %v374 = vld [vmem:[%s233 + $0x408] sm:$0xff]
        %v375 = vld [vmem:[%s233 + $0x410] sm:$0xff]
        %v376 = vld [vmem:[%s233 + $0x418] sm:$0xff]
        %v377 = vld [vmem:[%s233 + $0x420] sm:$0xff]
        %v378 = vld [vmem:[%s233 + $0x428] sm:$0xff]
        %v379 = vld [vmem:[%s233 + $0x430] sm:$0xff]
        %v380 = vld [vmem:[%s233 + $0x438] sm:$0xff]
        %v381 = vld [vmem:[%s233 + $0x440] sm:$0xff]
        %v382 = vld [vmem:[%s233 + $0x448] sm:$0xff]
        %v383 = vld [vmem:[%s233 + $0x450] sm:$0xff]
        %v384 = vld [vmem:[%s233 + $0x458] sm:$0xff]
        %v385 = vld [vmem:[%s233 + $0x460] sm:$0xff]
        %v386 = vld [vmem:[%s233 + $0x468] sm:$0xff]
        %v387 = vld [vmem:[%s233 + $0x470] sm:$0xff]
        %v388 = vld [vmem:[%s233 + $0x478] sm:$0xff]
        %v392 = vcombine.high %v242, %v242
        %v394 = vunpack.c.l.s4 1983009808
        %v395 = vunpack.c.0.s8 %v394
        %v396 = vlaneseq
        %v397 = vshrl.u32 %v396, 7
        %v398 = vsub.s32 %v395, %v397
        %v399 = vrot.slane %v242, %v398
        %v401 = vunpack.c.l.s4 1983009808
        %v402 = vunpack.c.0.s8 %v401
        %v403 = vlaneseq
        %v404 = vshrl.u32 %v403, 7
        %v405 = vsub.s32 %v402, %v404
        %v406 = vrot.slane %v392, %v405
        %v407 = vcombine.high %v399, %v399
        %v408 = vcombine.high %v406, %v406
        %v409 = vcombine.high %v243, %v243
        %v411 = vunpack.c.l.s4 1983009808
        %v412 = vunpack.c.0.s8 %v411
        %v413 = vlaneseq
        %v414 = vshrl.u32 %v413, 7
        %v415 = vsub.s32 %v412, %v414
        %v416 = vrot.slane %v243, %v415
        %v418 = vunpack.c.l.s4 1983009808
        %v419 = vunpack.c.0.s8 %v418
        %v420 = vlaneseq
        %v421 = vshrl.u32 %v420, 7
        %v422 = vsub.s32 %v419, %v421
        %v423 = vrot.slane %v409, %v422
        %v424 = vcombine.high %v416, %v416
        %v425 = vcombine.high %v423, %v423
        %v427 = vunpack.c.l.s4 1983009808
        %v428 = vunpack.c.0.s8 %v427
        %v429 = vlaneseq
        %v430 = vshrl.u32 %v429, 7
        %v431 = vsub.s32 %v428, %v430
        %v432 = vrot.slane %v244, %v431
        %442 = vmatprep.subr.mxu0 0.0
        %443 = vmatpush1.msra.mxu0 %v245
        %444 = vmatprep.subr.mxu0 0.0
        %445 = vmatpush1.msra.mxu0 %v246
        %446 = vmatprep.subr.mxu0 0.0
        %447 = vmatpush1.msra.mxu0 %v247
        %448 = vmatprep.subr.mxu0 0.0
        %449 = vmatpush1.msra.mxu0 %v248
        %450 = vmatprep.subr.mxu0 0.0
        %451 = vmatpush1.msra.mxu0 %v249
        %452 = vmatprep.subr.mxu0 0.0
        %453 = vmatpush1.msra.mxu0 %v250
        %454 = vmatprep.subr.mxu0 0.0
        %455 = vmatpush1.msra.mxu0 %v251
        %456 = vmatprep.subr.mxu0 0.0
        %457 = vmatpush1.msra.mxu0 %v252
        %458 = vmatprep.subr.mxu0 0.0
        %459 = vmatpush1.msra.mxu0 %v253
        %460 = vmatprep.subr.mxu0 0.0
        %461 = vmatpush1.msra.mxu0 %v254
        %462 = vmatprep.subr.mxu0 0.0
        %463 = vmatpush1.msra.mxu0 %v255
        %464 = vmatprep.subr.mxu0 0.0
        %465 = vmatpush1.msra.mxu0 %v256
        %466 = vmatprep.subr.mxu0 0.0
        %467 = vmatpush1.msra.mxu0 %v257
        %468 = vmatprep.subr.mxu0 0.0
        %469 = vmatpush1.msra.mxu0 %v258
        %470 = vmatprep.subr.mxu0 0.0
        %471 = vmatpush1.msra.mxu0 %v259
        %472 = vmatprep.subr.mxu0 0.0
        %473 = vmatpush1.msra.mxu0 %v260
        %474 = vmatprep.subr.mxu0 0.0
        %475 = vmatpush1.msra.mxu0 %v261
        %476 = vmatprep.subr.mxu0 0.0
        %477 = vmatpush1.msra.mxu0 %v262
        %478 = vmatprep.subr.mxu0 0.0
        %479 = vmatpush1.msra.mxu0 %v263
        %480 = vmatprep.subr.mxu0 0.0
        %481 = vmatpush1.msra.mxu0 %v264
        %482 = vmatprep.subr.mxu0 0.0
        %483 = vmatpush1.msra.mxu0 %v265
        %484 = vmatprep.subr.mxu0 0.0
        %485 = vmatpush1.msra.mxu0 %v266
        %486 = vmatprep.subr.mxu0 0.0
        %487 = vmatpush1.msra.mxu0 %v267
        %488 = vmatprep.subr.mxu0 0.0
        %489 = vmatpush1.msra.mxu0 %v268
        %490 = vmatprep.subr.mxu0 0.0
        %491 = vmatpush1.msra.mxu0 %v269
        %492 = vmatprep.subr.mxu0 0.0
        %493 = vmatpush1.msra.mxu0 %v270
        %494 = vmatprep.subr.mxu0 0.0
        %495 = vmatpush1.msra.mxu0 %v271
        %496 = vmatprep.subr.mxu0 0.0
        %497 = vmatpush1.msra.mxu0 %v272
        %498 = vmatprep.subr.mxu0 0.0
        %499 = vmatpush1.msra.mxu0 %v273
        %500 = vmatprep.subr.mxu0 0.0
        %501 = vmatpush1.msra.mxu0 %v274
        %502 = vmatprep.subr.mxu0 0.0
        %503 = vmatpush1.msra.mxu0 %v275
        %504 = vmatprep.subr.mxu0 0.0
        %505 = vmatpush1.msra.mxu0 %v276
        %506 = vmatprep.mubr.f32.mxu0 %v407
        %507 = vmatmul.mubr.f32.gmra.mrb[0].mxu0 %v399
        %v508 = vpop.f32.mrb[0].mxu0
        %v509 = vadd.f32 0.0, %v508
        %v510 = vpop.f32.mrb[0].mxu0
        %511 = vdwg.mxu0
        %512 = vmatprep.subr.mxu0 0.0
        %513 = vmatpush1.msra.mxu0 %v277
        %514 = vmatprep.subr.mxu0 0.0
        %515 = vmatpush1.msra.mxu0 %v278
        %516 = vmatprep.subr.mxu0 0.0
        %517 = vmatpush1.msra.mxu0 %v279
        %518 = vmatprep.subr.mxu0 0.0
        %519 = vmatpush1.msra.mxu0 %v280
        %520 = vmatprep.subr.mxu0 0.0
        %521 = vmatpush1.msra.mxu0 %v281
        %522 = vmatprep.subr.mxu0 0.0
        %523 = vmatpush1.msra.mxu0 %v282
        %524 = vmatprep.subr.mxu0 0.0
        %525 = vmatpush1.msra.mxu0 %v283
        %526 = vmatprep.subr.mxu0 0.0
        %527 = vmatpush1.msra.mxu0 %v284
        %528 = vmatprep.subr.mxu0 0.0
        %529 = vmatpush1.msra.mxu0 %v285
        %530 = vmatprep.subr.mxu0 0.0
        %531 = vmatpush1.msra.mxu0 %v286
        %532 = vmatprep.subr.mxu0 0.0
        %533 = vmatpush1.msra.mxu0 %v287
        %534 = vmatprep.subr.mxu0 0.0
        %535 = vmatpush1.msra.mxu0 %v288
        %536 = vmatprep.subr.mxu0 0.0
        %537 = vmatpush1.msra.mxu0 %v289
        %538 = vmatprep.subr.mxu0 0.0
        %539 = vmatpush1.msra.mxu0 %v290
        %540 = vmatprep.subr.mxu0 0.0
        %541 = vmatpush1.msra.mxu0 %v291
        %542 = vmatprep.subr.mxu0 0.0
        %543 = vmatpush1.msra.mxu0 %v292
        %544 = vmatprep.subr.mxu0 0.0
        %545 = vmatpush1.msra.mxu0 %v293
        %546 = vmatprep.subr.mxu0 0.0
        %547 = vmatpush1.msra.mxu0 %v294
        %548 = vmatprep.subr.mxu0 0.0
        %549 = vmatpush1.msra.mxu0 %v295
        %550 = vmatprep.subr.mxu0 0.0
        %551 = vmatpush1.msra.mxu0 %v296
        %552 = vmatprep.subr.mxu0 0.0
        %553 = vmatpush1.msra.mxu0 %v297
        %554 = vmatprep.subr.mxu0 0.0
        %555 = vmatpush1.msra.mxu0 %v298
        %556 = vmatprep.subr.mxu0 0.0
        %557 = vmatpush1.msra.mxu0 %v299
        %558 = vmatprep.subr.mxu0 0.0
        %559 = vmatpush1.msra.mxu0 %v300
        %560 = vmatprep.subr.mxu0 0.0
        %561 = vmatpush1.msra.mxu0 %v301
        %562 = vmatprep.subr.mxu0 0.0
        %563 = vmatpush1.msra.mxu0 %v302
        %564 = vmatprep.subr.mxu0 0.0
        %565 = vmatpush1.msra.mxu0 %v303
        %566 = vmatprep.subr.mxu0 0.0
        %567 = vmatpush1.msra.mxu0 %v304
        %568 = vmatprep.subr.mxu0 0.0
        %569 = vmatpush1.msra.mxu0 %v305
        %570 = vmatprep.subr.mxu0 0.0
        %571 = vmatpush1.msra.mxu0 %v306
        %572 = vmatprep.subr.mxu0 0.0
        %573 = vmatpush1.msra.mxu0 %v307
        %574 = vmatprep.subr.mxu0 0.0
        %575 = vmatpush1.msra.mxu0 %v308
        %576 = vmatprep.mubr.f32.mxu0 %v408
        %577 = vmatmul.mubr.f32.gmra.mrb[0].mxu0 %v406
        %v578 = vpop.f32.mrb[0].mxu0
        %v579 = vadd.f32 %v509, %v578
        %v580 = vpop.f32.mrb[0].mxu0
        %581 = vdwg.mxu0
        %582 = vmatprep.subr.mxu0 0.0
        %583 = vmatpush1.msra.mxu0 %v309
        %584 = vmatprep.subr.mxu0 0.0
        %585 = vmatpush1.msra.mxu0 %v310
        %586 = vmatprep.subr.mxu0 0.0
        %587 = vmatpush1.msra.mxu0 %v311
        %588 = vmatprep.subr.mxu0 0.0
        %589 = vmatpush1.msra.mxu0 %v312
        %590 = vmatprep.subr.mxu0 0.0
        %591 = vmatpush1.msra.mxu0 %v313
        %592 = vmatprep.subr.mxu0 0.0
        %593 = vmatpush1.msra.mxu0 %v314
        %594 = vmatprep.subr.mxu0 0.0
        %595 = vmatpush1.msra.mxu0 %v315
        %596 = vmatprep.subr.mxu0 0.0
        %597 = vmatpush1.msra.mxu0 %v316
        %598 = vmatprep.subr.mxu0 0.0
        %599 = vmatpush1.msra.mxu0 %v317
        %600 = vmatprep.subr.mxu0 0.0
        %601 = vmatpush1.msra.mxu0 %v318
        %602 = vmatprep.subr.mxu0 0.0
        %603 = vmatpush1.msra.mxu0 %v319
        %604 = vmatprep.subr.mxu0 0.0
        %605 = vmatpush1.msra.mxu0 %v320
        %606 = vmatprep.subr.mxu0 0.0
        %607 = vmatpush1.msra.mxu0 %v321
        %608 = vmatprep.subr.mxu0 0.0
        %609 = vmatpush1.msra.mxu0 %v322
        %610 = vmatprep.subr.mxu0 0.0
        %611 = vmatpush1.msra.mxu0 %v323
        %612 = vmatprep.subr.mxu0 0.0
        %613 = vmatpush1.msra.mxu0 %v324
        %614 = vmatprep.subr.mxu0 0.0
        %615 = vmatpush1.msra.mxu0 %v325
        %616 = vmatprep.subr.mxu0 0.0
        %617 = vmatpush1.msra.mxu0 %v326
        %618 = vmatprep.subr.mxu0 0.0
        %619 = vmatpush1.msra.mxu0 %v327
        %620 = vmatprep.subr.mxu0 0.0
        %621 = vmatpush1.msra.mxu0 %v328
        %622 = vmatprep.subr.mxu0 0.0
        %623 = vmatpush1.msra.mxu0 %v329
        %624 = vmatprep.subr.mxu0 0.0
        %625 = vmatpush1.msra.mxu0 %v330
        %626 = vmatprep.subr.mxu0 0.0
        %627 = vmatpush1.msra.mxu0 %v331
        %628 = vmatprep.subr.mxu0 0.0
        %629 = vmatpush1.msra.mxu0 %v332
        %630 = vmatprep.subr.mxu0 0.0
        %631 = vmatpush1.msra.mxu0 %v333
        %632 = vmatprep.subr.mxu0 0.0
        %633 = vmatpush1.msra.mxu0 %v334
        %634 = vmatprep.subr.mxu0 0.0
        %635 = vmatpush1.msra.mxu0 %v335
        %636 = vmatprep.subr.mxu0 0.0
        %637 = vmatpush1.msra.mxu0 %v336
        %638 = vmatprep.subr.mxu0 0.0
        %639 = vmatpush1.msra.mxu0 %v337
        %640 = vmatprep.subr.mxu0 0.0
        %641 = vmatpush1.msra.mxu0 %v338
        %642 = vmatprep.subr.mxu0 0.0
        %643 = vmatpush1.msra.mxu0 %v339
        %644 = vmatprep.subr.mxu0 0.0
        %645 = vmatpush1.msra.mxu0 %v340
        %646 = vmatprep.mubr.f32.mxu0 %v424
        %647 = vmatmul.mubr.f32.gmra.mrb[0].mxu0 %v416
        %v648 = vpop.f32.mrb[0].mxu0
        %v649 = vadd.f32 %v579, %v648
        %v650 = vpop.f32.mrb[0].mxu0
        %651 = vdwg.mxu0
        %652 = vmatprep.subr.mxu0 0.0
        %653 = vmatpush1.msra.mxu0 %v341
        %654 = vmatprep.subr.mxu0 0.0
        %655 = vmatpush1.msra.mxu0 %v342
        %656 = vmatprep.subr.mxu0 0.0
        %657 = vmatpush1.msra.mxu0 %v343
        %658 = vmatprep.subr.mxu0 0.0
        %659 = vmatpush1.msra.mxu0 %v344
        %660 = vmatprep.subr.mxu0 0.0
        %661 = vmatpush1.msra.mxu0 %v345
        %662 = vmatprep.subr.mxu0 0.0
        %663 = vmatpush1.msra.mxu0 %v346
        %664 = vmatprep.subr.mxu0 0.0
        %665 = vmatpush1.msra.mxu0 %v347
        %666 = vmatprep.subr.mxu0 0.0
        %667 = vmatpush1.msra.mxu0 %v348
        %668 = vmatprep.subr.mxu0 0.0
        %669 = vmatpush1.msra.mxu0 %v349
        %670 = vmatprep.subr.mxu0 0.0
        %671 = vmatpush1.msra.mxu0 %v350
        %672 = vmatprep.subr.mxu0 0.0
        %673 = vmatpush1.msra.mxu0 %v351
        %674 = vmatprep.subr.mxu0 0.0
        %675 = vmatpush1.msra.mxu0 %v352
        %676 = vmatprep.subr.mxu0 0.0
        %677 = vmatpush1.msra.mxu0 %v353
        %678 = vmatprep.subr.mxu0 0.0
        %679 = vmatpush1.msra.mxu0 %v354
        %680 = vmatprep.subr.mxu0 0.0
        %681 = vmatpush1.msra.mxu0 %v355
        %682 = vmatprep.subr.mxu0 0.0
        %683 = vmatpush1.msra.mxu0 %v356
        %684 = vmatprep.subr.mxu0 0.0
        %685 = vmatpush1.msra.mxu0 %v357
        %686 = vmatprep.subr.mxu0 0.0
        %687 = vmatpush1.msra.mxu0 %v358
        %688 = vmatprep.subr.mxu0 0.0
        %689 = vmatpush1.msra.mxu0 %v359
        %690 = vmatprep.subr.mxu0 0.0
        %691 = vmatpush1.msra.mxu0 %v360
        %692 = vmatprep.subr.mxu0 0.0
        %693 = vmatpush1.msra.mxu0 %v361
        %694 = vmatprep.subr.mxu0 0.0
        %695 = vmatpush1.msra.mxu0 %v362
        %696 = vmatprep.subr.mxu0 0.0
        %697 = vmatpush1.msra.mxu0 %v363
        %698 = vmatprep.subr.mxu0 0.0
        %699 = vmatpush1.msra.mxu0 %v364
        %700 = vmatprep.subr.mxu0 0.0
        %701 = vmatpush1.msra.mxu0 %v365
        %702 = vmatprep.subr.mxu0 0.0
        %703 = vmatpush1.msra.mxu0 %v366
        %704 = vmatprep.subr.mxu0 0.0
        %705 = vmatpush1.msra.mxu0 %v367
        %706 = vmatprep.subr.mxu0 0.0
        %707 = vmatpush1.msra.mxu0 %v368
        %708 = vmatprep.subr.mxu0 0.0
        %709 = vmatpush1.msra.mxu0 %v369
        %710 = vmatprep.subr.mxu0 0.0
        %711 = vmatpush1.msra.mxu0 %v370
        %712 = vmatprep.subr.mxu0 0.0
        %713 = vmatpush1.msra.mxu0 %v371
        %714 = vmatprep.subr.mxu0 0.0
        %715 = vmatpush1.msra.mxu0 %v372
        %716 = vmatprep.mubr.f32.mxu0 %v425
        %717 = vmatmul.mubr.f32.gmra.mrb[0].mxu0 %v423
        %v718 = vpop.f32.mrb[0].mxu0
        %v719 = vadd.f32 %v649, %v718
        %v720 = vpop.f32.mrb[0].mxu0
        %721 = vdwg.mxu0
        %722 = vmatprep.subr.mxu0 0.0
        %723 = vmatpush1.msra.mxu0 %v373
        %724 = vmatprep.subr.mxu0 0.0
        %725 = vmatpush1.msra.mxu0 %v374
        %726 = vmatprep.subr.mxu0 0.0
        %727 = vmatpush1.msra.mxu0 %v375
        %728 = vmatprep.subr.mxu0 0.0
        %729 = vmatpush1.msra.mxu0 %v376
        %730 = vmatprep.subr.mxu0 0.0
        %731 = vmatpush1.msra.mxu0 %v377
        %732 = vmatprep.subr.mxu0 0.0
        %733 = vmatpush1.msra.mxu0 %v378
        %734 = vmatprep.subr.mxu0 0.0
        %735 = vmatpush1.msra.mxu0 %v379
        %736 = vmatprep.subr.mxu0 0.0
        %737 = vmatpush1.msra.mxu0 %v380
        %738 = vmatprep.subr.mxu0 0.0
        %739 = vmatpush1.msra.mxu0 %v381
        %740 = vmatprep.subr.mxu0 0.0
        %741 = vmatpush1.msra.mxu0 %v382
        %742 = vmatprep.subr.mxu0 0.0
        %743 = vmatpush1.msra.mxu0 %v383
        %744 = vmatprep.subr.mxu0 0.0
        %745 = vmatpush1.msra.mxu0 %v384
        %746 = vmatprep.subr.mxu0 0.0
        %747 = vmatpush1.msra.mxu0 %v385
        %748 = vmatprep.subr.mxu0 0.0
        %749 = vmatpush1.msra.mxu0 %v386
        %750 = vmatprep.subr.mxu0 0.0
        %751 = vmatpush1.msra.mxu0 %v387
        %752 = vmatprep.subr.mxu0 0.0
        %753 = vmatpush1.msra.mxu0 %v388
        %754 = vmatprep.subr.mxu0 0.0
        %755 = vmatpush1.msra.mxu0 0.0
        %756 = vmatprep.subr.mxu0 0.0
        %757 = vmatpush1.msra.mxu0 0.0
        %758 = vmatprep.subr.mxu0 0.0
        %759 = vmatpush1.msra.mxu0 0.0
        %760 = vmatprep.subr.mxu0 0.0
        %761 = vmatpush1.msra.mxu0 0.0
        %762 = vmatprep.subr.mxu0 0.0
        %763 = vmatpush1.msra.mxu0 0.0
        %764 = vmatprep.subr.mxu0 0.0
        %765 = vmatpush1.msra.mxu0 0.0
        %766 = vmatprep.subr.mxu0 0.0
        %767 = vmatpush1.msra.mxu0 0.0
        %768 = vmatprep.subr.mxu0 0.0
        %769 = vmatpush1.msra.mxu0 0.0
        %770 = vmatprep.subr.mxu0 0.0
        %771 = vmatpush1.msra.mxu0 0.0
        %772 = vmatprep.subr.mxu0 0.0
        %773 = vmatpush1.msra.mxu0 0.0
        %774 = vmatprep.subr.mxu0 0.0
        %775 = vmatpush1.msra.mxu0 0.0
        %776 = vmatprep.subr.mxu0 0.0
        %777 = vmatpush1.msra.mxu0 0.0
        %778 = vmatprep.subr.mxu0 0.0
        %779 = vmatpush1.msra.mxu0 0.0
        %780 = vmatprep.subr.mxu0 0.0
        %781 = vmatpush1.msra.mxu0 0.0
        %782 = vmatprep.subr.mxu0 0.0
        %783 = vmatpush1.msra.mxu0 0.0
        %784 = vmatprep.subr.mxu0 0.0
        %785 = vmatpush1.msra.mxu0 0.0
        %786 = vmatprep.mubr.f32.mxu0 0.0
        %787 = vmatmul.mubr.f32.gmra.mrb[0].mxu0 %v432
        %v788 = vpop.f32.mrb[0].mxu0
        %v789 = vadd.f32 %v719, %v788
        %v790 = vpop.f32.mrb[0].mxu0
        %791 = vdwg.mxu0
        %v792 = vadd.f32 %v241, %v789
        %vm793 = vcmask 812032
        %794 = vst.msk [vmem:[#allocation2] sm:$0x3] %vm793, %v792
        %p795 = scmp.eq.s32.totalorder %s17, 7
        // Predicated region
        $region45: #{net_forward.3} parent=39 // pred_check
          %p796 = pneg %p795
        $region46: #{net_forward.3} parent=39 // pred_check_branch
          %798 = sbr.rel (%p796) target = $region48
        $region47: #{net_forward.3} parent=39 // pred_region
          %v799 = vld [vmem:[#allocation2] sm:$0x3]
          %v800 = vld [vmem:[%s2] sm:$0x1]
          %v802 = vlaneseq
          %v803 = vshrl.u32 %v802, 7
          %v804 = vsub.s32 0, %v803
          %v805 = vrot.slane %v800, %v804
          %v807 = vadd.f32 %v799, %v805
          %v808 = vmax.f32 %v807, 0.0
          %v809 = vld [vmem:[%s3] sm:$0xff]
          %v810 = vld [vmem:[%s3 + $0x8] sm:$0xff]
          %v811 = vld [vmem:[%s3 + $0x10] sm:$0xff]
          %v812 = vld [vmem:[%s3 + $0x18] sm:$0xff]
          %v813 = vld [vmem:[%s3 + $0x20] sm:$0xff]
          %v814 = vld [vmem:[%s3 + $0x28] sm:$0xff]
          %v815 = vld [vmem:[%s3 + $0x30] sm:$0xff]
          %v816 = vld [vmem:[%s3 + $0x38] sm:$0xff]
          %v817 = vld [vmem:[%s3 + $0x40] sm:$0xff]
          %v818 = vld [vmem:[%s3 + $0x48] sm:$0xff]
          %v819 = vld [vmem:[%s3 + $0x50] sm:$0xff]
          %v820 = vld [vmem:[%s3 + $0x58] sm:$0xff]
          %v821 = vld [vmem:[%s3 + $0x60] sm:$0xf]
          %v822 = vld [vmem:[%s4] sm:$0x1]
          %v824 = vlaneseq
          %v825 = vshrl.u32 %v824, 7
          %v826 = vsub.s32 0, %v825
          %v827 = vrot.slane %v822, %v826
          %vm829 = vcmask 818176
          %v831 = vsel %vm829, %v808, 0
          %vm833 = vcmask 1043456
          %v835 = vsel %vm833, %v821, 0
          %837 = vmatprep.subr.mxu0 0.0
          %838 = vmatpush1.msra.mxu0 %v809
          %839 = vmatprep.subr.mxu0 0.0
          %840 = vmatpush1.msra.mxu0 %v810
          %841 = vmatprep.subr.mxu0 0.0
          %842 = vmatpush1.msra.mxu0 %v811
          %843 = vmatprep.subr.mxu0 0.0
          %844 = vmatpush1.msra.mxu0 %v812
          %845 = vmatprep.subr.mxu0 0.0
          %846 = vmatpush1.msra.mxu0 %v813
          %847 = vmatprep.subr.mxu0 0.0
          %848 = vmatpush1.msra.mxu0 %v814
          %849 = vmatprep.subr.mxu0 0.0
          %850 = vmatpush1.msra.mxu0 %v815
          %851 = vmatprep.subr.mxu0 0.0
          %852 = vmatpush1.msra.mxu0 %v816
          %853 = vmatprep.subr.mxu0 0.0
          %854 = vmatpush1.msra.mxu0 %v817
          %855 = vmatprep.subr.mxu0 0.0
          %856 = vmatpush1.msra.mxu0 %v818
          %857 = vmatprep.subr.mxu0 0.0
          %858 = vmatpush1.msra.mxu0 %v819
          %859 = vmatprep.subr.mxu0 0.0
          %860 = vmatpush1.msra.mxu0 %v820
          %861 = vmatprep.subr.mxu0 0.0
          %862 = vmatpush1.msra.mxu0 %v835
          %863 = vmatprep.subr.mxu0 0.0
          %864 = vmatpush1.msra.mxu0 0.0
          %865 = vmatprep.subr.mxu0 0.0
          %866 = vmatpush1.msra.mxu0 0.0
          %867 = vmatprep.subr.mxu0 0.0
          %868 = vmatpush1.msra.mxu0 0.0
          %869 = vmatprep.subr.mxu0 0.0
          %870 = vmatpush1.msra.mxu0 0.0
          %871 = vmatprep.subr.mxu0 0.0
          %872 = vmatpush1.msra.mxu0 0.0
          %873 = vmatprep.subr.mxu0 0.0
          %874 = vmatpush1.msra.mxu0 0.0
          %875 = vmatprep.subr.mxu0 0.0
          %876 = vmatpush1.msra.mxu0 0.0
          %877 = vmatprep.subr.mxu0 0.0
          %878 = vmatpush1.msra.mxu0 0.0
          %879 = vmatprep.subr.mxu0 0.0
          %880 = vmatpush1.msra.mxu0 0.0
          %881 = vmatprep.subr.mxu0 0.0
          %882 = vmatpush1.msra.mxu0 0.0
          %883 = vmatprep.subr.mxu0 0.0
          %884 = vmatpush1.msra.mxu0 0.0
          %885 = vmatprep.subr.mxu0 0.0
          %886 = vmatpush1.msra.mxu0 0.0
          %887 = vmatprep.subr.mxu0 0.0
          %888 = vmatpush1.msra.mxu0 0.0
          %889 = vmatprep.subr.mxu0 0.0
          %890 = vmatpush1.msra.mxu0 0.0
          %891 = vmatprep.subr.mxu0 0.0
          %892 = vmatpush1.msra.mxu0 0.0
          %893 = vmatprep.subr.mxu0 0.0
          %894 = vmatpush1.msra.mxu0 0.0
          %895 = vmatprep.subr.mxu0 0.0
          %896 = vmatpush1.msra.mxu0 0.0
          %897 = vmatprep.subr.mxu0 0.0
          %898 = vmatpush1.msra.mxu0 0.0
          %899 = vmatprep.subr.mxu0 0.0
          %900 = vmatpush1.msra.mxu0 0.0
          %901 = vmatprep.mubr.f32.mxu0 0.0
          %902 = vmatmul.mubr.f32.gmra.mrb[0].mxu0 %v831
          %v903 = vpop.f32.mrb[0].mxu0
          %v904 = vadd.f32 %v827, %v903
          %v905 = vpop.f32.mrb[0].mxu0
          %906 = vdwg.mxu0
          %vm907 = vcmask 74752
          %v908 = vsel %vm907, %v904, -inf
          %909 = vmax.xlane.f32.xlu0 %v908
          %v910 = vpop.xlane.xlu0 %909
          %v911 = vsub.f32 %v904, %v910
          %v912 = vmul.f32 %v911, 1.442695
          %v913 = vpow.pop %v912
          %v914 = vsel %vm907, %v913, 0.0
          %915 = vadd.xlane.f32.xlu0 %v914
          %v916 = vpop.xlane.xlu0 %915
          %v917 = vlog2.pop %v916
          %v918 = vmul.f32 %v917, 0.6931472
          %v919 = vsub.f32 %v911, %v918
          %920 = vst.msk [vmem:[#allocation3] sm:$0x3] %vm907, %v919
        $region48: #{net_forward.3} parent=39 // pred_fallthru
          _
        // Predicated region
        $region49: #{net_forward.3} parent=39 // pred_check
          %p921 = pneg %p145
        $region50: #{net_forward.3} parent=39 // pred_check_branch
          %923 = sbr.rel (%p921) target = $region52
        $region51: #{net_forward.3} parent=39 // pred_region
          %s925 = ssub.s32 32, 32
          %926 = vsyncadd [#allocation4], %s925
          %s928 = sshll.u32 [#allocation3], 4
          %s929 = int_to_ptr.vmem [resolvable:$true] %s928
          %931 = dma.vmem_to_hbm [thread:$0]  %s929, 32, %s5, [#allocation4]
        $region52: #{net_forward.3} parent=39 // pred_fallthru
          _
        // Predicated region
        $region53: #{net_forward.3} parent=39 // pred_check
          %p932 = pneg %p145
        $region54: #{net_forward.3} parent=39 // pred_check_branch
          %934 = sbr.rel (%p932) target = $region56
        $region55: #{net_forward.3} parent=39 // pred_region
          %935 = dma.done [#allocation4], 32
        $region56: #{net_forward.3} parent=39 // pred_fallthru
          _
      $region40: #{net_forward.3} parent=5 // pred_fallthru
        _
      %p936 = scmp.le.s32.totalorder 2, %s12
      // Predicated region
      $region57: #{net_forward.3} parent=5 // pred_check
        %p937 = pneg %p936
      $region58: #{net_forward.3} parent=5 // pred_check_branch
        %939 = sbr.rel (%p937) target = $region60
      $region59: #{net_forward.3} parent=5 // pred_region
        %s940 = ssub.s32 %s12, 2
      $region60: #{net_forward.3} parent=5 // pred_fallthru
        _
    $region6: #{net_forward.3} parent=1 // loop_footer
      %s16 = sadd.s32 1, %s12
    $region7: #{net_forward.3} parent=1 // loop_footer_branch
      %11 = sbr.rel target = $region3
    $region8: #{net_forward.3} parent=1 // loop_exit
      _
    %941 = vsyncpa [#allocation4], 1
    %s942 = scalar_lea.sflag [#allocation4], 1
    %943 = vsyncpa %s942, 1

// kernel: net_forward.2
$region0: #{net_forward.2}
  #allocation0 [shape = 'u32[]', space=smem, size = 0x4, offset = 0x4, fixed_abs, tag = 'smem constant byte address 0x4 - core index']
  #allocation1 [shape = 'u32[144,128]{1,0:T(1,128)}', space=vmem, size = 0x12000, scoped, tag = 'internal scratch']
  #allocation2 [shape = 'f32[595,64]{1,0:T(8,128)}', space=vmem, size = 0x4b000, scoped, tag = 'scratch operand']
  %s0 = inlined_call_operand.vmem [shape: f32[2,676,9], index: 0, kind: input, shape index: {}]
  %s1 = inlined_call_operand.hbm [shape: f32[9,32], index: 1, kind: input, shape index: {}]
  %s2 = inlined_call_operand.hbm [shape: f32[1,32], index: 2, kind: input, shape index: {}]
  %s3 = inlined_call_operand.hbm [shape: f32[9,32,64], index: 3, kind: input, shape index: {}]
  %s4 = inlined_call_operand.hbm [shape: f32[1,64], index: 4, kind: input, shape index: {}]
  %s5 = inlined_call_operand.vmem [shape: f32[2,144,64], index: 5, kind: output, shape index: {}]
  %s6 = sld [smem:[#allocation0]]
  $region69: #{net_forward.2} parent=0
    _
  %s8 = ssub.s32 1, %s6
  %s9 = scalar_select 0, %s8, %s6
  $region1: #{net_forward.2} parent=0
    #allocation3 [shape = 'u8[8192]{0}', space=vmem, size = 0x2000, scoped, tag = 'input window, operand 1, single buffered']
    #allocation4 [shape = 's32[2]{0}', space=sflag, size = 0x8, scoped, tag = 'scoped memory for net_forward.2']
    #allocation5 [shape = 'u8[512]{0}', space=vmem, size = 0x400, scoped, tag = 'input window, operand 2, single buffered']
    #allocation6 [shape = 's32[1]{0}', space=sflag, size = 0x4, scoped, tag = 'scoped memory for net_forward.2']
    #allocation7 [shape = 'u8[147456]{0}', space=vmem, size = 0x24000, scoped, tag = 'input window, operand 3, single buffered']
    #allocation8 [shape = 'u8[512]{0}', space=vmem, size = 0x400, scoped, tag = 'input window, operand 4, single buffered']
    #allocation9 [shape = 's32[1]{0}', space=sflag, size = 0x4, scoped, tag = 'scoped memory for net_forward.2']
    %10 = vsyncpa [#allocation4], 0
    %11 = vsyncpa [#allocation6], 0
    %12 = vsyncpa [#allocation9], 0
    loop: start=0, step=1, limit=4
    $region2: #{net_forward.2} parent=1 // loop_pre_header
      _
    $region3: #{net_forward.2} parent=1 // loop_header
      %s14 = sphi 0, %s18
      %p15 = scmp.ge.s32.totalorder %s14, 4
      %s24 = sphi 0, %s26
      %s27 = sphi 0, %s24
      %s28 = sphi 0, %s27
      %s44 = sphi 0, %s28
      %s48 = sphi 0, %s48
      %s50 = sphi 0, %s48
      %s51 = sphi 0, %s50
      %s65 = sphi 0, %s51
      %s69 = sphi 0, %s69
      %s71 = sphi 0, %s69
      %s72 = sphi 0, %s71
      %s86 = sphi 0, %s72
      %s90 = sphi 0, %s90
      %s92 = sphi 0, %s90
      %s93 = sphi 0, %s92
      %s107 = sphi 0, %s93
      %s111 = sphi 0, %s111
      %s113 = sphi 0, %s111
      %s114 = sphi 0, %s113
      %s128 = sphi 0, %s114
      %s134 = sphi 0, %s136
      %s137 = sphi 0, %s134
      %s138 = sphi 0, %s137
      %s154 = sphi 0, %s138
    $region4: #{net_forward.2} parent=1 // loop_header_branch
      %17 = sbr.rel (%p15) target = $region8
    $region5: #{net_forward.2} parent=1 // loop_body
      %s19 = ssub.s32 %s14, 1
      %s20 = ssub.s32 %s14, 2
      %s21 = sadd.s32 %s14, 1
      %s22 = ssub.s32 %s14, %s21
      %p23 = scmp.eq.s32.totalorder %s22, 0
      %s25 = sadd.s32 %s24, 1
      %s26 = scalar_select %p23, %s24, %s25
      %p29 = pneg %p23
      %p30 = scmp.eq.s32.totalorder %s14, 1
      %p31 = por %p29, %p30
      %p32 = scmp.ne.s32.totalorder %s24, %s27
      %p33 = scmp.eq.s32.totalorder %s14, 0
      %p34 = por %p32, %p33
      %p35 = scmp.ne.s32.totalorder %s24, %s27
      %p36 = scmp.eq.s32.totalorder %s19, 1
      %p37 = por %p35, %p36
      %p38 = scmp.ne.s32.totalorder %s27, %s28
      %p39 = scmp.eq.s32.totalorder %s19, 0
      %p40 = por %p38, %p39
      %p41 = scmp.ne.s32.totalorder %s27, %s28
      %p42 = scmp.eq.s32.totalorder %s20, 1
      %p43 = por %p41, %p42
      %p45 = scmp.ne.s32.totalorder %s28, %s44
      %p46 = scmp.eq.s32.totalorder %s20, 0
      %p47 = por %p45, %p46
      %s49 = sadd.s32 %s48, 1
      %p52 = scmp.eq.s32.totalorder %s14, 1
      %p53 = scmp.ne.s32.totalorder %s48, %s50
      %p54 = scmp.eq.s32.totalorder %s14, 0
      %p55 = por %p53, %p54
      %p56 = scmp.ne.s32.totalorder %s48, %s50
      %p57 = scmp.eq.s32.totalorder %s19, 1
      %p58 = por %p56, %p57
      %p59 = scmp.ne.s32.totalorder %s50, %s51
      %p60 = scmp.eq.s32.totalorder %s19, 0
      %p61 = por %p59, %p60
      %p62 = scmp.ne.s32.totalorder %s50, %s51
      %p63 = scmp.eq.s32.totalorder %s20, 1
      %p64 = por %p62, %p63
      %p66 = scmp.ne.s32.totalorder %s51, %s65
      %p67 = scmp.eq.s32.totalorder %s20, 0
      %p68 = por %p66, %p67
      %s70 = sadd.s32 %s69, 1
      %p73 = scmp.eq.s32.totalorder %s14, 1
      %p74 = scmp.ne.s32.totalorder %s69, %s71
      %p75 = scmp.eq.s32.totalorder %s14, 0
      %p76 = por %p74, %p75
      %p77 = scmp.ne.s32.totalorder %s69, %s71
      %p78 = scmp.eq.s32.totalorder %s19, 1
      %p79 = por %p77, %p78
      %p80 = scmp.ne.s32.totalorder %s71, %s72
      %p81 = scmp.eq.s32.totalorder %s19, 0
      %p82 = por %p80, %p81
      %p83 = scmp.ne.s32.totalorder %s71, %s72
      %p84 = scmp.eq.s32.totalorder %s20, 1
      %p85 = por %p83, %p84
      %p87 = scmp.ne.s32.totalorder %s72, %s86
      %p88 = scmp.eq.s32.totalorder %s20, 0
      %p89 = por %p87, %p88
      %s91 = sadd.s32 %s90, 1
      %p94 = scmp.eq.s32.totalorder %s14, 1
      %p95 = scmp.ne.s32.totalorder %s90, %s92
      %p96 = scmp.eq.s32.totalorder %s14, 0
      %p97 = por %p95, %p96
      %p98 = scmp.ne.s32.totalorder %s90, %s92
      %p99 = scmp.eq.s32.totalorder %s19, 1
      %p100 = por %p98, %p99
      %p101 = scmp.ne.s32.totalorder %s92, %s93
      %p102 = scmp.eq.s32.totalorder %s19, 0
      %p103 = por %p101, %p102
      %p104 = scmp.ne.s32.totalorder %s92, %s93
      %p105 = scmp.eq.s32.totalorder %s20, 1
      %p106 = por %p104, %p105
      %p108 = scmp.ne.s32.totalorder %s93, %s107
      %p109 = scmp.eq.s32.totalorder %s20, 0
      %p110 = por %p108, %p109
      %s112 = sadd.s32 %s111, 1
      %p115 = scmp.eq.s32.totalorder %s14, 1
      %p116 = scmp.ne.s32.totalorder %s111, %s113
      %p117 = scmp.eq.s32.totalorder %s14, 0
      %p118 = por %p116, %p117
      %p119 = scmp.ne.s32.totalorder %s111, %s113
      %p120 = scmp.eq.s32.totalorder %s19, 1
      %p121 = por %p119, %p120
      %p122 = scmp.ne.s32.totalorder %s113, %s114
      %p123 = scmp.eq.s32.totalorder %s19, 0
      %p124 = por %p122, %p123
      %p125 = scmp.ne.s32.totalorder %s113, %s114
      %p126 = scmp.eq.s32.totalorder %s20, 1
      %p127 = por %p125, %p126
      %p129 = scmp.ne.s32.totalorder %s114, %s128
      %p130 = scmp.eq.s32.totalorder %s20, 0
      %p131 = por %p129, %p130
      %s132 = ssub.s32 %s14, %s21
      %p133 = scmp.eq.s32.totalorder %s132, 0
      %s135 = sadd.s32 %s134, 1
      %s136 = scalar_select %p133, %s134, %s135
      %p139 = pneg %p133
      %p140 = scmp.eq.s32.totalorder %s14, 1
      %p141 = por %p139, %p140
      %p142 = scmp.ne.s32.totalorder %s134, %s137
      %p143 = scmp.eq.s32.totalorder %s14, 0
      %p144 = por %p142, %p143
      %p145 = scmp.ne.s32.totalorder %s134, %s137
      %p146 = scmp.eq.s32.totalorder %s19, 1
      %p147 = por %p145, %p146
      %p148 = scmp.ne.s32.totalorder %s137, %s138
      %p149 = scmp.eq.s32.totalorder %s19, 0
      %p150 = por %p148, %p149
      %p151 = scmp.ne.s32.totalorder %s137, %s138
      %p152 = scmp.eq.s32.totalorder %s20, 1
      %p153 = por %p151, %p152
      %p155 = scmp.ne.s32.totalorder %s138, %s154
      %p156 = scmp.eq.s32.totalorder %s20, 0
      %p157 = por %p155, %p156
      %p158 = scmp.le.s32.totalorder 1, %s14
      %p159 = scmp.lt.s32.totalorder %s14, 3
      %p160 = pnand %p158, %p159
      %p161 = pneg %p160
      // Predicated region
      $region9: #{net_forward.2} parent=5 // pred_check
        _
      $region10: #{net_forward.2} parent=5 // pred_check_branch
        %163 = sbr.rel (%p160) target = $region12
      $region11: #{net_forward.2} parent=5 // pred_region
        %s164 = ssub.s32 %s14, 1
        // Predicated region
        $region13: #{net_forward.2} parent=11 // pred_check
          %p165 = pneg %p61
        $region14: #{net_forward.2} parent=11 // pred_check_branch
          %167 = sbr.rel (%p165) target = $region16
        $region15: #{net_forward.2} parent=11 // pred_region
          %s169 = ssub.s32 256, 256
          %170 = vsyncadd [#allocation4], %s169
          %s171 = sshll.u32 [#allocation3], 4
          %s172 = int_to_ptr.vmem [resolvable:$true] %s171
          %177 = dma.hbm_to_vmem [thread:$0]  %s1, 256, %s172, [#allocation4], 128, 128, 8
        $region16: #{net_forward.2} parent=11 // pred_fallthru
          _
        // Predicated region
        $region17: #{net_forward.2} parent=11 // pred_check
          %p178 = pneg %p82
        $region18: #{net_forward.2} parent=11 // pred_check_branch
          %180 = sbr.rel (%p178) target = $region20
        $region19: #{net_forward.2} parent=11 // pred_region
          %s182 = ssub.s32 16, 16
          %183 = vsyncadd [#allocation6], %s182
          %s185 = sshll.u32 [#allocation5], 4
          %s186 = int_to_ptr.vmem [resolvable:$true] %s185
          %188 = dma.hbm_to_vmem [thread:$0]  %s2, 16, %s186, [#allocation6]
        $region20: #{net_forward.2} parent=11 // pred_fallthru
          _
        // Predicated region
        $region21: #{net_forward.2} parent=11 // pred_check
          %p189 = pneg %p103
        $region22: #{net_forward.2} parent=11 // pred_check_branch
          %191 = sbr.rel (%p189) target = $region24
        $region23: #{net_forward.2} parent=11 // pred_region
          %s193 = ssub.s32 4608, 4608
          %194 = vsyncadd [#allocation6], %s193
          %s195 = sshll.u32 [#allocation7], 4
          %s196 = int_to_ptr.vmem [resolvable:$true] %s195
          %201 = dma.hbm_to_vmem [thread:$0]  %s3, 4608, %s196, [#allocation6], 128, 128, 8
        $region24: #{net_forward.2} parent=11 // pred_fallthru
          _
        // Predicated region
        $region25: #{net_forward.2} parent=11 // pred_check
          %p202 = pneg %p124
        $region26: #{net_forward.2} parent=11 // pred_check_branch
          %204 = sbr.rel (%p202) target = $region28
        $region27: #{net_forward.2} parent=11 // pred_region
          %s206 = ssub.s32 16, 16
          %207 = vsyncadd [#allocation9], %s206
          %s209 = sshll.u32 [#allocation8], 4
          %s210 = int_to_ptr.vmem [resolvable:$true] %s209
          %212 = dma.hbm_to_vmem [thread:$0]  %s4, 16, %s210, [#allocation9]
        $region28: #{net_forward.2} parent=11 // pred_fallthru
          _
      $region12: #{net_forward.2} parent=5 // pred_fallthru
        _
      %p213 = scmp.lt.s32.totalorder %s14, 2
      // Predicated region
      $region29: #{net_forward.2} parent=5 // pred_check
        %p214 = pneg %p213
      $region30: #{net_forward.2} parent=5 // pred_check_branch
        %216 = sbr.rel (%p214) target = $region32
      $region31: #{net_forward.2} parent=5 // pred_region
        // Predicated region
        $region33: #{net_forward.2} parent=31 // pred_check
          %p217 = pneg %p34
        $region34: #{net_forward.2} parent=31 // pred_check_branch
          %219 = sbr.rel (%p217) target = $region36
        $region35: #{net_forward.2} parent=31 // pred_region
          %p220 = scmp.lt.s32.totalorder %s14, 1
          %s221 = scalar_select %p220, %s14, 1
          %s222 = smul.addr %s221, 85
          %s223 = smul.addr %s222, 8
          %s224 = scalar_lea.vmem %s0, %s223
        $region36: #{net_forward.2} parent=31 // pred_fallthru
          _
      $region32: #{net_forward.2} parent=5 // pred_fallthru
        _
      %p225 = scmp.le.s32.totalorder 1, %s14
      %p226 = scmp.lt.s32.totalorder %s14, 3
      %p227 = pnand %p225, %p226
      %p228 = pneg %p227
      // Predicated region
      $region37: #{net_forward.2} parent=5 // pred_check
        _
      $region38: #{net_forward.2} parent=5 // pred_check_branch
        %230 = sbr.rel (%p227) target = $region40
      $region39: #{net_forward.2} parent=5 // pred_region
        %s231 = ssub.s32 %s14, 1
        // Predicated region
        $region41: #{net_forward.2} parent=39 // pred_check
          %p232 = pneg %p61
        $region42: #{net_forward.2} parent=39 // pred_check_branch
          %234 = sbr.rel (%p232) target = $region44
        $region43: #{net_forward.2} parent=39 // pred_region
          %235 = dma.done [#allocation4], 256
        $region44: #{net_forward.2} parent=39 // pred_fallthru
          _
        // Predicated region
        $region45: #{net_forward.2} parent=39 // pred_check
          %p236 = pneg %p82
        $region46: #{net_forward.2} parent=39 // pred_check_branch
          %238 = sbr.rel (%p236) target = $region48
        $region47: #{net_forward.2} parent=39 // pred_region
          %239 = dma.done [#allocation6], 16
        $region48: #{net_forward.2} parent=39 // pred_fallthru
          _
        // Predicated region
        $region49: #{net_forward.2} parent=39 // pred_check
          %p240 = pneg %p103
        $region50: #{net_forward.2} parent=39 // pred_check_branch
          %242 = sbr.rel (%p240) target = $region52
        $region51: #{net_forward.2} parent=39 // pred_region
          %243 = dma.done [#allocation6], 4608
        $region52: #{net_forward.2} parent=39 // pred_fallthru
          _
        // Predicated region
        $region53: #{net_forward.2} parent=39 // pred_check
          %p244 = pneg %p124
        $region54: #{net_forward.2} parent=39 // pred_check_branch
          %246 = sbr.rel (%p244) target = $region56
        $region55: #{net_forward.2} parent=39 // pred_region
          %247 = dma.done [#allocation9], 16
        $region56: #{net_forward.2} parent=39 // pred_fallthru
          _
        %p248 = scmp.lt.s32.totalorder %s19, 1
        %s249 = scalar_select %p248, %s19, 1
        %s250 = smul.addr %s249, 85
        %s251 = smul.addr %s250, 8
        %s252 = scalar_lea.vmem %s0, %s251
        %p253 = pneg %p40
        %p254 = pneg %p37
        %p255 = pneg %p61
        %p256 = pneg %p58
        %p257 = pneg %p82
        %p258 = pneg %p79
        %p259 = pneg %p103
        %p260 = pneg %p100
        %p261 = pneg %p124
        %p262 = pneg %p121
        %p263 = pneg %p150
        %p264 = pneg %p147
        %p265 = scmp.lt.s32.totalorder %s19, 1
        %s266 = scalar_select %p265, %s19, 1
        %s267 = smul.addr %s266, 18
        %s268 = smul.addr %s267, 8
        %s269 = scalar_lea.vmem %s5, %s268
        %p270 = scmp.lt.s32.totalorder %s19, 1
        %s271 = scalar_select %p270, %s19, 1
        %s272 = smul.addr %s271, 85
        %s273 = smul.addr %s272, 8
        %s274 = scalar_lea.vmem %s0, %s273
        %p275 = scmp.lt.s32.totalorder %s19, 1
        %s276 = scalar_select %p275, %s19, 1
        %s277 = smul.addr %s276, 18
        %s278 = smul.addr %s277, 8
        %s279 = scalar_lea.vmem %s5, %s278
        %v280 = vld [vmem:[%s274] sm:$0xff]
        %v281 = vld [vmem:[%s274 + $0x8] sm:$0xff]
        %v282 = vld [vmem:[%s274 + $0x10] sm:$0xff]
        %v283 = vld [vmem:[%s274 + $0x18] sm:$0xff]
        %v284 = vld [vmem:[%s274 + $0x20] sm:$0xff]
        %v285 = vld [vmem:[%s274 + $0x28] sm:$0xff]
        %v286 = vld [vmem:[%s274 + $0x30] sm:$0xff]
        %v287 = vld [vmem:[%s274 + $0x38] sm:$0xff]
        %v288 = vld [vmem:[%s274 + $0x40] sm:$0xff]
        %v289 = vld [vmem:[%s274 + $0x48] sm:$0xff]
        %v290 = vld [vmem:[%s274 + $0x50] sm:$0xff]
        %v291 = vld [vmem:[%s274 + $0x58] sm:$0xff]
        %v292 = vld [vmem:[%s274 + $0x60] sm:$0xff]
        %v293 = vld [vmem:[%s274 + $0x68] sm:$0xff]
        %v294 = vld [vmem:[%s274 + $0x70] sm:$0xff]
        %v295 = vld [vmem:[%s274 + $0x78] sm:$0xff]
        %v296 = vld [vmem:[%s274 + $0x80] sm:$0xff]
        %v297 = vld [vmem:[%s274 + $0x88] sm:$0xff]
        %v298 = vld [vmem:[%s274 + $0x90] sm:$0xff]
        %v299 = vld [vmem:[%s274 + $0x98] sm:$0xff]
        %v300 = vld [vmem:[%s274 + $0xa0] sm:$0xff]
        %v301 = vld [vmem:[%s274 + $0xa8] sm:$0xff]
        %v302 = vld [vmem:[%s274 + $0xb0] sm:$0xff]
        %v303 = vld [vmem:[%s274 + $0xb8] sm:$0xff]
        %v304 = vld [vmem:[%s274 + $0xc0] sm:$0xff]
        %v305 = vld [vmem:[%s274 + $0xc8] sm:$0xff]
        %v306 = vld [vmem:[%s274 + $0xd0] sm:$0xff]
        %v307 = vld [vmem:[%s274 + $0xd8] sm:$0xff]
        %v308 = vld [vmem:[%s274 + $0xe0] sm:$0xff]
        %v309 = vld [vmem:[%s274 + $0xe8] sm:$0xff]
        %v310 = vld [vmem:[%s274 + $0xf0] sm:$0xff]
        %v311 = vld [vmem:[%s274 + $0xf8] sm:$0xff]
        %v312 = vld [vmem:[%s274 + $0x100] sm:$0xff]
        %v313 = vld [vmem:[%s274 + $0x108] sm:$0xff]
        %v314 = vld [vmem:[%s274 + $0x110] sm:$0xff]
        %v315 = vld [vmem:[%s274 + $0x118] sm:$0xff]
        %v316 = vld [vmem:[%s274 + $0x120] sm:$0xff]
        %v317 = vld [vmem:[%s274 + $0x128] sm:$0xff]
        %v318 = vld [vmem:[%s274 + $0x130] sm:$0xff]
        %v319 = vld [vmem:[%s274 + $0x138] sm:$0xff]
        %v320 = vld [vmem:[%s274 + $0x140] sm:$0xff]
        %v321 = vld [vmem:[%s274 + $0x148] sm:$0xff]
        %v322 = vld [vmem:[%s274 + $0x150] sm:$0xff]
        %v323 = vld [vmem:[%s274 + $0x158] sm:$0xff]
        %v324 = vld [vmem:[%s274 + $0x160] sm:$0xff]
        %v325 = vld [vmem:[%s274 + $0x168] sm:$0xff]
        %v326 = vld [vmem:[%s274 + $0x170] sm:$0xff]
        %v327 = vld [vmem:[%s274 + $0x178] sm:$0xff]
        %v328 = vld [vmem:[%s274 + $0x180] sm:$0xff]
        %v329 = vld [vmem:[%s274 + $0x188] sm:$0xff]
        %v330 = vld [vmem:[%s274 + $0x190] sm:$0xff]
        %v331 = vld [vmem:[%s274 + $0x198] sm:$0xff]
        %v332 = vld [vmem:[%s274 + $0x1a0] sm:$0xff]
        %v333 = vld [vmem:[%s274 + $0x1a8] sm:$0xff]
        %v334 = vld [vmem:[%s274 + $0x1b0] sm:$0xff]
        %v335 = vld [vmem:[%s274 + $0x1b8] sm:$0xff]
        %v336 = vld [vmem:[%s274 + $0x1c0] sm:$0xff]
        %v337 = vld [vmem:[%s274 + $0x1c8] sm:$0xff]
        %v338 = vld [vmem:[%s274 + $0x1d0] sm:$0xff]
        %v339 = vld [vmem:[%s274 + $0x1d8] sm:$0xff]
        %v340 = vld [vmem:[%s274 + $0x1e0] sm:$0xff]
        %v341 = vld [vmem:[%s274 + $0x1e8] sm:$0xff]
        %v342 = vld [vmem:[%s274 + $0x1f0] sm:$0xff]
        %v343 = vld [vmem:[%s274 + $0x1f8] sm:$0xff]
        %v344 = vld [vmem:[%s274 + $0x200] sm:$0xff]
        %v345 = vld [vmem:[%s274 + $0x208] sm:$0xff]
        %v346 = vld [vmem:[%s274 + $0x210] sm:$0xff]
        %v347 = vld [vmem:[%s274 + $0x218] sm:$0xff]
        %v348 = vld [vmem:[%s274 + $0x220] sm:$0xff]
        %v349 = vld [vmem:[%s274 + $0x228] sm:$0xff]
        %v350 = vld [vmem:[%s274 + $0x230] sm:$0xff]
        %v351 = vld [vmem:[%s274 + $0x238] sm:$0xff]
        %v352 = vld [vmem:[%s274 + $0x240] sm:$0xff]
        %v353 = vld [vmem:[%s274 + $0x248] sm:$0xff]
        %v354 = vld [vmem:[%s274 + $0x250] sm:$0xff]
        %v355 = vld [vmem:[%s274 + $0x258] sm:$0xff]
        %v356 = vld [vmem:[%s274 + $0x260] sm:$0xff]
        %v357 = vld [vmem:[%s274 + $0x268] sm:$0xff]
        %v358 = vld [vmem:[%s274 + $0x270] sm:$0xff]
        %v359 = vld [vmem:[%s274 + $0x278] sm:$0xff]
        %v360 = vld [vmem:[%s274 + $0x280] sm:$0xff]
        %v361 = vld [vmem:[%s274 + $0x288] sm:$0xff]
        %v362 = vld [vmem:[%s274 + $0x290] sm:$0xff]
        %v363 = vld [vmem:[%s274 + $0x298] sm:$0xff]
        %v364 = vld [vmem:[%s274 + $0x2a0] sm:$0xf]
        %v365 = vld [vmem:[#allocation3] sm:$0xff]
        %v366 = vld [vmem:[#allocation3 + $0x8] sm:$0x1]
        %v367 = vld [vmem:[#allocation5] sm:$0x1]
        %v369 = vlaneseq
        %v370 = vshrl.u32 %v369, 7
        %v371 = vsub.s32 0, %v370
        %v372 = vrot.slane %v367, %v371
        %vm374 = vcmask 72704
        %v376 = vsel %vm374, %v280, 0
        %v379 = vsel %vm374, %v281, 0
        %v382 = vsel %vm374, %v282, 0
        %v385 = vsel %vm374, %v283, 0
        %v388 = vsel %vm374, %v284, 0
        %v391 = vsel %vm374, %v285, 0
        %v394 = vsel %vm374, %v286, 0
        %v397 = vsel %vm374, %v287, 0
        %v400 = vsel %vm374, %v288, 0
        %v403 = vsel %vm374, %v289, 0
        %v406 = vsel %vm374, %v290, 0
        %v409 = vsel %vm374, %v291, 0
        %v412 = vsel %vm374, %v292, 0
        %v415 = vsel %vm374, %v293, 0
        %v418 = vsel %vm374, %v294, 0
        %v421 = vsel %vm374, %v295, 0
        %v424 = vsel %vm374, %v296, 0
        %v427 = vsel %vm374, %v297, 0
        %v430 = vsel %vm374, %v298, 0
        %v433 = vsel %vm374, %v299, 0
        %v436 = vsel %vm374, %v300, 0
        %v439 = vsel %vm374, %v301, 0
        %v442 = vsel %vm374, %v302, 0
        %v445 = vsel %vm374, %v303, 0
        %v448 = vsel %vm374, %v304, 0
        %v451 = vsel %vm374, %v305, 0
        %v454 = vsel %vm374, %v306, 0
        %v457 = vsel %vm374, %v307, 0
        %v460 = vsel %vm374, %v308, 0
        %v463 = vsel %vm374, %v309, 0
        %v466 = vsel %vm374, %v310, 0
        %v469 = vsel %vm374, %v311, 0
        %v472 = vsel %vm374, %v312, 0
        %v475 = vsel %vm374, %v313, 0
        %v478 = vsel %vm374, %v314, 0
        %v481 = vsel %vm374, %v315, 0
        %v484 = vsel %vm374, %v316, 0
        %v487 = vsel %vm374, %v317, 0
        %v490 = vsel %vm374, %v318, 0
        %v493 = vsel %vm374, %v319, 0
        %v496 = vsel %vm374, %v320, 0
        %v499 = vsel %vm374, %v321, 0
        %v502 = vsel %vm374, %v322, 0
        %v505 = vsel %vm374, %v323, 0
        %v508 = vsel %vm374, %v324, 0
        %v511 = vsel %vm374, %v325, 0
        %v514 = vsel %vm374, %v326, 0
        %v517 = vsel %vm374, %v327, 0
        %v520 = vsel %vm374, %v328, 0
        %v523 = vsel %vm374, %v329, 0
        %v526 = vsel %vm374, %v330, 0
        %v529 = vsel %vm374, %v331, 0
        %v532 = vsel %vm374, %v332, 0
        %v535 = vsel %vm374, %v333, 0
        %v538 = vsel %vm374, %v334, 0
        %v541 = vsel %vm374, %v335, 0
        %v544 = vsel %vm374, %v336, 0
        %v547 = vsel %vm374, %v337, 0
        %v550 = vsel %vm374, %v338, 0
        %v553 = vsel %vm374, %v339, 0
        %v556 = vsel %vm374, %v340, 0
        %v559 = vsel %vm374, %v341, 0
        %v562 = vsel %vm374, %v342, 0
        %v565 = vsel %vm374, %v343, 0
        %v568 = vsel %vm374, %v344, 0
        %v571 = vsel %vm374, %v345, 0
        %v574 = vsel %vm374, %v346, 0
        %v577 = vsel %vm374, %v347, 0
        %v580 = vsel %vm374, %v348, 0
        %v583 = vsel %vm374, %v349, 0
        %v586 = vsel %vm374, %v350, 0
        %v589 = vsel %vm374, %v351, 0
        %v592 = vsel %vm374, %v352, 0
        %v595 = vsel %vm374, %v353, 0
        %v598 = vsel %vm374, %v354, 0
        %v601 = vsel %vm374, %v355, 0
        %v604 = vsel %vm374, %v356, 0
        %v607 = vsel %vm374, %v357, 0
        %v610 = vsel %vm374, %v358, 0
        %v613 = vsel %vm374, %v359, 0
        %v616 = vsel %vm374, %v360, 0
        %v619 = vsel %vm374, %v361, 0
        %v622 = vsel %vm374, %v362, 0
        %v625 = vsel %vm374, %v363, 0
        %v628 = vsel %vm374, %v364, 0
        %vm630 = vcmask 1040384
        %v632 = vsel %vm630, %v366, 0
        %634 = vmatprep.subr.mxu0 0.0
        %635 = vmatpush1.msra.mxu0 %v365
        %636 = vmatprep.subr.mxu0 0.0
        %637 = vmatpush1.msra.mxu0 %v632
        %638 = vmatprep.subr.mxu0 0.0
        %639 = vmatpush1.msra.mxu0 0.0
        %640 = vmatprep.subr.mxu0 0.0
        %641 = vmatpush1.msra.mxu0 0.0
        %642 = vmatprep.subr.mxu0 0.0
        %643 = vmatpush1.msra.mxu0 0.0
        %644 = vmatprep.subr.mxu0 0.0
        %645 = vmatpush1.msra.mxu0 0.0
        %646 = vmatprep.subr.mxu0 0.0
        %647 = vmatpush1.msra.mxu0 0.0
        %648 = vmatprep.subr.mxu0 0.0
        %649 = vmatpush1.msra.mxu0 0.0
        %650 = vmatprep.subr.mxu0 0.0
        %651 = vmatpush1.msra.mxu0 0.0
        %652 = vmatprep.subr.mxu0 0.0
        %653 = vmatpush1.msra.mxu0 0.0
        %654 = vmatprep.subr.mxu0 0.0
        %655 = vmatpush1.msra.mxu0 0.0
        %656 = vmatprep.subr.mxu0 0.0
        %657 = vmatpush1.msra.mxu0 0.0
        %658 = vmatprep.subr.mxu0 0.0
        %659 = vmatpush1.msra.mxu0 0.0
        %660 = vmatprep.subr.mxu0 0.0
        %661 = vmatpush1.msra.mxu0 0.0
        %662 = vmatprep.subr.mxu0 0.0
        %663 = vmatpush1.msra.mxu0 0.0
        %664 = vmatprep.subr.mxu0 0.0
        %665 = vmatpush1.msra.mxu0 0.0
        %666 = vmatprep.subr.mxu0 0.0
        %667 = vmatpush1.msra.mxu0 0.0
        %668 = vmatprep.subr.mxu0 0.0
        %669 = vmatpush1.msra.mxu0 0.0
        %670 = vmatprep.subr.mxu0 0.0
        %671 = vmatpush1.msra.mxu0 0.0
        %672 = vmatprep.subr.mxu0 0.0
        %673 = vmatpush1.msra.mxu0 0.0
        %674 = vmatprep.subr.mxu0 0.0
        %675 = vmatpush1.msra.mxu0 0.0
        %676 = vmatprep.subr.mxu0 0.0
        %677 = vmatpush1.msra.mxu0 0.0
        %678 = vmatprep.subr.mxu0 0.0
        %679 = vmatpush1.msra.mxu0 0.0
        %680 = vmatprep.subr.mxu0 0.0
        %681 = vmatpush1.msra.mxu0 0.0
        %682 = vmatprep.subr.mxu0 0.0
        %683 = vmatpush1.msra.mxu0 0.0
        %684 = vmatprep.subr.mxu0 0.0
        %685 = vmatpush1.msra.mxu0 0.0
        %686 = vmatprep.subr.mxu0 0.0
        %687 = vmatpush1.msra.mxu0 0.0
        %688 = vmatprep.subr.mxu0 0.0
        %689 = vmatpush1.msra.mxu0 0.0
        %690 = vmatprep.subr.mxu0 0.0
        %691 = vmatpush1.msra.mxu0 0.0
        %692 = vmatprep.subr.mxu0 0.0
        %693 = vmatpush1.msra.mxu0 0.0
        %694 = vmatprep.subr.mxu0 0.0
        %695 = vmatpush1.msra.mxu0 0.0
        %696 = vmatprep.subr.mxu0 0.0
        %697 = vmatpush1.msra.mxu0 0.0
        %698 = vmatprep.mubr.f32.mxu0 0.0
        %699 = vmatmul.mubr.f32.gmra.mrb[0].mxu0 %v376
        %v700 = vpop.f32.mrb[0].mxu0
        %v701 = vadd.f32 %v372, %v700
        %v702 = vpop.f32.mrb[0].mxu0
        %703 = vmatprep.mubr.f32.mxu0 0.0
        %704 = vmatmul.mubr.f32.gmra.mrb[0].mxu0 %v379
        %v705 = vpop.f32.mrb[0].mxu0
        %v706 = vadd.f32 %v372, %v705
        %v707 = vpop.f32.mrb[0].mxu0
        %708 = vmatprep.mubr.f32.mxu0 0.0
        %709 = vmatmul.mubr.f32.gmra.mrb[0].mxu0 %v382
        %v710 = vpop.f32.mrb[0].mxu0
        %v711 = vadd.f32 %v372, %v710
        %v712 = vpop.f32.mrb[0].mxu0
        %713 = vmatprep.mubr.f32.mxu0 0.0
        %714 = vmatmul.mubr.f32.gmra.mrb[0].mxu0 %v385
        %v715 = vpop.f32.mrb[0].mxu0
        %v716 = vadd.f32 %v372, %v715
        %v717 = vpop.f32.mrb[0].mxu0
        %718 = vmatprep.mubr.f32.mxu0 0.0
        %719 = vmatmul.mubr.f32.gmra.mrb[0].mxu0 %v388
        %v720 = vpop.f32.mrb[0].mxu0
        %v721 = vadd.f32 %v372, %v720
        %v722 = vpop.f32.mrb[0].mxu0
        %723 = vmatprep.mubr.f32.mxu0 0.0
        %724 = vmatmul.mubr.f32.gmra.mrb[0].mxu0 %v391
        %v725 = vpop.f32.mrb[0].mxu0
        %v726 = vadd.f32 %v372, %v725
        %v727 = vpop.f32.mrb[0].mxu0
        %728 = vmatprep.mubr.f32.mxu0 0.0
        %729 = vmatmul.mubr.f32.gmra.mrb[0].mxu0 %v394
        %v730 = vpop.f32.mrb[0].mxu0
        %v731 = vadd.f32 %v372, %v730
        %v732 = vpop.f32.mrb[0].mxu0
        %733 = vmatprep.mubr.f32.mxu0 0.0
        %734 = vmatmul.mubr.f32.gmra.mrb[0].mxu0 %v397
        %v735 = vpop.f32.mrb[0].mxu0
        %v736 = vadd.f32 %v372, %v735
        %v737 = vpop.f32.mrb[0].mxu0
        %738 = vmatprep.mubr.f32.mxu0 0.0
        %739 = vmatmul.mubr.f32.gmra.mrb[0].mxu0 %v400
        %v740 = vpop.f32.mrb[0].mxu0
        %v741 = vadd.f32 %v372, %v740
        %v742 = vpop.f32.mrb[0].mxu0
        %743 = vmatprep.mubr.f32.mxu0 0.0
        %744 = vmatmul.mubr.f32.gmra.mrb[0].mxu0 %v403
        %v745 = vpop.f32.mrb[0].mxu0
        %v746 = vadd.f32 %v372, %v745
        %v747 = vpop.f32.mrb[0].mxu0
        %748 = vmatprep.mubr.f32.mxu0 0.0
        %749 = vmatmul.mubr.f32.gmra.mrb[0].mxu0 %v406
        %v750 = vpop.f32.mrb[0].mxu0
        %v751 = vadd.f32 %v372, %v750
        %v752 = vpop.f32.mrb[0].mxu0
        %753 = vmatprep.mubr.f32.mxu0 0.0
        %754 = vmatmul.mubr.f32.gmra.mrb[0].mxu0 %v409
        %v755 = vpop.f32.mrb[0].mxu0
        %v756 = vadd.f32 %v372, %v755
        %v757 = vpop.f32.mrb[0].mxu0
        %758 = vmatprep.mubr.f32.mxu0 0.0
        %759 = vmatmul.mubr.f32.gmra.mrb[0].mxu0 %v412
        %v760 = vpop.f32.mrb[0].mxu0
        %v761 = vadd.f32 %v372, %v760
        %v762 = vpop.f32.mrb[0].mxu0
        %763 = vmatprep.mubr.f32.mxu0 0.0
        %764 = vmatmul.mubr.f32.gmra.mrb[0].mxu0 %v415
        %v765 = vpop.f32.mrb[0].mxu0
        %v766 = vadd.f32 %v372, %v765
        %v767 = vpop.f32.mrb[0].mxu0
        %768 = vmatprep.mubr.f32.mxu0 0.0
        %769 = vmatmul.mubr.f32.gmra.mrb[0].mxu0 %v418
        %v770 = vpop.f32.mrb[0].mxu0
        %v771 = vadd.f32 %v372, %v770
        %v772 = vpop.f32.mrb[0].mxu0
        %773 = vmatprep.mubr.f32.mxu0 0.0
        %774 = vmatmul.mubr.f32.gmra.mrb[0].mxu0 %v421
        %v775 = vpop.f32.mrb[0].mxu0
        %v776 = vadd.f32 %v372, %v775
        %v777 = vpop.f32.mrb[0].mxu0
        %778 = vmatprep.mubr.f32.mxu0 0.0
        %779 = vmatmul.mubr.f32.gmra.mrb[0].mxu0 %v424
        %v780 = vpop.f32.mrb[0].mxu0
        %v781 = vadd.f32 %v372, %v780
        %v782 = vpop.f32.mrb[0].mxu0
        %783 = vmatprep.mubr.f32.mxu0 0.0
        %784 = vmatmul.mubr.f32.gmra.mrb[0].mxu0 %v427
        %v785 = vpop.f32.mrb[0].mxu0
        %v786 = vadd.f32 %v372, %v785
        %v787 = vpop.f32.mrb[0].mxu0
        %788 = vmatprep.mubr.f32.mxu0 0.0
        %789 = vmatmul.mubr.f32.gmra.mrb[0].mxu0 %v430
        %v790 = vpop.f32.mrb[0].mxu0
        %v791 = vadd.f32 %v372, %v790
        %v792 = vpop.f32.mrb[0].mxu0
        %793 = vmatprep.mubr.f32.mxu0 0.0
        %794 = vmatmul.mubr.f32.gmra.mrb[0].mxu0 %v433
        %v795 = vpop.f32.mrb[0].mxu0
        %v796 = vadd.f32 %v372, %v795
        %v797 = vpop.f32.mrb[0].mxu0
        %798 = vmatprep.mubr.f32.mxu0 0.0
        %799 = vmatmul.mubr.f32.gmra.mrb[0].mxu0 %v436
        %v800 = vpop.f32.mrb[0].mxu0
        %v801 = vadd.f32 %v372, %v800
        %v802 = vpop.f32.mrb[0].mxu0
        %803 = vmatprep.mubr.f32.mxu0 0.0
        %804 = vmatmul.mubr.f32.gmra.mrb[0].mxu0 %v439
        %v805 = vpop.f32.mrb[0].mxu0
        %v806 = vadd.f32 %v372, %v805
        %v807 = vpop.f32.mrb[0].mxu0
        %808 = vmatprep.mubr.f32.mxu0 0.0
        %809 = vmatmul.mubr.f32.gmra.mrb[0].mxu0 %v442
        %v810 = vpop.f32.mrb[0].mxu0
        %v811 = vadd.f32 %v372, %v810
        %v812 = vpop.f32.mrb[0].mxu0
        %813 = vmatprep.mubr.f32.mxu0 0.0
        %814 = vmatmul.mubr.f32.gmra.mrb[0].mxu0 %v445
        %v815 = vpop.f32.mrb[0].mxu0
        %v816 = vadd.f32 %v372, %v815
        %v817 = vpop.f32.mrb[0].mxu0
        %818 = vmatprep.mubr.f32.mxu0 0.0
        %819 = vmatmul.mubr.f32.gmra.mrb[0].mxu0 %v448
        %v820 = vpop.f32.mrb[0].mxu0
        %v821 = vadd.f32 %v372, %v820
        %v822 = vpop.f32.mrb[0].mxu0
        %823 = vmatprep.mubr.f32.mxu0 0.0
        %824 = vmatmul.mubr.f32.gmra.mrb[0].mxu0 %v451
        %v825 = vpop.f32.mrb[0].mxu0
        %v826 = vadd.f32 %v372, %v825
        %v827 = vpop.f32.mrb[0].mxu0
        %828 = vmatprep.mubr.f32.mxu0 0.0
        %829 = vmatmul.mubr.f32.gmra.mrb[0].mxu0 %v454
        %v830 = vpop.f32.mrb[0].mxu0
        %v831 = vadd.f32 %v372, %v830
        %v832 = vpop.f32.mrb[0].mxu0
        %833 = vmatprep.mubr.f32.mxu0 0.0
        %834 = vmatmul.mubr.f32.gmra.mrb[0].mxu0 %v457
        %v835 = vpop.f32.mrb[0].mxu0
        %v836 = vadd.f32 %v372, %v835
        %v837 = vpop.f32.mrb[0].mxu0
        %838 = vmatprep.mubr.f32.mxu0 0.0
        %839 = vmatmul.mubr.f32.gmra.mrb[0].mxu0 %v460
        %v840 = vpop.f32.mrb[0].mxu0
        %v841 = vadd.f32 %v372, %v840
        %v842 = vpop.f32.mrb[0].mxu0
        %843 = vmatprep.mubr.f32.mxu0 0.0
        %844 = vmatmul.mubr.f32.gmra.mrb[0].mxu0 %v463
        %v845 = vpop.f32.mrb[0].mxu0
        %v846 = vadd.f32 %v372, %v845
        %v847 = vpop.f32.mrb[0].mxu0
        %848 = vmatprep.mubr.f32.mxu0 0.0
        %849 = vmatmul.mubr.f32.gmra.mrb[0].mxu0 %v466
        %v850 = vpop.f32.mrb[0].mxu0
        %v851 = vadd.f32 %v372, %v850
        %v852 = vpop.f32.mrb[0].mxu0
        %853 = vmatprep.mubr.f32.mxu0 0.0
        %854 = vmatmul.mubr.f32.gmra.mrb[0].mxu0 %v469
        %v855 = vpop.f32.mrb[0].mxu0
        %v856 = vadd.f32 %v372, %v855
        %v857 = vpop.f32.mrb[0].mxu0
        %858 = vmatprep.mubr.f32.mxu0 0.0
        %859 = vmatmul.mubr.f32.gmra.mrb[0].mxu0 %v472
        %v860 = vpop.f32.mrb[0].mxu0
        %v861 = vadd.f32 %v372, %v860
        %v862 = vpop.f32.mrb[0].mxu0
        %863 = vmatprep.mubr.f32.mxu0 0.0
        %864 = vmatmul.mubr.f32.gmra.mrb[0].mxu0 %v475
        %v865 = vpop.f32.mrb[0].mxu0
        %v866 = vadd.f32 %v372, %v865
        %v867 = vpop.f32.mrb[0].mxu0
        %868 = vmatprep.mubr.f32.mxu0 0.0
        %869 = vmatmul.mubr.f32.gmra.mrb[0].mxu0 %v478
        %v870 = vpop.f32.mrb[0].mxu0
        %v871 = vadd.f32 %v372, %v870
        %v872 = vpop.f32.mrb[0].mxu0
        %873 = vmatprep.mubr.f32.mxu0 0.0
        %874 = vmatmul.mubr.f32.gmra.mrb[0].mxu0 %v481
        %v875 = vpop.f32.mrb[0].mxu0
        %v876 = vadd.f32 %v372, %v875
        %v877 = vpop.f32.mrb[0].mxu0
        %878 = vmatprep.mubr.f32.mxu0 0.0
        %879 = vmatmul.mubr.f32.gmra.mrb[0].mxu0 %v484
        %v880 = vpop.f32.mrb[0].mxu0
        %v881 = vadd.f32 %v372, %v880
        %v882 = vpop.f32.mrb[0].mxu0
        %883 = vmatprep.mubr.f32.mxu0 0.0
        %884 = vmatmul.mubr.f32.gmra.mrb[0].mxu0 %v487
        %v885 = vpop.f32.mrb[0].mxu0
        %v886 = vadd.f32 %v372, %v885
        %v887 = vpop.f32.mrb[0].mxu0
        %888 = vmatprep.mubr.f32.mxu0 0.0
        %889 = vmatmul.mubr.f32.gmra.mrb[0].mxu0 %v490
        %v890 = vpop.f32.mrb[0].mxu0
        %v891 = vadd.f32 %v372, %v890
        %v892 = vpop.f32.mrb[0].mxu0
        %893 = vmatprep.mubr.f32.mxu0 0.0
        %894 = vmatmul.mubr.f32.gmra.mrb[0].mxu0 %v493
        %v895 = vpop.f32.mrb[0].mxu0
        %v896 = vadd.f32 %v372, %v895
        %v897 = vpop.f32.mrb[0].mxu0
        %898 = vmatprep.mubr.f32.mxu0 0.0
        %899 = vmatmul.mubr.f32.gmra.mrb[0].mxu0 %v496
        %v900 = vpop.f32.mrb[0].mxu0
        %v901 = vadd.f32 %v372, %v900
        %v902 = vpop.f32.mrb[0].mxu0
        %903 = vmatprep.mubr.f32.mxu0 0.0
        %904 = vmatmul.mubr.f32.gmra.mrb[0].mxu0 %v499
        %v905 = vpop.f32.mrb[0].mxu0
        %v906 = vadd.f32 %v372, %v905
        %v907 = vpop.f32.mrb[0].mxu0
        %908 = vmatprep.mubr.f32.mxu0 0.0
        %909 = vmatmul.mubr.f32.gmra.mrb[0].mxu0 %v502
        %v910 = vpop.f32.mrb[0].mxu0
        %v911 = vadd.f32 %v372, %v910
        %v912 = vpop.f32.mrb[0].mxu0
        %913 = vmatprep.mubr.f32.mxu0 0.0
        %914 = vmatmul.mubr.f32.gmra.mrb[0].mxu0 %v505
        %v915 = vpop.f32.mrb[0].mxu0
        %v916 = vadd.f32 %v372, %v915
        %v917 = vpop.f32.mrb[0].mxu0
        %918 = vmatprep.mubr.f32.mxu0 0.0
        %919 = vmatmul.mubr.f32.gmra.mrb[0].mxu0 %v508
        %v920 = vpop.f32.mrb[0].mxu0
        %v921 = vadd.f32 %v372, %v920
        %v922 = vpop.f32.mrb[0].mxu0
        %923 = vmatprep.mubr.f32.mxu0 0.0
        %924 = vmatmul.mubr.f32.gmra.mrb[0].mxu0 %v511
        %v925 = vpop.f32.mrb[0].mxu0
        %v926 = vadd.f32 %v372, %v925
        %v927 = vpop.f32.mrb[0].mxu0
        %928 = vmatprep.mubr.f32.mxu0 0.0
        %929 = vmatmul.mubr.f32.gmra.mrb[0].mxu0 %v514
        %v930 = vpop.f32.mrb[0].mxu0
        %v931 = vadd.f32 %v372, %v930
        %v932 = vpop.f32.mrb[0].mxu0
        %933 = vmatprep.mubr.f32.mxu0 0.0
        %934 = vmatmul.mubr.f32.gmra.mrb[0].mxu0 %v517
        %v935 = vpop.f32.mrb[0].mxu0
        %v936 = vadd.f32 %v372, %v935
        %v937 = vpop.f32.mrb[0].mxu0
        %938 = vmatprep.mubr.f32.mxu0 0.0
        %939 = vmatmul.mubr.f32.gmra.mrb[0].mxu0 %v520
        %v940 = vpop.f32.mrb[0].mxu0
        %v941 = vadd.f32 %v372, %v940
        %v942 = vpop.f32.mrb[0].mxu0
        %943 = vmatprep.mubr.f32.mxu0 0.0
        %944 = vmatmul.mubr.f32.gmra.mrb[0].mxu0 %v523
        %v945 = vpop.f32.mrb[0].mxu0
        %v946 = vadd.f32 %v372, %v945
        %v947 = vpop.f32.mrb[0].mxu0
        %948 = vmatprep.mubr.f32.mxu0 0.0
        %949 = vmatmul.mubr.f32.gmra.mrb[0].mxu0 %v526
        %v950 = vpop.f32.mrb[0].mxu0
        %v951 = vadd.f32 %v372, %v950
        %v952 = vpop.f32.mrb[0].mxu0
        %953 = vmatprep.mubr.f32.mxu0 0.0
        %954 = vmatmul.mubr.f32.gmra.mrb[0].mxu0 %v529
        %v955 = vpop.f32.mrb[0].mxu0
        %v956 = vadd.f32 %v372, %v955
        %v957 = vpop.f32.mrb[0].mxu0
        %958 = vmatprep.mubr.f32.mxu0 0.0
        %959 = vmatmul.mubr.f32.gmra.mrb[0].mxu0 %v532
        %v960 = vpop.f32.mrb[0].mxu0
        %v961 = vadd.f32 %v372, %v960
        %v962 = vpop.f32.mrb[0].mxu0
        %963 = vmatprep.mubr.f32.mxu0 0.0
        %964 = vmatmul.mubr.f32.gmra.mrb[0].mxu0 %v535
        %v965 = vpop.f32.mrb[0].mxu0
        %v966 = vadd.f32 %v372, %v965
        %v967 = vpop.f32.mrb[0].mxu0
        %968 = vmatprep.mubr.f32.mxu0 0.0
        %969 = vmatmul.mubr.f32.gmra.mrb[0].mxu0 %v538
        %v970 = vpop.f32.mrb[0].mxu0
        %v971 = vadd.f32 %v372, %v970
        %v972 = vpop.f32.mrb[0].mxu0
        %973 = vmatprep.mubr.f32.mxu0 0.0
        %974 = vmatmul.mubr.f32.gmra.mrb[0].mxu0 %v541
        %v975 = vpop.f32.mrb[0].mxu0
        %v976 = vadd.f32 %v372, %v975
        %v977 = vpop.f32.mrb[0].mxu0
        %978 = vmatprep.mubr.f32.mxu0 0.0
        %979 = vmatmul.mubr.f32.gmra.mrb[0].mxu0 %v544
        %v980 = vpop.f32.mrb[0].mxu0
        %v981 = vadd.f32 %v372, %v980
        %v982 = vpop.f32.mrb[0].mxu0
        %983 = vmatprep.mubr.f32.mxu0 0.0
        %984 = vmatmul.mubr.f32.gmra.mrb[0].mxu0 %v547
        %v985 = vpop.f32.mrb[0].mxu0
        %v986 = vadd.f32 %v372, %v985
        %v987 = vpop.f32.mrb[0].mxu0
        %988 = vmatprep.mubr.f32.mxu0 0.0
        %989 = vmatmul.mubr.f32.gmra.mrb[0].mxu0 %v550
        %v990 = vpop.f32.mrb[0].mxu0
        %v991 = vadd.f32 %v372, %v990
        %v992 = vpop.f32.mrb[0].mxu0
        %993 = vmatprep.mubr.f32.mxu0 0.0
        %994 = vmatmul.mubr.f32.gmra.mrb[0].mxu0 %v553
        %v995 = vpop.f32.mrb[0].mxu0
        %v996 = vadd.f32 %v372, %v995
        %v997 = vpop.f32.mrb[0].mxu0
        %998 = vmatprep.mubr.f32.mxu0 0.0
        %999 = vmatmul.mubr.f32.gmra.mrb[0].mxu0 %v556
        %v1000 = vpop.f32.mrb[0].mxu0
        %v1001 = vadd.f32 %v372, %v1000
        %v1002 = vpop.f32.mrb[0].mxu0
        %1003 = vmatprep.mubr.f32.mxu0 0.0
        %1004 = vmatmul.mubr.f32.gmra.mrb[0].mxu0 %v559
        %v1005 = vpop.f32.mrb[0].mxu0
        %v1006 = vadd.f32 %v372, %v1005
        %v1007 = vpop.f32.mrb[0].mxu0
        %1008 = vmatprep.mubr.f32.mxu0 0.0
        %1009 = vmatmul.mubr.f32.gmra.mrb[0].mxu0 %v562
        %v1010 = vpop.f32.mrb[0].mxu0
        %v1011 = vadd.f32 %v372, %v1010
        %v1012 = vpop.f32.mrb[0].mxu0
        %1013 = vmatprep.mubr.f32.mxu0 0.0
        %1014 = vmatmul.mubr.f32.gmra.mrb[0].mxu0 %v565
        %v1015 = vpop.f32.mrb[0].mxu0
        %v1016 = vadd.f32 %v372, %v1015
        %v1017 = vpop.f32.mrb[0].mxu0
        %1018 = vmatprep.mubr.f32.mxu0 0.0
        %1019 = vmatmul.mubr.f32.gmra.mrb[0].mxu0 %v568
        %v1020 = vpop.f32.mrb[0].mxu0
        %v1021 = vadd.f32 %v372, %v1020
        %v1022 = vpop.f32.mrb[0].mxu0
        %1023 = vmatprep.mubr.f32.mxu0 0.0
        %1024 = vmatmul.mubr.f32.gmra.mrb[0].mxu0 %v571
        %v1025 = vpop.f32.mrb[0].mxu0
        %v1026 = vadd.f32 %v372, %v1025
        %v1027 = vpop.f32.mrb[0].mxu0
        %1028 = vmatprep.mubr.f32.mxu0 0.0
        %1029 = vmatmul.mubr.f32.gmra.mrb[0].mxu0 %v574
        %v1030 = vpop.f32.mrb[0].mxu0
        %v1031 = vadd.f32 %v372, %v1030
        %v1032 = vpop.f32.mrb[0].mxu0
        %1033 = vmatprep.mubr.f32.mxu0 0.0
        %1034 = vmatmul.mubr.f32.gmra.mrb[0].mxu0 %v577
        %v1035 = vpop.f32.mrb[0].mxu0
        %v1036 = vadd.f32 %v372, %v1035
        %v1037 = vpop.f32.mrb[0].mxu0
        %1038 = vmatprep.mubr.f32.mxu0 0.0
        %1039 = vmatmul.mubr.f32.gmra.mrb[0].mxu0 %v580
        %v1040 = vpop.f32.mrb[0].mxu0
        %v1041 = vadd.f32 %v372, %v1040
        %v1042 = vpop.f32.mrb[0].mxu0
        %1043 = vmatprep.mubr.f32.mxu0 0.0
        %1044 = vmatmul.mubr.f32.gmra.mrb[0].mxu0 %v583
        %v1045 = vpop.f32.mrb[0].mxu0
        %v1046 = vadd.f32 %v372, %v1045
        %v1047 = vpop.f32.mrb[0].mxu0
        %1048 = vmatprep.mubr.f32.mxu0 0.0
        %1049 = vmatmul.mubr.f32.gmra.mrb[0].mxu0 %v586
        %v1050 = vpop.f32.mrb[0].mxu0
        %v1051 = vadd.f32 %v372, %v1050
        %v1052 = vpop.f32.mrb[0].mxu0
        %1053 = vmatprep.mubr.f32.mxu0 0.0
        %1054 = vmatmul.mubr.f32.gmra.mrb[0].mxu0 %v589
        %v1055 = vpop.f32.mrb[0].mxu0
        %v1056 = vadd.f32 %v372, %v1055
        %v1057 = vpop.f32.mrb[0].mxu0
        %1058 = vmatprep.mubr.f32.mxu0 0.0
        %1059 = vmatmul.mubr.f32.gmra.mrb[0].mxu0 %v592
        %v1060 = vpop.f32.mrb[0].mxu0
        %v1061 = vadd.f32 %v372, %v1060
        %v1062 = vpop.f32.mrb[0].mxu0
        %1063 = vmatprep.mubr.f32.mxu0 0.0
        %1064 = vmatmul.mubr.f32.gmra.mrb[0].mxu0 %v595
        %v1065 = vpop.f32.mrb[0].mxu0
        %v1066 = vadd.f32 %v372, %v1065
        %v1067 = vpop.f32.mrb[0].mxu0
        %1068 = vmatprep.mubr.f32.mxu0 0.0
        %1069 = vmatmul.mubr.f32.gmra.mrb[0].mxu0 %v598
        %v1070 = vpop.f32.mrb[0].mxu0
        %v1071 = vadd.f32 %v372, %v1070
        %v1072 = vpop.f32.mrb[0].mxu0
        %1073 = vmatprep.mubr.f32.mxu0 0.0
        %1074 = vmatmul.mubr.f32.gmra.mrb[0].mxu0 %v601
        %v1075 = vpop.f32.mrb[0].mxu0
        %v1076 = vadd.f32 %v372, %v1075
        %v1077 = vpop.f32.mrb[0].mxu0
        %1078 = vmatprep.mubr.f32.mxu0 0.0
        %1079 = vmatmul.mubr.f32.gmra.mrb[0].mxu0 %v604
        %v1080 = vpop.f32.mrb[0].mxu0
        %v1081 = vadd.f32 %v372, %v1080
        %v1082 = vpop.f32.mrb[0].mxu0
        %1083 = vmatprep.mubr.f32.mxu0 0.0
        %1084 = vmatmul.mubr.f32.gmra.mrb[0].mxu0 %v607
        %v1085 = vpop.f32.mrb[0].mxu0
        %v1086 = vadd.f32 %v372, %v1085
        %v1087 = vpop.f32.mrb[0].mxu0
        %1088 = vmatprep.mubr.f32.mxu0 0.0
        %1089 = vmatmul.mubr.f32.gmra.mrb[0].mxu0 %v610
        %v1090 = vpop.f32.mrb[0].mxu0
        %v1091 = vadd.f32 %v372, %v1090
        %v1092 = vpop.f32.mrb[0].mxu0
        %1093 = vmatprep.mubr.f32.mxu0 0.0
        %1094 = vmatmul.mubr.f32.gmra.mrb[0].mxu0 %v613
        %v1095 = vpop.f32.mrb[0].mxu0
        %v1096 = vadd.f32 %v372, %v1095
        %v1097 = vpop.f32.mrb[0].mxu0
        %1098 = vmatprep.mubr.f32.mxu0 0.0
        %1099 = vmatmul.mubr.f32.gmra.mrb[0].mxu0 %v616
        %v1100 = vpop.f32.mrb[0].mxu0
        %v1101 = vadd.f32 %v372, %v1100
        %v1102 = vpop.f32.mrb[0].mxu0
        %1103 = vmatprep.mubr.f32.mxu0 0.0
        %1104 = vmatmul.mubr.f32.gmra.mrb[0].mxu0 %v619
        %v1105 = vpop.f32.mrb[0].mxu0
        %v1106 = vadd.f32 %v372, %v1105
        %v1107 = vpop.f32.mrb[0].mxu0
        %1108 = vmatprep.mubr.f32.mxu0 0.0
        %1109 = vmatmul.mubr.f32.gmra.mrb[0].mxu0 %v622
        %v1110 = vpop.f32.mrb[0].mxu0
        %v1111 = vadd.f32 %v372, %v1110
        %v1112 = vpop.f32.mrb[0].mxu0
        %1113 = vmatprep.mubr.f32.mxu0 0.0
        %1114 = vmatmul.mubr.f32.gmra.mrb[0].mxu0 %v625
        %v1115 = vpop.f32.mrb[0].mxu0
        %v1116 = vadd.f32 %v372, %v1115
        %v1117 = vpop.f32.mrb[0].mxu0
        %1118 = vmatprep.mubr.f32.mxu0 0.0
        %1119 = vmatmul.mubr.f32.gmra.mrb[0].mxu0 %v628
        %v1120 = vpop.f32.mrb[0].mxu0
        %v1121 = vadd.f32 %v372, %v1120
        %v1122 = vpop.f32.mrb[0].mxu0
        %1123 = vdwg.mxu0
        %v1124 = vmax.f32 %v701, 0.0
        %v1125 = vmax.f32 %v706, 0.0
        %v1126 = vmax.f32 %v711, 0.0
        %v1127 = vmax.f32 %v716, 0.0
        %v1128 = vmax.f32 %v721, 0.0
        %v1129 = vmax.f32 %v726, 0.0
        %v1130 = vmax.f32 %v731, 0.0
        %v1131 = vmax.f32 %v736, 0.0
        %v1132 = vmax.f32 %v741, 0.0
        %v1133 = vmax.f32 %v746, 0.0
        %v1134 = vmax.f32 %v751, 0.0
        %v1135 = vmax.f32 %v756, 0.0
        %v1136 = vmax.f32 %v761, 0.0
        %v1137 = vmax.f32 %v766, 0.0
        %v1138 = vmax.f32 %v771, 0.0
        %v1139 = vmax.f32 %v776, 0.0
        %v1140 = vmax.f32 %v781, 0.0
        %v1141 = vmax.f32 %v786, 0.0
        %v1142 = vmax.f32 %v791, 0.0
        %v1143 = vmax.f32 %v796, 0.0
        %v1144 = vmax.f32 %v801, 0.0
        %v1145 = vmax.f32 %v806, 0.0
        %v1146 = vmax.f32 %v811, 0.0
        %v1147 = vmax.f32 %v816, 0.0
        %v1148 = vmax.f32 %v821, 0.0
        %v1149 = vmax.f32 %v826, 0.0
        %v1150 = vmax.f32 %v831, 0.0
        %v1151 = vmax.f32 %v836, 0.0
        %v1152 = vmax.f32 %v841, 0.0
        %v1153 = vmax.f32 %v846, 0.0
        %v1154 = vmax.f32 %v851, 0.0
        %v1155 = vmax.f32 %v856, 0.0
        %v1156 = vmax.f32 %v861, 0.0
        %v1157 = vmax.f32 %v866, 0.0
        %v1158 = vmax.f32 %v871, 0.0
        %v1159 = vmax.f32 %v876, 0.0
        %v1160 = vmax.f32 %v881, 0.0
        %v1161 = vmax.f32 %v886, 0.0
        %v1162 = vmax.f32 %v891, 0.0
        %v1163 = vmax.f32 %v896, 0.0
        %v1164 = vmax.f32 %v901, 0.0
        %v1165 = vmax.f32 %v906, 0.0
        %v1166 = vmax.f32 %v911, 0.0
        %v1167 = vmax.f32 %v916, 0.0
        %v1168 = vmax.f32 %v921, 0.0
        %v1169 = vmax.f32 %v926, 0.0
        %v1170 = vmax.f32 %v931, 0.0
        %v1171 = vmax.f32 %v936, 0.0
        %v1172 = vmax.f32 %v941, 0.0
        %v1173 = vmax.f32 %v946, 0.0
        %v1174 = vmax.f32 %v951, 0.0
        %v1175 = vmax.f32 %v956, 0.0
        %v1176 = vmax.f32 %v961, 0.0
        %v1177 = vmax.f32 %v966, 0.0
        %v1178 = vmax.f32 %v971, 0.0
        %v1179 = vmax.f32 %v976, 0.0
        %v1180 = vmax.f32 %v981, 0.0
        %v1181 = vmax.f32 %v986, 0.0
        %v1182 = vmax.f32 %v991, 0.0
        %v1183 = vmax.f32 %v996, 0.0
        %v1184 = vmax.f32 %v1001, 0.0
        %v1185 = vmax.f32 %v1006, 0.0
        %v1186 = vmax.f32 %v1011, 0.0
        %v1187 = vmax.f32 %v1016, 0.0
        %v1188 = vmax.f32 %v1021, 0.0
        %v1189 = vmax.f32 %v1026, 0.0
        %v1190 = vmax.f32 %v1031, 0.0
        %v1191 = vmax.f32 %v1036, 0.0
        %v1192 = vmax.f32 %v1041, 0.0
        %v1193 = vmax.f32 %v1046, 0.0
        %v1194 = vmax.f32 %v1051, 0.0
        %v1195 = vmax.f32 %v1056, 0.0
        %v1196 = vmax.f32 %v1061, 0.0
        %v1197 = vmax.f32 %v1066, 0.0
        %v1198 = vmax.f32 %v1071, 0.0
        %v1199 = vmax.f32 %v1076, 0.0
        %v1200 = vmax.f32 %v1081, 0.0
        %v1201 = vmax.f32 %v1086, 0.0
        %v1202 = vmax.f32 %v1091, 0.0
        %v1203 = vmax.f32 %v1096, 0.0
        %v1204 = vmax.f32 %v1101, 0.0
        %v1205 = vmax.f32 %v1106, 0.0
        %v1206 = vmax.f32 %v1111, 0.0
        %v1207 = vmax.f32 %v1116, 0.0
        %v1208 = vmax.f32 %v1121, 0.0
        %v1209 = vld [vmem:[#allocation7] sm:$0xff]
        %v1210 = vld [vmem:[#allocation7 + $0x8] sm:$0xff]
        %v1211 = vld [vmem:[#allocation7 + $0x10] sm:$0xff]
        %v1212 = vld [vmem:[#allocation7 + $0x18] sm:$0xff]
        %s1213 = scalar_lea.vmem [#allocation7], 32
        %v1214 = vld [vmem:[%s1213] sm:$0xff]
        %v1215 = vld [vmem:[%s1213 + $0x8] sm:$0xff]
        %v1216 = vld [vmem:[%s1213 + $0x10] sm:$0xff]
        %v1217 = vld [vmem:[%s1213 + $0x18] sm:$0xff]
        %vm1296 = vcmask 1046528
        %v1297 = vrot.slane %v1124, 1
        %v1298 = vrot.slane %v1125, 1
        %v1299 = vsel %vm1296, %v1297, %v1298
        %v1300 = vrot.slane %v1126, 1
        %v1301 = vsel %vm1296, %v1298, %v1300
        %v1302 = vrot.slane %v1127, 1
        %v1303 = vsel %vm1296, %v1300, %v1302
        %v1304 = vrot.slane %v1128, 1
        %v1305 = vsel %vm1296, %v1302, %v1304
        %v1306 = vrot.slane %v1129, 1
        %v1307 = vsel %vm1296, %v1304, %v1306
        %v1308 = vrot.slane %v1130, 1
        %v1309 = vsel %vm1296, %v1306, %v1308
        %v1310 = vrot.slane %v1131, 1
        %v1311 = vsel %vm1296, %v1308, %v1310
        %v1312 = vrot.slane %v1132, 1
        %v1313 = vsel %vm1296, %v1310, %v1312
        %v1314 = vrot.slane %v1133, 1
        %v1315 = vsel %vm1296, %v1312, %v1314
        %v1316 = vrot.slane %v1134, 1
        %v1317 = vsel %vm1296, %v1314, %v1316
        %v1318 = vrot.slane %v1135, 1
        %v1319 = vsel %vm1296, %v1316, %v1318
        %v1320 = vrot.slane %v1136, 1
        %v1321 = vsel %vm1296, %v1318, %v1320
        %v1322 = vrot.slane %v1137, 1
        %v1323 = vsel %vm1296, %v1320, %v1322
        %v1324 = vrot.slane %v1138, 1
        %v1325 = vsel %vm1296, %v1322, %v1324
        %v1326 = vrot.slane %v1139, 1
        %v1327 = vsel %vm1296, %v1324, %v1326
        %v1328 = vrot.slane %v1140, 1
        %v1329 = vsel %vm1296, %v1326, %v1328
        %v1330 = vrot.slane %v1141, 1
        %v1331 = vsel %vm1296, %v1328, %v1330
        %v1332 = vrot.slane %v1142, 1
        %v1333 = vsel %vm1296, %v1330, %v1332
        %v1334 = vrot.slane %v1143, 1
        %v1335 = vsel %vm1296, %v1332, %v1334
        %v1336 = vrot.slane %v1144, 1
        %v1337 = vsel %vm1296, %v1334, %v1336
        %v1338 = vrot.slane %v1145, 1
        %v1339 = vsel %vm1296, %v1336, %v1338
        %v1340 = vrot.slane %v1146, 1
        %v1341 = vsel %vm1296, %v1338, %v1340
        %v1342 = vrot.slane %v1147, 1
        %v1343 = vsel %vm1296, %v1340, %v1342
        %v1344 = vrot.slane %v1148, 1
        %v1345 = vsel %vm1296, %v1342, %v1344
        %v1346 = vrot.slane %v1149, 1
        %v1347 = vsel %vm1296, %v1344, %v1346
        %v1348 = vrot.slane %v1150, 1
        %v1349 = vsel %vm1296, %v1346, %v1348
        %v1350 = vrot.slane %v1151, 1
        %v1351 = vsel %vm1296, %v1348, %v1350
        %v1352 = vrot.slane %v1152, 1
        %v1353 = vsel %vm1296, %v1350, %v1352
        %v1354 = vrot.slane %v1153, 1
        %v1355 = vsel %vm1296, %v1352, %v1354
        %v1356 = vrot.slane %v1154, 1
        %v1357 = vsel %vm1296, %v1354, %v1356
        %v1358 = vrot.slane %v1155, 1
        %v1359 = vsel %vm1296, %v1356, %v1358
        %v1360 = vrot.slane %v1156, 1
        %v1361 = vsel %vm1296, %v1358, %v1360
        %v1362 = vrot.slane %v1157, 1
        %v1363 = vsel %vm1296, %v1360, %v1362
        %v1364 = vrot.slane %v1158, 1
        %v1365 = vsel %vm1296, %v1362, %v1364
        %v1366 = vrot.slane %v1159, 1
        %v1367 = vsel %vm1296, %v1364, %v1366
        %v1368 = vrot.slane %v1160, 1
        %v1369 = vsel %vm1296, %v1366, %v1368
        %v1370 = vrot.slane %v1161, 1
        %v1371 = vsel %vm1296, %v1368, %v1370
        %v1372 = vrot.slane %v1162, 1
        %v1373 = vsel %vm1296, %v1370, %v1372
        %v1374 = vrot.slane %v1163, 1
        %v1375 = vsel %vm1296, %v1372, %v1374
        %v1376 = vrot.slane %v1164, 1
        %v1377 = vsel %vm1296, %v1374, %v1376
        %v1378 = vrot.slane %v1165, 1
        %v1379 = vsel %vm1296, %v1376, %v1378
        %v1380 = vrot.slane %v1166, 1
        %v1381 = vsel %vm1296, %v1378, %v1380
        %v1382 = vrot.slane %v1167, 1
        %v1383 = vsel %vm1296, %v1380, %v1382
        %v1384 = vrot.slane %v1168, 1
        %v1385 = vsel %vm1296, %v1382, %v1384
        %v1386 = vrot.slane %v1169, 1
        %v1387 = vsel %vm1296, %v1384, %v1386
        %v1388 = vrot.slane %v1170, 1
        %v1389 = vsel %vm1296, %v1386, %v1388
        %v1390 = vrot.slane %v1171, 1
        %v1391 = vsel %vm1296, %v1388, %v1390
        %v1392 = vrot.slane %v1172, 1
        %v1393 = vsel %vm1296, %v1390, %v1392
        %v1394 = vrot.slane %v1173, 1
        %v1395 = vsel %vm1296, %v1392, %v1394
        %v1396 = vrot.slane %v1174, 1
        %v1397 = vsel %vm1296, %v1394, %v1396
        %v1398 = vrot.slane %v1175, 1
        %v1399 = vsel %vm1296, %v1396, %v1398
        %v1400 = vrot.slane %v1176, 1
        %v1401 = vsel %vm1296, %v1398, %v1400
        %v1402 = vrot.slane %v1177, 1
        %v1403 = vsel %vm1296, %v1400, %v1402
        %v1404 = vrot.slane %v1178, 1
        %v1405 = vsel %vm1296, %v1402, %v1404
        %v1406 = vrot.slane %v1179, 1
        %v1407 = vsel %vm1296, %v1404, %v1406
        %v1408 = vrot.slane %v1180, 1
        %v1409 = vsel %vm1296, %v1406, %v1408
        %v1410 = vrot.slane %v1181, 1
        %v1411 = vsel %vm1296, %v1408, %v1410
        %v1412 = vrot.slane %v1182, 1
        %v1413 = vsel %vm1296, %v1410, %v1412
        %v1414 = vrot.slane %v1183, 1
        %v1415 = vsel %vm1296, %v1412, %v1414
        %v1416 = vrot.slane %v1184, 1
        %v1417 = vsel %vm1296, %v1414, %v1416
        %v1418 = vrot.slane %v1185, 1
        %v1419 = vsel %vm1296, %v1416, %v1418
        %v1420 = vrot.slane %v1186, 1
        %v1421 = vsel %vm1296, %v1418, %v1420
        %v1422 = vrot.slane %v1187, 1
        %v1423 = vsel %vm1296, %v1420, %v1422
        %v1424 = vrot.slane %v1188, 1
        %v1425 = vsel %vm1296, %v1422, %v1424
        %v1426 = vrot.slane %v1189, 1
        %v1427 = vsel %vm1296, %v1424, %v1426
        %v1428 = vrot.slane %v1190, 1
        %v1429 = vsel %vm1296, %v1426, %v1428
        %v1430 = vrot.slane %v1191, 1
        %v1431 = vsel %vm1296, %v1428, %v1430
        %v1432 = vrot.slane %v1192, 1
        %v1433 = vsel %vm1296, %v1430, %v1432
        %v1434 = vrot.slane %v1193, 1
        %v1435 = vsel %vm1296, %v1432, %v1434
        %v1436 = vrot.slane %v1194, 1
        %v1437 = vsel %vm1296, %v1434, %v1436
        %v1438 = vrot.slane %v1195, 1
        %v1439 = vsel %vm1296, %v1436, %v1438
        %v1440 = vrot.slane %v1196, 1
        %v1441 = vsel %vm1296, %v1438, %v1440
        %v1442 = vrot.slane %v1197, 1
        %v1443 = vsel %vm1296, %v1440, %v1442
        %v1444 = vrot.slane %v1198, 1
        %v1445 = vsel %vm1296, %v1442, %v1444
        %v1446 = vrot.slane %v1199, 1
        %v1447 = vsel %vm1296, %v1444, %v1446
        %v1448 = vrot.slane %v1200, 1
        %v1449 = vsel %vm1296, %v1446, %v1448
        %v1450 = vrot.slane %v1201, 1
        %v1451 = vsel %vm1296, %v1448, %v1450
        %vm1452 = vcmask 261120
        %v1453 = vsel %vm1452, %v1299, 0
        %v1455 = vsel %vm1452, %v1301, 0
        %v1457 = vsel %vm1452, %v1303, 0
        %v1459 = vsel %vm1452, %v1305, 0
        %v1461 = vsel %vm1452, %v1307, 0
        %v1463 = vsel %vm1452, %v1309, 0
        %v1465 = vsel %vm1452, %v1311, 0
        %v1467 = vsel %vm1452, %v1313, 0
        %v1469 = vsel %vm1452, %v1315, 0
        %v1471 = vsel %vm1452, %v1317, 0
        %v1473 = vsel %vm1452, %v1319, 0
        %v1475 = vsel %vm1452, %v1321, 0
        %v1477 = vsel %vm1452, %v1323, 0
        %v1479 = vsel %vm1452, %v1325, 0
        %v1481 = vsel %vm1452, %v1327, 0
        %v1483 = vsel %vm1452, %v1329, 0
        %v1485 = vsel %vm1452, %v1331, 0
        %v1487 = vsel %vm1452, %v1333, 0
        %v1489 = vsel %vm1452, %v1335, 0
        %v1491 = vsel %vm1452, %v1337, 0
        %v1493 = vsel %vm1452, %v1339, 0
        %v1495 = vsel %vm1452, %v1341, 0
        %v1497 = vsel %vm1452, %v1343, 0
        %v1499 = vsel %vm1452, %v1345, 0
        %v1501 = vsel %vm1452, %v1347, 0
        %v1503 = vsel %vm1452, %v1349, 0
        %v1505 = vsel %vm1452, %v1351, 0
        %v1507 = vsel %vm1452, %v1353, 0
        %v1509 = vsel %vm1452, %v1355, 0
        %v1511 = vsel %vm1452, %v1357, 0
        %v1513 = vsel %vm1452, %v1359, 0
        %v1515 = vsel %vm1452, %v1361, 0
        %v1517 = vsel %vm1452, %v1363, 0
        %v1519 = vsel %vm1452, %v1365, 0
        %v1521 = vsel %vm1452, %v1367, 0
        %v1523 = vsel %vm1452, %v1369, 0
        %v1525 = vsel %vm1452, %v1371, 0
        %v1527 = vsel %vm1452, %v1373, 0
        %v1529 = vsel %vm1452, %v1375, 0
        %v1531 = vsel %vm1452, %v1377, 0
        %v1533 = vsel %vm1452, %v1379, 0
        %v1535 = vsel %vm1452, %v1381, 0
        %v1537 = vsel %vm1452, %v1383, 0
        %v1539 = vsel %vm1452, %v1385, 0
        %v1541 = vsel %vm1452, %v1387, 0
        %v1543 = vsel %vm1452, %v1389, 0
        %v1545 = vsel %vm1452, %v1391, 0
        %v1547 = vsel %vm1452, %v1393, 0
        %v1549 = vsel %vm1452, %v1395, 0
        %v1551 = vsel %vm1452, %v1397, 0
        %v1553 = vsel %vm1452, %v1399, 0
        %v1555 = vsel %vm1452, %v1401, 0
        %v1557 = vsel %vm1452, %v1403, 0
        %v1559 = vsel %vm1452, %v1405, 0
        %v1561 = vsel %vm1452, %v1407, 0
        %v1563 = vsel %vm1452, %v1409, 0
        %v1565 = vsel %vm1452, %v1411, 0
        %v1567 = vsel %vm1452, %v1413, 0
        %v1569 = vsel %vm1452, %v1415, 0
        %v1571 = vsel %vm1452, %v1417, 0
        %v1573 = vsel %vm1452, %v1419, 0
        %v1575 = vsel %vm1452, %v1421, 0
        %v1577 = vsel %vm1452, %v1423, 0
        %v1579 = vsel %vm1452, %v1425, 0
        %v1581 = vsel %vm1452, %v1427, 0
        %v1583 = vsel %vm1452, %v1429, 0
        %v1585 = vsel %vm1452, %v1431, 0
        %v1587 = vsel %vm1452, %v1433, 0
        %v1589 = vsel %vm1452, %v1435, 0
        %v1591 = vsel %vm1452, %v1437, 0
        %v1593 = vsel %vm1452, %v1439, 0
        %v1595 = vsel %vm1452, %v1441, 0
        %v1597 = vsel %vm1452, %v1443, 0
        %v1599 = vsel %vm1452, %v1445, 0
        %v1601 = vsel %vm1452, %v1447, 0
        %v1603 = vsel %vm1452, %v1449, 0
        %v1605 = vsel %vm1452, %v1451, 0
        %v1607 = vsel %vm1452, %v1450, 0
        %1609 = vmatprep.subr.mxu0 0.0
        %1610 = vmatpush1.msra.mxu0 %v1214
        %1611 = vmatprep.subr.mxu0 0.0
        %1612 = vmatpush1.msra.mxu0 %v1215
        %1613 = vmatprep.subr.mxu0 0.0
        %1614 = vmatpush1.msra.mxu0 %v1216
        %1615 = vmatprep.subr.mxu0 0.0
        %1616 = vmatpush1.msra.mxu0 %v1217
        %1617 = vmatprep.subr.mxu0 0.0
        %1618 = vmatpush1.msra.mxu0 0.0
        %1619 = vmatprep.subr.mxu0 0.0
        %1620 = vmatpush1.msra.mxu0 0.0
        %1621 = vmatprep.subr.mxu0 0.0
        %1622 = vmatpush1.msra.mxu0 0.0
        %1623 = vmatprep.subr.mxu0 0.0
        %1624 = vmatpush1.msra.mxu0 0.0
        %1625 = vmatprep.subr.mxu0 0.0
        %1626 = vmatpush1.msra.mxu0 0.0
        %1627 = vmatprep.subr.mxu0 0.0
        %1628 = vmatpush1.msra.mxu0 0.0
        %1629 = vmatprep.subr.mxu0 0.0
        %1630 = vmatpush1.msra.mxu0 0.0
        %1631 = vmatprep.subr.mxu0 0.0
        %1632 = vmatpush1.msra.mxu0 0.0
        %1633 = vmatprep.subr.mxu0 0.0
        %1634 = vmatpush1.msra.mxu0 0.0
        %1635 = vmatprep.subr.mxu0 0.0
        %1636 = vmatpush1.msra.mxu0 0.0
        %1637 = vmatprep.subr.mxu0 0.0
        %1638 = vmatpush1.msra.mxu0 0.0
        %1639 = vmatprep.subr.mxu0 0.0
        %1640 = vmatpush1.msra.mxu0 0.0
        %1641 = vmatprep.subr.mxu0 0.0
        %1642 = vmatpush1.msra.mxu0 0.0
        %1643 = vmatprep.subr.mxu0 0.0
        %1644 = vmatpush1.msra.mxu0 0.0
        %1645 = vmatprep.subr.mxu0 0.0
        %1646 = vmatpush1.msra.mxu0 0.0
        %1647 = vmatprep.subr.mxu0 0.0
        %1648 = vmatpush1.msra.mxu0 0.0
        %1649 = vmatprep.subr.mxu0 0.0
        %1650 = vmatpush1.msra.mxu0 0.0
        %1651 = vmatprep.subr.mxu0 0.0
        %1652 = vmatpush1.msra.mxu0 0.0
        %1653 = vmatprep.subr.mxu0 0.0
        %1654 = vmatpush1.msra.mxu0 0.0
        %1655 = vmatprep.subr.mxu0 0.0
        %1656 = vmatpush1.msra.mxu0 0.0
        %1657 = vmatprep.subr.mxu0 0.0
        %1658 = vmatpush1.msra.mxu0 0.0
        %1659 = vmatprep.subr.mxu0 0.0
        %1660 = vmatpush1.msra.mxu0 0.0
        %1661 = vmatprep.subr.mxu0 0.0
        %1662 = vmatpush1.msra.mxu0 0.0
        %1663 = vmatprep.subr.mxu0 0.0
        %1664 = vmatpush1.msra.mxu0 0.0
        %1665 = vmatprep.subr.mxu0 0.0
        %1666 = vmatpush1.msra.mxu0 0.0
        %1667 = vmatprep.subr.mxu0 0.0
        %1668 = vmatpush1.msra.mxu0 0.0
        %1669 = vmatprep.subr.mxu0 0.0
        %1670 = vmatpush1.msra.mxu0 0.0
        %1671 = vmatprep.subr.mxu0 0.0
        %1672 = vmatpush1.msra.mxu0 0.0
        %1673 = vmatprep.mubr.f32.mxu0 0.0
        %1674 = vmatmul.mubr.f32.gmra.mrb[0].mxu0 %v1453
        %v1675 = vpop.f32.mrb[0].mxu0
        %v1676 = vadd.f32 0.0, %v1675
        %v1677 = vpop.f32.mrb[0].mxu0
        %1678 = vmatprep.mubr.f32.mxu0 0.0
        %1679 = vmatmul.mubr.f32.gmra.mrb[0].mxu0 %v1455
        %v1680 = vpop.f32.mrb[0].mxu0
        %v1681 = vadd.f32 0.0, %v1680
        %v1682 = vpop.f32.mrb[0].mxu0
        %1683 = vmatprep.mubr.f32.mxu0 0.0
        %1684 = vmatmul.mubr.f32.gmra.mrb[0].mxu0 %v1457
        %v1685 = vpop.f32.mrb[0].mxu0
        %v1686 = vadd.f32 0.0, %v1685
        %v1687 = vpop.f32.mrb[0].mxu0
        %1688 = vmatprep.mubr.f32.mxu0 0.0
        %1689 = vmatmul.mubr.f32.gmra.mrb[0].mxu0 %v1459
        %v1690 = vpop.f32.mrb[0].mxu0
        %v1691 = vadd.f32 0.0, %v1690
        %v1692 = vpop.f32.mrb[0].mxu0
        %1693 = vmatprep.mubr.f32.mxu0 0.0
        %1694 = vmatmul.mubr.f32.gmra.mrb[0].mxu0 %v1461
        %v1695 = vpop.f32.mrb[0].mxu0
        %v1696 = vadd.f32 0.0, %v1695
        %v1697 = vpop.f32.mrb[0].mxu0
        %1698 = vmatprep.mubr.f32.mxu0 0.0
        %1699 = vmatmul.mubr.f32.gmra.mrb[0].mxu0 %v1463
        %v1700 = vpop.f32.mrb[0].mxu0
        %v1701 = vadd.f32 0.0, %v1700
        %v1702 = vpop.f32.mrb[0].mxu0
        %1703 = vmatprep.mubr.f32.mxu0 0.0
        %1704 = vmatmul.mubr.f32.gmra.mrb[0].mxu0 %v1465
        %v1705 = vpop.f32.mrb[0].mxu0
        %v1706 = vadd.f32 0.0, %v1705
        %v1707 = vpop.f32.mrb[0].mxu0
        %1708 = vmatprep.mubr.f32.mxu0 0.0
        %1709 = vmatmul.mubr.f32.gmra.mrb[0].mxu0 %v1467
        %v1710 = vpop.f32.mrb[0].mxu0
        %v1711 = vadd.f32 0.0, %v1710
        %v1712 = vpop.f32.mrb[0].mxu0
        %1713 = vmatprep.mubr.f32.mxu0 0.0
        %1714 = vmatmul.mubr.f32.gmra.mrb[0].mxu0 %v1469
        %v1715 = vpop.f32.mrb[0].mxu0
        %v1716 = vadd.f32 0.0, %v1715
        %v1717 = vpop.f32.mrb[0].mxu0
        %1718 = vmatprep.mubr.f32.mxu0 0.0
        %1719 = vmatmul.mubr.f32.gmra.mrb[0].mxu0 %v1471
        %v1720 = vpop.f32.mrb[0].mxu0
        %v1721 = vadd.f32 0.0, %v1720
        %v1722 = vpop.f32.mrb[0].mxu0
        %1723 = vmatprep.mubr.f32.mxu0 0.0
        %1724 = vmatmul.mubr.f32.gmra.mrb[0].mxu0 %v1473
        %v1725 = vpop.f32.mrb[0].mxu0
        %v1726 = vadd.f32 0.0, %v1725
        %v1727 = vpop.f32.mrb[0].mxu0
        %1728 = vmatprep.mubr.f32.mxu0 0.0
        %1729 = vmatmul.mubr.f32.gmra.mrb[0].mxu0 %v1475
        %v1730 = vpop.f32.mrb[0].mxu0
        %v1731 = vadd.f32 0.0, %v1730
        %v1732 = vpop.f32.mrb[0].mxu0
        %1733 = vmatprep.mubr.f32.mxu0 0.0
        %1734 = vmatmul.mubr.f32.gmra.mrb[0].mxu0 %v1477
        %v1735 = vpop.f32.mrb[0].mxu0
        %v1736 = vadd.f32 0.0, %v1735
        %v1737 = vpop.f32.mrb[0].mxu0
        %1738 = vmatprep.mubr.f32.mxu0 0.0
        %1739 = vmatmul.mubr.f32.gmra.mrb[0].mxu0 %v1479
        %v1740 = vpop.f32.mrb[0].mxu0
        %v1741 = vadd.f32 0.0, %v1740
        %v1742 = vpop.f32.mrb[0].mxu0
        %1743 = vmatprep.mubr.f32.mxu0 0.0
        %1744 = vmatmul.mubr.f32.gmra.mrb[0].mxu0 %v1481
        %v1745 = vpop.f32.mrb[0].mxu0
        %v1746 = vadd.f32 0.0, %v1745
        %v1747 = vpop.f32.mrb[0].mxu0
        %1748 = vmatprep.mubr.f32.mxu0 0.0
        %1749 = vmatmul.mubr.f32.gmra.mrb[0].mxu0 %v1483
        %v1750 = vpop.f32.mrb[0].mxu0
        %v1751 = vadd.f32 0.0, %v1750
        %v1752 = vpop.f32.mrb[0].mxu0
        %1753 = vmatprep.mubr.f32.mxu0 0.0
        %1754 = vmatmul.mubr.f32.gmra.mrb[0].mxu0 %v1485
        %v1755 = vpop.f32.mrb[0].mxu0
        %v1756 = vadd.f32 0.0, %v1755
        %v1757 = vpop.f32.mrb[0].mxu0
        %1758 = vmatprep.mubr.f32.mxu0 0.0
        %1759 = vmatmul.mubr.f32.gmra.mrb[0].mxu0 %v1487
        %v1760 = vpop.f32.mrb[0].mxu0
        %v1761 = vadd.f32 0.0, %v1760
        %v1762 = vpop.f32.mrb[0].mxu0
        %1763 = vmatprep.mubr.f32.mxu0 0.0
        %1764 = vmatmul.mubr.f32.gmra.mrb[0].mxu0 %v1489
        %v1765 = vpop.f32.mrb[0].mxu0
        %v1766 = vadd.f32 0.0, %v1765
        %v1767 = vpop.f32.mrb[0].mxu0
        %1768 = vmatprep.mubr.f32.mxu0 0.0
        %1769 = vmatmul.mubr.f32.gmra.mrb[0].mxu0 %v1491
        %v1770 = vpop.f32.mrb[0].mxu0
        %v1771 = vadd.f32 0.0, %v1770
        %v1772 = vpop.f32.mrb[0].mxu0
        %1773 = vmatprep.mubr.f32.mxu0 0.0
        %1774 = vmatmul.mubr.f32.gmra.mrb[0].mxu0 %v1493
        %v1775 = vpop.f32.mrb[0].mxu0
        %v1776 = vadd.f32 0.0, %v1775
        %v1777 = vpop.f32.mrb[0].mxu0
        %1778 = vmatprep.mubr.f32.mxu0 0.0
        %1779 = vmatmul.mubr.f32.gmra.mrb[0].mxu0 %v1495
        %v1780 = vpop.f32.mrb[0].mxu0
        %v1781 = vadd.f32 0.0, %v1780
        %v1782 = vpop.f32.mrb[0].mxu0
        %1783 = vmatprep.mubr.f32.mxu0 0.0
        %1784 = vmatmul.mubr.f32.gmra.mrb[0].mxu0 %v1497
        %v1785 = vpop.f32.mrb[0].mxu0
        %v1786 = vadd.f32 0.0, %v1785
        %v1787 = vpop.f32.mrb[0].mxu0
        %1788 = vmatprep.mubr.f32.mxu0 0.0
        %1789 = vmatmul.mubr.f32.gmra.mrb[0].mxu0 %v1499
        %v1790 = vpop.f32.mrb[0].mxu0
        %v1791 = vadd.f32 0.0, %v1790
        %v1792 = vpop.f32.mrb[0].mxu0
        %1793 = vmatprep.mubr.f32.mxu0 0.0
        %1794 = vmatmul.mubr.f32.gmra.mrb[0].mxu0 %v1501
        %v1795 = vpop.f32.mrb[0].mxu0
        %v1796 = vadd.f32 0.0, %v1795
        %v1797 = vpop.f32.mrb[0].mxu0
        %1798 = vmatprep.mubr.f32.mxu0 0.0
        %1799 = vmatmul.mubr.f32.gmra.mrb[0].mxu0 %v1503
        %v1800 = vpop.f32.mrb[0].mxu0
        %v1801 = vadd.f32 0.0, %v1800
        %v1802 = vpop.f32.mrb[0].mxu0
        %1803 = vmatprep.mubr.f32.mxu0 0.0
        %1804 = vmatmul.mubr.f32.gmra.mrb[0].mxu0 %v1505
        %v1805 = vpop.f32.mrb[0].mxu0
        %v1806 = vadd.f32 0.0, %v1805
        %v1807 = vpop.f32.mrb[0].mxu0
        %1808 = vmatprep.mubr.f32.mxu0 0.0
        %1809 = vmatmul.mubr.f32.gmra.mrb[0].mxu0 %v1507
        %v1810 = vpop.f32.mrb[0].mxu0
        %v1811 = vadd.f32 0.0, %v1810
        %v1812 = vpop.f32.mrb[0].mxu0
        %1813 = vmatprep.mubr.f32.mxu0 0.0
        %1814 = vmatmul.mubr.f32.gmra.mrb[0].mxu0 %v1509
        %v1815 = vpop.f32.mrb[0].mxu0
        %v1816 = vadd.f32 0.0, %v1815
        %v1817 = vpop.f32.mrb[0].mxu0
        %1818 = vmatprep.mubr.f32.mxu0 0.0
        %1819 = vmatmul.mubr.f32.gmra.mrb[0].mxu0 %v1511
        %v1820 = vpop.f32.mrb[0].mxu0
        %v1821 = vadd.f32 0.0, %v1820
        %v1822 = vpop.f32.mrb[0].mxu0
        %1823 = vmatprep.mubr.f32.mxu0 0.0
        %1824 = vmatmul.mubr.f32.gmra.mrb[0].mxu0 %v1513
        %v1825 = vpop.f32.mrb[0].mxu0
        %v1826 = vadd.f32 0.0, %v1825
        %v1827 = vpop.f32.mrb[0].mxu0
        %1828 = vmatprep.mubr.f32.mxu0 0.0
        %1829 = vmatmul.mubr.f32.gmra.mrb[0].mxu0 %v1515
        %v1830 = vpop.f32.mrb[0].mxu0
        %v1831 = vadd.f32 0.0, %v1830
        %v1832 = vpop.f32.mrb[0].mxu0
        %1833 = vmatprep.mubr.f32.mxu0 0.0
        %1834 = vmatmul.mubr.f32.gmra.mrb[0].mxu0 %v1517
        %v1835 = vpop.f32.mrb[0].mxu0
        %v1836 = vadd.f32 0.0, %v1835
        %v1837 = vpop.f32.mrb[0].mxu0
        %1838 = vmatprep.mubr.f32.mxu0 0.0
        %1839 = vmatmul.mubr.f32.gmra.mrb[0].mxu0 %v1519
        %v1840 = vpop.f32.mrb[0].mxu0
        %v1841 = vadd.f32 0.0, %v1840
        %v1842 = vpop.f32.mrb[0].mxu0
        %1843 = vmatprep.mubr.f32.mxu0 0.0
        %1844 = vmatmul.mubr.f32.gmra.mrb[0].mxu0 %v1521
        %v1845 = vpop.f32.mrb[0].mxu0
        %v1846 = vadd.f32 0.0, %v1845
        %v1847 = vpop.f32.mrb[0].mxu0
        %1848 = vmatprep.mubr.f32.mxu0 0.0
        %1849 = vmatmul.mubr.f32.gmra.mrb[0].mxu0 %v1523
        %v1850 = vpop.f32.mrb[0].mxu0
        %v1851 = vadd.f32 0.0, %v1850
        %v1852 = vpop.f32.mrb[0].mxu0
        %1853 = vmatprep.mubr.f32.mxu0 0.0
        %1854 = vmatmul.mubr.f32.gmra.mrb[0].mxu0 %v1525
        %v1855 = vpop.f32.mrb[0].mxu0
        %v1856 = vadd.f32 0.0, %v1855
        %v1857 = vpop.f32.mrb[0].mxu0
        %1858 = vmatprep.mubr.f32.mxu0 0.0
        %1859 = vmatmul.mubr.f32.gmra.mrb[0].mxu0 %v1527
        %v1860 = vpop.f32.mrb[0].mxu0
        %v1861 = vadd.f32 0.0, %v1860
        %v1862 = vpop.f32.mrb[0].mxu0
        %1863 = vmatprep.mubr.f32.mxu0 0.0
        %1864 = vmatmul.mubr.f32.gmra.mrb[0].mxu0 %v1529
        %v1865 = vpop.f32.mrb[0].mxu0
        %v1866 = vadd.f32 0.0, %v1865
        %v1867 = vpop.f32.mrb[0].mxu0
        %1868 = vmatprep.mubr.f32.mxu0 0.0
        %1869 = vmatmul.mubr.f32.gmra.mrb[0].mxu0 %v1531
        %v1870 = vpop.f32.mrb[0].mxu0
        %v1871 = vadd.f32 0.0, %v1870
        %v1872 = vpop.f32.mrb[0].mxu0
        %1873 = vmatprep.mubr.f32.mxu0 0.0
        %1874 = vmatmul.mubr.f32.gmra.mrb[0].mxu0 %v1533
        %v1875 = vpop.f32.mrb[0].mxu0
        %v1876 = vadd.f32 0.0, %v1875
        %v1877 = vpop.f32.mrb[0].mxu0
        %1878 = vmatprep.mubr.f32.mxu0 0.0
        %1879 = vmatmul.mubr.f32.gmra.mrb[0].mxu0 %v1535
        %v1880 = vpop.f32.mrb[0].mxu0
        %v1881 = vadd.f32 0.0, %v1880
        %v1882 = vpop.f32.mrb[0].mxu0
        %1883 = vmatprep.mubr.f32.mxu0 0.0
        %1884 = vmatmul.mubr.f32.gmra.mrb[0].mxu0 %v1537
        %v1885 = vpop.f32.mrb[0].mxu0
        %v1886 = vadd.f32 0.0, %v1885
        %v1887 = vpop.f32.mrb[0].mxu0
        %1888 = vmatprep.mubr.f32.mxu0 0.0
        %1889 = vmatmul.mubr.f32.gmra.mrb[0].mxu0 %v1539
        %v1890 = vpop.f32.mrb[0].mxu0
        %v1891 = vadd.f32 0.0, %v1890
        %v1892 = vpop.f32.mrb[0].mxu0
        %1893 = vmatprep.mubr.f32.mxu0 0.0
        %1894 = vmatmul.mubr.f32.gmra.mrb[0].mxu0 %v1541
        %v1895 = vpop.f32.mrb[0].mxu0
        %v1896 = vadd.f32 0.0, %v1895
        %v1897 = vpop.f32.mrb[0].mxu0
        %1898 = vmatprep.mubr.f32.mxu0 0.0
        %1899 = vmatmul.mubr.f32.gmra.mrb[0].mxu0 %v1543
        %v1900 = vpop.f32.mrb[0].mxu0
        %v1901 = vadd.f32 0.0, %v1900
        %v1902 = vpop.f32.mrb[0].mxu0
        %1903 = vmatprep.mubr.f32.mxu0 0.0
        %1904 = vmatmul.mubr.f32.gmra.mrb[0].mxu0 %v1545
        %v1905 = vpop.f32.mrb[0].mxu0
        %v1906 = vadd.f32 0.0, %v1905
        %v1907 = vpop.f32.mrb[0].mxu0
        %1908 = vmatprep.mubr.f32.mxu0 0.0
        %1909 = vmatmul.mubr.f32.gmra.mrb[0].mxu0 %v1547
        %v1910 = vpop.f32.mrb[0].mxu0
        %v1911 = vadd.f32 0.0, %v1910
        %v1912 = vpop.f32.mrb[0].mxu0
        %1913 = vmatprep.mubr.f32.mxu0 0.0
        %1914 = vmatmul.mubr.f32.gmra.mrb[0].mxu0 %v1549
        %v1915 = vpop.f32.mrb[0].mxu0
        %v1916 = vadd.f32 0.0, %v1915
        %v1917 = vpop.f32.mrb[0].mxu0
        %1918 = vmatprep.mubr.f32.mxu0 0.0
        %1919 = vmatmul.mubr.f32.gmra.mrb[0].mxu0 %v1551
        %v1920 = vpop.f32.mrb[0].mxu0
        %v1921 = vadd.f32 0.0, %v1920
        %v1922 = vpop.f32.mrb[0].mxu0
        %1923 = vmatprep.mubr.f32.mxu0 0.0
        %1924 = vmatmul.mubr.f32.gmra.mrb[0].mxu0 %v1553
        %v1925 = vpop.f32.mrb[0].mxu0
        %v1926 = vadd.f32 0.0, %v1925
        %v1927 = vpop.f32.mrb[0].mxu0
        %1928 = vmatprep.mubr.f32.mxu0 0.0
        %1929 = vmatmul.mubr.f32.gmra.mrb[0].mxu0 %v1555
        %v1930 = vpop.f32.mrb[0].mxu0
        %v1931 = vadd.f32 0.0, %v1930
        %v1932 = vpop.f32.mrb[0].mxu0
        %1933 = vmatprep.mubr.f32.mxu0 0.0
        %1934 = vmatmul.mubr.f32.gmra.mrb[0].mxu0 %v1557
        %v1935 = vpop.f32.mrb[0].mxu0
        %v1936 = vadd.f32 0.0, %v1935
        %v1937 = vpop.f32.mrb[0].mxu0
        %1938 = vmatprep.mubr.f32.mxu0 0.0
        %1939 = vmatmul.mubr.f32.gmra.mrb[0].mxu0 %v1559
        %v1940 = vpop.f32.mrb[0].mxu0
        %v1941 = vadd.f32 0.0, %v1940
        %v1942 = vpop.f32.mrb[0].mxu0
        %1943 = vmatprep.mubr.f32.mxu0 0.0
        %1944 = vmatmul.mubr.f32.gmra.mrb[0].mxu0 %v1561
        %v1945 = vpop.f32.mrb[0].mxu0
        %v1946 = vadd.f32 0.0, %v1945
        %v1947 = vpop.f32.mrb[0].mxu0
        %1948 = vmatprep.mubr.f32.mxu0 0.0
        %1949 = vmatmul.mubr.f32.gmra.mrb[0].mxu0 %v1563
        %v1950 = vpop.f32.mrb[0].mxu0
        %v1951 = vadd.f32 0.0, %v1950
        %v1952 = vpop.f32.mrb[0].mxu0
        %1953 = vmatprep.mubr.f32.mxu0 0.0
        %1954 = vmatmul.mubr.f32.gmra.mrb[0].mxu0 %v1565
        %v1955 = vpop.f32.mrb[0].mxu0
        %v1956 = vadd.f32 0.0, %v1955
        %v1957 = vpop.f32.mrb[0].mxu0
        %1958 = vmatprep.mubr.f32.mxu0 0.0
        %1959 = vmatmul.mubr.f32.gmra.mrb[0].mxu0 %v1567
        %v1960 = vpop.f32.mrb[0].mxu0
        %v1961 = vadd.f32 0.0, %v1960
        %v1962 = vpop.f32.mrb[0].mxu0
        %1963 = vmatprep.mubr.f32.mxu0 0.0
        %1964 = vmatmul.mubr.f32.gmra.mrb[0].mxu0 %v1569
        %v1965 = vpop.f32.mrb[0].mxu0
        %v1966 = vadd.f32 0.0, %v1965
        %v1967 = vpop.f32.mrb[0].mxu0
        %1968 = vmatprep.mubr.f32.mxu0 0.0
        %1969 = vmatmul.mubr.f32.gmra.mrb[0].mxu0 %v1571
        %v1970 = vpop.f32.mrb[0].mxu0
        %v1971 = vadd.f32 0.0, %v1970
        %v1972 = vpop.f32.mrb[0].mxu0
        %1973 = vmatprep.mubr.f32.mxu0 0.0
        %1974 = vmatmul.mubr.f32.gmra.mrb[0].mxu0 %v1573
        %v1975 = vpop.f32.mrb[0].mxu0
        %v1976 = vadd.f32 0.0, %v1975
        %v1977 = vpop.f32.mrb[0].mxu0
        %1978 = vmatprep.mubr.f32.mxu0 0.0
        %1979 = vmatmul.mubr.f32.gmra.mrb[0].mxu0 %v1575
        %v1980 = vpop.f32.mrb[0].mxu0
        %v1981 = vadd.f32 0.0, %v1980
        %v1982 = vpop.f32.mrb[0].mxu0
        %1983 = vmatprep.mubr.f32.mxu0 0.0
        %1984 = vmatmul.mubr.f32.gmra.mrb[0].mxu0 %v1577
        %v1985 = vpop.f32.mrb[0].mxu0
        %v1986 = vadd.f32 0.0, %v1985
        %v1987 = vpop.f32.mrb[0].mxu0
        %1988 = vmatprep.mubr.f32.mxu0 0.0
        %1989 = vmatmul.mubr.f32.gmra.mrb[0].mxu0 %v1579
        %v1990 = vpop.f32.mrb[0].mxu0
        %v1991 = vadd.f32 0.0, %v1990
        %v1992 = vpop.f32.mrb[0].mxu0
        %1993 = vmatprep.mubr.f32.mxu0 0.0
        %1994 = vmatmul.mubr.f32.gmra.mrb[0].mxu0 %v1581
        %v1995 = vpop.f32.mrb[0].mxu0
        %v1996 = vadd.f32 0.0, %v1995
        %v1997 = vpop.f32.mrb[0].mxu0
        %1998 = vmatprep.mubr.f32.mxu0 0.0
        %1999 = vmatmul.mubr.f32.gmra.mrb[0].mxu0 %v1583
        %v2000 = vpop.f32.mrb[0].mxu0
        %v2001 = vadd.f32 0.0, %v2000
        %v2002 = vpop.f32.mrb[0].mxu0
        %2003 = vmatprep.mubr.f32.mxu0 0.0
        %2004 = vmatmul.mubr.f32.gmra.mrb[0].mxu0 %v1585
        %v2005 = vpop.f32.mrb[0].mxu0
        %v2006 = vadd.f32 0.0, %v2005
        %v2007 = vpop.f32.mrb[0].mxu0
        %2008 = vmatprep.mubr.f32.mxu0 0.0
        %2009 = vmatmul.mubr.f32.gmra.mrb[0].mxu0 %v1587
        %v2010 = vpop.f32.mrb[0].mxu0
        %v2011 = vadd.f32 0.0, %v2010
        %v2012 = vpop.f32.mrb[0].mxu0
        %2013 = vmatprep.mubr.f32.mxu0 0.0
        %2014 = vmatmul.mubr.f32.gmra.mrb[0].mxu0 %v1589
        %v2015 = vpop.f32.mrb[0].mxu0
        %v2016 = vadd.f32 0.0, %v2015
        %v2017 = vpop.f32.mrb[0].mxu0
        %2018 = vmatprep.mubr.f32.mxu0 0.0
        %2019 = vmatmul.mubr.f32.gmra.mrb[0].mxu0 %v1591
        %v2020 = vpop.f32.mrb[0].mxu0
        %v2021 = vadd.f32 0.0, %v2020
        %v2022 = vpop.f32.mrb[0].mxu0
        %2023 = vmatprep.mubr.f32.mxu0 0.0
        %2024 = vmatmul.mubr.f32.gmra.mrb[0].mxu0 %v1593
        %v2025 = vpop.f32.mrb[0].mxu0
        %v2026 = vadd.f32 0.0, %v2025
        %v2027 = vpop.f32.mrb[0].mxu0
        %2028 = vmatprep.mubr.f32.mxu0 0.0
        %2029 = vmatmul.mubr.f32.gmra.mrb[0].mxu0 %v1595
        %v2030 = vpop.f32.mrb[0].mxu0
        %v2031 = vadd.f32 0.0, %v2030
        %v2032 = vpop.f32.mrb[0].mxu0
        %2033 = vmatprep.mubr.f32.mxu0 0.0
        %2034 = vmatmul.mubr.f32.gmra.mrb[0].mxu0 %v1597
        %v2035 = vpop.f32.mrb[0].mxu0
        %v2036 = vadd.f32 0.0, %v2035
        %v2037 = vpop.f32.mrb[0].mxu0
        %2038 = vmatprep.mubr.f32.mxu0 0.0
        %2039 = vmatmul.mubr.f32.gmra.mrb[0].mxu0 %v1599
        %v2040 = vpop.f32.mrb[0].mxu0
        %v2041 = vadd.f32 0.0, %v2040
        %v2042 = vpop.f32.mrb[0].mxu0
        %2043 = vmatprep.mubr.f32.mxu0 0.0
        %2044 = vmatmul.mubr.f32.gmra.mrb[0].mxu0 %v1601
        %v2045 = vpop.f32.mrb[0].mxu0
        %v2046 = vadd.f32 0.0, %v2045
        %v2047 = vpop.f32.mrb[0].mxu0
        %2048 = vmatprep.mubr.f32.mxu0 0.0
        %2049 = vmatmul.mubr.f32.gmra.mrb[0].mxu0 %v1603
        %v2050 = vpop.f32.mrb[0].mxu0
        %v2051 = vadd.f32 0.0, %v2050
        %v2052 = vpop.f32.mrb[0].mxu0
        %2053 = vmatprep.mubr.f32.mxu0 0.0
        %2054 = vmatmul.mubr.f32.gmra.mrb[0].mxu0 %v1605
        %v2055 = vpop.f32.mrb[0].mxu0
        %v2056 = vadd.f32 0.0, %v2055
        %v2057 = vpop.f32.mrb[0].mxu0
        %2058 = vmatprep.mubr.f32.mxu0 0.0
        %2059 = vmatmul.mubr.f32.gmra.mrb[0].mxu0 %v1607
        %v2060 = vpop.f32.mrb[0].mxu0
        %v2061 = vadd.f32 0.0, %v2060
        %v2062 = vpop.f32.mrb[0].mxu0
        %2063 = vdwg.mxu0
        %v2064 = vsel %vm1452, %v1124, 0
        %v2066 = vsel %vm1452, %v1125, 0
        %v2068 = vsel %vm1452, %v1126, 0
        %v2070 = vsel %vm1452, %v1127, 0
        %v2072 = vsel %vm1452, %v1128, 0
        %v2074 = vsel %vm1452, %v1129, 0
        %v2076 = vsel %vm1452, %v1130, 0
        %v2078 = vsel %vm1452, %v1131, 0
        %v2080 = vsel %vm1452, %v1132, 0
        %v2082 = vsel %vm1452, %v1133, 0
        %v2084 = vsel %vm1452, %v1134, 0
        %v2086 = vsel %vm1452, %v1135, 0
        %v2088 = vsel %vm1452, %v1136, 0
        %v2090 = vsel %vm1452, %v1137, 0
        %v2092 = vsel %vm1452, %v1138, 0
        %v2094 = vsel %vm1452, %v1139, 0
        %v2096 = vsel %vm1452, %v1140, 0
        %v2098 = vsel %vm1452, %v1141, 0
        %v2100 = vsel %vm1452, %v1142, 0
        %v2102 = vsel %vm1452, %v1143, 0
        %v2104 = vsel %vm1452, %v1144, 0
        %v2106 = vsel %vm1452, %v1145, 0
        %v2108 = vsel %vm1452, %v1146, 0
        %v2110 = vsel %vm1452, %v1147, 0
        %v2112 = vsel %vm1452, %v1148, 0
        %v2114 = vsel %vm1452, %v1149, 0
        %v2116 = vsel %vm1452, %v1150, 0
        %v2118 = vsel %vm1452, %v1151, 0
        %v2120 = vsel %vm1452, %v1152, 0
        %v2122 = vsel %vm1452, %v1153, 0
        %v2124 = vsel %vm1452, %v1154, 0
        %v2126 = vsel %vm1452, %v1155, 0
        %v2128 = vsel %vm1452, %v1156, 0
        %v2130 = vsel %vm1452, %v1157, 0
        %v2132 = vsel %vm1452, %v1158, 0
        %v2134 = vsel %vm1452, %v1159, 0
        %v2136 = vsel %vm1452, %v1160, 0
        %v2138 = vsel %vm1452, %v1161, 0
        %v2140 = vsel %vm1452, %v1162, 0
        %v2142 = vsel %vm1452, %v1163, 0
        %v2144 = vsel %vm1452, %v1164, 0
        %v2146 = vsel %vm1452, %v1165, 0
        %v2148 = vsel %vm1452, %v1166, 0
        %v2150 = vsel %vm1452, %v1167, 0
        %v2152 = vsel %vm1452, %v1168, 0
        %v2154 = vsel %vm1452, %v1169, 0
        %v2156 = vsel %vm1452, %v1170, 0
        %v2158 = vsel %vm1452, %v1171, 0
        %v2160 = vsel %vm1452, %v1172, 0
        %v2162 = vsel %vm1452, %v1173, 0
        %v2164 = vsel %vm1452, %v1174, 0
        %v2166 = vsel %vm1452, %v1175, 0
        %v2168 = vsel %vm1452, %v1176, 0
        %v2170 = vsel %vm1452, %v1177, 0
        %v2172 = vsel %vm1452, %v1178, 0
        %v2174 = vsel %vm1452, %v1179, 0
        %v2176 = vsel %vm1452, %v1180, 0
        %v2178 = vsel %vm1452, %v1181, 0
        %v2180 = vsel %vm1452, %v1182, 0
        %v2182 = vsel %vm1452, %v1183, 0
        %v2184 = vsel %vm1452, %v1184, 0
        %v2186 = vsel %vm1452, %v1185, 0
        %v2188 = vsel %vm1452, %v1186, 0
        %v2190 = vsel %vm1452, %v1187, 0
        %v2192 = vsel %vm1452, %v1188, 0
        %v2194 = vsel %vm1452, %v1189, 0
        %v2196 = vsel %vm1452, %v1190, 0
        %v2198 = vsel %vm1452, %v1191, 0
        %v2200 = vsel %vm1452, %v1192, 0
        %v2202 = vsel %vm1452, %v1193, 0
        %v2204 = vsel %vm1452, %v1194, 0
        %v2206 = vsel %vm1452, %v1195, 0
        %v2208 = vsel %vm1452, %v1196, 0
        %v2210 = vsel %vm1452, %v1197, 0
        %v2212 = vsel %vm1452, %v1198, 0
        %v2214 = vsel %vm1452, %v1199, 0
        %v2216 = vsel %vm1452, %v1200, 0
        %v2218 = vsel %vm1452, %v1201, 0
        %2220 = vmatprep.subr.mxu0 0.0
        %2221 = vmatpush1.msra.mxu0 %v1209
        %2222 = vmatprep.subr.mxu0 0.0
        %2223 = vmatpush1.msra.mxu0 %v1210
        %2224 = vmatprep.subr.mxu0 0.0
        %2225 = vmatpush1.msra.mxu0 %v1211
        %2226 = vmatprep.subr.mxu0 0.0
        %2227 = vmatpush1.msra.mxu0 %v1212
        %2228 = vmatprep.subr.mxu0 0.0
        %2229 = vmatpush1.msra.mxu0 0.0
        %2230 = vmatprep.subr.mxu0 0.0
        %2231 = vmatpush1.msra.mxu0 0.0
        %2232 = vmatprep.subr.mxu0 0.0
        %2233 = vmatpush1.msra.mxu0 0.0
        %2234 = vmatprep.subr.mxu0 0.0
        %2235 = vmatpush1.msra.mxu0 0.0
        %2236 = vmatprep.subr.mxu0 0.0
        %2237 = vmatpush1.msra.mxu0 0.0
        %2238 = vmatprep.subr.mxu0 0.0
        %2239 = vmatpush1.msra.mxu0 0.0
        %2240 = vmatprep.subr.mxu0 0.0
        %2241 = vmatpush1.msra.mxu0 0.0
        %2242 = vmatprep.subr.mxu0 0.0
        %2243 = vmatpush1.msra.mxu0 0.0
        %2244 = vmatprep.subr.mxu0 0.0
        %2245 = vmatpush1.msra.mxu0 0.0
        %2246 = vmatprep.subr.mxu0 0.0
        %2247 = vmatpush1.msra.mxu0 0.0
        %2248 = vmatprep.subr.mxu0 0.0
        %2249 = vmatpush1.msra.mxu0 0.0
        %2250 = vmatprep.subr.mxu0 0.0
        %2251 = vmatpush1.msra.mxu0 0.0
        %2252 = vmatprep.subr.mxu0 0.0
        %2253 = vmatpush1.msra.mxu0 0.0
        %2254 = vmatprep.subr.mxu0 0.0
        %2255 = vmatpush1.msra.mxu0 0.0
        %2256 = vmatprep.subr.mxu0 0.0
        %2257 = vmatpush1.msra.mxu0 0.0
        %2258 = vmatprep.subr.mxu0 0.0
        %2259 = vmatpush1.msra.mxu0 0.0
        %2260 = vmatprep.subr.mxu0 0.0
        %2261 = vmatpush1.msra.mxu0 0.0
        %2262 = vmatprep.subr.mxu0 0.0
        %2263 = vmatpush1.msra.mxu0 0.0
        %2264 = vmatprep.subr.mxu0 0.0
        %2265 = vmatpush1.msra.mxu0 0.0
        %2266 = vmatprep.subr.mxu0 0.0
        %2267 = vmatpush1.msra.mxu0 0.0
        %2268 = vmatprep.subr.mxu0 0.0
        %2269 = vmatpush1.msra.mxu0 0.0
        %2270 = vmatprep.subr.mxu0 0.0
        %2271 = vmatpush1.msra.mxu0 0.0
        %2272 = vmatprep.subr.mxu0 0.0
        %2273 = vmatpush1.msra.mxu0 0.0
        %2274 = vmatprep.subr.mxu0 0.0
        %2275 = vmatpush1.msra.mxu0 0.0
        %2276 = vmatprep.subr.mxu0 0.0
        %2277 = vmatpush1.msra.mxu0 0.0
        %2278 = vmatprep.subr.mxu0 0.0
        %2279 = vmatpush1.msra.mxu0 0.0
        %2280 = vmatprep.subr.mxu0 0.0
        %2281 = vmatpush1.msra.mxu0 0.0
        %2282 = vmatprep.subr.mxu0 0.0
        %2283 = vmatpush1.msra.mxu0 0.0
        %2284 = vmatprep.mubr.f32.mxu0 0.0
        %2285 = vmatmul.mubr.f32.gmra.mrb[0].mxu0 %v2064
        %v2286 = vpop.f32.mrb[0].mxu0
        %v2287 = vadd.f32 %v1676, %v2286
        %v2288 = vpop.f32.mrb[0].mxu0
        %2289 = vmatprep.mubr.f32.mxu0 0.0
        %2290 = vmatmul.mubr.f32.gmra.mrb[0].mxu0 %v2066
        %v2291 = vpop.f32.mrb[0].mxu0
        %v2292 = vadd.f32 %v1681, %v2291
        %v2293 = vpop.f32.mrb[0].mxu0
        %2294 = vmatprep.mubr.f32.mxu0 0.0
        %2295 = vmatmul.mubr.f32.gmra.mrb[0].mxu0 %v2068
        %v2296 = vpop.f32.mrb[0].mxu0
        %v2297 = vadd.f32 %v1686, %v2296
        %v2298 = vpop.f32.mrb[0].mxu0
        %2299 = vmatprep.mubr.f32.mxu0 0.0
        %2300 = vmatmul.mubr.f32.gmra.mrb[0].mxu0 %v2070
        %v2301 = vpop.f32.mrb[0].mxu0
        %v2302 = vadd.f32 %v1691, %v2301
        %v2303 = vpop.f32.mrb[0].mxu0
        %2304 = vmatprep.mubr.f32.mxu0 0.0
        %2305 = vmatmul.mubr.f32.gmra.mrb[0].mxu0 %v2072
        %v2306 = vpop.f32.mrb[0].mxu0
        %v2307 = vadd.f32 %v1696, %v2306
        %v2308 = vpop.f32.mrb[0].mxu0
        %2309 = vmatprep.mubr.f32.mxu0 0.0
        %2310 = vmatmul.mubr.f32.gmra.mrb[0].mxu0 %v2074
        %v2311 = vpop.f32.mrb[0].mxu0
        %v2312 = vadd.f32 %v1701, %v2311
        %v2313 = vpop.f32.mrb[0].mxu0
        %2314 = vmatprep.mubr.f32.mxu0 0.0
        %2315 = vmatmul.mubr.f32.gmra.mrb[0].mxu0 %v2076
        %v2316 = vpop.f32.mrb[0].mxu0
        %v2317 = vadd.f32 %v1706, %v2316
        %v2318 = vpop.f32.mrb[0].mxu0
        %2319 = vmatprep.mubr.f32.mxu0 0.0
        %2320 = vmatmul.mubr.f32.gmra.mrb[0].mxu0 %v2078
        %v2321 = vpop.f32.mrb[0].mxu0
        %v2322 = vadd.f32 %v1711, %v2321
        %v2323 = vpop.f32.mrb[0].mxu0
        %2324 = vmatprep.mubr.f32.mxu0 0.0
        %2325 = vmatmul.mubr.f32.gmra.mrb[0].mxu0 %v2080
        %v2326 = vpop.f32.mrb[0].mxu0
        %v2327 = vadd.f32 %v1716, %v2326
        %v2328 = vpop.f32.mrb[0].mxu0
        %2329 = vmatprep.mubr.f32.mxu0 0.0
        %2330 = vmatmul.mubr.f32.gmra.mrb[0].mxu0 %v2082
        %v2331 = vpop.f32.mrb[0].mxu0
        %v2332 = vadd.f32 %v1721, %v2331
        %v2333 = vpop.f32.mrb[0].mxu0
        %2334 = vmatprep.mubr.f32.mxu0 0.0
        %2335 = vmatmul.mubr.f32.gmra.mrb[0].mxu0 %v2084
        %v2336 = vpop.f32.mrb[0].mxu0
        %v2337 = vadd.f32 %v1726, %v2336
        %v2338 = vpop.f32.mrb[0].mxu0
        %2339 = vmatprep.mubr.f32.mxu0 0.0
        %2340 = vmatmul.mubr.f32.gmra.mrb[0].mxu0 %v2086
        %v2341 = vpop.f32.mrb[0].mxu0
        %v2342 = vadd.f32 %v1731, %v2341
        %v2343 = vpop.f32.mrb[0].mxu0
        %2344 = vmatprep.mubr.f32.mxu0 0.0
        %2345 = vmatmul.mubr.f32.gmra.mrb[0].mxu0 %v2088
        %v2346 = vpop.f32.mrb[0].mxu0
        %v2347 = vadd.f32 %v1736, %v2346
        %v2348 = vpop.f32.mrb[0].mxu0
        %2349 = vmatprep.mubr.f32.mxu0 0.0
        %2350 = vmatmul.mubr.f32.gmra.mrb[0].mxu0 %v2090
        %v2351 = vpop.f32.mrb[0].mxu0
        %v2352 = vadd.f32 %v1741, %v2351
        %v2353 = vpop.f32.mrb[0].mxu0
        %2354 = vmatprep.mubr.f32.mxu0 0.0
        %2355 = vmatmul.mubr.f32.gmra.mrb[0].mxu0 %v2092
        %v2356 = vpop.f32.mrb[0].mxu0
        %v2357 = vadd.f32 %v1746, %v2356
        %v2358 = vpop.f32.mrb[0].mxu0
        %2359 = vmatprep.mubr.f32.mxu0 0.0
        %2360 = vmatmul.mubr.f32.gmra.mrb[0].mxu0 %v2094
        %v2361 = vpop.f32.mrb[0].mxu0
        %v2362 = vadd.f32 %v1751, %v2361
        %v2363 = vpop.f32.mrb[0].mxu0
        %2364 = vmatprep.mubr.f32.mxu0 0.0
        %2365 = vmatmul.mubr.f32.gmra.mrb[0].mxu0 %v2096
        %v2366 = vpop.f32.mrb[0].mxu0
        %v2367 = vadd.f32 %v1756, %v2366
        %v2368 = vpop.f32.mrb[0].mxu0
        %2369 = vmatprep.mubr.f32.mxu0 0.0
        %2370 = vmatmul.mubr.f32.gmra.mrb[0].mxu0 %v2098
        %v2371 = vpop.f32.mrb[0].mxu0
        %v2372 = vadd.f32 %v1761, %v2371
        %v2373 = vpop.f32.mrb[0].mxu0
        %2374 = vmatprep.mubr.f32.mxu0 0.0
        %2375 = vmatmul.mubr.f32.gmra.mrb[0].mxu0 %v2100
        %v2376 = vpop.f32.mrb[0].mxu0
        %v2377 = vadd.f32 %v1766, %v2376
        %v2378 = vpop.f32.mrb[0].mxu0
        %2379 = vmatprep.mubr.f32.mxu0 0.0
        %2380 = vmatmul.mubr.f32.gmra.mrb[0].mxu0 %v2102
        %v2381 = vpop.f32.mrb[0].mxu0
        %v2382 = vadd.f32 %v1771, %v2381
        %v2383 = vpop.f32.mrb[0].mxu0
        %2384 = vmatprep.mubr.f32.mxu0 0.0
        %2385 = vmatmul.mubr.f32.gmra.mrb[0].mxu0 %v2104
        %v2386 = vpop.f32.mrb[0].mxu0
        %v2387 = vadd.f32 %v1776, %v2386
        %v2388 = vpop.f32.mrb[0].mxu0
        %2389 = vmatprep.mubr.f32.mxu0 0.0
        %2390 = vmatmul.mubr.f32.gmra.mrb[0].mxu0 %v2106
        %v2391 = vpop.f32.mrb[0].mxu0
        %v2392 = vadd.f32 %v1781, %v2391
        %v2393 = vpop.f32.mrb[0].mxu0
        %2394 = vmatprep.mubr.f32.mxu0 0.0
        %2395 = vmatmul.mubr.f32.gmra.mrb[0].mxu0 %v2108
        %v2396 = vpop.f32.mrb[0].mxu0
        %v2397 = vadd.f32 %v1786, %v2396
        %v2398 = vpop.f32.mrb[0].mxu0
        %2399 = vmatprep.mubr.f32.mxu0 0.0
        %2400 = vmatmul.mubr.f32.gmra.mrb[0].mxu0 %v2110
        %v2401 = vpop.f32.mrb[0].mxu0
        %v2402 = vadd.f32 %v1791, %v2401
        %v2403 = vpop.f32.mrb[0].mxu0
        %2404 = vmatprep.mubr.f32.mxu0 0.0
        %2405 = vmatmul.mubr.f32.gmra.mrb[0].mxu0 %v2112
        %v2406 = vpop.f32.mrb[0].mxu0
        %v2407 = vadd.f32 %v1796, %v2406
        %v2408 = vpop.f32.mrb[0].mxu0
        %2409 = vmatprep.mubr.f32.mxu0 0.0
        %2410 = vmatmul.mubr.f32.gmra.mrb[0].mxu0 %v2114
        %v2411 = vpop.f32.mrb[0].mxu0
        %v2412 = vadd.f32 %v1801, %v2411
        %v2413 = vpop.f32.mrb[0].mxu0
        %2414 = vmatprep.mubr.f32.mxu0 0.0
        %2415 = vmatmul.mubr.f32.gmra.mrb[0].mxu0 %v2116
        %v2416 = vpop.f32.mrb[0].mxu0
        %v2417 = vadd.f32 %v1806, %v2416
        %v2418 = vpop.f32.mrb[0].mxu0
        %2419 = vmatprep.mubr.f32.mxu0 0.0
        %2420 = vmatmul.mubr.f32.gmra.mrb[0].mxu0 %v2118
        %v2421 = vpop.f32.mrb[0].mxu0
        %v2422 = vadd.f32 %v1811, %v2421
        %v2423 = vpop.f32.mrb[0].mxu0
        %2424 = vmatprep.mubr.f32.mxu0 0.0
        %2425 = vmatmul.mubr.f32.gmra.mrb[0].mxu0 %v2120
        %v2426 = vpop.f32.mrb[0].mxu0
        %v2427 = vadd.f32 %v1816, %v2426
        %v2428 = vpop.f32.mrb[0].mxu0
        %2429 = vmatprep.mubr.f32.mxu0 0.0
        %2430 = vmatmul.mubr.f32.gmra.mrb[0].mxu0 %v2122
        %v2431 = vpop.f32.mrb[0].mxu0
        %v2432 = vadd.f32 %v1821, %v2431
        %v2433 = vpop.f32.mrb[0].mxu0
        %2434 = vmatprep.mubr.f32.mxu0 0.0
        %2435 = vmatmul.mubr.f32.gmra.mrb[0].mxu0 %v2124
        %v2436 = vpop.f32.mrb[0].mxu0
        %v2437 = vadd.f32 %v1826, %v2436
        %v2438 = vpop.f32.mrb[0].mxu0
        %2439 = vmatprep.mubr.f32.mxu0 0.0
        %2440 = vmatmul.mubr.f32.gmra.mrb[0].mxu0 %v2126
        %v2441 = vpop.f32.mrb[0].mxu0
        %v2442 = vadd.f32 %v1831, %v2441
        %v2443 = vpop.f32.mrb[0].mxu0
        %2444 = vmatprep.mubr.f32.mxu0 0.0
        %2445 = vmatmul.mubr.f32.gmra.mrb[0].mxu0 %v2128
        %v2446 = vpop.f32.mrb[0].mxu0
        %v2447 = vadd.f32 %v1836, %v2446
        %v2448 = vpop.f32.mrb[0].mxu0
        %2449 = vmatprep.mubr.f32.mxu0 0.0
        %2450 = vmatmul.mubr.f32.gmra.mrb[0].mxu0 %v2130
        %v2451 = vpop.f32.mrb[0].mxu0
        %v2452 = vadd.f32 %v1841, %v2451
        %v2453 = vpop.f32.mrb[0].mxu0
        %2454 = vmatprep.mubr.f32.mxu0 0.0
        %2455 = vmatmul.mubr.f32.gmra.mrb[0].mxu0 %v2132
        %v2456 = vpop.f32.mrb[0].mxu0
        %v2457 = vadd.f32 %v1846, %v2456
        %v2458 = vpop.f32.mrb[0].mxu0
        %2459 = vmatprep.mubr.f32.mxu0 0.0
        %2460 = vmatmul.mubr.f32.gmra.mrb[0].mxu0 %v2134
        %v2461 = vpop.f32.mrb[0].mxu0
        %v2462 = vadd.f32 %v1851, %v2461
        %v2463 = vpop.f32.mrb[0].mxu0
        %2464 = vmatprep.mubr.f32.mxu0 0.0
        %2465 = vmatmul.mubr.f32.gmra.mrb[0].mxu0 %v2136
        %v2466 = vpop.f32.mrb[0].mxu0
        %v2467 = vadd.f32 %v1856, %v2466
        %v2468 = vpop.f32.mrb[0].mxu0
        %2469 = vmatprep.mubr.f32.mxu0 0.0
        %2470 = vmatmul.mubr.f32.gmra.mrb[0].mxu0 %v2138
        %v2471 = vpop.f32.mrb[0].mxu0
        %v2472 = vadd.f32 %v1861, %v2471
        %v2473 = vpop.f32.mrb[0].mxu0
        %2474 = vmatprep.mubr.f32.mxu0 0.0
        %2475 = vmatmul.mubr.f32.gmra.mrb[0].mxu0 %v2140
        %v2476 = vpop.f32.mrb[0].mxu0
        %v2477 = vadd.f32 %v1866, %v2476
        %v2478 = vpop.f32.mrb[0].mxu0
        %2479 = vmatprep.mubr.f32.mxu0 0.0
        %2480 = vmatmul.mubr.f32.gmra.mrb[0].mxu0 %v2142
        %v2481 = vpop.f32.mrb[0].mxu0
        %v2482 = vadd.f32 %v1871, %v2481
        %v2483 = vpop.f32.mrb[0].mxu0
        %2484 = vmatprep.mubr.f32.mxu0 0.0
        %2485 = vmatmul.mubr.f32.gmra.mrb[0].mxu0 %v2144
        %v2486 = vpop.f32.mrb[0].mxu0
        %v2487 = vadd.f32 %v1876, %v2486
        %v2488 = vpop.f32.mrb[0].mxu0
        %2489 = vmatprep.mubr.f32.mxu0 0.0
        %2490 = vmatmul.mubr.f32.gmra.mrb[0].mxu0 %v2146
        %v2491 = vpop.f32.mrb[0].mxu0
        %v2492 = vadd.f32 %v1881, %v2491
        %v2493 = vpop.f32.mrb[0].mxu0
        %2494 = vmatprep.mubr.f32.mxu0 0.0
        %2495 = vmatmul.mubr.f32.gmra.mrb[0].mxu0 %v2148
        %v2496 = vpop.f32.mrb[0].mxu0
        %v2497 = vadd.f32 %v1886, %v2496
        %v2498 = vpop.f32.mrb[0].mxu0
        %2499 = vmatprep.mubr.f32.mxu0 0.0
        %2500 = vmatmul.mubr.f32.gmra.mrb[0].mxu0 %v2150
        %v2501 = vpop.f32.mrb[0].mxu0
        %v2502 = vadd.f32 %v1891, %v2501
        %v2503 = vpop.f32.mrb[0].mxu0
        %2504 = vmatprep.mubr.f32.mxu0 0.0
        %2505 = vmatmul.mubr.f32.gmra.mrb[0].mxu0 %v2152
        %v2506 = vpop.f32.mrb[0].mxu0
        %v2507 = vadd.f32 %v1896, %v2506
        %v2508 = vpop.f32.mrb[0].mxu0
        %2509 = vmatprep.mubr.f32.mxu0 0.0
        %2510 = vmatmul.mubr.f32.gmra.mrb[0].mxu0 %v2154
        %v2511 = vpop.f32.mrb[0].mxu0
        %v2512 = vadd.f32 %v1901, %v2511
        %v2513 = vpop.f32.mrb[0].mxu0
        %2514 = vmatprep.mubr.f32.mxu0 0.0
        %2515 = vmatmul.mubr.f32.gmra.mrb[0].mxu0 %v2156
        %v2516 = vpop.f32.mrb[0].mxu0
        %v2517 = vadd.f32 %v1906, %v2516
        %v2518 = vpop.f32.mrb[0].mxu0
        %2519 = vmatprep.mubr.f32.mxu0 0.0
        %2520 = vmatmul.mubr.f32.gmra.mrb[0].mxu0 %v2158
        %v2521 = vpop.f32.mrb[0].mxu0
        %v2522 = vadd.f32 %v1911, %v2521
        %v2523 = vpop.f32.mrb[0].mxu0
        %2524 = vmatprep.mubr.f32.mxu0 0.0
        %2525 = vmatmul.mubr.f32.gmra.mrb[0].mxu0 %v2160
        %v2526 = vpop.f32.mrb[0].mxu0
        %v2527 = vadd.f32 %v1916, %v2526
        %v2528 = vpop.f32.mrb[0].mxu0
        %2529 = vmatprep.mubr.f32.mxu0 0.0
        %2530 = vmatmul.mubr.f32.gmra.mrb[0].mxu0 %v2162
        %v2531 = vpop.f32.mrb[0].mxu0
        %v2532 = vadd.f32 %v1921, %v2531
        %v2533 = vpop.f32.mrb[0].mxu0
        %2534 = vmatprep.mubr.f32.mxu0 0.0
        %2535 = vmatmul.mubr.f32.gmra.mrb[0].mxu0 %v2164
        %v2536 = vpop.f32.mrb[0].mxu0
        %v2537 = vadd.f32 %v1926, %v2536
        %v2538 = vpop.f32.mrb[0].mxu0
        %2539 = vmatprep.mubr.f32.mxu0 0.0
        %2540 = vmatmul.mubr.f32.gmra.mrb[0].mxu0 %v2166
        %v2541 = vpop.f32.mrb[0].mxu0
        %v2542 = vadd.f32 %v1931, %v2541
        %v2543 = vpop.f32.mrb[0].mxu0
        %2544 = vmatprep.mubr.f32.mxu0 0.0
        %2545 = vmatmul.mubr.f32.gmra.mrb[0].mxu0 %v2168
        %v2546 = vpop.f32.mrb[0].mxu0
        %v2547 = vadd.f32 %v1936, %v2546
        %v2548 = vpop.f32.mrb[0].mxu0
        %2549 = vmatprep.mubr.f32.mxu0 0.0
        %2550 = vmatmul.mubr.f32.gmra.mrb[0].mxu0 %v2170
        %v2551 = vpop.f32.mrb[0].mxu0
        %v2552 = vadd.f32 %v1941, %v2551
        %v2553 = vpop.f32.mrb[0].mxu0
        %2554 = vmatprep.mubr.f32.mxu0 0.0
        %2555 = vmatmul.mubr.f32.gmra.mrb[0].mxu0 %v2172
        %v2556 = vpop.f32.mrb[0].mxu0
        %v2557 = vadd.f32 %v1946, %v2556
        %v2558 = vpop.f32.mrb[0].mxu0
        %2559 = vmatprep.mubr.f32.mxu0 0.0
        %2560 = vmatmul.mubr.f32.gmra.mrb[0].mxu0 %v2174
        %v2561 = vpop.f32.mrb[0].mxu0
        %v2562 = vadd.f32 %v1951, %v2561
        %v2563 = vpop.f32.mrb[0].mxu0
        %2564 = vmatprep.mubr.f32.mxu0 0.0
        %2565 = vmatmul.mubr.f32.gmra.mrb[0].mxu0 %v2176
        %v2566 = vpop.f32.mrb[0].mxu0
        %v2567 = vadd.f32 %v1956, %v2566
        %v2568 = vpop.f32.mrb[0].mxu0
        %2569 = vmatprep.mubr.f32.mxu0 0.0
        %2570 = vmatmul.mubr.f32.gmra.mrb[0].mxu0 %v2178
        %v2571 = vpop.f32.mrb[0].mxu0
        %v2572 = vadd.f32 %v1961, %v2571
        %v2573 = vpop.f32.mrb[0].mxu0
        %2574 = vmatprep.mubr.f32.mxu0 0.0
        %2575 = vmatmul.mubr.f32.gmra.mrb[0].mxu0 %v2180
        %v2576 = vpop.f32.mrb[0].mxu0
        %v2577 = vadd.f32 %v1966, %v2576
        %v2578 = vpop.f32.mrb[0].mxu0
        %2579 = vmatprep.mubr.f32.mxu0 0.0
        %2580 = vmatmul.mubr.f32.gmra.mrb[0].mxu0 %v2182
        %v2581 = vpop.f32.mrb[0].mxu0
        %v2582 = vadd.f32 %v1971, %v2581
        %v2583 = vpop.f32.mrb[0].mxu0
        %2584 = vmatprep.mubr.f32.mxu0 0.0
        %2585 = vmatmul.mubr.f32.gmra.mrb[0].mxu0 %v2184
        %v2586 = vpop.f32.mrb[0].mxu0
        %v2587 = vadd.f32 %v1976, %v2586
        %v2588 = vpop.f32.mrb[0].mxu0
        %2589 = vmatprep.mubr.f32.mxu0 0.0
        %2590 = vmatmul.mubr.f32.gmra.mrb[0].mxu0 %v2186
        %v2591 = vpop.f32.mrb[0].mxu0
        %v2592 = vadd.f32 %v1981, %v2591
        %v2593 = vpop.f32.mrb[0].mxu0
        %2594 = vmatprep.mubr.f32.mxu0 0.0
        %2595 = vmatmul.mubr.f32.gmra.mrb[0].mxu0 %v2188
        %v2596 = vpop.f32.mrb[0].mxu0
        %v2597 = vadd.f32 %v1986, %v2596
        %v2598 = vpop.f32.mrb[0].mxu0
        %2599 = vmatprep.mubr.f32.mxu0 0.0
        %2600 = vmatmul.mubr.f32.gmra.mrb[0].mxu0 %v2190
        %v2601 = vpop.f32.mrb[0].mxu0
        %v2602 = vadd.f32 %v1991, %v2601
        %v2603 = vpop.f32.mrb[0].mxu0
        %2604 = vmatprep.mubr.f32.mxu0 0.0
        %2605 = vmatmul.mubr.f32.gmra.mrb[0].mxu0 %v2192
        %v2606 = vpop.f32.mrb[0].mxu0
        %v2607 = vadd.f32 %v1996, %v2606
        %v2608 = vpop.f32.mrb[0].mxu0
        %2609 = vmatprep.mubr.f32.mxu0 0.0
        %2610 = vmatmul.mubr.f32.gmra.mrb[0].mxu0 %v2194
        %v2611 = vpop.f32.mrb[0].mxu0
        %v2612 = vadd.f32 %v2001, %v2611
        %v2613 = vpop.f32.mrb[0].mxu0
        %2614 = vmatprep.mubr.f32.mxu0 0.0
        %2615 = vmatmul.mubr.f32.gmra.mrb[0].mxu0 %v2196
        %v2616 = vpop.f32.mrb[0].mxu0
        %v2617 = vadd.f32 %v2006, %v2616
        %v2618 = vpop.f32.mrb[0].mxu0
        %2619 = vmatprep.mubr.f32.mxu0 0.0
        %2620 = vmatmul.mubr.f32.gmra.mrb[0].mxu0 %v2198
        %v2621 = vpop.f32.mrb[0].mxu0
        %v2622 = vadd.f32 %v2011, %v2621
        %v2623 = vpop.f32.mrb[0].mxu0
        %2624 = vmatprep.mubr.f32.mxu0 0.0
        %2625 = vmatmul.mubr.f32.gmra.mrb[0].mxu0 %v2200
        %v2626 = vpop.f32.mrb[0].mxu0
        %v2627 = vadd.f32 %v2016, %v2626
        %v2628 = vpop.f32.mrb[0].mxu0
        %2629 = vmatprep.mubr.f32.mxu0 0.0
        %2630 = vmatmul.mubr.f32.gmra.mrb[0].mxu0 %v2202
        %v2631 = vpop.f32.mrb[0].mxu0
        %v2632 = vadd.f32 %v2021, %v2631
        %v2633 = vpop.f32.mrb[0].mxu0
        %2634 = vmatprep.mubr.f32.mxu0 0.0
        %2635 = vmatmul.mubr.f32.gmra.mrb[0].mxu0 %v2204
        %v2636 = vpop.f32.mrb[0].mxu0
        %v2637 = vadd.f32 %v2026, %v2636
        %v2638 = vpop.f32.mrb[0].mxu0
        %2639 = vmatprep.mubr.f32.mxu0 0.0
        %2640 = vmatmul.mubr.f32.gmra.mrb[0].mxu0 %v2206
        %v2641 = vpop.f32.mrb[0].mxu0
        %v2642 = vadd.f32 %v2031, %v2641
        %v2643 = vpop.f32.mrb[0].mxu0
        %2644 = vmatprep.mubr.f32.mxu0 0.0
        %2645 = vmatmul.mubr.f32.gmra.mrb[0].mxu0 %v2208
        %v2646 = vpop.f32.mrb[0].mxu0
        %v2647 = vadd.f32 %v2036, %v2646
        %v2648 = vpop.f32.mrb[0].mxu0
        %2649 = vmatprep.mubr.f32.mxu0 0.0
        %2650 = vmatmul.mubr.f32.gmra.mrb[0].mxu0 %v2210
        %v2651 = vpop.f32.mrb[0].mxu0
        %v2652 = vadd.f32 %v2041, %v2651
        %v2653 = vpop.f32.mrb[0].mxu0
        %2654 = vmatprep.mubr.f32.mxu0 0.0
        %2655 = vmatmul.mubr.f32.gmra.mrb[0].mxu0 %v2212
        %v2656 = vpop.f32.mrb[0].mxu0
        %v2657 = vadd.f32 %v2046, %v2656
        %v2658 = vpop.f32.mrb[0].mxu0
        %2659 = vmatprep.mubr.f32.mxu0 0.0
        %2660 = vmatmul.mubr.f32.gmra.mrb[0].mxu0 %v2214
        %v2661 = vpop.f32.mrb[0].mxu0
        %v2662 = vadd.f32 %v2051, %v2661
        %v2663 = vpop.f32.mrb[0].mxu0
        %2664 = vmatprep.mubr.f32.mxu0 0.0
        %2665 = vmatmul.mubr.f32.gmra.mrb[0].mxu0 %v2216
        %v2666 = vpop.f32.mrb[0].mxu0
        %v2667 = vadd.f32 %v2056, %v2666
        %v2668 = vpop.f32.mrb[0].mxu0
        %2669 = vmatprep.mubr.f32.mxu0 0.0
        %2670 = vmatmul.mubr.f32.gmra.mrb[0].mxu0 %v2218
        %v2671 = vpop.f32.mrb[0].mxu0
        %v2672 = vadd.f32 %v2061, %v2671
        %v2673 = vpop.f32.mrb[0].mxu0
        %2674 = vdwg.mxu0
        %s2675 = scalar_lea.vmem [#allocation7], 64
        %v2676 = vld [vmem:[%s2675] sm:$0xff]
        %v2677 = vld [vmem:[%s2675 + $0x8] sm:$0xff]
        %v2678 = vld [vmem:[%s2675 + $0x10] sm:$0xff]
        %v2679 = vld [vmem:[%s2675 + $0x18] sm:$0xff]
        %vm2680 = vcmask 1045504
        %v2681 = vrot.slane %v1124, 2
        %v2682 = vrot.slane %v1125, 2
        %v2683 = vsel %vm2680, %v2681, %v2682
        %v2684 = vrot.slane %v1126, 2
        %v2685 = vsel %vm2680, %v2682, %v2684
        %v2686 = vrot.slane %v1127, 2
        %v2687 = vsel %vm2680, %v2684, %v2686
        %v2688 = vrot.slane %v1128, 2
        %v2689 = vsel %vm2680, %v2686, %v2688
        %v2690 = vrot.slane %v1129, 2
        %v2691 = vsel %vm2680, %v2688, %v2690
        %v2692 = vrot.slane %v1130, 2
        %v2693 = vsel %vm2680, %v2690, %v2692
        %v2694 = vrot.slane %v1131, 2
        %v2695 = vsel %vm2680, %v2692, %v2694
        %v2696 = vrot.slane %v1132, 2
        %v2697 = vsel %vm2680, %v2694, %v2696
        %v2698 = vrot.slane %v1133, 2
        %v2699 = vsel %vm2680, %v2696, %v2698
        %v2700 = vrot.slane %v1134, 2
        %v2701 = vsel %vm2680, %v2698, %v2700
        %v2702 = vrot.slane %v1135, 2
        %v2703 = vsel %vm2680, %v2700, %v2702
        %v2704 = vrot.slane %v1136, 2
        %v2705 = vsel %vm2680, %v2702, %v2704
        %v2706 = vrot.slane %v1137, 2
        %v2707 = vsel %vm2680, %v2704, %v2706
        %v2708 = vrot.slane %v1138, 2
        %v2709 = vsel %vm2680, %v2706, %v2708
        %v2710 = vrot.slane %v1139, 2
        %v2711 = vsel %vm2680, %v2708, %v2710
        %v2712 = vrot.slane %v1140, 2
        %v2713 = vsel %vm2680, %v2710, %v2712
        %v2714 = vrot.slane %v1141, 2
        %v2715 = vsel %vm2680, %v2712, %v2714
        %v2716 = vrot.slane %v1142, 2
        %v2717 = vsel %vm2680, %v2714, %v2716
        %v2718 = vrot.slane %v1143, 2
        %v2719 = vsel %vm2680, %v2716, %v2718
        %v2720 = vrot.slane %v1144, 2
        %v2721 = vsel %vm2680, %v2718, %v2720
        %v2722 = vrot.slane %v1145, 2
        %v2723 = vsel %vm2680, %v2720, %v2722
        %v2724 = vrot.slane %v1146, 2
        %v2725 = vsel %vm2680, %v2722, %v2724
        %v2726 = vrot.slane %v1147, 2
        %v2727 = vsel %vm2680, %v2724, %v2726
        %v2728 = vrot.slane %v1148, 2
        %v2729 = vsel %vm2680, %v2726, %v2728
        %v2730 = vrot.slane %v1149, 2
        %v2731 = vsel %vm2680, %v2728, %v2730
        %v2732 = vrot.slane %v1150, 2
        %v2733 = vsel %vm2680, %v2730, %v2732
        %v2734 = vrot.slane %v1151, 2
        %v2735 = vsel %vm2680, %v2732, %v2734
        %v2736 = vrot.slane %v1152, 2
        %v2737 = vsel %vm2680, %v2734, %v2736
        %v2738 = vrot.slane %v1153, 2
        %v2739 = vsel %vm2680, %v2736, %v2738
        %v2740 = vrot.slane %v1154, 2
        %v2741 = vsel %vm2680, %v2738, %v2740
        %v2742 = vrot.slane %v1155, 2
        %v2743 = vsel %vm2680, %v2740, %v2742
        %v2744 = vrot.slane %v1156, 2
        %v2745 = vsel %vm2680, %v2742, %v2744
        %v2746 = vrot.slane %v1157, 2
        %v2747 = vsel %vm2680, %v2744, %v2746
        %v2748 = vrot.slane %v1158, 2
        %v2749 = vsel %vm2680, %v2746, %v2748
        %v2750 = vrot.slane %v1159, 2
        %v2751 = vsel %vm2680, %v2748, %v2750
        %v2752 = vrot.slane %v1160, 2
        %v2753 = vsel %vm2680, %v2750, %v2752
        %v2754 = vrot.slane %v1161, 2
        %v2755 = vsel %vm2680, %v2752, %v2754
        %v2756 = vrot.slane %v1162, 2
        %v2757 = vsel %vm2680, %v2754, %v2756
        %v2758 = vrot.slane %v1163, 2
        %v2759 = vsel %vm2680, %v2756, %v2758
        %v2760 = vrot.slane %v1164, 2
        %v2761 = vsel %vm2680, %v2758, %v2760
        %v2762 = vrot.slane %v1165, 2
        %v2763 = vsel %vm2680, %v2760, %v2762
        %v2764 = vrot.slane %v1166, 2
        %v2765 = vsel %vm2680, %v2762, %v2764
        %v2766 = vrot.slane %v1167, 2
        %v2767 = vsel %vm2680, %v2764, %v2766
        %v2768 = vrot.slane %v1168, 2
        %v2769 = vsel %vm2680, %v2766, %v2768
        %v2770 = vrot.slane %v1169, 2
        %v2771 = vsel %vm2680, %v2768, %v2770
        %v2772 = vrot.slane %v1170, 2
        %v2773 = vsel %vm2680, %v2770, %v2772
        %v2774 = vrot.slane %v1171, 2
        %v2775 = vsel %vm2680, %v2772, %v2774
        %v2776 = vrot.slane %v1172, 2
        %v2777 = vsel %vm2680, %v2774, %v2776
        %v2778 = vrot.slane %v1173, 2
        %v2779 = vsel %vm2680, %v2776, %v2778
        %v2780 = vrot.slane %v1174, 2
        %v2781 = vsel %vm2680, %v2778, %v2780
        %v2782 = vrot.slane %v1175, 2
        %v2783 = vsel %vm2680, %v2780, %v2782
        %v2784 = vrot.slane %v1176, 2
        %v2785 = vsel %vm2680, %v2782, %v2784
        %v2786 = vrot.slane %v1177, 2
        %v2787 = vsel %vm2680, %v2784, %v2786
        %v2788 = vrot.slane %v1178, 2
        %v2789 = vsel %vm2680, %v2786, %v2788
        %v2790 = vrot.slane %v1179, 2
        %v2791 = vsel %vm2680, %v2788, %v2790
        %v2792 = vrot.slane %v1180, 2
        %v2793 = vsel %vm2680, %v2790, %v2792
        %v2794 = vrot.slane %v1181, 2
        %v2795 = vsel %vm2680, %v2792, %v2794
        %v2796 = vrot.slane %v1182, 2
        %v2797 = vsel %vm2680, %v2794, %v2796
        %v2798 = vrot.slane %v1183, 2
        %v2799 = vsel %vm2680, %v2796, %v2798
        %v2800 = vrot.slane %v1184, 2
        %v2801 = vsel %vm2680, %v2798, %v2800
        %v2802 = vrot.slane %v1185, 2
        %v2803 = vsel %vm2680, %v2800, %v2802
        %v2804 = vrot.slane %v1186, 2
        %v2805 = vsel %vm2680, %v2802, %v2804
        %v2806 = vrot.slane %v1187, 2
        %v2807 = vsel %vm2680, %v2804, %v2806
        %v2808 = vrot.slane %v1188, 2
        %v2809 = vsel %vm2680, %v2806, %v2808
        %v2810 = vrot.slane %v1189, 2
        %v2811 = vsel %vm2680, %v2808, %v2810
        %v2812 = vrot.slane %v1190, 2
        %v2813 = vsel %vm2680, %v2810, %v2812
        %v2814 = vrot.slane %v1191, 2
        %v2815 = vsel %vm2680, %v2812, %v2814
        %v2816 = vrot.slane %v1192, 2
        %v2817 = vsel %vm2680, %v2814, %v2816
        %v2818 = vrot.slane %v1193, 2
        %v2819 = vsel %vm2680, %v2816, %v2818
        %v2820 = vrot.slane %v1194, 2
        %v2821 = vsel %vm2680, %v2818, %v2820
        %v2822 = vrot.slane %v1195, 2
        %v2823 = vsel %vm2680, %v2820, %v2822
        %v2824 = vrot.slane %v1196, 2
        %v2825 = vsel %vm2680, %v2822, %v2824
        %v2826 = vrot.slane %v1197, 2
        %v2827 = vsel %vm2680, %v2824, %v2826
        %v2828 = vrot.slane %v1198, 2
        %v2829 = vsel %vm2680, %v2826, %v2828
        %v2830 = vrot.slane %v1199, 2
        %v2831 = vsel %vm2680, %v2828, %v2830
        %v2832 = vrot.slane %v1200, 2
        %v2833 = vsel %vm2680, %v2830, %v2832
        %v2834 = vrot.slane %v1201, 2
        %v2835 = vsel %vm2680, %v2832, %v2834
        %v2836 = vsel %vm1452, %v2683, 0
        %v2838 = vsel %vm1452, %v2685, 0
        %v2840 = vsel %vm1452, %v2687, 0
        %v2842 = vsel %vm1452, %v2689, 0
        %v2844 = vsel %vm1452, %v2691, 0
        %v2846 = vsel %vm1452, %v2693, 0
        %v2848 = vsel %vm1452, %v2695, 0
        %v2850 = vsel %vm1452, %v2697, 0
        %v2852 = vsel %vm1452, %v2699, 0
        %v2854 = vsel %vm1452, %v2701, 0
        %v2856 = vsel %vm1452, %v2703, 0
        %v2858 = vsel %vm1452, %v2705, 0
        %v2860 = vsel %vm1452, %v2707, 0
        %v2862 = vsel %vm1452, %v2709, 0
        %v2864 = vsel %vm1452, %v2711, 0
        %v2866 = vsel %vm1452, %v2713, 0
        %v2868 = vsel %vm1452, %v2715, 0
        %v2870 = vsel %vm1452, %v2717, 0
        %v2872 = vsel %vm1452, %v2719, 0
        %v2874 = vsel %vm1452, %v2721, 0
        %v2876 = vsel %vm1452, %v2723, 0
        %v2878 = vsel %vm1452, %v2725, 0
        %v2880 = vsel %vm1452, %v2727, 0
        %v2882 = vsel %vm1452, %v2729, 0
        %v2884 = vsel %vm1452, %v2731, 0
        %v2886 = vsel %vm1452, %v2733, 0
        %v2888 = vsel %vm1452, %v2735, 0
        %v2890 = vsel %vm1452, %v2737, 0
        %v2892 = vsel %vm1452, %v2739, 0
        %v2894 = vsel %vm1452, %v2741, 0
        %v2896 = vsel %vm1452, %v2743, 0
        %v2898 = vsel %vm1452, %v2745, 0
        %v2900 = vsel %vm1452, %v2747, 0
        %v2902 = vsel %vm1452, %v2749, 0
        %v2904 = vsel %vm1452, %v2751, 0
        %v2906 = vsel %vm1452, %v2753, 0
        %v2908 = vsel %vm1452, %v2755, 0
        %v2910 = vsel %vm1452, %v2757, 0
        %v2912 = vsel %vm1452, %v2759, 0
        %v2914 = vsel %vm1452, %v2761, 0
        %v2916 = vsel %vm1452, %v2763, 0
        %v2918 = vsel %vm1452, %v2765, 0
        %v2920 = vsel %vm1452, %v2767, 0
        %v2922 = vsel %vm1452, %v2769, 0
        %v2924 = vsel %vm1452, %v2771, 0
        %v2926 = vsel %vm1452, %v2773, 0
        %v2928 = vsel %vm1452, %v2775, 0
        %v2930 = vsel %vm1452, %v2777, 0
        %v2932 = vsel %vm1452, %v2779, 0
        %v2934 = vsel %vm1452, %v2781, 0
        %v2936 = vsel %vm1452, %v2783, 0
        %v2938 = vsel %vm1452, %v2785, 0
        %v2940 = vsel %vm1452, %v2787, 0
        %v2942 = vsel %vm1452, %v2789, 0
        %v2944 = vsel %vm1452, %v2791, 0
        %v2946 = vsel %vm1452, %v2793, 0
        %v2948 = vsel %vm1452, %v2795, 0
        %v2950 = vsel %vm1452, %v2797, 0
        %v2952 = vsel %vm1452, %v2799, 0
        %v2954 = vsel %vm1452, %v2801, 0
        %v2956 = vsel %vm1452, %v2803, 0
        %v2958 = vsel %vm1452, %v2805, 0
        %v2960 = vsel %vm1452, %v2807, 0
        %v2962 = vsel %vm1452, %v2809, 0
        %v2964 = vsel %vm1452, %v2811, 0
        %v2966 = vsel %vm1452, %v2813, 0
        %v2968 = vsel %vm1452, %v2815, 0
        %v2970 = vsel %vm1452, %v2817, 0
        %v2972 = vsel %vm1452, %v2819, 0
        %v2974 = vsel %vm1452, %v2821, 0
        %v2976 = vsel %vm1452, %v2823, 0
        %v2978 = vsel %vm1452, %v2825, 0
        %v2980 = vsel %vm1452, %v2827, 0
        %v2982 = vsel %vm1452, %v2829, 0
        %v2984 = vsel %vm1452, %v2831, 0
        %v2986 = vsel %vm1452, %v2833, 0
        %v2988 = vsel %vm1452, %v2835, 0
        %v2990 = vsel %vm1452, %v2834, 0
        %2992 = vmatprep.subr.mxu0 0.0
        %2993 = vmatpush1.msra.mxu0 %v2676
        %2994 = vmatprep.subr.mxu0 0.0
        %2995 = vmatpush1.msra.mxu0 %v2677
        %2996 = vmatprep.subr.mxu0 0.0
        %2997 = vmatpush1.msra.mxu0 %v2678
        %2998 = vmatprep.subr.mxu0 0.0
        %2999 = vmatpush1.msra.mxu0 %v2679
        %3000 = vmatprep.subr.mxu0 0.0
        %3001 = vmatpush1.msra.mxu0 0.0
        %3002 = vmatprep.subr.mxu0 0.0
        %3003 = vmatpush1.msra.mxu0 0.0
        %3004 = vmatprep.subr.mxu0 0.0
        %3005 = vmatpush1.msra.mxu0 0.0
        %3006 = vmatprep.subr.mxu0 0.0
        %3007 = vmatpush1.msra.mxu0 0.0
        %3008 = vmatprep.subr.mxu0 0.0
        %3009 = vmatpush1.msra.mxu0 0.0
        %3010 = vmatprep.subr.mxu0 0.0
        %3011 = vmatpush1.msra.mxu0 0.0
        %3012 = vmatprep.subr.mxu0 0.0
        %3013 = vmatpush1.msra.mxu0 0.0
        %3014 = vmatprep.subr.mxu0 0.0
        %3015 = vmatpush1.msra.mxu0 0.0
        %3016 = vmatprep.subr.mxu0 0.0
        %3017 = vmatpush1.msra.mxu0 0.0
        %3018 = vmatprep.subr.mxu0 0.0
        %3019 = vmatpush1.msra.mxu0 0.0
        %3020 = vmatprep.subr.mxu0 0.0
        %3021 = vmatpush1.msra.mxu0 0.0
        %3022 = vmatprep.subr.mxu0 0.0
        %3023 = vmatpush1.msra.mxu0 0.0
        %3024 = vmatprep.subr.mxu0 0.0
        %3025 = vmatpush1.msra.mxu0 0.0
        %3026 = vmatprep.subr.mxu0 0.0
        %3027 = vmatpush1.msra.mxu0 0.0
        %3028 = vmatprep.subr.mxu0 0.0
        %3029 = vmatpush1.msra.mxu0 0.0
        %3030 = vmatprep.subr.mxu0 0.0
        %3031 = vmatpush1.msra.mxu0 0.0
        %3032 = vmatprep.subr.mxu0 0.0
        %3033 = vmatpush1.msra.mxu0 0.0
        %3034 = vmatprep.subr.mxu0 0.0
        %3035 = vmatpush1.msra.mxu0 0.0
        %3036 = vmatprep.subr.mxu0 0.0
        %3037 = vmatpush1.msra.mxu0 0.0
        %3038 = vmatprep.subr.mxu0 0.0
        %3039 = vmatpush1.msra.mxu0 0.0
        %3040 = vmatprep.subr.mxu0 0.0
        %3041 = vmatpush1.msra.mxu0 0.0
        %3042 = vmatprep.subr.mxu0 0.0
        %3043 = vmatpush1.msra.mxu0 0.0
        %3044 = vmatprep.subr.mxu0 0.0
        %3045 = vmatpush1.msra.mxu0 0.0
        %3046 = vmatprep.subr.mxu0 0.0
        %3047 = vmatpush1.msra.mxu0 0.0
        %3048 = vmatprep.subr.mxu0 0.0
        %3049 = vmatpush1.msra.mxu0 0.0
        %3050 = vmatprep.subr.mxu0 0.0
        %3051 = vmatpush1.msra.mxu0 0.0
        %3052 = vmatprep.subr.mxu0 0.0
        %3053 = vmatpush1.msra.mxu0 0.0
        %3054 = vmatprep.subr.mxu0 0.0
        %3055 = vmatpush1.msra.mxu0 0.0
        %3056 = vmatprep.mubr.f32.mxu0 0.0
        %3057 = vmatmul.mubr.f32.gmra.mrb[0].mxu0 %v2836
        %v3058 = vpop.f32.mrb[0].mxu0
        %v3059 = vadd.f32 0.0, %v3058
        %v3060 = vpop.f32.mrb[0].mxu0
        %3061 = vmatprep.mubr.f32.mxu0 0.0
        %3062 = vmatmul.mubr.f32.gmra.mrb[0].mxu0 %v2838
        %v3063 = vpop.f32.mrb[0].mxu0
        %v3064 = vadd.f32 0.0, %v3063
        %v3065 = vpop.f32.mrb[0].mxu0
        %3066 = vmatprep.mubr.f32.mxu0 0.0
        %3067 = vmatmul.mubr.f32.gmra.mrb[0].mxu0 %v2840
        %v3068 = vpop.f32.mrb[0].mxu0
        %v3069 = vadd.f32 0.0, %v3068
        %v3070 = vpop.f32.mrb[0].mxu0
        %3071 = vmatprep.mubr.f32.mxu0 0.0
        %3072 = vmatmul.mubr.f32.gmra.mrb[0].mxu0 %v2842
        %v3073 = vpop.f32.mrb[0].mxu0
        %v3074 = vadd.f32 0.0, %v3073
        %v3075 = vpop.f32.mrb[0].mxu0
        %3076 = vmatprep.mubr.f32.mxu0 0.0
        %3077 = vmatmul.mubr.f32.gmra.mrb[0].mxu0 %v2844
        %v3078 = vpop.f32.mrb[0].mxu0
        %v3079 = vadd.f32 0.0, %v3078
        %v3080 = vpop.f32.mrb[0].mxu0
        %3081 = vmatprep.mubr.f32.mxu0 0.0
        %3082 = vmatmul.mubr.f32.gmra.mrb[0].mxu0 %v2846
        %v3083 = vpop.f32.mrb[0].mxu0
        %v3084 = vadd.f32 0.0, %v3083
        %v3085 = vpop.f32.mrb[0].mxu0
        %3086 = vmatprep.mubr.f32.mxu0 0.0
        %3087 = vmatmul.mubr.f32.gmra.mrb[0].mxu0 %v2848
        %v3088 = vpop.f32.mrb[0].mxu0
        %v3089 = vadd.f32 0.0, %v3088
        %v3090 = vpop.f32.mrb[0].mxu0
        %3091 = vmatprep.mubr.f32.mxu0 0.0
        %3092 = vmatmul.mubr.f32.gmra.mrb[0].mxu0 %v2850
        %v3093 = vpop.f32.mrb[0].mxu0
        %v3094 = vadd.f32 0.0, %v3093
        %v3095 = vpop.f32.mrb[0].mxu0
        %3096 = vmatprep.mubr.f32.mxu0 0.0
        %3097 = vmatmul.mubr.f32.gmra.mrb[0].mxu0 %v2852
        %v3098 = vpop.f32.mrb[0].mxu0
        %v3099 = vadd.f32 0.0, %v3098
        %v3100 = vpop.f32.mrb[0].mxu0
        %3101 = vmatprep.mubr.f32.mxu0 0.0
        %3102 = vmatmul.mubr.f32.gmra.mrb[0].mxu0 %v2854
        %v3103 = vpop.f32.mrb[0].mxu0
        %v3104 = vadd.f32 0.0, %v3103
        %v3105 = vpop.f32.mrb[0].mxu0
        %3106 = vmatprep.mubr.f32.mxu0 0.0
        %3107 = vmatmul.mubr.f32.gmra.mrb[0].mxu0 %v2856
        %v3108 = vpop.f32.mrb[0].mxu0
        %v3109 = vadd.f32 0.0, %v3108
        %v3110 = vpop.f32.mrb[0].mxu0
        %3111 = vmatprep.mubr.f32.mxu0 0.0
        %3112 = vmatmul.mubr.f32.gmra.mrb[0].mxu0 %v2858
        %v3113 = vpop.f32.mrb[0].mxu0
        %v3114 = vadd.f32 0.0, %v3113
        %v3115 = vpop.f32.mrb[0].mxu0
        %3116 = vmatprep.mubr.f32.mxu0 0.0
        %3117 = vmatmul.mubr.f32.gmra.mrb[0].mxu0 %v2860
        %v3118 = vpop.f32.mrb[0].mxu0
        %v3119 = vadd.f32 0.0, %v3118
        %v3120 = vpop.f32.mrb[0].mxu0
        %3121 = vmatprep.mubr.f32.mxu0 0.0
        %3122 = vmatmul.mubr.f32.gmra.mrb[0].mxu0 %v2862
        %v3123 = vpop.f32.mrb[0].mxu0
        %v3124 = vadd.f32 0.0, %v3123
        %v3125 = vpop.f32.mrb[0].mxu0
        %3126 = vmatprep.mubr.f32.mxu0 0.0
        %3127 = vmatmul.mubr.f32.gmra.mrb[0].mxu0 %v2864
        %v3128 = vpop.f32.mrb[0].mxu0
        %v3129 = vadd.f32 0.0, %v3128
        %v3130 = vpop.f32.mrb[0].mxu0
        %3131 = vmatprep.mubr.f32.mxu0 0.0
        %3132 = vmatmul.mubr.f32.gmra.mrb[0].mxu0 %v2866
        %v3133 = vpop.f32.mrb[0].mxu0
        %v3134 = vadd.f32 0.0, %v3133
        %v3135 = vpop.f32.mrb[0].mxu0
        %3136 = vmatprep.mubr.f32.mxu0 0.0
        %3137 = vmatmul.mubr.f32.gmra.mrb[0].mxu0 %v2868
        %v3138 = vpop.f32.mrb[0].mxu0
        %v3139 = vadd.f32 0.0, %v3138
        %v3140 = vpop.f32.mrb[0].mxu0
        %3141 = vmatprep.mubr.f32.mxu0 0.0
        %3142 = vmatmul.mubr.f32.gmra.mrb[0].mxu0 %v2870
        %v3143 = vpop.f32.mrb[0].mxu0
        %v3144 = vadd.f32 0.0, %v3143
        %v3145 = vpop.f32.mrb[0].mxu0
        %3146 = vmatprep.mubr.f32.mxu0 0.0
        %3147 = vmatmul.mubr.f32.gmra.mrb[0].mxu0 %v2872
        %v3148 = vpop.f32.mrb[0].mxu0
        %v3149 = vadd.f32 0.0, %v3148
        %v3150 = vpop.f32.mrb[0].mxu0
        %3151 = vmatprep.mubr.f32.mxu0 0.0
        %3152 = vmatmul.mubr.f32.gmra.mrb[0].mxu0 %v2874
        %v3153 = vpop.f32.mrb[0].mxu0
        %v3154 = vadd.f32 0.0, %v3153
        %v3155 = vpop.f32.mrb[0].mxu0
        %3156 = vmatprep.mubr.f32.mxu0 0.0
        %3157 = vmatmul.mubr.f32.gmra.mrb[0].mxu0 %v2876
        %v3158 = vpop.f32.mrb[0].mxu0
        %v3159 = vadd.f32 0.0, %v3158
        %v3160 = vpop.f32.mrb[0].mxu0
        %3161 = vmatprep.mubr.f32.mxu0 0.0
        %3162 = vmatmul.mubr.f32.gmra.mrb[0].mxu0 %v2878
        %v3163 = vpop.f32.mrb[0].mxu0
        %v3164 = vadd.f32 0.0, %v3163
        %v3165 = vpop.f32.mrb[0].mxu0
        %3166 = vmatprep.mubr.f32.mxu0 0.0
        %3167 = vmatmul.mubr.f32.gmra.mrb[0].mxu0 %v2880
        %v3168 = vpop.f32.mrb[0].mxu0
        %v3169 = vadd.f32 0.0, %v3168
        %v3170 = vpop.f32.mrb[0].mxu0
        %3171 = vmatprep.mubr.f32.mxu0 0.0
        %3172 = vmatmul.mubr.f32.gmra.mrb[0].mxu0 %v2882
        %v3173 = vpop.f32.mrb[0].mxu0
        %v3174 = vadd.f32 0.0, %v3173
        %v3175 = vpop.f32.mrb[0].mxu0
        %3176 = vmatprep.mubr.f32.mxu0 0.0
        %3177 = vmatmul.mubr.f32.gmra.mrb[0].mxu0 %v2884
        %v3178 = vpop.f32.mrb[0].mxu0
        %v3179 = vadd.f32 0.0, %v3178
        %v3180 = vpop.f32.mrb[0].mxu0
        %3181 = vmatprep.mubr.f32.mxu0 0.0
        %3182 = vmatmul.mubr.f32.gmra.mrb[0].mxu0 %v2886
        %v3183 = vpop.f32.mrb[0].mxu0
        %v3184 = vadd.f32 0.0, %v3183
        %v3185 = vpop.f32.mrb[0].mxu0
        %3186 = vmatprep.mubr.f32.mxu0 0.0
        %3187 = vmatmul.mubr.f32.gmra.mrb[0].mxu0 %v2888
        %v3188 = vpop.f32.mrb[0].mxu0
        %v3189 = vadd.f32 0.0, %v3188
        %v3190 = vpop.f32.mrb[0].mxu0
        %3191 = vmatprep.mubr.f32.mxu0 0.0
        %3192 = vmatmul.mubr.f32.gmra.mrb[0].mxu0 %v2890
        %v3193 = vpop.f32.mrb[0].mxu0
        %v3194 = vadd.f32 0.0, %v3193
        %v3195 = vpop.f32.mrb[0].mxu0
        %3196 = vmatprep.mubr.f32.mxu0 0.0
        %3197 = vmatmul.mubr.f32.gmra.mrb[0].mxu0 %v2892
        %v3198 = vpop.f32.mrb[0].mxu0
        %v3199 = vadd.f32 0.0, %v3198
        %v3200 = vpop.f32.mrb[0].mxu0
        %3201 = vmatprep.mubr.f32.mxu0 0.0
        %3202 = vmatmul.mubr.f32.gmra.mrb[0].mxu0 %v2894
        %v3203 = vpop.f32.mrb[0].mxu0
        %v3204 = vadd.f32 0.0, %v3203
        %v3205 = vpop.f32.mrb[0].mxu0
        %3206 = vmatprep.mubr.f32.mxu0 0.0
        %3207 = vmatmul.mubr.f32.gmra.mrb[0].mxu0 %v2896
        %v3208 = vpop.f32.mrb[0].mxu0
        %v3209 = vadd.f32 0.0, %v3208
        %v3210 = vpop.f32.mrb[0].mxu0
        %3211 = vmatprep.mubr.f32.mxu0 0.0
        %3212 = vmatmul.mubr.f32.gmra.mrb[0].mxu0 %v2898
        %v3213 = vpop.f32.mrb[0].mxu0
        %v3214 = vadd.f32 0.0, %v3213
        %v3215 = vpop.f32.mrb[0].mxu0
        %3216 = vmatprep.mubr.f32.mxu0 0.0
        %3217 = vmatmul.mubr.f32.gmra.mrb[0].mxu0 %v2900
        %v3218 = vpop.f32.mrb[0].mxu0
        %v3219 = vadd.f32 0.0, %v3218
        %v3220 = vpop.f32.mrb[0].mxu0
        %3221 = vmatprep.mubr.f32.mxu0 0.0
        %3222 = vmatmul.mubr.f32.gmra.mrb[0].mxu0 %v2902
        %v3223 = vpop.f32.mrb[0].mxu0
        %v3224 = vadd.f32 0.0, %v3223
        %v3225 = vpop.f32.mrb[0].mxu0
        %3226 = vmatprep.mubr.f32.mxu0 0.0
        %3227 = vmatmul.mubr.f32.gmra.mrb[0].mxu0 %v2904
        %v3228 = vpop.f32.mrb[0].mxu0
        %v3229 = vadd.f32 0.0, %v3228
        %v3230 = vpop.f32.mrb[0].mxu0
        %3231 = vmatprep.mubr.f32.mxu0 0.0
        %3232 = vmatmul.mubr.f32.gmra.mrb[0].mxu0 %v2906
        %v3233 = vpop.f32.mrb[0].mxu0
        %v3234 = vadd.f32 0.0, %v3233
        %v3235 = vpop.f32.mrb[0].mxu0
        %3236 = vmatprep.mubr.f32.mxu0 0.0
        %3237 = vmatmul.mubr.f32.gmra.mrb[0].mxu0 %v2908
        %v3238 = vpop.f32.mrb[0].mxu0
        %v3239 = vadd.f32 0.0, %v3238
        %v3240 = vpop.f32.mrb[0].mxu0
        %3241 = vmatprep.mubr.f32.mxu0 0.0
        %3242 = vmatmul.mubr.f32.gmra.mrb[0].mxu0 %v2910
        %v3243 = vpop.f32.mrb[0].mxu0
        %v3244 = vadd.f32 0.0, %v3243
        %v3245 = vpop.f32.mrb[0].mxu0
        %3246 = vmatprep.mubr.f32.mxu0 0.0
        %3247 = vmatmul.mubr.f32.gmra.mrb[0].mxu0 %v2912
        %v3248 = vpop.f32.mrb[0].mxu0
        %v3249 = vadd.f32 0.0, %v3248
        %v3250 = vpop.f32.mrb[0].mxu0
        %3251 = vmatprep.mubr.f32.mxu0 0.0
        %3252 = vmatmul.mubr.f32.gmra.mrb[0].mxu0 %v2914
        %v3253 = vpop.f32.mrb[0].mxu0
        %v3254 = vadd.f32 0.0, %v3253
        %v3255 = vpop.f32.mrb[0].mxu0
        %3256 = vmatprep.mubr.f32.mxu0 0.0
        %3257 = vmatmul.mubr.f32.gmra.mrb[0].mxu0 %v2916
        %v3258 = vpop.f32.mrb[0].mxu0
        %v3259 = vadd.f32 0.0, %v3258
        %v3260 = vpop.f32.mrb[0].mxu0
        %3261 = vmatprep.mubr.f32.mxu0 0.0
        %3262 = vmatmul.mubr.f32.gmra.mrb[0].mxu0 %v2918
        %v3263 = vpop.f32.mrb[0].mxu0
        %v3264 = vadd.f32 0.0, %v3263
        %v3265 = vpop.f32.mrb[0].mxu0
        %3266 = vmatprep.mubr.f32.mxu0 0.0
        %3267 = vmatmul.mubr.f32.gmra.mrb[0].mxu0 %v2920
        %v3268 = vpop.f32.mrb[0].mxu0
        %v3269 = vadd.f32 0.0, %v3268
        %v3270 = vpop.f32.mrb[0].mxu0
        %3271 = vmatprep.mubr.f32.mxu0 0.0
        %3272 = vmatmul.mubr.f32.gmra.mrb[0].mxu0 %v2922
        %v3273 = vpop.f32.mrb[0].mxu0
        %v3274 = vadd.f32 0.0, %v3273
        %v3275 = vpop.f32.mrb[0].mxu0
        %3276 = vmatprep.mubr.f32.mxu0 0.0
        %3277 = vmatmul.mubr.f32.gmra.mrb[0].mxu0 %v2924
        %v3278 = vpop.f32.mrb[0].mxu0
        %v3279 = vadd.f32 0.0, %v3278
        %v3280 = vpop.f32.mrb[0].mxu0
        %3281 = vmatprep.mubr.f32.mxu0 0.0
        %3282 = vmatmul.mubr.f32.gmra.mrb[0].mxu0 %v2926
        %v3283 = vpop.f32.mrb[0].mxu0
        %v3284 = vadd.f32 0.0, %v3283
        %v3285 = vpop.f32.mrb[0].mxu0
        %3286 = vmatprep.mubr.f32.mxu0 0.0
        %3287 = vmatmul.mubr.f32.gmra.mrb[0].mxu0 %v2928
        %v3288 = vpop.f32.mrb[0].mxu0
        %v3289 = vadd.f32 0.0, %v3288
        %v3290 = vpop.f32.mrb[0].mxu0
        %3291 = vmatprep.mubr.f32.mxu0 0.0
        %3292 = vmatmul.mubr.f32.gmra.mrb[0].mxu0 %v2930
        %v3293 = vpop.f32.mrb[0].mxu0
        %v3294 = vadd.f32 0.0, %v3293
        %v3295 = vpop.f32.mrb[0].mxu0
        %3296 = vmatprep.mubr.f32.mxu0 0.0
        %3297 = vmatmul.mubr.f32.gmra.mrb[0].mxu0 %v2932
        %v3298 = vpop.f32.mrb[0].mxu0
        %v3299 = vadd.f32 0.0, %v3298
        %v3300 = vpop.f32.mrb[0].mxu0
        %3301 = vmatprep.mubr.f32.mxu0 0.0
        %3302 = vmatmul.mubr.f32.gmra.mrb[0].mxu0 %v2934
        %v3303 = vpop.f32.mrb[0].mxu0
        %v3304 = vadd.f32 0.0, %v3303
        %v3305 = vpop.f32.mrb[0].mxu0
        %3306 = vmatprep.mubr.f32.mxu0 0.0
        %3307 = vmatmul.mubr.f32.gmra.mrb[0].mxu0 %v2936
        %v3308 = vpop.f32.mrb[0].mxu0
        %v3309 = vadd.f32 0.0, %v3308
        %v3310 = vpop.f32.mrb[0].mxu0
        %3311 = vmatprep.mubr.f32.mxu0 0.0
        %3312 = vmatmul.mubr.f32.gmra.mrb[0].mxu0 %v2938
        %v3313 = vpop.f32.mrb[0].mxu0
        %v3314 = vadd.f32 0.0, %v3313
        %v3315 = vpop.f32.mrb[0].mxu0
        %3316 = vmatprep.mubr.f32.mxu0 0.0
        %3317 = vmatmul.mubr.f32.gmra.mrb[0].mxu0 %v2940
        %v3318 = vpop.f32.mrb[0].mxu0
        %v3319 = vadd.f32 0.0, %v3318
        %v3320 = vpop.f32.mrb[0].mxu0
        %3321 = vmatprep.mubr.f32.mxu0 0.0
        %3322 = vmatmul.mubr.f32.gmra.mrb[0].mxu0 %v2942
        %v3323 = vpop.f32.mrb[0].mxu0
        %v3324 = vadd.f32 0.0, %v3323
        %v3325 = vpop.f32.mrb[0].mxu0
        %3326 = vmatprep.mubr.f32.mxu0 0.0
        %3327 = vmatmul.mubr.f32.gmra.mrb[0].mxu0 %v2944
        %v3328 = vpop.f32.mrb[0].mxu0
        %v3329 = vadd.f32 0.0, %v3328
        %v3330 = vpop.f32.mrb[0].mxu0
        %3331 = vmatprep.mubr.f32.mxu0 0.0
        %3332 = vmatmul.mubr.f32.gmra.mrb[0].mxu0 %v2946
        %v3333 = vpop.f32.mrb[0].mxu0
        %v3334 = vadd.f32 0.0, %v3333
        %v3335 = vpop.f32.mrb[0].mxu0
        %3336 = vmatprep.mubr.f32.mxu0 0.0
        %3337 = vmatmul.mubr.f32.gmra.mrb[0].mxu0 %v2948
        %v3338 = vpop.f32.mrb[0].mxu0
        %v3339 = vadd.f32 0.0, %v3338
        %v3340 = vpop.f32.mrb[0].mxu0
        %3341 = vmatprep.mubr.f32.mxu0 0.0
        %3342 = vmatmul.mubr.f32.gmra.mrb[0].mxu0 %v2950
        %v3343 = vpop.f32.mrb[0].mxu0
        %v3344 = vadd.f32 0.0, %v3343
        %v3345 = vpop.f32.mrb[0].mxu0
        %3346 = vmatprep.mubr.f32.mxu0 0.0
        %3347 = vmatmul.mubr.f32.gmra.mrb[0].mxu0 %v2952
        %v3348 = vpop.f32.mrb[0].mxu0
        %v3349 = vadd.f32 0.0, %v3348
        %v3350 = vpop.f32.mrb[0].mxu0
        %3351 = vmatprep.mubr.f32.mxu0 0.0
        %3352 = vmatmul.mubr.f32.gmra.mrb[0].mxu0 %v2954
        %v3353 = vpop.f32.mrb[0].mxu0
        %v3354 = vadd.f32 0.0, %v3353
        %v3355 = vpop.f32.mrb[0].mxu0
        %3356 = vmatprep.mubr.f32.mxu0 0.0
        %3357 = vmatmul.mubr.f32.gmra.mrb[0].mxu0 %v2956
        %v3358 = vpop.f32.mrb[0].mxu0
        %v3359 = vadd.f32 0.0, %v3358
        %v3360 = vpop.f32.mrb[0].mxu0
        %3361 = vmatprep.mubr.f32.mxu0 0.0
        %3362 = vmatmul.mubr.f32.gmra.mrb[0].mxu0 %v2958
        %v3363 = vpop.f32.mrb[0].mxu0
        %v3364 = vadd.f32 0.0, %v3363
        %v3365 = vpop.f32.mrb[0].mxu0
        %3366 = vmatprep.mubr.f32.mxu0 0.0
        %3367 = vmatmul.mubr.f32.gmra.mrb[0].mxu0 %v2960
        %v3368 = vpop.f32.mrb[0].mxu0
        %v3369 = vadd.f32 0.0, %v3368
        %v3370 = vpop.f32.mrb[0].mxu0
        %3371 = vmatprep.mubr.f32.mxu0 0.0
        %3372 = vmatmul.mubr.f32.gmra.mrb[0].mxu0 %v2962
        %v3373 = vpop.f32.mrb[0].mxu0
        %v3374 = vadd.f32 0.0, %v3373
        %v3375 = vpop.f32.mrb[0].mxu0
        %3376 = vmatprep.mubr.f32.mxu0 0.0
        %3377 = vmatmul.mubr.f32.gmra.mrb[0].mxu0 %v2964
        %v3378 = vpop.f32.mrb[0].mxu0
        %v3379 = vadd.f32 0.0, %v3378
        %v3380 = vpop.f32.mrb[0].mxu0
        %3381 = vmatprep.mubr.f32.mxu0 0.0
        %3382 = vmatmul.mubr.f32.gmra.mrb[0].mxu0 %v2966
        %v3383 = vpop.f32.mrb[0].mxu0
        %v3384 = vadd.f32 0.0, %v3383
        %v3385 = vpop.f32.mrb[0].mxu0
        %3386 = vmatprep.mubr.f32.mxu0 0.0
        %3387 = vmatmul.mubr.f32.gmra.mrb[0].mxu0 %v2968
        %v3388 = vpop.f32.mrb[0].mxu0
        %v3389 = vadd.f32 0.0, %v3388
        %v3390 = vpop.f32.mrb[0].mxu0
        %3391 = vmatprep.mubr.f32.mxu0 0.0
        %3392 = vmatmul.mubr.f32.gmra.mrb[0].mxu0 %v2970
        %v3393 = vpop.f32.mrb[0].mxu0
        %v3394 = vadd.f32 0.0, %v3393
        %v3395 = vpop.f32.mrb[0].mxu0
        %3396 = vmatprep.mubr.f32.mxu0 0.0
        %3397 = vmatmul.mubr.f32.gmra.mrb[0].mxu0 %v2972
        %v3398 = vpop.f32.mrb[0].mxu0
        %v3399 = vadd.f32 0.0, %v3398
        %v3400 = vpop.f32.mrb[0].mxu0
        %3401 = vmatprep.mubr.f32.mxu0 0.0
        %3402 = vmatmul.mubr.f32.gmra.mrb[0].mxu0 %v2974
        %v3403 = vpop.f32.mrb[0].mxu0
        %v3404 = vadd.f32 0.0, %v3403
        %v3405 = vpop.f32.mrb[0].mxu0
        %3406 = vmatprep.mubr.f32.mxu0 0.0
        %3407 = vmatmul.mubr.f32.gmra.mrb[0].mxu0 %v2976
        %v3408 = vpop.f32.mrb[0].mxu0
        %v3409 = vadd.f32 0.0, %v3408
        %v3410 = vpop.f32.mrb[0].mxu0
        %3411 = vmatprep.mubr.f32.mxu0 0.0
        %3412 = vmatmul.mubr.f32.gmra.mrb[0].mxu0 %v2978
        %v3413 = vpop.f32.mrb[0].mxu0
        %v3414 = vadd.f32 0.0, %v3413
        %v3415 = vpop.f32.mrb[0].mxu0
        %3416 = vmatprep.mubr.f32.mxu0 0.0
        %3417 = vmatmul.mubr.f32.gmra.mrb[0].mxu0 %v2980
        %v3418 = vpop.f32.mrb[0].mxu0
        %v3419 = vadd.f32 0.0, %v3418
        %v3420 = vpop.f32.mrb[0].mxu0
        %3421 = vmatprep.mubr.f32.mxu0 0.0
        %3422 = vmatmul.mubr.f32.gmra.mrb[0].mxu0 %v2982
        %v3423 = vpop.f32.mrb[0].mxu0
        %v3424 = vadd.f32 0.0, %v3423
        %v3425 = vpop.f32.mrb[0].mxu0
        %3426 = vmatprep.mubr.f32.mxu0 0.0
        %3427 = vmatmul.mubr.f32.gmra.mrb[0].mxu0 %v2984
        %v3428 = vpop.f32.mrb[0].mxu0
        %v3429 = vadd.f32 0.0, %v3428
        %v3430 = vpop.f32.mrb[0].mxu0
        %3431 = vmatprep.mubr.f32.mxu0 0.0
        %3432 = vmatmul.mubr.f32.gmra.mrb[0].mxu0 %v2986
        %v3433 = vpop.f32.mrb[0].mxu0
        %v3434 = vadd.f32 0.0, %v3433
        %v3435 = vpop.f32.mrb[0].mxu0
        %3436 = vmatprep.mubr.f32.mxu0 0.0
        %3437 = vmatmul.mubr.f32.gmra.mrb[0].mxu0 %v2988
        %v3438 = vpop.f32.mrb[0].mxu0
        %v3439 = vadd.f32 0.0, %v3438
        %v3440 = vpop.f32.mrb[0].mxu0
        %3441 = vmatprep.mubr.f32.mxu0 0.0
        %3442 = vmatmul.mubr.f32.gmra.mrb[0].mxu0 %v2990
        %v3443 = vpop.f32.mrb[0].mxu0
        %v3444 = vadd.f32 0.0, %v3443
        %v3445 = vpop.f32.mrb[0].mxu0
        %3446 = vdwg.mxu0
        %v3447 = vadd.f32 %v2287, %v3059
        %v3448 = vadd.f32 %v2292, %v3064
        %v3449 = vadd.f32 %v2297, %v3069
        %v3450 = vadd.f32 %v2302, %v3074
        %v3451 = vadd.f32 %v2307, %v3079
        %v3452 = vadd.f32 %v2312, %v3084
        %v3453 = vadd.f32 %v2317, %v3089
        %v3454 = vadd.f32 %v2322, %v3094
        %v3455 = vadd.f32 %v2327, %v3099
        %v3456 = vadd.f32 %v2332, %v3104
        %v3457 = vadd.f32 %v2337, %v3109
        %v3458 = vadd.f32 %v2342, %v3114
        %v3459 = vadd.f32 %v2347, %v3119
        %v3460 = vadd.f32 %v2352, %v3124
        %v3461 = vadd.f32 %v2357, %v3129
        %v3462 = vadd.f32 %v2362, %v3134
        %v3463 = vadd.f32 %v2367, %v3139
        %v3464 = vadd.f32 %v2372, %v3144
        %v3465 = vadd.f32 %v2377, %v3149
        %v3466 = vadd.f32 %v2382, %v3154
        %v3467 = vadd.f32 %v2387, %v3159
        %v3468 = vadd.f32 %v2392, %v3164
        %v3469 = vadd.f32 %v2397, %v3169
        %v3470 = vadd.f32 %v2402, %v3174
        %v3471 = vadd.f32 %v2407, %v3179
        %v3472 = vadd.f32 %v2412, %v3184
        %v3473 = vadd.f32 %v2417, %v3189
        %v3474 = vadd.f32 %v2422, %v3194
        %v3475 = vadd.f32 %v2427, %v3199
        %v3476 = vadd.f32 %v2432, %v3204
        %v3477 = vadd.f32 %v2437, %v3209
        %v3478 = vadd.f32 %v2442, %v3214
        %v3479 = vadd.f32 %v2447, %v3219
        %v3480 = vadd.f32 %v2452, %v3224
        %v3481 = vadd.f32 %v2457, %v3229
        %v3482 = vadd.f32 %v2462, %v3234
        %v3483 = vadd.f32 %v2467, %v3239
        %v3484 = vadd.f32 %v2472, %v3244
        %v3485 = vadd.f32 %v2477, %v3249
        %v3486 = vadd.f32 %v2482, %v3254
        %v3487 = vadd.f32 %v2487, %v3259
        %v3488 = vadd.f32 %v2492, %v3264
        %v3489 = vadd.f32 %v2497, %v3269
        %v3490 = vadd.f32 %v2502, %v3274
        %v3491 = vadd.f32 %v2507, %v3279
        %v3492 = vadd.f32 %v2512, %v3284
        %v3493 = vadd.f32 %v2517, %v3289
        %v3494 = vadd.f32 %v2522, %v3294
        %v3495 = vadd.f32 %v2527, %v3299
        %v3496 = vadd.f32 %v2532, %v3304
        %v3497 = vadd.f32 %v2537, %v3309
        %v3498 = vadd.f32 %v2542, %v3314
        %v3499 = vadd.f32 %v2547, %v3319
        %v3500 = vadd.f32 %v2552, %v3324
        %v3501 = vadd.f32 %v2557, %v3329
        %v3502 = vadd.f32 %v2562, %v3334
        %v3503 = vadd.f32 %v2567, %v3339
        %v3504 = vadd.f32 %v2572, %v3344
        %v3505 = vadd.f32 %v2577, %v3349
        %v3506 = vadd.f32 %v2582, %v3354
        %v3507 = vadd.f32 %v2587, %v3359
        %v3508 = vadd.f32 %v2592, %v3364
        %v3509 = vadd.f32 %v2597, %v3369
        %v3510 = vadd.f32 %v2602, %v3374
        %v3511 = vadd.f32 %v2607, %v3379
        %v3512 = vadd.f32 %v2612, %v3384
        %v3513 = vadd.f32 %v2617, %v3389
        %v3514 = vadd.f32 %v2622, %v3394
        %v3515 = vadd.f32 %v2627, %v3399
        %v3516 = vadd.f32 %v2632, %v3404
        %v3517 = vadd.f32 %v2637, %v3409
        %v3518 = vadd.f32 %v2642, %v3414
        %v3519 = vadd.f32 %v2647, %v3419
        %v3520 = vadd.f32 %v2652, %v3424
        %v3521 = vadd.f32 %v2657, %v3429
        %v3522 = vadd.f32 %v2662, %v3434
        %v3523 = vadd.f32 %v2667, %v3439
        %v3524 = vadd.f32 %v2672, %v3444
        %s3525 = scalar_lea.vmem [#allocation7], 96
        %v3526 = vld [vmem:[%s3525] sm:$0xff]
        %v3527 = vld [vmem:[%s3525 + $0x8] sm:$0xff]
        %v3528 = vld [vmem:[%s3525 + $0x10] sm:$0xff]
        %v3529 = vld [vmem:[%s3525 + $0x18] sm:$0xff]
        %v3533 = vrot.slane %v1202, 2
        %v3534 = vsel %vm2680, %v2834, %v3533
        %v3535 = vrot.slane %v1203, 2
        %v3536 = vsel %vm2680, %v3533, %v3535
        %v3537 = vrot.slane %v1204, 2
        %v3538 = vsel %vm2680, %v3535, %v3537
        %v3539 = vsel %vm1452, %v3534, 0
        %v3541 = vsel %vm1452, %v3536, 0
        %v3543 = vsel %vm1452, %v3538, 0
        %v3545 = vsel %vm1452, %v3537, 0
        %3547 = vmatprep.subr.mxu0 0.0
        %3548 = vmatpush1.msra.mxu0 %v3526
        %3549 = vmatprep.subr.mxu0 0.0
        %3550 = vmatpush1.msra.mxu0 %v3527
        %3551 = vmatprep.subr.mxu0 0.0
        %3552 = vmatpush1.msra.mxu0 %v3528
        %3553 = vmatprep.subr.mxu0 0.0
        %3554 = vmatpush1.msra.mxu0 %v3529
        %3555 = vmatprep.subr.mxu0 0.0
        %3556 = vmatpush1.msra.mxu0 0.0
        %3557 = vmatprep.subr.mxu0 0.0
        %3558 = vmatpush1.msra.mxu0 0.0
        %3559 = vmatprep.subr.mxu0 0.0
        %3560 = vmatpush1.msra.mxu0 0.0
        %3561 = vmatprep.subr.mxu0 0.0
        %3562 = vmatpush1.msra.mxu0 0.0
        %3563 = vmatprep.subr.mxu0 0.0
        %3564 = vmatpush1.msra.mxu0 0.0
        %3565 = vmatprep.subr.mxu0 0.0
        %3566 = vmatpush1.msra.mxu0 0.0
        %3567 = vmatprep.subr.mxu0 0.0
        %3568 = vmatpush1.msra.mxu0 0.0
        %3569 = vmatprep.subr.mxu0 0.0
        %3570 = vmatpush1.msra.mxu0 0.0
        %3571 = vmatprep.subr.mxu0 0.0
        %3572 = vmatpush1.msra.mxu0 0.0
        %3573 = vmatprep.subr.mxu0 0.0
        %3574 = vmatpush1.msra.mxu0 0.0
        %3575 = vmatprep.subr.mxu0 0.0
        %3576 = vmatpush1.msra.mxu0 0.0
        %3577 = vmatprep.subr.mxu0 0.0
        %3578 = vmatpush1.msra.mxu0 0.0
        %3579 = vmatprep.subr.mxu0 0.0
        %3580 = vmatpush1.msra.mxu0 0.0
        %3581 = vmatprep.subr.mxu0 0.0
        %3582 = vmatpush1.msra.mxu0 0.0
        %3583 = vmatprep.subr.mxu0 0.0
        %3584 = vmatpush1.msra.mxu0 0.0
        %3585 = vmatprep.subr.mxu0 0.0
        %3586 = vmatpush1.msra.mxu0 0.0
        %3587 = vmatprep.subr.mxu0 0.0
        %3588 = vmatpush1.msra.mxu0 0.0
        %3589 = vmatprep.subr.mxu0 0.0
        %3590 = vmatpush1.msra.mxu0 0.0
        %3591 = vmatprep.subr.mxu0 0.0
        %3592 = vmatpush1.msra.mxu0 0.0
        %3593 = vmatprep.subr.mxu0 0.0
        %3594 = vmatpush1.msra.mxu0 0.0
        %3595 = vmatprep.subr.mxu0 0.0
        %3596 = vmatpush1.msra.mxu0 0.0
        %3597 = vmatprep.subr.mxu0 0.0
        %3598 = vmatpush1.msra.mxu0 0.0
        %3599 = vmatprep.subr.mxu0 0.0
        %3600 = vmatpush1.msra.mxu0 0.0
        %3601 = vmatprep.subr.mxu0 0.0
        %3602 = vmatpush1.msra.mxu0 0.0
        %3603 = vmatprep.subr.mxu0 0.0
        %3604 = vmatpush1.msra.mxu0 0.0
        %3605 = vmatprep.subr.mxu0 0.0
        %3606 = vmatpush1.msra.mxu0 0.0
        %3607 = vmatprep.subr.mxu0 0.0
        %3608 = vmatpush1.msra.mxu0 0.0
        %3609 = vmatprep.subr.mxu0 0.0
        %3610 = vmatpush1.msra.mxu0 0.0
        %3611 = vmatprep.mubr.f32.mxu0 0.0
        %3612 = vmatmul.mubr.f32.gmra.mrb[0].mxu0 %v2842
        %v3613 = vpop.f32.mrb[0].mxu0
        %v3614 = vadd.f32 0.0, %v3613
        %v3615 = vpop.f32.mrb[0].mxu0
        %3616 = vmatprep.mubr.f32.mxu0 0.0
        %3617 = vmatmul.mubr.f32.gmra.mrb[0].mxu0 %v2844
        %v3618 = vpop.f32.mrb[0].mxu0
        %v3619 = vadd.f32 0.0, %v3618
        %v3620 = vpop.f32.mrb[0].mxu0
        %3621 = vmatprep.mubr.f32.mxu0 0.0
        %3622 = vmatmul.mubr.f32.gmra.mrb[0].mxu0 %v2846
        %v3623 = vpop.f32.mrb[0].mxu0
        %v3624 = vadd.f32 0.0, %v3623
        %v3625 = vpop.f32.mrb[0].mxu0
        %3626 = vmatprep.mubr.f32.mxu0 0.0
        %3627 = vmatmul.mubr.f32.gmra.mrb[0].mxu0 %v2848
        %v3628 = vpop.f32.mrb[0].mxu0
        %v3629 = vadd.f32 0.0, %v3628
        %v3630 = vpop.f32.mrb[0].mxu0
        %3631 = vmatprep.mubr.f32.mxu0 0.0
        %3632 = vmatmul.mubr.f32.gmra.mrb[0].mxu0 %v2850
        %v3633 = vpop.f32.mrb[0].mxu0
        %v3634 = vadd.f32 0.0, %v3633
        %v3635 = vpop.f32.mrb[0].mxu0
        %3636 = vmatprep.mubr.f32.mxu0 0.0
        %3637 = vmatmul.mubr.f32.gmra.mrb[0].mxu0 %v2852
        %v3638 = vpop.f32.mrb[0].mxu0
        %v3639 = vadd.f32 0.0, %v3638
        %v3640 = vpop.f32.mrb[0].mxu0
        %3641 = vmatprep.mubr.f32.mxu0 0.0
        %3642 = vmatmul.mubr.f32.gmra.mrb[0].mxu0 %v2854
        %v3643 = vpop.f32.mrb[0].mxu0
        %v3644 = vadd.f32 0.0, %v3643
        %v3645 = vpop.f32.mrb[0].mxu0
        %3646 = vmatprep.mubr.f32.mxu0 0.0
        %3647 = vmatmul.mubr.f32.gmra.mrb[0].mxu0 %v2856
        %v3648 = vpop.f32.mrb[0].mxu0
        %v3649 = vadd.f32 0.0, %v3648
        %v3650 = vpop.f32.mrb[0].mxu0
        %3651 = vmatprep.mubr.f32.mxu0 0.0
        %3652 = vmatmul.mubr.f32.gmra.mrb[0].mxu0 %v2858
        %v3653 = vpop.f32.mrb[0].mxu0
        %v3654 = vadd.f32 0.0, %v3653
        %v3655 = vpop.f32.mrb[0].mxu0
        %3656 = vmatprep.mubr.f32.mxu0 0.0
        %3657 = vmatmul.mubr.f32.gmra.mrb[0].mxu0 %v2860
        %v3658 = vpop.f32.mrb[0].mxu0
        %v3659 = vadd.f32 0.0, %v3658
        %v3660 = vpop.f32.mrb[0].mxu0
        %3661 = vmatprep.mubr.f32.mxu0 0.0
        %3662 = vmatmul.mubr.f32.gmra.mrb[0].mxu0 %v2862
        %v3663 = vpop.f32.mrb[0].mxu0
        %v3664 = vadd.f32 0.0, %v3663
        %v3665 = vpop.f32.mrb[0].mxu0
        %3666 = vmatprep.mubr.f32.mxu0 0.0
        %3667 = vmatmul.mubr.f32.gmra.mrb[0].mxu0 %v2864
        %v3668 = vpop.f32.mrb[0].mxu0
        %v3669 = vadd.f32 0.0, %v3668
        %v3670 = vpop.f32.mrb[0].mxu0
        %3671 = vmatprep.mubr.f32.mxu0 0.0
        %3672 = vmatmul.mubr.f32.gmra.mrb[0].mxu0 %v2866
        %v3673 = vpop.f32.mrb[0].mxu0
        %v3674 = vadd.f32 0.0, %v3673
        %v3675 = vpop.f32.mrb[0].mxu0
        %3676 = vmatprep.mubr.f32.mxu0 0.0
        %3677 = vmatmul.mubr.f32.gmra.mrb[0].mxu0 %v2868
        %v3678 = vpop.f32.mrb[0].mxu0
        %v3679 = vadd.f32 0.0, %v3678
        %v3680 = vpop.f32.mrb[0].mxu0
        %3681 = vmatprep.mubr.f32.mxu0 0.0
        %3682 = vmatmul.mubr.f32.gmra.mrb[0].mxu0 %v2870
        %v3683 = vpop.f32.mrb[0].mxu0
        %v3684 = vadd.f32 0.0, %v3683
        %v3685 = vpop.f32.mrb[0].mxu0
        %3686 = vmatprep.mubr.f32.mxu0 0.0
        %3687 = vmatmul.mubr.f32.gmra.mrb[0].mxu0 %v2872
        %v3688 = vpop.f32.mrb[0].mxu0
        %v3689 = vadd.f32 0.0, %v3688
        %v3690 = vpop.f32.mrb[0].mxu0
        %3691 = vmatprep.mubr.f32.mxu0 0.0
        %3692 = vmatmul.mubr.f32.gmra.mrb[0].mxu0 %v2874
        %v3693 = vpop.f32.mrb[0].mxu0
        %v3694 = vadd.f32 0.0, %v3693
        %v3695 = vpop.f32.mrb[0].mxu0
        %3696 = vmatprep.mubr.f32.mxu0 0.0
        %3697 = vmatmul.mubr.f32.gmra.mrb[0].mxu0 %v2876
        %v3698 = vpop.f32.mrb[0].mxu0
        %v3699 = vadd.f32 0.0, %v3698
        %v3700 = vpop.f32.mrb[0].mxu0
        %3701 = vmatprep.mubr.f32.mxu0 0.0
        %3702 = vmatmul.mubr.f32.gmra.mrb[0].mxu0 %v2878
        %v3703 = vpop.f32.mrb[0].mxu0
        %v3704 = vadd.f32 0.0, %v3703
        %v3705 = vpop.f32.mrb[0].mxu0
        %3706 = vmatprep.mubr.f32.mxu0 0.0
        %3707 = vmatmul.mubr.f32.gmra.mrb[0].mxu0 %v2880
        %v3708 = vpop.f32.mrb[0].mxu0
        %v3709 = vadd.f32 0.0, %v3708
        %v3710 = vpop.f32.mrb[0].mxu0
        %3711 = vmatprep.mubr.f32.mxu0 0.0
        %3712 = vmatmul.mubr.f32.gmra.mrb[0].mxu0 %v2882
        %v3713 = vpop.f32.mrb[0].mxu0
        %v3714 = vadd.f32 0.0, %v3713
        %v3715 = vpop.f32.mrb[0].mxu0
        %3716 = vmatprep.mubr.f32.mxu0 0.0
        %3717 = vmatmul.mubr.f32.gmra.mrb[0].mxu0 %v2884
        %v3718 = vpop.f32.mrb[0].mxu0
        %v3719 = vadd.f32 0.0, %v3718
        %v3720 = vpop.f32.mrb[0].mxu0
        %3721 = vmatprep.mubr.f32.mxu0 0.0
        %3722 = vmatmul.mubr.f32.gmra.mrb[0].mxu0 %v2886
        %v3723 = vpop.f32.mrb[0].mxu0
        %v3724 = vadd.f32 0.0, %v3723
        %v3725 = vpop.f32.mrb[0].mxu0
        %3726 = vmatprep.mubr.f32.mxu0 0.0
        %3727 = vmatmul.mubr.f32.gmra.mrb[0].mxu0 %v2888
        %v3728 = vpop.f32.mrb[0].mxu0
        %v3729 = vadd.f32 0.0, %v3728
        %v3730 = vpop.f32.mrb[0].mxu0
        %3731 = vmatprep.mubr.f32.mxu0 0.0
        %3732 = vmatmul.mubr.f32.gmra.mrb[0].mxu0 %v2890
        %v3733 = vpop.f32.mrb[0].mxu0
        %v3734 = vadd.f32 0.0, %v3733
        %v3735 = vpop.f32.mrb[0].mxu0
        %3736 = vmatprep.mubr.f32.mxu0 0.0
        %3737 = vmatmul.mubr.f32.gmra.mrb[0].mxu0 %v2892
        %v3738 = vpop.f32.mrb[0].mxu0
        %v3739 = vadd.f32 0.0, %v3738
        %v3740 = vpop.f32.mrb[0].mxu0
        %3741 = vmatprep.mubr.f32.mxu0 0.0
        %3742 = vmatmul.mubr.f32.gmra.mrb[0].mxu0 %v2894
        %v3743 = vpop.f32.mrb[0].mxu0
        %v3744 = vadd.f32 0.0, %v3743
        %v3745 = vpop.f32.mrb[0].mxu0
        %3746 = vmatprep.mubr.f32.mxu0 0.0
        %3747 = vmatmul.mubr.f32.gmra.mrb[0].mxu0 %v2896
        %v3748 = vpop.f32.mrb[0].mxu0
        %v3749 = vadd.f32 0.0, %v3748
        %v3750 = vpop.f32.mrb[0].mxu0
        %3751 = vmatprep.mubr.f32.mxu0 0.0
        %3752 = vmatmul.mubr.f32.gmra.mrb[0].mxu0 %v2898
        %v3753 = vpop.f32.mrb[0].mxu0
        %v3754 = vadd.f32 0.0, %v3753
        %v3755 = vpop.f32.mrb[0].mxu0
        %3756 = vmatprep.mubr.f32.mxu0 0.0
        %3757 = vmatmul.mubr.f32.gmra.mrb[0].mxu0 %v2900
        %v3758 = vpop.f32.mrb[0].mxu0
        %v3759 = vadd.f32 0.0, %v3758
        %v3760 = vpop.f32.mrb[0].mxu0
        %3761 = vmatprep.mubr.f32.mxu0 0.0
        %3762 = vmatmul.mubr.f32.gmra.mrb[0].mxu0 %v2902
        %v3763 = vpop.f32.mrb[0].mxu0
        %v3764 = vadd.f32 0.0, %v3763
        %v3765 = vpop.f32.mrb[0].mxu0
        %3766 = vmatprep.mubr.f32.mxu0 0.0
        %3767 = vmatmul.mubr.f32.gmra.mrb[0].mxu0 %v2904
        %v3768 = vpop.f32.mrb[0].mxu0
        %v3769 = vadd.f32 0.0, %v3768
        %v3770 = vpop.f32.mrb[0].mxu0
        %3771 = vmatprep.mubr.f32.mxu0 0.0
        %3772 = vmatmul.mubr.f32.gmra.mrb[0].mxu0 %v2906
        %v3773 = vpop.f32.mrb[0].mxu0
        %v3774 = vadd.f32 0.0, %v3773
        %v3775 = vpop.f32.mrb[0].mxu0
        %3776 = vmatprep.mubr.f32.mxu0 0.0
        %3777 = vmatmul.mubr.f32.gmra.mrb[0].mxu0 %v2908
        %v3778 = vpop.f32.mrb[0].mxu0
        %v3779 = vadd.f32 0.0, %v3778
        %v3780 = vpop.f32.mrb[0].mxu0
        %3781 = vmatprep.mubr.f32.mxu0 0.0
        %3782 = vmatmul.mubr.f32.gmra.mrb[0].mxu0 %v2910
        %v3783 = vpop.f32.mrb[0].mxu0
        %v3784 = vadd.f32 0.0, %v3783
        %v3785 = vpop.f32.mrb[0].mxu0
        %3786 = vmatprep.mubr.f32.mxu0 0.0
        %3787 = vmatmul.mubr.f32.gmra.mrb[0].mxu0 %v2912
        %v3788 = vpop.f32.mrb[0].mxu0
        %v3789 = vadd.f32 0.0, %v3788
        %v3790 = vpop.f32.mrb[0].mxu0
        %3791 = vmatprep.mubr.f32.mxu0 0.0
        %3792 = vmatmul.mubr.f32.gmra.mrb[0].mxu0 %v2914
        %v3793 = vpop.f32.mrb[0].mxu0
        %v3794 = vadd.f32 0.0, %v3793
        %v3795 = vpop.f32.mrb[0].mxu0
        %3796 = vmatprep.mubr.f32.mxu0 0.0
        %3797 = vmatmul.mubr.f32.gmra.mrb[0].mxu0 %v2916
        %v3798 = vpop.f32.mrb[0].mxu0
        %v3799 = vadd.f32 0.0, %v3798
        %v3800 = vpop.f32.mrb[0].mxu0
        %3801 = vmatprep.mubr.f32.mxu0 0.0
        %3802 = vmatmul.mubr.f32.gmra.mrb[0].mxu0 %v2918
        %v3803 = vpop.f32.mrb[0].mxu0
        %v3804 = vadd.f32 0.0, %v3803
        %v3805 = vpop.f32.mrb[0].mxu0
        %3806 = vmatprep.mubr.f32.mxu0 0.0
        %3807 = vmatmul.mubr.f32.gmra.mrb[0].mxu0 %v2920
        %v3808 = vpop.f32.mrb[0].mxu0
        %v3809 = vadd.f32 0.0, %v3808
        %v3810 = vpop.f32.mrb[0].mxu0
        %3811 = vmatprep.mubr.f32.mxu0 0.0
        %3812 = vmatmul.mubr.f32.gmra.mrb[0].mxu0 %v2922
        %v3813 = vpop.f32.mrb[0].mxu0
        %v3814 = vadd.f32 0.0, %v3813
        %v3815 = vpop.f32.mrb[0].mxu0
        %3816 = vmatprep.mubr.f32.mxu0 0.0
        %3817 = vmatmul.mubr.f32.gmra.mrb[0].mxu0 %v2924
        %v3818 = vpop.f32.mrb[0].mxu0
        %v3819 = vadd.f32 0.0, %v3818
        %v3820 = vpop.f32.mrb[0].mxu0
        %3821 = vmatprep.mubr.f32.mxu0 0.0
        %3822 = vmatmul.mubr.f32.gmra.mrb[0].mxu0 %v2926
        %v3823 = vpop.f32.mrb[0].mxu0
        %v3824 = vadd.f32 0.0, %v3823
        %v3825 = vpop.f32.mrb[0].mxu0
        %3826 = vmatprep.mubr.f32.mxu0 0.0
        %3827 = vmatmul.mubr.f32.gmra.mrb[0].mxu0 %v2928
        %v3828 = vpop.f32.mrb[0].mxu0
        %v3829 = vadd.f32 0.0, %v3828
        %v3830 = vpop.f32.mrb[0].mxu0
        %3831 = vmatprep.mubr.f32.mxu0 0.0
        %3832 = vmatmul.mubr.f32.gmra.mrb[0].mxu0 %v2930
        %v3833 = vpop.f32.mrb[0].mxu0
        %v3834 = vadd.f32 0.0, %v3833
        %v3835 = vpop.f32.mrb[0].mxu0
        %3836 = vmatprep.mubr.f32.mxu0 0.0
        %3837 = vmatmul.mubr.f32.gmra.mrb[0].mxu0 %v2932
        %v3838 = vpop.f32.mrb[0].mxu0
        %v3839 = vadd.f32 0.0, %v3838
        %v3840 = vpop.f32.mrb[0].mxu0
        %3841 = vmatprep.mubr.f32.mxu0 0.0
        %3842 = vmatmul.mubr.f32.gmra.mrb[0].mxu0 %v2934
        %v3843 = vpop.f32.mrb[0].mxu0
        %v3844 = vadd.f32 0.0, %v3843
        %v3845 = vpop.f32.mrb[0].mxu0
        %3846 = vmatprep.mubr.f32.mxu0 0.0
        %3847 = vmatmul.mubr.f32.gmra.mrb[0].mxu0 %v2936
        %v3848 = vpop.f32.mrb[0].mxu0
        %v3849 = vadd.f32 0.0, %v3848
        %v3850 = vpop.f32.mrb[0].mxu0
        %3851 = vmatprep.mubr.f32.mxu0 0.0
        %3852 = vmatmul.mubr.f32.gmra.mrb[0].mxu0 %v2938
        %v3853 = vpop.f32.mrb[0].mxu0
        %v3854 = vadd.f32 0.0, %v3853
        %v3855 = vpop.f32.mrb[0].mxu0
        %3856 = vmatprep.mubr.f32.mxu0 0.0
        %3857 = vmatmul.mubr.f32.gmra.mrb[0].mxu0 %v2940
        %v3858 = vpop.f32.mrb[0].mxu0
        %v3859 = vadd.f32 0.0, %v3858
        %v3860 = vpop.f32.mrb[0].mxu0
        %3861 = vmatprep.mubr.f32.mxu0 0.0
        %3862 = vmatmul.mubr.f32.gmra.mrb[0].mxu0 %v2942
        %v3863 = vpop.f32.mrb[0].mxu0
        %v3864 = vadd.f32 0.0, %v3863
        %v3865 = vpop.f32.mrb[0].mxu0
        %3866 = vmatprep.mubr.f32.mxu0 0.0
        %3867 = vmatmul.mubr.f32.gmra.mrb[0].mxu0 %v2944
        %v3868 = vpop.f32.mrb[0].mxu0
        %v3869 = vadd.f32 0.0, %v3868
        %v3870 = vpop.f32.mrb[0].mxu0
        %3871 = vmatprep.mubr.f32.mxu0 0.0
        %3872 = vmatmul.mubr.f32.gmra.mrb[0].mxu0 %v2946
        %v3873 = vpop.f32.mrb[0].mxu0
        %v3874 = vadd.f32 0.0, %v3873
        %v3875 = vpop.f32.mrb[0].mxu0
        %3876 = vmatprep.mubr.f32.mxu0 0.0
        %3877 = vmatmul.mubr.f32.gmra.mrb[0].mxu0 %v2948
        %v3878 = vpop.f32.mrb[0].mxu0
        %v3879 = vadd.f32 0.0, %v3878
        %v3880 = vpop.f32.mrb[0].mxu0
        %3881 = vmatprep.mubr.f32.mxu0 0.0
        %3882 = vmatmul.mubr.f32.gmra.mrb[0].mxu0 %v2950
        %v3883 = vpop.f32.mrb[0].mxu0
        %v3884 = vadd.f32 0.0, %v3883
        %v3885 = vpop.f32.mrb[0].mxu0
        %3886 = vmatprep.mubr.f32.mxu0 0.0
        %3887 = vmatmul.mubr.f32.gmra.mrb[0].mxu0 %v2952
        %v3888 = vpop.f32.mrb[0].mxu0
        %v3889 = vadd.f32 0.0, %v3888
        %v3890 = vpop.f32.mrb[0].mxu0
        %3891 = vmatprep.mubr.f32.mxu0 0.0
        %3892 = vmatmul.mubr.f32.gmra.mrb[0].mxu0 %v2954
        %v3893 = vpop.f32.mrb[0].mxu0
        %v3894 = vadd.f32 0.0, %v3893
        %v3895 = vpop.f32.mrb[0].mxu0
        %3896 = vmatprep.mubr.f32.mxu0 0.0
        %3897 = vmatmul.mubr.f32.gmra.mrb[0].mxu0 %v2956
        %v3898 = vpop.f32.mrb[0].mxu0
        %v3899 = vadd.f32 0.0, %v3898
        %v3900 = vpop.f32.mrb[0].mxu0
        %3901 = vmatprep.mubr.f32.mxu0 0.0
        %3902 = vmatmul.mubr.f32.gmra.mrb[0].mxu0 %v2958
        %v3903 = vpop.f32.mrb[0].mxu0
        %v3904 = vadd.f32 0.0, %v3903
        %v3905 = vpop.f32.mrb[0].mxu0
        %3906 = vmatprep.mubr.f32.mxu0 0.0
        %3907 = vmatmul.mubr.f32.gmra.mrb[0].mxu0 %v2960
        %v3908 = vpop.f32.mrb[0].mxu0
        %v3909 = vadd.f32 0.0, %v3908
        %v3910 = vpop.f32.mrb[0].mxu0
        %3911 = vmatprep.mubr.f32.mxu0 0.0
        %3912 = vmatmul.mubr.f32.gmra.mrb[0].mxu0 %v2962
        %v3913 = vpop.f32.mrb[0].mxu0
        %v3914 = vadd.f32 0.0, %v3913
        %v3915 = vpop.f32.mrb[0].mxu0
        %3916 = vmatprep.mubr.f32.mxu0 0.0
        %3917 = vmatmul.mubr.f32.gmra.mrb[0].mxu0 %v2964
        %v3918 = vpop.f32.mrb[0].mxu0
        %v3919 = vadd.f32 0.0, %v3918
        %v3920 = vpop.f32.mrb[0].mxu0
        %3921 = vmatprep.mubr.f32.mxu0 0.0
        %3922 = vmatmul.mubr.f32.gmra.mrb[0].mxu0 %v2966
        %v3923 = vpop.f32.mrb[0].mxu0
        %v3924 = vadd.f32 0.0, %v3923
        %v3925 = vpop.f32.mrb[0].mxu0
        %3926 = vmatprep.mubr.f32.mxu0 0.0
        %3927 = vmatmul.mubr.f32.gmra.mrb[0].mxu0 %v2968
        %v3928 = vpop.f32.mrb[0].mxu0
        %v3929 = vadd.f32 0.0, %v3928
        %v3930 = vpop.f32.mrb[0].mxu0
        %3931 = vmatprep.mubr.f32.mxu0 0.0
        %3932 = vmatmul.mubr.f32.gmra.mrb[0].mxu0 %v2970
        %v3933 = vpop.f32.mrb[0].mxu0
        %v3934 = vadd.f32 0.0, %v3933
        %v3935 = vpop.f32.mrb[0].mxu0
        %3936 = vmatprep.mubr.f32.mxu0 0.0
        %3937 = vmatmul.mubr.f32.gmra.mrb[0].mxu0 %v2972
        %v3938 = vpop.f32.mrb[0].mxu0
        %v3939 = vadd.f32 0.0, %v3938
        %v3940 = vpop.f32.mrb[0].mxu0
        %3941 = vmatprep.mubr.f32.mxu0 0.0
        %3942 = vmatmul.mubr.f32.gmra.mrb[0].mxu0 %v2974
        %v3943 = vpop.f32.mrb[0].mxu0
        %v3944 = vadd.f32 0.0, %v3943
        %v3945 = vpop.f32.mrb[0].mxu0
        %3946 = vmatprep.mubr.f32.mxu0 0.0
        %3947 = vmatmul.mubr.f32.gmra.mrb[0].mxu0 %v2976
        %v3948 = vpop.f32.mrb[0].mxu0
        %v3949 = vadd.f32 0.0, %v3948
        %v3950 = vpop.f32.mrb[0].mxu0
        %3951 = vmatprep.mubr.f32.mxu0 0.0
        %3952 = vmatmul.mubr.f32.gmra.mrb[0].mxu0 %v2978
        %v3953 = vpop.f32.mrb[0].mxu0
        %v3954 = vadd.f32 0.0, %v3953
        %v3955 = vpop.f32.mrb[0].mxu0
        %3956 = vmatprep.mubr.f32.mxu0 0.0
        %3957 = vmatmul.mubr.f32.gmra.mrb[0].mxu0 %v2980
        %v3958 = vpop.f32.mrb[0].mxu0
        %v3959 = vadd.f32 0.0, %v3958
        %v3960 = vpop.f32.mrb[0].mxu0
        %3961 = vmatprep.mubr.f32.mxu0 0.0
        %3962 = vmatmul.mubr.f32.gmra.mrb[0].mxu0 %v2982
        %v3963 = vpop.f32.mrb[0].mxu0
        %v3964 = vadd.f32 0.0, %v3963
        %v3965 = vpop.f32.mrb[0].mxu0
        %3966 = vmatprep.mubr.f32.mxu0 0.0
        %3967 = vmatmul.mubr.f32.gmra.mrb[0].mxu0 %v2984
        %v3968 = vpop.f32.mrb[0].mxu0
        %v3969 = vadd.f32 0.0, %v3968
        %v3970 = vpop.f32.mrb[0].mxu0
        %3971 = vmatprep.mubr.f32.mxu0 0.0
        %3972 = vmatmul.mubr.f32.gmra.mrb[0].mxu0 %v2986
        %v3973 = vpop.f32.mrb[0].mxu0
        %v3974 = vadd.f32 0.0, %v3973
        %v3975 = vpop.f32.mrb[0].mxu0
        %3976 = vmatprep.mubr.f32.mxu0 0.0
        %3977 = vmatmul.mubr.f32.gmra.mrb[0].mxu0 %v2988
        %v3978 = vpop.f32.mrb[0].mxu0
        %v3979 = vadd.f32 0.0, %v3978
        %v3980 = vpop.f32.mrb[0].mxu0
        %3981 = vmatprep.mubr.f32.mxu0 0.0
        %3982 = vmatmul.mubr.f32.gmra.mrb[0].mxu0 %v3539
        %v3983 = vpop.f32.mrb[0].mxu0
        %v3984 = vadd.f32 0.0, %v3983
        %v3985 = vpop.f32.mrb[0].mxu0
        %3986 = vmatprep.mubr.f32.mxu0 0.0
        %3987 = vmatmul.mubr.f32.gmra.mrb[0].mxu0 %v3541
        %v3988 = vpop.f32.mrb[0].mxu0
        %v3989 = vadd.f32 0.0, %v3988
        %v3990 = vpop.f32.mrb[0].mxu0
        %3991 = vmatprep.mubr.f32.mxu0 0.0
        %3992 = vmatmul.mubr.f32.gmra.mrb[0].mxu0 %v3543
        %v3993 = vpop.f32.mrb[0].mxu0
        %v3994 = vadd.f32 0.0, %v3993
        %v3995 = vpop.f32.mrb[0].mxu0
        %3996 = vmatprep.mubr.f32.mxu0 0.0
        %3997 = vmatmul.mubr.f32.gmra.mrb[0].mxu0 %v3545
        %v3998 = vpop.f32.mrb[0].mxu0
        %v3999 = vadd.f32 0.0, %v3998
        %v4000 = vpop.f32.mrb[0].mxu0
        %4001 = vdwg.mxu0
        %v4002 = vadd.f32 %v3447, %v3614
        %v4003 = vadd.f32 %v3448, %v3619
        %v4004 = vadd.f32 %v3449, %v3624
        %v4005 = vadd.f32 %v3450, %v3629
        %v4006 = vadd.f32 %v3451, %v3634
        %v4007 = vadd.f32 %v3452, %v3639
        %v4008 = vadd.f32 %v3453, %v3644
        %v4009 = vadd.f32 %v3454, %v3649
        %v4010 = vadd.f32 %v3455, %v3654
        %v4011 = vadd.f32 %v3456, %v3659
        %v4012 = vadd.f32 %v3457, %v3664
        %v4013 = vadd.f32 %v3458, %v3669
        %v4014 = vadd.f32 %v3459, %v3674
        %v4015 = vadd.f32 %v3460, %v3679
        %v4016 = vadd.f32 %v3461, %v3684
        %v4017 = vadd.f32 %v3462, %v3689
        %v4018 = vadd.f32 %v3463, %v3694
        %v4019 = vadd.f32 %v3464, %v3699
        %v4020 = vadd.f32 %v3465, %v3704
        %v4021 = vadd.f32 %v3466, %v3709
        %v4022 = vadd.f32 %v3467, %v3714
        %v4023 = vadd.f32 %v3468, %v3719
        %v4024 = vadd.f32 %v3469, %v3724
        %v4025 = vadd.f32 %v3470, %v3729
        %v4026 = vadd.f32 %v3471, %v3734
        %v4027 = vadd.f32 %v3472, %v3739
        %v4028 = vadd.f32 %v3473, %v3744
        %v4029 = vadd.f32 %v3474, %v3749
        %v4030 = vadd.f32 %v3475, %v3754
        %v4031 = vadd.f32 %v3476, %v3759
        %v4032 = vadd.f32 %v3477, %v3764
        %v4033 = vadd.f32 %v3478, %v3769
        %v4034 = vadd.f32 %v3479, %v3774
        %v4035 = vadd.f32 %v3480, %v3779
        %v4036 = vadd.f32 %v3481, %v3784
        %v4037 = vadd.f32 %v3482, %v3789
        %v4038 = vadd.f32 %v3483, %v3794
        %v4039 = vadd.f32 %v3484, %v3799
        %v4040 = vadd.f32 %v3485, %v3804
        %v4041 = vadd.f32 %v3486, %v3809
        %v4042 = vadd.f32 %v3487, %v3814
        %v4043 = vadd.f32 %v3488, %v3819
        %v4044 = vadd.f32 %v3489, %v3824
        %v4045 = vadd.f32 %v3490, %v3829
        %v4046 = vadd.f32 %v3491, %v3834
        %v4047 = vadd.f32 %v3492, %v3839
        %v4048 = vadd.f32 %v3493, %v3844
        %v4049 = vadd.f32 %v3494, %v3849
        %v4050 = vadd.f32 %v3495, %v3854
        %v4051 = vadd.f32 %v3496, %v3859
        %v4052 = vadd.f32 %v3497, %v3864
        %v4053 = vadd.f32 %v3498, %v3869
        %v4054 = vadd.f32 %v3499, %v3874
        %v4055 = vadd.f32 %v3500, %v3879
        %v4056 = vadd.f32 %v3501, %v3884
        %v4057 = vadd.f32 %v3502, %v3889
        %v4058 = vadd.f32 %v3503, %v3894
        %v4059 = vadd.f32 %v3504, %v3899
        %v4060 = vadd.f32 %v3505, %v3904
        %v4061 = vadd.f32 %v3506, %v3909
        %v4062 = vadd.f32 %v3507, %v3914
        %v4063 = vadd.f32 %v3508, %v3919
        %v4064 = vadd.f32 %v3509, %v3924
        %v4065 = vadd.f32 %v3510, %v3929
        %v4066 = vadd.f32 %v3511, %v3934
        %v4067 = vadd.f32 %v3512, %v3939
        %v4068 = vadd.f32 %v3513, %v3944
        %v4069 = vadd.f32 %v3514, %v3949
        %v4070 = vadd.f32 %v3515, %v3954
        %v4071 = vadd.f32 %v3516, %v3959
        %v4072 = vadd.f32 %v3517, %v3964
        %v4073 = vadd.f32 %v3518, %v3969
        %v4074 = vadd.f32 %v3519, %v3974
        %v4075 = vadd.f32 %v3520, %v3979
        %v4076 = vadd.f32 %v3521, %v3984
        %v4077 = vadd.f32 %v3522, %v3989
        %v4078 = vadd.f32 %v3523, %v3994
        %v4079 = vadd.f32 %v3524, %v3999
        %s4080 = scalar_lea.vmem [#allocation7], 128
        %v4081 = vld [vmem:[%s4080] sm:$0xff]
        %v4082 = vld [vmem:[%s4080 + $0x8] sm:$0xff]
        %v4083 = vld [vmem:[%s4080 + $0x10] sm:$0xff]
        %v4084 = vld [vmem:[%s4080 + $0x18] sm:$0xff]
        %vm4086 = vcmask 1044480
        %v4087 = vrot.slane %v1127, 3
        %v4088 = vrot.slane %v1128, 3
        %v4089 = vsel %vm4086, %v4087, %v4088
        %v4090 = vrot.slane %v1129, 3
        %v4091 = vsel %vm4086, %v4088, %v4090
        %v4092 = vrot.slane %v1130, 3
        %v4093 = vsel %vm4086, %v4090, %v4092
        %v4094 = vrot.slane %v1131, 3
        %v4095 = vsel %vm4086, %v4092, %v4094
        %v4096 = vrot.slane %v1132, 3
        %v4097 = vsel %vm4086, %v4094, %v4096
        %v4098 = vrot.slane %v1133, 3
        %v4099 = vsel %vm4086, %v4096, %v4098
        %v4100 = vrot.slane %v1134, 3
        %v4101 = vsel %vm4086, %v4098, %v4100
        %v4102 = vrot.slane %v1135, 3
        %v4103 = vsel %vm4086, %v4100, %v4102
        %v4104 = vrot.slane %v1136, 3
        %v4105 = vsel %vm4086, %v4102, %v4104
        %v4106 = vrot.slane %v1137, 3
        %v4107 = vsel %vm4086, %v4104, %v4106
        %v4108 = vrot.slane %v1138, 3
        %v4109 = vsel %vm4086, %v4106, %v4108
        %v4110 = vrot.slane %v1139, 3
        %v4111 = vsel %vm4086, %v4108, %v4110
        %v4112 = vrot.slane %v1140, 3
        %v4113 = vsel %vm4086, %v4110, %v4112
        %v4114 = vrot.slane %v1141, 3
        %v4115 = vsel %vm4086, %v4112, %v4114
        %v4116 = vrot.slane %v1142, 3
        %v4117 = vsel %vm4086, %v4114, %v4116
        %v4118 = vrot.slane %v1143, 3
        %v4119 = vsel %vm4086, %v4116, %v4118
        %v4120 = vrot.slane %v1144, 3
        %v4121 = vsel %vm4086, %v4118, %v4120
        %v4122 = vrot.slane %v1145, 3
        %v4123 = vsel %vm4086, %v4120, %v4122
        %v4124 = vrot.slane %v1146, 3
        %v4125 = vsel %vm4086, %v4122, %v4124
        %v4126 = vrot.slane %v1147, 3
        %v4127 = vsel %vm4086, %v4124, %v4126
        %v4128 = vrot.slane %v1148, 3
        %v4129 = vsel %vm4086, %v4126, %v4128
        %v4130 = vrot.slane %v1149, 3
        %v4131 = vsel %vm4086, %v4128, %v4130
        %v4132 = vrot.slane %v1150, 3
        %v4133 = vsel %vm4086, %v4130, %v4132
        %v4134 = vrot.slane %v1151, 3
        %v4135 = vsel %vm4086, %v4132, %v4134
        %v4136 = vrot.slane %v1152, 3
        %v4137 = vsel %vm4086, %v4134, %v4136
        %v4138 = vrot.slane %v1153, 3
        %v4139 = vsel %vm4086, %v4136, %v4138
        %v4140 = vrot.slane %v1154, 3
        %v4141 = vsel %vm4086, %v4138, %v4140
        %v4142 = vrot.slane %v1155, 3
        %v4143 = vsel %vm4086, %v4140, %v4142
        %v4144 = vrot.slane %v1156, 3
        %v4145 = vsel %vm4086, %v4142, %v4144
        %v4146 = vrot.slane %v1157, 3
        %v4147 = vsel %vm4086, %v4144, %v4146
        %v4148 = vrot.slane %v1158, 3
        %v4149 = vsel %vm4086, %v4146, %v4148
        %v4150 = vrot.slane %v1159, 3
        %v4151 = vsel %vm4086, %v4148, %v4150
        %v4152 = vrot.slane %v1160, 3
        %v4153 = vsel %vm4086, %v4150, %v4152
        %v4154 = vrot.slane %v1161, 3
        %v4155 = vsel %vm4086, %v4152, %v4154
        %v4156 = vrot.slane %v1162, 3
        %v4157 = vsel %vm4086, %v4154, %v4156
        %v4158 = vrot.slane %v1163, 3
        %v4159 = vsel %vm4086, %v4156, %v4158
        %v4160 = vrot.slane %v1164, 3
        %v4161 = vsel %vm4086, %v4158, %v4160
        %v4162 = vrot.slane %v1165, 3
        %v4163 = vsel %vm4086, %v4160, %v4162
        %v4164 = vrot.slane %v1166, 3
        %v4165 = vsel %vm4086, %v4162, %v4164
        %v4166 = vrot.slane %v1167, 3
        %v4167 = vsel %vm4086, %v4164, %v4166
        %v4168 = vrot.slane %v1168, 3
        %v4169 = vsel %vm4086, %v4166, %v4168
        %v4170 = vrot.slane %v1169, 3
        %v4171 = vsel %vm4086, %v4168, %v4170
        %v4172 = vrot.slane %v1170, 3
        %v4173 = vsel %vm4086, %v4170, %v4172
        %v4174 = vrot.slane %v1171, 3
        %v4175 = vsel %vm4086, %v4172, %v4174
        %v4176 = vrot.slane %v1172, 3
        %v4177 = vsel %vm4086, %v4174, %v4176
        %v4178 = vrot.slane %v1173, 3
        %v4179 = vsel %vm4086, %v4176, %v4178
        %v4180 = vrot.slane %v1174, 3
        %v4181 = vsel %vm4086, %v4178, %v4180
        %v4182 = vrot.slane %v1175, 3
        %v4183 = vsel %vm4086, %v4180, %v4182
        %v4184 = vrot.slane %v1176, 3
        %v4185 = vsel %vm4086, %v4182, %v4184
        %v4186 = vrot.slane %v1177, 3
        %v4187 = vsel %vm4086, %v4184, %v4186
        %v4188 = vrot.slane %v1178, 3
        %v4189 = vsel %vm4086, %v4186, %v4188
        %v4190 = vrot.slane %v1179, 3
        %v4191 = vsel %vm4086, %v4188, %v4190
        %v4192 = vrot.slane %v1180, 3
        %v4193 = vsel %vm4086, %v4190, %v4192
        %v4194 = vrot.slane %v1181, 3
        %v4195 = vsel %vm4086, %v4192, %v4194
        %v4196 = vrot.slane %v1182, 3
        %v4197 = vsel %vm4086, %v4194, %v4196
        %v4198 = vrot.slane %v1183, 3
        %v4199 = vsel %vm4086, %v4196, %v4198
        %v4200 = vrot.slane %v1184, 3
        %v4201 = vsel %vm4086, %v4198, %v4200
        %v4202 = vrot.slane %v1185, 3
        %v4203 = vsel %vm4086, %v4200, %v4202
        %v4204 = vrot.slane %v1186, 3
        %v4205 = vsel %vm4086, %v4202, %v4204
        %v4206 = vrot.slane %v1187, 3
        %v4207 = vsel %vm4086, %v4204, %v4206
        %v4208 = vrot.slane %v1188, 3
        %v4209 = vsel %vm4086, %v4206, %v4208
        %v4210 = vrot.slane %v1189, 3
        %v4211 = vsel %vm4086, %v4208, %v4210
        %v4212 = vrot.slane %v1190, 3
        %v4213 = vsel %vm4086, %v4210, %v4212
        %v4214 = vrot.slane %v1191, 3
        %v4215 = vsel %vm4086, %v4212, %v4214
        %v4216 = vrot.slane %v1192, 3
        %v4217 = vsel %vm4086, %v4214, %v4216
        %v4218 = vrot.slane %v1193, 3
        %v4219 = vsel %vm4086, %v4216, %v4218
        %v4220 = vrot.slane %v1194, 3
        %v4221 = vsel %vm4086, %v4218, %v4220
        %v4222 = vrot.slane %v1195, 3
        %v4223 = vsel %vm4086, %v4220, %v4222
        %v4224 = vrot.slane %v1196, 3
        %v4225 = vsel %vm4086, %v4222, %v4224
        %v4226 = vrot.slane %v1197, 3
        %v4227 = vsel %vm4086, %v4224, %v4226
        %v4228 = vrot.slane %v1198, 3
        %v4229 = vsel %vm4086, %v4226, %v4228
        %v4230 = vrot.slane %v1199, 3
        %v4231 = vsel %vm4086, %v4228, %v4230
        %v4232 = vrot.slane %v1200, 3
        %v4233 = vsel %vm4086, %v4230, %v4232
        %v4234 = vrot.slane %v1201, 3
        %v4235 = vsel %vm4086, %v4232, %v4234
        %v4236 = vrot.slane %v1202, 3
        %v4237 = vsel %vm4086, %v4234, %v4236
        %v4238 = vrot.slane %v1203, 3
        %v4239 = vsel %vm4086, %v4236, %v4238
        %v4240 = vrot.slane %v1204, 3
        %v4241 = vsel %vm4086, %v4238, %v4240
        %v4242 = vrot.slane %v1205, 3
        %v4243 = vsel %vm4086, %v4240, %v4242
        %v4244 = vsel %vm1452, %v4089, 0
        %v4246 = vsel %vm1452, %v4091, 0
        %v4248 = vsel %vm1452, %v4093, 0
        %v4250 = vsel %vm1452, %v4095, 0
        %v4252 = vsel %vm1452, %v4097, 0
        %v4254 = vsel %vm1452, %v4099, 0
        %v4256 = vsel %vm1452, %v4101, 0
        %v4258 = vsel %vm1452, %v4103, 0
        %v4260 = vsel %vm1452, %v4105, 0
        %v4262 = vsel %vm1452, %v4107, 0
        %v4264 = vsel %vm1452, %v4109, 0
        %v4266 = vsel %vm1452, %v4111, 0
        %v4268 = vsel %vm1452, %v4113, 0
        %v4270 = vsel %vm1452, %v4115, 0
        %v4272 = vsel %vm1452, %v4117, 0
        %v4274 = vsel %vm1452, %v4119, 0
        %v4276 = vsel %vm1452, %v4121, 0
        %v4278 = vsel %vm1452, %v4123, 0
        %v4280 = vsel %vm1452, %v4125, 0
        %v4282 = vsel %vm1452, %v4127, 0
        %v4284 = vsel %vm1452, %v4129, 0
        %v4286 = vsel %vm1452, %v4131, 0
        %v4288 = vsel %vm1452, %v4133, 0
        %v4290 = vsel %vm1452, %v4135, 0
        %v4292 = vsel %vm1452, %v4137, 0
        %v4294 = vsel %vm1452, %v4139, 0
        %v4296 = vsel %vm1452, %v4141, 0
        %v4298 = vsel %vm1452, %v4143, 0
        %v4300 = vsel %vm1452, %v4145, 0
        %v4302 = vsel %vm1452, %v4147, 0
        %v4304 = vsel %vm1452, %v4149, 0
        %v4306 = vsel %vm1452, %v4151, 0
        %v4308 = vsel %vm1452, %v4153, 0
        %v4310 = vsel %vm1452, %v4155, 0
        %v4312 = vsel %vm1452, %v4157, 0
        %v4314 = vsel %vm1452, %v4159, 0
        %v4316 = vsel %vm1452, %v4161, 0
        %v4318 = vsel %vm1452, %v4163, 0
        %v4320 = vsel %vm1452, %v4165, 0
        %v4322 = vsel %vm1452, %v4167, 0
        %v4324 = vsel %vm1452, %v4169, 0
        %v4326 = vsel %vm1452, %v4171, 0
        %v4328 = vsel %vm1452, %v4173, 0
        %v4330 = vsel %vm1452, %v4175, 0
        %v4332 = vsel %vm1452, %v4177, 0
        %v4334 = vsel %vm1452, %v4179, 0
        %v4336 = vsel %vm1452, %v4181, 0
        %v4338 = vsel %vm1452, %v4183, 0
        %v4340 = vsel %vm1452, %v4185, 0
        %v4342 = vsel %vm1452, %v4187, 0
        %v4344 = vsel %vm1452, %v4189, 0
        %v4346 = vsel %vm1452, %v4191, 0
        %v4348 = vsel %vm1452, %v4193, 0
        %v4350 = vsel %vm1452, %v4195, 0
        %v4352 = vsel %vm1452, %v4197, 0
        %v4354 = vsel %vm1452, %v4199, 0
        %v4356 = vsel %vm1452, %v4201, 0
        %v4358 = vsel %vm1452, %v4203, 0
        %v4360 = vsel %vm1452, %v4205, 0
        %v4362 = vsel %vm1452, %v4207, 0
        %v4364 = vsel %vm1452, %v4209, 0
        %v4366 = vsel %vm1452, %v4211, 0
        %v4368 = vsel %vm1452, %v4213, 0
        %v4370 = vsel %vm1452, %v4215, 0
        %v4372 = vsel %vm1452, %v4217, 0
        %v4374 = vsel %vm1452, %v4219, 0
        %v4376 = vsel %vm1452, %v4221, 0
        %v4378 = vsel %vm1452, %v4223, 0
        %v4380 = vsel %vm1452, %v4225, 0
        %v4382 = vsel %vm1452, %v4227, 0
        %v4384 = vsel %vm1452, %v4229, 0
        %v4386 = vsel %vm1452, %v4231, 0
        %v4388 = vsel %vm1452, %v4233, 0
        %v4390 = vsel %vm1452, %v4235, 0
        %v4392 = vsel %vm1452, %v4237, 0
        %v4394 = vsel %vm1452, %v4239, 0
        %v4396 = vsel %vm1452, %v4241, 0
        %v4398 = vsel %vm1452, %v4243, 0
        %4400 = vmatprep.subr.mxu0 0.0
        %4401 = vmatpush1.msra.mxu0 %v4081
        %4402 = vmatprep.subr.mxu0 0.0
        %4403 = vmatpush1.msra.mxu0 %v4082
        %4404 = vmatprep.subr.mxu0 0.0
        %4405 = vmatpush1.msra.mxu0 %v4083
        %4406 = vmatprep.subr.mxu0 0.0
        %4407 = vmatpush1.msra.mxu0 %v4084
        %4408 = vmatprep.subr.mxu0 0.0
        %4409 = vmatpush1.msra.mxu0 0.0
        %4410 = vmatprep.subr.mxu0 0.0
        %4411 = vmatpush1.msra.mxu0 0.0
        %4412 = vmatprep.subr.mxu0 0.0
        %4413 = vmatpush1.msra.mxu0 0.0
        %4414 = vmatprep.subr.mxu0 0.0
        %4415 = vmatpush1.msra.mxu0 0.0
        %4416 = vmatprep.subr.mxu0 0.0
        %4417 = vmatpush1.msra.mxu0 0.0
        %4418 = vmatprep.subr.mxu0 0.0
        %4419 = vmatpush1.msra.mxu0 0.0
        %4420 = vmatprep.subr.mxu0 0.0
        %4421 = vmatpush1.msra.mxu0 0.0
        %4422 = vmatprep.subr.mxu0 0.0
        %4423 = vmatpush1.msra.mxu0 0.0
        %4424 = vmatprep.subr.mxu0 0.0
        %4425 = vmatpush1.msra.mxu0 0.0
        %4426 = vmatprep.subr.mxu0 0.0
        %4427 = vmatpush1.msra.mxu0 0.0
        %4428 = vmatprep.subr.mxu0 0.0
        %4429 = vmatpush1.msra.mxu0 0.0
        %4430 = vmatprep.subr.mxu0 0.0
        %4431 = vmatpush1.msra.mxu0 0.0
        %4432 = vmatprep.subr.mxu0 0.0
        %4433 = vmatpush1.msra.mxu0 0.0
        %4434 = vmatprep.subr.mxu0 0.0
        %4435 = vmatpush1.msra.mxu0 0.0
        %4436 = vmatprep.subr.mxu0 0.0
        %4437 = vmatpush1.msra.mxu0 0.0
        %4438 = vmatprep.subr.mxu0 0.0
        %4439 = vmatpush1.msra.mxu0 0.0
        %4440 = vmatprep.subr.mxu0 0.0
        %4441 = vmatpush1.msra.mxu0 0.0
        %4442 = vmatprep.subr.mxu0 0.0
        %4443 = vmatpush1.msra.mxu0 0.0
        %4444 = vmatprep.subr.mxu0 0.0
        %4445 = vmatpush1.msra.mxu0 0.0
        %4446 = vmatprep.subr.mxu0 0.0
        %4447 = vmatpush1.msra.mxu0 0.0
        %4448 = vmatprep.subr.mxu0 0.0
        %4449 = vmatpush1.msra.mxu0 0.0
        %4450 = vmatprep.subr.mxu0 0.0
        %4451 = vmatpush1.msra.mxu0 0.0
        %4452 = vmatprep.subr.mxu0 0.0
        %4453 = vmatpush1.msra.mxu0 0.0
        %4454 = vmatprep.subr.mxu0 0.0
        %4455 = vmatpush1.msra.mxu0 0.0
        %4456 = vmatprep.subr.mxu0 0.0
        %4457 = vmatpush1.msra.mxu0 0.0
        %4458 = vmatprep.subr.mxu0 0.0
        %4459 = vmatpush1.msra.mxu0 0.0
        %4460 = vmatprep.subr.mxu0 0.0
        %4461 = vmatpush1.msra.mxu0 0.0
        %4462 = vmatprep.subr.mxu0 0.0
        %4463 = vmatpush1.msra.mxu0 0.0
        %4464 = vmatprep.mubr.f32.mxu0 0.0
        %4465 = vmatmul.mubr.f32.gmra.mrb[0].mxu0 %v4244
        %v4466 = vpop.f32.mrb[0].mxu0
        %v4467 = vadd.f32 0.0, %v4466
        %v4468 = vpop.f32.mrb[0].mxu0
        %4469 = vmatprep.mubr.f32.mxu0 0.0
        %4470 = vmatmul.mubr.f32.gmra.mrb[0].mxu0 %v4246
        %v4471 = vpop.f32.mrb[0].mxu0
        %v4472 = vadd.f32 0.0, %v4471
        %v4473 = vpop.f32.mrb[0].mxu0
        %4474 = vmatprep.mubr.f32.mxu0 0.0
        %4475 = vmatmul.mubr.f32.gmra.mrb[0].mxu0 %v4248
        %v4476 = vpop.f32.mrb[0].mxu0
        %v4477 = vadd.f32 0.0, %v4476
        %v4478 = vpop.f32.mrb[0].mxu0
        %4479 = vmatprep.mubr.f32.mxu0 0.0
        %4480 = vmatmul.mubr.f32.gmra.mrb[0].mxu0 %v4250
        %v4481 = vpop.f32.mrb[0].mxu0
        %v4482 = vadd.f32 0.0, %v4481
        %v4483 = vpop.f32.mrb[0].mxu0
        %4484 = vmatprep.mubr.f32.mxu0 0.0
        %4485 = vmatmul.mubr.f32.gmra.mrb[0].mxu0 %v4252
        %v4486 = vpop.f32.mrb[0].mxu0
        %v4487 = vadd.f32 0.0, %v4486
        %v4488 = vpop.f32.mrb[0].mxu0
        %4489 = vmatprep.mubr.f32.mxu0 0.0
        %4490 = vmatmul.mubr.f32.gmra.mrb[0].mxu0 %v4254
        %v4491 = vpop.f32.mrb[0].mxu0
        %v4492 = vadd.f32 0.0, %v4491
        %v4493 = vpop.f32.mrb[0].mxu0
        %4494 = vmatprep.mubr.f32.mxu0 0.0
        %4495 = vmatmul.mubr.f32.gmra.mrb[0].mxu0 %v4256
        %v4496 = vpop.f32.mrb[0].mxu0
        %v4497 = vadd.f32 0.0, %v4496
        %v4498 = vpop.f32.mrb[0].mxu0
        %4499 = vmatprep.mubr.f32.mxu0 0.0
        %4500 = vmatmul.mubr.f32.gmra.mrb[0].mxu0 %v4258
        %v4501 = vpop.f32.mrb[0].mxu0
        %v4502 = vadd.f32 0.0, %v4501
        %v4503 = vpop.f32.mrb[0].mxu0
        %4504 = vmatprep.mubr.f32.mxu0 0.0
        %4505 = vmatmul.mubr.f32.gmra.mrb[0].mxu0 %v4260
        %v4506 = vpop.f32.mrb[0].mxu0
        %v4507 = vadd.f32 0.0, %v4506
        %v4508 = vpop.f32.mrb[0].mxu0
        %4509 = vmatprep.mubr.f32.mxu0 0.0
        %4510 = vmatmul.mubr.f32.gmra.mrb[0].mxu0 %v4262
        %v4511 = vpop.f32.mrb[0].mxu0
        %v4512 = vadd.f32 0.0, %v4511
        %v4513 = vpop.f32.mrb[0].mxu0
        %4514 = vmatprep.mubr.f32.mxu0 0.0
        %4515 = vmatmul.mubr.f32.gmra.mrb[0].mxu0 %v4264
        %v4516 = vpop.f32.mrb[0].mxu0
        %v4517 = vadd.f32 0.0, %v4516
        %v4518 = vpop.f32.mrb[0].mxu0
        %4519 = vmatprep.mubr.f32.mxu0 0.0
        %4520 = vmatmul.mubr.f32.gmra.mrb[0].mxu0 %v4266
        %v4521 = vpop.f32.mrb[0].mxu0
        %v4522 = vadd.f32 0.0, %v4521
        %v4523 = vpop.f32.mrb[0].mxu0
        %4524 = vmatprep.mubr.f32.mxu0 0.0
        %4525 = vmatmul.mubr.f32.gmra.mrb[0].mxu0 %v4268
        %v4526 = vpop.f32.mrb[0].mxu0
        %v4527 = vadd.f32 0.0, %v4526
        %v4528 = vpop.f32.mrb[0].mxu0
        %4529 = vmatprep.mubr.f32.mxu0 0.0
        %4530 = vmatmul.mubr.f32.gmra.mrb[0].mxu0 %v4270
        %v4531 = vpop.f32.mrb[0].mxu0
        %v4532 = vadd.f32 0.0, %v4531
        %v4533 = vpop.f32.mrb[0].mxu0
        %4534 = vmatprep.mubr.f32.mxu0 0.0
        %4535 = vmatmul.mubr.f32.gmra.mrb[0].mxu0 %v4272
        %v4536 = vpop.f32.mrb[0].mxu0
        %v4537 = vadd.f32 0.0, %v4536
        %v4538 = vpop.f32.mrb[0].mxu0
        %4539 = vmatprep.mubr.f32.mxu0 0.0
        %4540 = vmatmul.mubr.f32.gmra.mrb[0].mxu0 %v4274
        %v4541 = vpop.f32.mrb[0].mxu0
        %v4542 = vadd.f32 0.0, %v4541
        %v4543 = vpop.f32.mrb[0].mxu0
        %4544 = vmatprep.mubr.f32.mxu0 0.0
        %4545 = vmatmul.mubr.f32.gmra.mrb[0].mxu0 %v4276
        %v4546 = vpop.f32.mrb[0].mxu0
        %v4547 = vadd.f32 0.0, %v4546
        %v4548 = vpop.f32.mrb[0].mxu0
        %4549 = vmatprep.mubr.f32.mxu0 0.0
        %4550 = vmatmul.mubr.f32.gmra.mrb[0].mxu0 %v4278
        %v4551 = vpop.f32.mrb[0].mxu0
        %v4552 = vadd.f32 0.0, %v4551
        %v4553 = vpop.f32.mrb[0].mxu0
        %4554 = vmatprep.mubr.f32.mxu0 0.0
        %4555 = vmatmul.mubr.f32.gmra.mrb[0].mxu0 %v4280
        %v4556 = vpop.f32.mrb[0].mxu0
        %v4557 = vadd.f32 0.0, %v4556
        %v4558 = vpop.f32.mrb[0].mxu0
        %4559 = vmatprep.mubr.f32.mxu0 0.0
        %4560 = vmatmul.mubr.f32.gmra.mrb[0].mxu0 %v4282
        %v4561 = vpop.f32.mrb[0].mxu0
        %v4562 = vadd.f32 0.0, %v4561
        %v4563 = vpop.f32.mrb[0].mxu0
        %4564 = vmatprep.mubr.f32.mxu0 0.0
        %4565 = vmatmul.mubr.f32.gmra.mrb[0].mxu0 %v4284
        %v4566 = vpop.f32.mrb[0].mxu0
        %v4567 = vadd.f32 0.0, %v4566
        %v4568 = vpop.f32.mrb[0].mxu0
        %4569 = vmatprep.mubr.f32.mxu0 0.0
        %4570 = vmatmul.mubr.f32.gmra.mrb[0].mxu0 %v4286
        %v4571 = vpop.f32.mrb[0].mxu0
        %v4572 = vadd.f32 0.0, %v4571
        %v4573 = vpop.f32.mrb[0].mxu0
        %4574 = vmatprep.mubr.f32.mxu0 0.0
        %4575 = vmatmul.mubr.f32.gmra.mrb[0].mxu0 %v4288
        %v4576 = vpop.f32.mrb[0].mxu0
        %v4577 = vadd.f32 0.0, %v4576
        %v4578 = vpop.f32.mrb[0].mxu0
        %4579 = vmatprep.mubr.f32.mxu0 0.0
        %4580 = vmatmul.mubr.f32.gmra.mrb[0].mxu0 %v4290
        %v4581 = vpop.f32.mrb[0].mxu0
        %v4582 = vadd.f32 0.0, %v4581
        %v4583 = vpop.f32.mrb[0].mxu0
        %4584 = vmatprep.mubr.f32.mxu0 0.0
        %4585 = vmatmul.mubr.f32.gmra.mrb[0].mxu0 %v4292
        %v4586 = vpop.f32.mrb[0].mxu0
        %v4587 = vadd.f32 0.0, %v4586
        %v4588 = vpop.f32.mrb[0].mxu0
        %4589 = vmatprep.mubr.f32.mxu0 0.0
        %4590 = vmatmul.mubr.f32.gmra.mrb[0].mxu0 %v4294
        %v4591 = vpop.f32.mrb[0].mxu0
        %v4592 = vadd.f32 0.0, %v4591
        %v4593 = vpop.f32.mrb[0].mxu0
        %4594 = vmatprep.mubr.f32.mxu0 0.0
        %4595 = vmatmul.mubr.f32.gmra.mrb[0].mxu0 %v4296
        %v4596 = vpop.f32.mrb[0].mxu0
        %v4597 = vadd.f32 0.0, %v4596
        %v4598 = vpop.f32.mrb[0].mxu0
        %4599 = vmatprep.mubr.f32.mxu0 0.0
        %4600 = vmatmul.mubr.f32.gmra.mrb[0].mxu0 %v4298
        %v4601 = vpop.f32.mrb[0].mxu0
        %v4602 = vadd.f32 0.0, %v4601
        %v4603 = vpop.f32.mrb[0].mxu0
        %4604 = vmatprep.mubr.f32.mxu0 0.0
        %4605 = vmatmul.mubr.f32.gmra.mrb[0].mxu0 %v4300
        %v4606 = vpop.f32.mrb[0].mxu0
        %v4607 = vadd.f32 0.0, %v4606
        %v4608 = vpop.f32.mrb[0].mxu0
        %4609 = vmatprep.mubr.f32.mxu0 0.0
        %4610 = vmatmul.mubr.f32.gmra.mrb[0].mxu0 %v4302
        %v4611 = vpop.f32.mrb[0].mxu0
        %v4612 = vadd.f32 0.0, %v4611
        %v4613 = vpop.f32.mrb[0].mxu0
        %4614 = vmatprep.mubr.f32.mxu0 0.0
        %4615 = vmatmul.mubr.f32.gmra.mrb[0].mxu0 %v4304
        %v4616 = vpop.f32.mrb[0].mxu0
        %v4617 = vadd.f32 0.0, %v4616
        %v4618 = vpop.f32.mrb[0].mxu0
        %4619 = vmatprep.mubr.f32.mxu0 0.0
        %4620 = vmatmul.mubr.f32.gmra.mrb[0].mxu0 %v4306
        %v4621 = vpop.f32.mrb[0].mxu0
        %v4622 = vadd.f32 0.0, %v4621
        %v4623 = vpop.f32.mrb[0].mxu0
        %4624 = vmatprep.mubr.f32.mxu0 0.0
        %4625 = vmatmul.mubr.f32.gmra.mrb[0].mxu0 %v4308
        %v4626 = vpop.f32.mrb[0].mxu0
        %v4627 = vadd.f32 0.0, %v4626
        %v4628 = vpop.f32.mrb[0].mxu0
        %4629 = vmatprep.mubr.f32.mxu0 0.0
        %4630 = vmatmul.mubr.f32.gmra.mrb[0].mxu0 %v4310
        %v4631 = vpop.f32.mrb[0].mxu0
        %v4632 = vadd.f32 0.0, %v4631
        %v4633 = vpop.f32.mrb[0].mxu0
        %4634 = vmatprep.mubr.f32.mxu0 0.0
        %4635 = vmatmul.mubr.f32.gmra.mrb[0].mxu0 %v4312
        %v4636 = vpop.f32.mrb[0].mxu0
        %v4637 = vadd.f32 0.0, %v4636
        %v4638 = vpop.f32.mrb[0].mxu0
        %4639 = vmatprep.mubr.f32.mxu0 0.0
        %4640 = vmatmul.mubr.f32.gmra.mrb[0].mxu0 %v4314
        %v4641 = vpop.f32.mrb[0].mxu0
        %v4642 = vadd.f32 0.0, %v4641
        %v4643 = vpop.f32.mrb[0].mxu0
        %4644 = vmatprep.mubr.f32.mxu0 0.0
        %4645 = vmatmul.mubr.f32.gmra.mrb[0].mxu0 %v4316
        %v4646 = vpop.f32.mrb[0].mxu0
        %v4647 = vadd.f32 0.0, %v4646
        %v4648 = vpop.f32.mrb[0].mxu0
        %4649 = vmatprep.mubr.f32.mxu0 0.0
        %4650 = vmatmul.mubr.f32.gmra.mrb[0].mxu0 %v4318
        %v4651 = vpop.f32.mrb[0].mxu0
        %v4652 = vadd.f32 0.0, %v4651
        %v4653 = vpop.f32.mrb[0].mxu0
        %4654 = vmatprep.mubr.f32.mxu0 0.0
        %4655 = vmatmul.mubr.f32.gmra.mrb[0].mxu0 %v4320
        %v4656 = vpop.f32.mrb[0].mxu0
        %v4657 = vadd.f32 0.0, %v4656
        %v4658 = vpop.f32.mrb[0].mxu0
        %4659 = vmatprep.mubr.f32.mxu0 0.0
        %4660 = vmatmul.mubr.f32.gmra.mrb[0].mxu0 %v4322
        %v4661 = vpop.f32.mrb[0].mxu0
        %v4662 = vadd.f32 0.0, %v4661
        %v4663 = vpop.f32.mrb[0].mxu0
        %4664 = vmatprep.mubr.f32.mxu0 0.0
        %4665 = vmatmul.mubr.f32.gmra.mrb[0].mxu0 %v4324
        %v4666 = vpop.f32.mrb[0].mxu0
        %v4667 = vadd.f32 0.0, %v4666
        %v4668 = vpop.f32.mrb[0].mxu0
        %4669 = vmatprep.mubr.f32.mxu0 0.0
        %4670 = vmatmul.mubr.f32.gmra.mrb[0].mxu0 %v4326
        %v4671 = vpop.f32.mrb[0].mxu0
        %v4672 = vadd.f32 0.0, %v4671
        %v4673 = vpop.f32.mrb[0].mxu0
        %4674 = vmatprep.mubr.f32.mxu0 0.0
        %4675 = vmatmul.mubr.f32.gmra.mrb[0].mxu0 %v4328
        %v4676 = vpop.f32.mrb[0].mxu0
        %v4677 = vadd.f32 0.0, %v4676
        %v4678 = vpop.f32.mrb[0].mxu0
        %4679 = vmatprep.mubr.f32.mxu0 0.0
        %4680 = vmatmul.mubr.f32.gmra.mrb[0].mxu0 %v4330
        %v4681 = vpop.f32.mrb[0].mxu0
        %v4682 = vadd.f32 0.0, %v4681
        %v4683 = vpop.f32.mrb[0].mxu0
        %4684 = vmatprep.mubr.f32.mxu0 0.0
        %4685 = vmatmul.mubr.f32.gmra.mrb[0].mxu0 %v4332
        %v4686 = vpop.f32.mrb[0].mxu0
        %v4687 = vadd.f32 0.0, %v4686
        %v4688 = vpop.f32.mrb[0].mxu0
        %4689 = vmatprep.mubr.f32.mxu0 0.0
        %4690 = vmatmul.mubr.f32.gmra.mrb[0].mxu0 %v4334
        %v4691 = vpop.f32.mrb[0].mxu0
        %v4692 = vadd.f32 0.0, %v4691
        %v4693 = vpop.f32.mrb[0].mxu0
        %4694 = vmatprep.mubr.f32.mxu0 0.0
        %4695 = vmatmul.mubr.f32.gmra.mrb[0].mxu0 %v4336
        %v4696 = vpop.f32.mrb[0].mxu0
        %v4697 = vadd.f32 0.0, %v4696
        %v4698 = vpop.f32.mrb[0].mxu0
        %4699 = vmatprep.mubr.f32.mxu0 0.0
        %4700 = vmatmul.mubr.f32.gmra.mrb[0].mxu0 %v4338
        %v4701 = vpop.f32.mrb[0].mxu0
        %v4702 = vadd.f32 0.0, %v4701
        %v4703 = vpop.f32.mrb[0].mxu0
        %4704 = vmatprep.mubr.f32.mxu0 0.0
        %4705 = vmatmul.mubr.f32.gmra.mrb[0].mxu0 %v4340
        %v4706 = vpop.f32.mrb[0].mxu0
        %v4707 = vadd.f32 0.0, %v4706
        %v4708 = vpop.f32.mrb[0].mxu0
        %4709 = vmatprep.mubr.f32.mxu0 0.0
        %4710 = vmatmul.mubr.f32.gmra.mrb[0].mxu0 %v4342
        %v4711 = vpop.f32.mrb[0].mxu0
        %v4712 = vadd.f32 0.0, %v4711
        %v4713 = vpop.f32.mrb[0].mxu0
        %4714 = vmatprep.mubr.f32.mxu0 0.0
        %4715 = vmatmul.mubr.f32.gmra.mrb[0].mxu0 %v4344
        %v4716 = vpop.f32.mrb[0].mxu0
        %v4717 = vadd.f32 0.0, %v4716
        %v4718 = vpop.f32.mrb[0].mxu0
        %4719 = vmatprep.mubr.f32.mxu0 0.0
        %4720 = vmatmul.mubr.f32.gmra.mrb[0].mxu0 %v4346
        %v4721 = vpop.f32.mrb[0].mxu0
        %v4722 = vadd.f32 0.0, %v4721
        %v4723 = vpop.f32.mrb[0].mxu0
        %4724 = vmatprep.mubr.f32.mxu0 0.0
        %4725 = vmatmul.mubr.f32.gmra.mrb[0].mxu0 %v4348
        %v4726 = vpop.f32.mrb[0].mxu0
        %v4727 = vadd.f32 0.0, %v4726
        %v4728 = vpop.f32.mrb[0].mxu0
        %4729 = vmatprep.mubr.f32.mxu0 0.0
        %4730 = vmatmul.mubr.f32.gmra.mrb[0].mxu0 %v4350
        %v4731 = vpop.f32.mrb[0].mxu0
        %v4732 = vadd.f32 0.0, %v4731
        %v4733 = vpop.f32.mrb[0].mxu0
        %4734 = vmatprep.mubr.f32.mxu0 0.0
        %4735 = vmatmul.mubr.f32.gmra.mrb[0].mxu0 %v4352
        %v4736 = vpop.f32.mrb[0].mxu0
        %v4737 = vadd.f32 0.0, %v4736
        %v4738 = vpop.f32.mrb[0].mxu0
        %4739 = vmatprep.mubr.f32.mxu0 0.0
        %4740 = vmatmul.mubr.f32.gmra.mrb[0].mxu0 %v4354
        %v4741 = vpop.f32.mrb[0].mxu0
        %v4742 = vadd.f32 0.0, %v4741
        %v4743 = vpop.f32.mrb[0].mxu0
        %4744 = vmatprep.mubr.f32.mxu0 0.0
        %4745 = vmatmul.mubr.f32.gmra.mrb[0].mxu0 %v4356
        %v4746 = vpop.f32.mrb[0].mxu0
        %v4747 = vadd.f32 0.0, %v4746
        %v4748 = vpop.f32.mrb[0].mxu0
        %4749 = vmatprep.mubr.f32.mxu0 0.0
        %4750 = vmatmul.mubr.f32.gmra.mrb[0].mxu0 %v4358
        %v4751 = vpop.f32.mrb[0].mxu0
        %v4752 = vadd.f32 0.0, %v4751
        %v4753 = vpop.f32.mrb[0].mxu0
        %4754 = vmatprep.mubr.f32.mxu0 0.0
        %4755 = vmatmul.mubr.f32.gmra.mrb[0].mxu0 %v4360
        %v4756 = vpop.f32.mrb[0].mxu0
        %v4757 = vadd.f32 0.0, %v4756
        %v4758 = vpop.f32.mrb[0].mxu0
        %4759 = vmatprep.mubr.f32.mxu0 0.0
        %4760 = vmatmul.mubr.f32.gmra.mrb[0].mxu0 %v4362
        %v4761 = vpop.f32.mrb[0].mxu0
        %v4762 = vadd.f32 0.0, %v4761
        %v4763 = vpop.f32.mrb[0].mxu0
        %4764 = vmatprep.mubr.f32.mxu0 0.0
        %4765 = vmatmul.mubr.f32.gmra.mrb[0].mxu0 %v4364
        %v4766 = vpop.f32.mrb[0].mxu0
        %v4767 = vadd.f32 0.0, %v4766
        %v4768 = vpop.f32.mrb[0].mxu0
        %4769 = vmatprep.mubr.f32.mxu0 0.0
        %4770 = vmatmul.mubr.f32.gmra.mrb[0].mxu0 %v4366
        %v4771 = vpop.f32.mrb[0].mxu0
        %v4772 = vadd.f32 0.0, %v4771
        %v4773 = vpop.f32.mrb[0].mxu0
        %4774 = vmatprep.mubr.f32.mxu0 0.0
        %4775 = vmatmul.mubr.f32.gmra.mrb[0].mxu0 %v4368
        %v4776 = vpop.f32.mrb[0].mxu0
        %v4777 = vadd.f32 0.0, %v4776
        %v4778 = vpop.f32.mrb[0].mxu0
        %4779 = vmatprep.mubr.f32.mxu0 0.0
        %4780 = vmatmul.mubr.f32.gmra.mrb[0].mxu0 %v4370
        %v4781 = vpop.f32.mrb[0].mxu0
        %v4782 = vadd.f32 0.0, %v4781
        %v4783 = vpop.f32.mrb[0].mxu0
        %4784 = vmatprep.mubr.f32.mxu0 0.0
        %4785 = vmatmul.mubr.f32.gmra.mrb[0].mxu0 %v4372
        %v4786 = vpop.f32.mrb[0].mxu0
        %v4787 = vadd.f32 0.0, %v4786
        %v4788 = vpop.f32.mrb[0].mxu0
        %4789 = vmatprep.mubr.f32.mxu0 0.0
        %4790 = vmatmul.mubr.f32.gmra.mrb[0].mxu0 %v4374
        %v4791 = vpop.f32.mrb[0].mxu0
        %v4792 = vadd.f32 0.0, %v4791
        %v4793 = vpop.f32.mrb[0].mxu0
        %4794 = vmatprep.mubr.f32.mxu0 0.0
        %4795 = vmatmul.mubr.f32.gmra.mrb[0].mxu0 %v4376
        %v4796 = vpop.f32.mrb[0].mxu0
        %v4797 = vadd.f32 0.0, %v4796
        %v4798 = vpop.f32.mrb[0].mxu0
        %4799 = vmatprep.mubr.f32.mxu0 0.0
        %4800 = vmatmul.mubr.f32.gmra.mrb[0].mxu0 %v4378
        %v4801 = vpop.f32.mrb[0].mxu0
        %v4802 = vadd.f32 0.0, %v4801
        %v4803 = vpop.f32.mrb[0].mxu0
        %4804 = vmatprep.mubr.f32.mxu0 0.0
        %4805 = vmatmul.mubr.f32.gmra.mrb[0].mxu0 %v4380
        %v4806 = vpop.f32.mrb[0].mxu0
        %v4807 = vadd.f32 0.0, %v4806
        %v4808 = vpop.f32.mrb[0].mxu0
        %4809 = vmatprep.mubr.f32.mxu0 0.0
        %4810 = vmatmul.mubr.f32.gmra.mrb[0].mxu0 %v4382
        %v4811 = vpop.f32.mrb[0].mxu0
        %v4812 = vadd.f32 0.0, %v4811
        %v4813 = vpop.f32.mrb[0].mxu0
        %4814 = vmatprep.mubr.f32.mxu0 0.0
        %4815 = vmatmul.mubr.f32.gmra.mrb[0].mxu0 %v4384
        %v4816 = vpop.f32.mrb[0].mxu0
        %v4817 = vadd.f32 0.0, %v4816
        %v4818 = vpop.f32.mrb[0].mxu0
        %4819 = vmatprep.mubr.f32.mxu0 0.0
        %4820 = vmatmul.mubr.f32.gmra.mrb[0].mxu0 %v4386
        %v4821 = vpop.f32.mrb[0].mxu0
        %v4822 = vadd.f32 0.0, %v4821
        %v4823 = vpop.f32.mrb[0].mxu0
        %4824 = vmatprep.mubr.f32.mxu0 0.0
        %4825 = vmatmul.mubr.f32.gmra.mrb[0].mxu0 %v4388
        %v4826 = vpop.f32.mrb[0].mxu0
        %v4827 = vadd.f32 0.0, %v4826
        %v4828 = vpop.f32.mrb[0].mxu0
        %4829 = vmatprep.mubr.f32.mxu0 0.0
        %4830 = vmatmul.mubr.f32.gmra.mrb[0].mxu0 %v4390
        %v4831 = vpop.f32.mrb[0].mxu0
        %v4832 = vadd.f32 0.0, %v4831
        %v4833 = vpop.f32.mrb[0].mxu0
        %4834 = vmatprep.mubr.f32.mxu0 0.0
        %4835 = vmatmul.mubr.f32.gmra.mrb[0].mxu0 %v4392
        %v4836 = vpop.f32.mrb[0].mxu0
        %v4837 = vadd.f32 0.0, %v4836
        %v4838 = vpop.f32.mrb[0].mxu0
        %4839 = vmatprep.mubr.f32.mxu0 0.0
        %4840 = vmatmul.mubr.f32.gmra.mrb[0].mxu0 %v4394
        %v4841 = vpop.f32.mrb[0].mxu0
        %v4842 = vadd.f32 0.0, %v4841
        %v4843 = vpop.f32.mrb[0].mxu0
        %4844 = vmatprep.mubr.f32.mxu0 0.0
        %4845 = vmatmul.mubr.f32.gmra.mrb[0].mxu0 %v4396
        %v4846 = vpop.f32.mrb[0].mxu0
        %v4847 = vadd.f32 0.0, %v4846
        %v4848 = vpop.f32.mrb[0].mxu0
        %4849 = vmatprep.mubr.f32.mxu0 0.0
        %4850 = vmatmul.mubr.f32.gmra.mrb[0].mxu0 %v4398
        %v4851 = vpop.f32.mrb[0].mxu0
        %v4852 = vadd.f32 0.0, %v4851
        %v4853 = vpop.f32.mrb[0].mxu0
        %4854 = vdwg.mxu0
        %v4855 = vadd.f32 %v4002, %v4467
        %v4856 = vadd.f32 %v4003, %v4472
        %v4857 = vadd.f32 %v4004, %v4477
        %v4858 = vadd.f32 %v4005, %v4482
        %v4859 = vadd.f32 %v4006, %v4487
        %v4860 = vadd.f32 %v4007, %v4492
        %v4861 = vadd.f32 %v4008, %v4497
        %v4862 = vadd.f32 %v4009, %v4502
        %v4863 = vadd.f32 %v4010, %v4507
        %v4864 = vadd.f32 %v4011, %v4512
        %v4865 = vadd.f32 %v4012, %v4517
        %v4866 = vadd.f32 %v4013, %v4522
        %v4867 = vadd.f32 %v4014, %v4527
        %v4868 = vadd.f32 %v4015, %v4532
        %v4869 = vadd.f32 %v4016, %v4537
        %v4870 = vadd.f32 %v4017, %v4542
        %v4871 = vadd.f32 %v4018, %v4547
        %v4872 = vadd.f32 %v4019, %v4552
        %v4873 = vadd.f32 %v4020, %v4557
        %v4874 = vadd.f32 %v4021, %v4562
        %v4875 = vadd.f32 %v4022, %v4567
        %v4876 = vadd.f32 %v4023, %v4572
        %v4877 = vadd.f32 %v4024, %v4577
        %v4878 = vadd.f32 %v4025, %v4582
        %v4879 = vadd.f32 %v4026, %v4587
        %v4880 = vadd.f32 %v4027, %v4592
        %v4881 = vadd.f32 %v4028, %v4597
        %v4882 = vadd.f32 %v4029, %v4602
        %v4883 = vadd.f32 %v4030, %v4607
        %v4884 = vadd.f32 %v4031, %v4612
        %v4885 = vadd.f32 %v4032, %v4617
        %v4886 = vadd.f32 %v4033, %v4622
        %v4887 = vadd.f32 %v4034, %v4627
        %v4888 = vadd.f32 %v4035, %v4632
        %v4889 = vadd.f32 %v4036, %v4637
        %v4890 = vadd.f32 %v4037, %v4642
        %v4891 = vadd.f32 %v4038, %v4647
        %v4892 = vadd.f32 %v4039, %v4652
        %v4893 = vadd.f32 %v4040, %v4657
        %v4894 = vadd.f32 %v4041, %v4662
        %v4895 = vadd.f32 %v4042, %v4667
        %v4896 = vadd.f32 %v4043, %v4672
        %v4897 = vadd.f32 %v4044, %v4677
        %v4898 = vadd.f32 %v4045, %v4682
        %v4899 = vadd.f32 %v4046, %v4687
        %v4900 = vadd.f32 %v4047, %v4692
        %v4901 = vadd.f32 %v4048, %v4697
        %v4902 = vadd.f32 %v4049, %v4702
        %v4903 = vadd.f32 %v4050, %v4707
        %v4904 = vadd.f32 %v4051, %v4712
        %v4905 = vadd.f32 %v4052, %v4717
        %v4906 = vadd.f32 %v4053, %v4722
        %v4907 = vadd.f32 %v4054, %v4727
        %v4908 = vadd.f32 %v4055, %v4732
        %v4909 = vadd.f32 %v4056, %v4737
        %v4910 = vadd.f32 %v4057, %v4742
        %v4911 = vadd.f32 %v4058, %v4747
        %v4912 = vadd.f32 %v4059, %v4752
        %v4913 = vadd.f32 %v4060, %v4757
        %v4914 = vadd.f32 %v4061, %v4762
        %v4915 = vadd.f32 %v4062, %v4767
        %v4916 = vadd.f32 %v4063, %v4772
        %v4917 = vadd.f32 %v4064, %v4777
        %v4918 = vadd.f32 %v4065, %v4782
        %v4919 = vadd.f32 %v4066, %v4787
        %v4920 = vadd.f32 %v4067, %v4792
        %v4921 = vadd.f32 %v4068, %v4797
        %v4922 = vadd.f32 %v4069, %v4802
        %v4923 = vadd.f32 %v4070, %v4807
        %v4924 = vadd.f32 %v4071, %v4812
        %v4925 = vadd.f32 %v4072, %v4817
        %v4926 = vadd.f32 %v4073, %v4822
        %v4927 = vadd.f32 %v4074, %v4827
        %v4928 = vadd.f32 %v4075, %v4832
        %v4929 = vadd.f32 %v4076, %v4837
        %v4930 = vadd.f32 %v4077, %v4842
        %v4931 = vadd.f32 %v4078, %v4847
        %v4932 = vadd.f32 %v4079, %v4852
        %s4933 = scalar_lea.vmem [#allocation7], 160
        %v4934 = vld [vmem:[%s4933] sm:$0xff]
        %v4935 = vld [vmem:[%s4933 + $0x8] sm:$0xff]
        %v4936 = vld [vmem:[%s4933 + $0x10] sm:$0xff]
        %v4937 = vld [vmem:[%s4933 + $0x18] sm:$0xff]
        %vm4938 = vcmask 1043456
        %v4939 = vrot.slane %v1127, 4
        %v4940 = vrot.slane %v1128, 4
        %v4941 = vsel %vm4938, %v4939, %v4940
        %v4942 = vrot.slane %v1129, 4
        %v4943 = vsel %vm4938, %v4940, %v4942
        %v4944 = vrot.slane %v1130, 4
        %v4945 = vsel %vm4938, %v4942, %v4944
        %v4946 = vrot.slane %v1131, 4
        %v4947 = vsel %vm4938, %v4944, %v4946
        %v4948 = vrot.slane %v1132, 4
        %v4949 = vsel %vm4938, %v4946, %v4948
        %v4950 = vrot.slane %v1133, 4
        %v4951 = vsel %vm4938, %v4948, %v4950
        %v4952 = vrot.slane %v1134, 4
        %v4953 = vsel %vm4938, %v4950, %v4952
        %v4954 = vrot.slane %v1135, 4
        %v4955 = vsel %vm4938, %v4952, %v4954
        %v4956 = vrot.slane %v1136, 4
        %v4957 = vsel %vm4938, %v4954, %v4956
        %v4958 = vrot.slane %v1137, 4
        %v4959 = vsel %vm4938, %v4956, %v4958
        %v4960 = vrot.slane %v1138, 4
        %v4961 = vsel %vm4938, %v4958, %v4960
        %v4962 = vrot.slane %v1139, 4
        %v4963 = vsel %vm4938, %v4960, %v4962
        %v4964 = vrot.slane %v1140, 4
        %v4965 = vsel %vm4938, %v4962, %v4964
        %v4966 = vrot.slane %v1141, 4
        %v4967 = vsel %vm4938, %v4964, %v4966
        %v4968 = vrot.slane %v1142, 4
        %v4969 = vsel %vm4938, %v4966, %v4968
        %v4970 = vrot.slane %v1143, 4
        %v4971 = vsel %vm4938, %v4968, %v4970
        %v4972 = vrot.slane %v1144, 4
        %v4973 = vsel %vm4938, %v4970, %v4972
        %v4974 = vrot.slane %v1145, 4
        %v4975 = vsel %vm4938, %v4972, %v4974
        %v4976 = vrot.slane %v1146, 4
        %v4977 = vsel %vm4938, %v4974, %v4976
        %v4978 = vrot.slane %v1147, 4
        %v4979 = vsel %vm4938, %v4976, %v4978
        %v4980 = vrot.slane %v1148, 4
        %v4981 = vsel %vm4938, %v4978, %v4980
        %v4982 = vrot.slane %v1149, 4
        %v4983 = vsel %vm4938, %v4980, %v4982
        %v4984 = vrot.slane %v1150, 4
        %v4985 = vsel %vm4938, %v4982, %v4984
        %v4986 = vrot.slane %v1151, 4
        %v4987 = vsel %vm4938, %v4984, %v4986
        %v4988 = vrot.slane %v1152, 4
        %v4989 = vsel %vm4938, %v4986, %v4988
        %v4990 = vrot.slane %v1153, 4
        %v4991 = vsel %vm4938, %v4988, %v4990
        %v4992 = vrot.slane %v1154, 4
        %v4993 = vsel %vm4938, %v4990, %v4992
        %v4994 = vrot.slane %v1155, 4
        %v4995 = vsel %vm4938, %v4992, %v4994
        %v4996 = vrot.slane %v1156, 4
        %v4997 = vsel %vm4938, %v4994, %v4996
        %v4998 = vrot.slane %v1157, 4
        %v4999 = vsel %vm4938, %v4996, %v4998
        %v5000 = vrot.slane %v1158, 4
        %v5001 = vsel %vm4938, %v4998, %v5000
        %v5002 = vrot.slane %v1159, 4
        %v5003 = vsel %vm4938, %v5000, %v5002
        %v5004 = vrot.slane %v1160, 4
        %v5005 = vsel %vm4938, %v5002, %v5004
        %v5006 = vrot.slane %v1161, 4
        %v5007 = vsel %vm4938, %v5004, %v5006
        %v5008 = vrot.slane %v1162, 4
        %v5009 = vsel %vm4938, %v5006, %v5008
        %v5010 = vrot.slane %v1163, 4
        %v5011 = vsel %vm4938, %v5008, %v5010
        %v5012 = vrot.slane %v1164, 4
        %v5013 = vsel %vm4938, %v5010, %v5012
        %v5014 = vrot.slane %v1165, 4
        %v5015 = vsel %vm4938, %v5012, %v5014
        %v5016 = vrot.slane %v1166, 4
        %v5017 = vsel %vm4938, %v5014, %v5016
        %v5018 = vrot.slane %v1167, 4
        %v5019 = vsel %vm4938, %v5016, %v5018
        %v5020 = vrot.slane %v1168, 4
        %v5021 = vsel %vm4938, %v5018, %v5020
        %v5022 = vrot.slane %v1169, 4
        %v5023 = vsel %vm4938, %v5020, %v5022
        %v5024 = vrot.slane %v1170, 4
        %v5025 = vsel %vm4938, %v5022, %v5024
        %v5026 = vrot.slane %v1171, 4
        %v5027 = vsel %vm4938, %v5024, %v5026
        %v5028 = vrot.slane %v1172, 4
        %v5029 = vsel %vm4938, %v5026, %v5028
        %v5030 = vrot.slane %v1173, 4
        %v5031 = vsel %vm4938, %v5028, %v5030
        %v5032 = vrot.slane %v1174, 4
        %v5033 = vsel %vm4938, %v5030, %v5032
        %v5034 = vrot.slane %v1175, 4
        %v5035 = vsel %vm4938, %v5032, %v5034
        %v5036 = vrot.slane %v1176, 4
        %v5037 = vsel %vm4938, %v5034, %v5036
        %v5038 = vrot.slane %v1177, 4
        %v5039 = vsel %vm4938, %v5036, %v5038
        %v5040 = vrot.slane %v1178, 4
        %v5041 = vsel %vm4938, %v5038, %v5040
        %v5042 = vrot.slane %v1179, 4
        %v5043 = vsel %vm4938, %v5040, %v5042
        %v5044 = vrot.slane %v1180, 4
        %v5045 = vsel %vm4938, %v5042, %v5044
        %v5046 = vrot.slane %v1181, 4
        %v5047 = vsel %vm4938, %v5044, %v5046
        %v5048 = vrot.slane %v1182, 4
        %v5049 = vsel %vm4938, %v5046, %v5048
        %v5050 = vrot.slane %v1183, 4
        %v5051 = vsel %vm4938, %v5048, %v5050
        %v5052 = vrot.slane %v1184, 4
        %v5053 = vsel %vm4938, %v5050, %v5052
        %v5054 = vrot.slane %v1185, 4
        %v5055 = vsel %vm4938, %v5052, %v5054
        %v5056 = vrot.slane %v1186, 4
        %v5057 = vsel %vm4938, %v5054, %v5056
        %v5058 = vrot.slane %v1187, 4
        %v5059 = vsel %vm4938, %v5056, %v5058
        %v5060 = vrot.slane %v1188, 4
        %v5061 = vsel %vm4938, %v5058, %v5060
        %v5062 = vrot.slane %v1189, 4
        %v5063 = vsel %vm4938, %v5060, %v5062
        %v5064 = vrot.slane %v1190, 4
        %v5065 = vsel %vm4938, %v5062, %v5064
        %v5066 = vrot.slane %v1191, 4
        %v5067 = vsel %vm4938, %v5064, %v5066
        %v5068 = vrot.slane %v1192, 4
        %v5069 = vsel %vm4938, %v5066, %v5068
        %v5070 = vrot.slane %v1193, 4
        %v5071 = vsel %vm4938, %v5068, %v5070
        %v5072 = vrot.slane %v1194, 4
        %v5073 = vsel %vm4938, %v5070, %v5072
        %v5074 = vrot.slane %v1195, 4
        %v5075 = vsel %vm4938, %v5072, %v5074
        %v5076 = vrot.slane %v1196, 4
        %v5077 = vsel %vm4938, %v5074, %v5076
        %v5078 = vrot.slane %v1197, 4
        %v5079 = vsel %vm4938, %v5076, %v5078
        %v5080 = vrot.slane %v1198, 4
        %v5081 = vsel %vm4938, %v5078, %v5080
        %v5082 = vrot.slane %v1199, 4
        %v5083 = vsel %vm4938, %v5080, %v5082
        %v5084 = vrot.slane %v1200, 4
        %v5085 = vsel %vm4938, %v5082, %v5084
        %v5086 = vrot.slane %v1201, 4
        %v5087 = vsel %vm4938, %v5084, %v5086
        %v5088 = vrot.slane %v1202, 4
        %v5089 = vsel %vm4938, %v5086, %v5088
        %v5090 = vrot.slane %v1203, 4
        %v5091 = vsel %vm4938, %v5088, %v5090
        %v5092 = vrot.slane %v1204, 4
        %v5093 = vsel %vm4938, %v5090, %v5092
        %v5094 = vrot.slane %v1205, 4
        %v5095 = vsel %vm4938, %v5092, %v5094
        %v5096 = vsel %vm1452, %v4941, 0
        %v5098 = vsel %vm1452, %v4943, 0
        %v5100 = vsel %vm1452, %v4945, 0
        %v5102 = vsel %vm1452, %v4947, 0
        %v5104 = vsel %vm1452, %v4949, 0
        %v5106 = vsel %vm1452, %v4951, 0
        %v5108 = vsel %vm1452, %v4953, 0
        %v5110 = vsel %vm1452, %v4955, 0
        %v5112 = vsel %vm1452, %v4957, 0
        %v5114 = vsel %vm1452, %v4959, 0
        %v5116 = vsel %vm1452, %v4961, 0
        %v5118 = vsel %vm1452, %v4963, 0
        %v5120 = vsel %vm1452, %v4965, 0
        %v5122 = vsel %vm1452, %v4967, 0
        %v5124 = vsel %vm1452, %v4969, 0
        %v5126 = vsel %vm1452, %v4971, 0
        %v5128 = vsel %vm1452, %v4973, 0
        %v5130 = vsel %vm1452, %v4975, 0
        %v5132 = vsel %vm1452, %v4977, 0
        %v5134 = vsel %vm1452, %v4979, 0
        %v5136 = vsel %vm1452, %v4981, 0
        %v5138 = vsel %vm1452, %v4983, 0
        %v5140 = vsel %vm1452, %v4985, 0
        %v5142 = vsel %vm1452, %v4987, 0
        %v5144 = vsel %vm1452, %v4989, 0
        %v5146 = vsel %vm1452, %v4991, 0
        %v5148 = vsel %vm1452, %v4993, 0
        %v5150 = vsel %vm1452, %v4995, 0
        %v5152 = vsel %vm1452, %v4997, 0
        %v5154 = vsel %vm1452, %v4999, 0
        %v5156 = vsel %vm1452, %v5001, 0
        %v5158 = vsel %vm1452, %v5003, 0
        %v5160 = vsel %vm1452, %v5005, 0
        %v5162 = vsel %vm1452, %v5007, 0
        %v5164 = vsel %vm1452, %v5009, 0
        %v5166 = vsel %vm1452, %v5011, 0
        %v5168 = vsel %vm1452, %v5013, 0
        %v5170 = vsel %vm1452, %v5015, 0
        %v5172 = vsel %vm1452, %v5017, 0
        %v5174 = vsel %vm1452, %v5019, 0
        %v5176 = vsel %vm1452, %v5021, 0
        %v5178 = vsel %vm1452, %v5023, 0
        %v5180 = vsel %vm1452, %v5025, 0
        %v5182 = vsel %vm1452, %v5027, 0
        %v5184 = vsel %vm1452, %v5029, 0
        %v5186 = vsel %vm1452, %v5031, 0
        %v5188 = vsel %vm1452, %v5033, 0
        %v5190 = vsel %vm1452, %v5035, 0
        %v5192 = vsel %vm1452, %v5037, 0
        %v5194 = vsel %vm1452, %v5039, 0
        %v5196 = vsel %vm1452, %v5041, 0
        %v5198 = vsel %vm1452, %v5043, 0
        %v5200 = vsel %vm1452, %v5045, 0
        %v5202 = vsel %vm1452, %v5047, 0
        %v5204 = vsel %vm1452, %v5049, 0
        %v5206 = vsel %vm1452, %v5051, 0
        %v5208 = vsel %vm1452, %v5053, 0
        %v5210 = vsel %vm1452, %v5055, 0
        %v5212 = vsel %vm1452, %v5057, 0
        %v5214 = vsel %vm1452, %v5059, 0
        %v5216 = vsel %vm1452, %v5061, 0
        %v5218 = vsel %vm1452, %v5063, 0
        %v5220 = vsel %vm1452, %v5065, 0
        %v5222 = vsel %vm1452, %v5067, 0
        %v5224 = vsel %vm1452, %v5069, 0
        %v5226 = vsel %vm1452, %v5071, 0
        %v5228 = vsel %vm1452, %v5073, 0
        %v5230 = vsel %vm1452, %v5075, 0
        %v5232 = vsel %vm1452, %v5077, 0
        %v5234 = vsel %vm1452, %v5079, 0
        %v5236 = vsel %vm1452, %v5081, 0
        %v5238 = vsel %vm1452, %v5083, 0
        %v5240 = vsel %vm1452, %v5085, 0
        %v5242 = vsel %vm1452, %v5087, 0
        %v5244 = vsel %vm1452, %v5089, 0
        %v5246 = vsel %vm1452, %v5091, 0
        %v5248 = vsel %vm1452, %v5093, 0
        %v5250 = vsel %vm1452, %v5095, 0
        %5252 = vmatprep.subr.mxu0 0.0
        %5253 = vmatpush1.msra.mxu0 %v4934
        %5254 = vmatprep.subr.mxu0 0.0
        %5255 = vmatpush1.msra.mxu0 %v4935
        %5256 = vmatprep.subr.mxu0 0.0
        %5257 = vmatpush1.msra.mxu0 %v4936
        %5258 = vmatprep.subr.mxu0 0.0
        %5259 = vmatpush1.msra.mxu0 %v4937
        %5260 = vmatprep.subr.mxu0 0.0
        %5261 = vmatpush1.msra.mxu0 0.0
        %5262 = vmatprep.subr.mxu0 0.0
        %5263 = vmatpush1.msra.mxu0 0.0
        %5264 = vmatprep.subr.mxu0 0.0
        %5265 = vmatpush1.msra.mxu0 0.0
        %5266 = vmatprep.subr.mxu0 0.0
        %5267 = vmatpush1.msra.mxu0 0.0
        %5268 = vmatprep.subr.mxu0 0.0
        %5269 = vmatpush1.msra.mxu0 0.0
        %5270 = vmatprep.subr.mxu0 0.0
        %5271 = vmatpush1.msra.mxu0 0.0
        %5272 = vmatprep.subr.mxu0 0.0
        %5273 = vmatpush1.msra.mxu0 0.0
        %5274 = vmatprep.subr.mxu0 0.0
        %5275 = vmatpush1.msra.mxu0 0.0
        %5276 = vmatprep.subr.mxu0 0.0
        %5277 = vmatpush1.msra.mxu0 0.0
        %5278 = vmatprep.subr.mxu0 0.0
        %5279 = vmatpush1.msra.mxu0 0.0
        %5280 = vmatprep.subr.mxu0 0.0
        %5281 = vmatpush1.msra.mxu0 0.0
        %5282 = vmatprep.subr.mxu0 0.0
        %5283 = vmatpush1.msra.mxu0 0.0
        %5284 = vmatprep.subr.mxu0 0.0
        %5285 = vmatpush1.msra.mxu0 0.0
        %5286 = vmatprep.subr.mxu0 0.0
        %5287 = vmatpush1.msra.mxu0 0.0
        %5288 = vmatprep.subr.mxu0 0.0
        %5289 = vmatpush1.msra.mxu0 0.0
        %5290 = vmatprep.subr.mxu0 0.0
        %5291 = vmatpush1.msra.mxu0 0.0
        %5292 = vmatprep.subr.mxu0 0.0
        %5293 = vmatpush1.msra.mxu0 0.0
        %5294 = vmatprep.subr.mxu0 0.0
        %5295 = vmatpush1.msra.mxu0 0.0
        %5296 = vmatprep.subr.mxu0 0.0
        %5297 = vmatpush1.msra.mxu0 0.0
        %5298 = vmatprep.subr.mxu0 0.0
        %5299 = vmatpush1.msra.mxu0 0.0
        %5300 = vmatprep.subr.mxu0 0.0
        %5301 = vmatpush1.msra.mxu0 0.0
        %5302 = vmatprep.subr.mxu0 0.0
        %5303 = vmatpush1.msra.mxu0 0.0
        %5304 = vmatprep.subr.mxu0 0.0
        %5305 = vmatpush1.msra.mxu0 0.0
        %5306 = vmatprep.subr.mxu0 0.0
        %5307 = vmatpush1.msra.mxu0 0.0
        %5308 = vmatprep.subr.mxu0 0.0
        %5309 = vmatpush1.msra.mxu0 0.0
        %5310 = vmatprep.subr.mxu0 0.0
        %5311 = vmatpush1.msra.mxu0 0.0
        %5312 = vmatprep.subr.mxu0 0.0
        %5313 = vmatpush1.msra.mxu0 0.0
        %5314 = vmatprep.subr.mxu0 0.0
        %5315 = vmatpush1.msra.mxu0 0.0
        %5316 = vmatprep.mubr.f32.mxu0 0.0
        %5317 = vmatmul.mubr.f32.gmra.mrb[0].mxu0 %v5096
        %v5318 = vpop.f32.mrb[0].mxu0
        %v5319 = vadd.f32 0.0, %v5318
        %v5320 = vpop.f32.mrb[0].mxu0
        %5321 = vmatprep.mubr.f32.mxu0 0.0
        %5322 = vmatmul.mubr.f32.gmra.mrb[0].mxu0 %v5098
        %v5323 = vpop.f32.mrb[0].mxu0
        %v5324 = vadd.f32 0.0, %v5323
        %v5325 = vpop.f32.mrb[0].mxu0
        %5326 = vmatprep.mubr.f32.mxu0 0.0
        %5327 = vmatmul.mubr.f32.gmra.mrb[0].mxu0 %v5100
        %v5328 = vpop.f32.mrb[0].mxu0
        %v5329 = vadd.f32 0.0, %v5328
        %v5330 = vpop.f32.mrb[0].mxu0
        %5331 = vmatprep.mubr.f32.mxu0 0.0
        %5332 = vmatmul.mubr.f32.gmra.mrb[0].mxu0 %v5102
        %v5333 = vpop.f32.mrb[0].mxu0
        %v5334 = vadd.f32 0.0, %v5333
        %v5335 = vpop.f32.mrb[0].mxu0
        %5336 = vmatprep.mubr.f32.mxu0 0.0
        %5337 = vmatmul.mubr.f32.gmra.mrb[0].mxu0 %v5104
        %v5338 = vpop.f32.mrb[0].mxu0
        %v5339 = vadd.f32 0.0, %v5338
        %v5340 = vpop.f32.mrb[0].mxu0
        %5341 = vmatprep.mubr.f32.mxu0 0.0
        %5342 = vmatmul.mubr.f32.gmra.mrb[0].mxu0 %v5106
        %v5343 = vpop.f32.mrb[0].mxu0
        %v5344 = vadd.f32 0.0, %v5343
        %v5345 = vpop.f32.mrb[0].mxu0
        %5346 = vmatprep.mubr.f32.mxu0 0.0
        %5347 = vmatmul.mubr.f32.gmra.mrb[0].mxu0 %v5108
        %v5348 = vpop.f32.mrb[0].mxu0
        %v5349 = vadd.f32 0.0, %v5348
        %v5350 = vpop.f32.mrb[0].mxu0
        %5351 = vmatprep.mubr.f32.mxu0 0.0
        %5352 = vmatmul.mubr.f32.gmra.mrb[0].mxu0 %v5110
        %v5353 = vpop.f32.mrb[0].mxu0
        %v5354 = vadd.f32 0.0, %v5353
        %v5355 = vpop.f32.mrb[0].mxu0
        %5356 = vmatprep.mubr.f32.mxu0 0.0
        %5357 = vmatmul.mubr.f32.gmra.mrb[0].mxu0 %v5112
        %v5358 = vpop.f32.mrb[0].mxu0
        %v5359 = vadd.f32 0.0, %v5358
        %v5360 = vpop.f32.mrb[0].mxu0
        %5361 = vmatprep.mubr.f32.mxu0 0.0
        %5362 = vmatmul.mubr.f32.gmra.mrb[0].mxu0 %v5114
        %v5363 = vpop.f32.mrb[0].mxu0
        %v5364 = vadd.f32 0.0, %v5363
        %v5365 = vpop.f32.mrb[0].mxu0
        %5366 = vmatprep.mubr.f32.mxu0 0.0
        %5367 = vmatmul.mubr.f32.gmra.mrb[0].mxu0 %v5116
        %v5368 = vpop.f32.mrb[0].mxu0
        %v5369 = vadd.f32 0.0, %v5368
        %v5370 = vpop.f32.mrb[0].mxu0
        %5371 = vmatprep.mubr.f32.mxu0 0.0
        %5372 = vmatmul.mubr.f32.gmra.mrb[0].mxu0 %v5118
        %v5373 = vpop.f32.mrb[0].mxu0
        %v5374 = vadd.f32 0.0, %v5373
        %v5375 = vpop.f32.mrb[0].mxu0
        %5376 = vmatprep.mubr.f32.mxu0 0.0
        %5377 = vmatmul.mubr.f32.gmra.mrb[0].mxu0 %v5120
        %v5378 = vpop.f32.mrb[0].mxu0
        %v5379 = vadd.f32 0.0, %v5378
        %v5380 = vpop.f32.mrb[0].mxu0
        %5381 = vmatprep.mubr.f32.mxu0 0.0
        %5382 = vmatmul.mubr.f32.gmra.mrb[0].mxu0 %v5122
        %v5383 = vpop.f32.mrb[0].mxu0
        %v5384 = vadd.f32 0.0, %v5383
        %v5385 = vpop.f32.mrb[0].mxu0
        %5386 = vmatprep.mubr.f32.mxu0 0.0
        %5387 = vmatmul.mubr.f32.gmra.mrb[0].mxu0 %v5124
        %v5388 = vpop.f32.mrb[0].mxu0
        %v5389 = vadd.f32 0.0, %v5388
        %v5390 = vpop.f32.mrb[0].mxu0
        %5391 = vmatprep.mubr.f32.mxu0 0.0
        %5392 = vmatmul.mubr.f32.gmra.mrb[0].mxu0 %v5126
        %v5393 = vpop.f32.mrb[0].mxu0
        %v5394 = vadd.f32 0.0, %v5393
        %v5395 = vpop.f32.mrb[0].mxu0
        %5396 = vmatprep.mubr.f32.mxu0 0.0
        %5397 = vmatmul.mubr.f32.gmra.mrb[0].mxu0 %v5128
        %v5398 = vpop.f32.mrb[0].mxu0
        %v5399 = vadd.f32 0.0, %v5398
        %v5400 = vpop.f32.mrb[0].mxu0
        %5401 = vmatprep.mubr.f32.mxu0 0.0
        %5402 = vmatmul.mubr.f32.gmra.mrb[0].mxu0 %v5130
        %v5403 = vpop.f32.mrb[0].mxu0
        %v5404 = vadd.f32 0.0, %v5403
        %v5405 = vpop.f32.mrb[0].mxu0
        %5406 = vmatprep.mubr.f32.mxu0 0.0
        %5407 = vmatmul.mubr.f32.gmra.mrb[0].mxu0 %v5132
        %v5408 = vpop.f32.mrb[0].mxu0
        %v5409 = vadd.f32 0.0, %v5408
        %v5410 = vpop.f32.mrb[0].mxu0
        %5411 = vmatprep.mubr.f32.mxu0 0.0
        %5412 = vmatmul.mubr.f32.gmra.mrb[0].mxu0 %v5134
        %v5413 = vpop.f32.mrb[0].mxu0
        %v5414 = vadd.f32 0.0, %v5413
        %v5415 = vpop.f32.mrb[0].mxu0
        %5416 = vmatprep.mubr.f32.mxu0 0.0
        %5417 = vmatmul.mubr.f32.gmra.mrb[0].mxu0 %v5136
        %v5418 = vpop.f32.mrb[0].mxu0
        %v5419 = vadd.f32 0.0, %v5418
        %v5420 = vpop.f32.mrb[0].mxu0
        %5421 = vmatprep.mubr.f32.mxu0 0.0
        %5422 = vmatmul.mubr.f32.gmra.mrb[0].mxu0 %v5138
        %v5423 = vpop.f32.mrb[0].mxu0
        %v5424 = vadd.f32 0.0, %v5423
        %v5425 = vpop.f32.mrb[0].mxu0
        %5426 = vmatprep.mubr.f32.mxu0 0.0
        %5427 = vmatmul.mubr.f32.gmra.mrb[0].mxu0 %v5140
        %v5428 = vpop.f32.mrb[0].mxu0
        %v5429 = vadd.f32 0.0, %v5428
        %v5430 = vpop.f32.mrb[0].mxu0
        %5431 = vmatprep.mubr.f32.mxu0 0.0
        %5432 = vmatmul.mubr.f32.gmra.mrb[0].mxu0 %v5142
        %v5433 = vpop.f32.mrb[0].mxu0
        %v5434 = vadd.f32 0.0, %v5433
        %v5435 = vpop.f32.mrb[0].mxu0
        %5436 = vmatprep.mubr.f32.mxu0 0.0
        %5437 = vmatmul.mubr.f32.gmra.mrb[0].mxu0 %v5144
        %v5438 = vpop.f32.mrb[0].mxu0
        %v5439 = vadd.f32 0.0, %v5438
        %v5440 = vpop.f32.mrb[0].mxu0
        %5441 = vmatprep.mubr.f32.mxu0 0.0
        %5442 = vmatmul.mubr.f32.gmra.mrb[0].mxu0 %v5146
        %v5443 = vpop.f32.mrb[0].mxu0
        %v5444 = vadd.f32 0.0, %v5443
        %v5445 = vpop.f32.mrb[0].mxu0
        %5446 = vmatprep.mubr.f32.mxu0 0.0
        %5447 = vmatmul.mubr.f32.gmra.mrb[0].mxu0 %v5148
        %v5448 = vpop.f32.mrb[0].mxu0
        %v5449 = vadd.f32 0.0, %v5448
        %v5450 = vpop.f32.mrb[0].mxu0
        %5451 = vmatprep.mubr.f32.mxu0 0.0
        %5452 = vmatmul.mubr.f32.gmra.mrb[0].mxu0 %v5150
        %v5453 = vpop.f32.mrb[0].mxu0
        %v5454 = vadd.f32 0.0, %v5453
        %v5455 = vpop.f32.mrb[0].mxu0
        %5456 = vmatprep.mubr.f32.mxu0 0.0
        %5457 = vmatmul.mubr.f32.gmra.mrb[0].mxu0 %v5152
        %v5458 = vpop.f32.mrb[0].mxu0
        %v5459 = vadd.f32 0.0, %v5458
        %v5460 = vpop.f32.mrb[0].mxu0
        %5461 = vmatprep.mubr.f32.mxu0 0.0
        %5462 = vmatmul.mubr.f32.gmra.mrb[0].mxu0 %v5154
        %v5463 = vpop.f32.mrb[0].mxu0
        %v5464 = vadd.f32 0.0, %v5463
        %v5465 = vpop.f32.mrb[0].mxu0
        %5466 = vmatprep.mubr.f32.mxu0 0.0
        %5467 = vmatmul.mubr.f32.gmra.mrb[0].mxu0 %v5156
        %v5468 = vpop.f32.mrb[0].mxu0
        %v5469 = vadd.f32 0.0, %v5468
        %v5470 = vpop.f32.mrb[0].mxu0
        %5471 = vmatprep.mubr.f32.mxu0 0.0
        %5472 = vmatmul.mubr.f32.gmra.mrb[0].mxu0 %v5158
        %v5473 = vpop.f32.mrb[0].mxu0
        %v5474 = vadd.f32 0.0, %v5473
        %v5475 = vpop.f32.mrb[0].mxu0
        %5476 = vmatprep.mubr.f32.mxu0 0.0
        %5477 = vmatmul.mubr.f32.gmra.mrb[0].mxu0 %v5160
        %v5478 = vpop.f32.mrb[0].mxu0
        %v5479 = vadd.f32 0.0, %v5478
        %v5480 = vpop.f32.mrb[0].mxu0
        %5481 = vmatprep.mubr.f32.mxu0 0.0
        %5482 = vmatmul.mubr.f32.gmra.mrb[0].mxu0 %v5162
        %v5483 = vpop.f32.mrb[0].mxu0
        %v5484 = vadd.f32 0.0, %v5483
        %v5485 = vpop.f32.mrb[0].mxu0
        %5486 = vmatprep.mubr.f32.mxu0 0.0
        %5487 = vmatmul.mubr.f32.gmra.mrb[0].mxu0 %v5164
        %v5488 = vpop.f32.mrb[0].mxu0
        %v5489 = vadd.f32 0.0, %v5488
        %v5490 = vpop.f32.mrb[0].mxu0
        %5491 = vmatprep.mubr.f32.mxu0 0.0
        %5492 = vmatmul.mubr.f32.gmra.mrb[0].mxu0 %v5166
        %v5493 = vpop.f32.mrb[0].mxu0
        %v5494 = vadd.f32 0.0, %v5493
        %v5495 = vpop.f32.mrb[0].mxu0
        %5496 = vmatprep.mubr.f32.mxu0 0.0
        %5497 = vmatmul.mubr.f32.gmra.mrb[0].mxu0 %v5168
        %v5498 = vpop.f32.mrb[0].mxu0
        %v5499 = vadd.f32 0.0, %v5498
        %v5500 = vpop.f32.mrb[0].mxu0
        %5501 = vmatprep.mubr.f32.mxu0 0.0
        %5502 = vmatmul.mubr.f32.gmra.mrb[0].mxu0 %v5170
        %v5503 = vpop.f32.mrb[0].mxu0
        %v5504 = vadd.f32 0.0, %v5503
        %v5505 = vpop.f32.mrb[0].mxu0
        %5506 = vmatprep.mubr.f32.mxu0 0.0
        %5507 = vmatmul.mubr.f32.gmra.mrb[0].mxu0 %v5172
        %v5508 = vpop.f32.mrb[0].mxu0
        %v5509 = vadd.f32 0.0, %v5508
        %v5510 = vpop.f32.mrb[0].mxu0
        %5511 = vmatprep.mubr.f32.mxu0 0.0
        %5512 = vmatmul.mubr.f32.gmra.mrb[0].mxu0 %v5174
        %v5513 = vpop.f32.mrb[0].mxu0
        %v5514 = vadd.f32 0.0, %v5513
        %v5515 = vpop.f32.mrb[0].mxu0
        %5516 = vmatprep.mubr.f32.mxu0 0.0
        %5517 = vmatmul.mubr.f32.gmra.mrb[0].mxu0 %v5176
        %v5518 = vpop.f32.mrb[0].mxu0
        %v5519 = vadd.f32 0.0, %v5518
        %v5520 = vpop.f32.mrb[0].mxu0
        %5521 = vmatprep.mubr.f32.mxu0 0.0
        %5522 = vmatmul.mubr.f32.gmra.mrb[0].mxu0 %v5178
        %v5523 = vpop.f32.mrb[0].mxu0
        %v5524 = vadd.f32 0.0, %v5523
        %v5525 = vpop.f32.mrb[0].mxu0
        %5526 = vmatprep.mubr.f32.mxu0 0.0
        %5527 = vmatmul.mubr.f32.gmra.mrb[0].mxu0 %v5180
        %v5528 = vpop.f32.mrb[0].mxu0
        %v5529 = vadd.f32 0.0, %v5528
        %v5530 = vpop.f32.mrb[0].mxu0
        %5531 = vmatprep.mubr.f32.mxu0 0.0
        %5532 = vmatmul.mubr.f32.gmra.mrb[0].mxu0 %v5182
        %v5533 = vpop.f32.mrb[0].mxu0
        %v5534 = vadd.f32 0.0, %v5533
        %v5535 = vpop.f32.mrb[0].mxu0
        %5536 = vmatprep.mubr.f32.mxu0 0.0
        %5537 = vmatmul.mubr.f32.gmra.mrb[0].mxu0 %v5184
        %v5538 = vpop.f32.mrb[0].mxu0
        %v5539 = vadd.f32 0.0, %v5538
        %v5540 = vpop.f32.mrb[0].mxu0
        %5541 = vmatprep.mubr.f32.mxu0 0.0
        %5542 = vmatmul.mubr.f32.gmra.mrb[0].mxu0 %v5186
        %v5543 = vpop.f32.mrb[0].mxu0
        %v5544 = vadd.f32 0.0, %v5543
        %v5545 = vpop.f32.mrb[0].mxu0
        %5546 = vmatprep.mubr.f32.mxu0 0.0
        %5547 = vmatmul.mubr.f32.gmra.mrb[0].mxu0 %v5188
        %v5548 = vpop.f32.mrb[0].mxu0
        %v5549 = vadd.f32 0.0, %v5548
        %v5550 = vpop.f32.mrb[0].mxu0
        %5551 = vmatprep.mubr.f32.mxu0 0.0
        %5552 = vmatmul.mubr.f32.gmra.mrb[0].mxu0 %v5190
        %v5553 = vpop.f32.mrb[0].mxu0
        %v5554 = vadd.f32 0.0, %v5553
        %v5555 = vpop.f32.mrb[0].mxu0
        %5556 = vmatprep.mubr.f32.mxu0 0.0
        %5557 = vmatmul.mubr.f32.gmra.mrb[0].mxu0 %v5192
        %v5558 = vpop.f32.mrb[0].mxu0
        %v5559 = vadd.f32 0.0, %v5558
        %v5560 = vpop.f32.mrb[0].mxu0
        %5561 = vmatprep.mubr.f32.mxu0 0.0
        %5562 = vmatmul.mubr.f32.gmra.mrb[0].mxu0 %v5194
        %v5563 = vpop.f32.mrb[0].mxu0
        %v5564 = vadd.f32 0.0, %v5563
        %v5565 = vpop.f32.mrb[0].mxu0
        %5566 = vmatprep.mubr.f32.mxu0 0.0
        %5567 = vmatmul.mubr.f32.gmra.mrb[0].mxu0 %v5196
        %v5568 = vpop.f32.mrb[0].mxu0
        %v5569 = vadd.f32 0.0, %v5568
        %v5570 = vpop.f32.mrb[0].mxu0
        %5571 = vmatprep.mubr.f32.mxu0 0.0
        %5572 = vmatmul.mubr.f32.gmra.mrb[0].mxu0 %v5198
        %v5573 = vpop.f32.mrb[0].mxu0
        %v5574 = vadd.f32 0.0, %v5573
        %v5575 = vpop.f32.mrb[0].mxu0
        %5576 = vmatprep.mubr.f32.mxu0 0.0
        %5577 = vmatmul.mubr.f32.gmra.mrb[0].mxu0 %v5200
        %v5578 = vpop.f32.mrb[0].mxu0
        %v5579 = vadd.f32 0.0, %v5578
        %v5580 = vpop.f32.mrb[0].mxu0
        %5581 = vmatprep.mubr.f32.mxu0 0.0
        %5582 = vmatmul.mubr.f32.gmra.mrb[0].mxu0 %v5202
        %v5583 = vpop.f32.mrb[0].mxu0
        %v5584 = vadd.f32 0.0, %v5583
        %v5585 = vpop.f32.mrb[0].mxu0
        %5586 = vmatprep.mubr.f32.mxu0 0.0
        %5587 = vmatmul.mubr.f32.gmra.mrb[0].mxu0 %v5204
        %v5588 = vpop.f32.mrb[0].mxu0
        %v5589 = vadd.f32 0.0, %v5588
        %v5590 = vpop.f32.mrb[0].mxu0
        %5591 = vmatprep.mubr.f32.mxu0 0.0
        %5592 = vmatmul.mubr.f32.gmra.mrb[0].mxu0 %v5206
        %v5593 = vpop.f32.mrb[0].mxu0
        %v5594 = vadd.f32 0.0, %v5593
        %v5595 = vpop.f32.mrb[0].mxu0
        %5596 = vmatprep.mubr.f32.mxu0 0.0
        %5597 = vmatmul.mubr.f32.gmra.mrb[0].mxu0 %v5208
        %v5598 = vpop.f32.mrb[0].mxu0
        %v5599 = vadd.f32 0.0, %v5598
        %v5600 = vpop.f32.mrb[0].mxu0
        %5601 = vmatprep.mubr.f32.mxu0 0.0
        %5602 = vmatmul.mubr.f32.gmra.mrb[0].mxu0 %v5210
        %v5603 = vpop.f32.mrb[0].mxu0
        %v5604 = vadd.f32 0.0, %v5603
        %v5605 = vpop.f32.mrb[0].mxu0
        %5606 = vmatprep.mubr.f32.mxu0 0.0
        %5607 = vmatmul.mubr.f32.gmra.mrb[0].mxu0 %v5212
        %v5608 = vpop.f32.mrb[0].mxu0
        %v5609 = vadd.f32 0.0, %v5608
        %v5610 = vpop.f32.mrb[0].mxu0
        %5611 = vmatprep.mubr.f32.mxu0 0.0
        %5612 = vmatmul.mubr.f32.gmra.mrb[0].mxu0 %v5214
        %v5613 = vpop.f32.mrb[0].mxu0
        %v5614 = vadd.f32 0.0, %v5613
        %v5615 = vpop.f32.mrb[0].mxu0
        %5616 = vmatprep.mubr.f32.mxu0 0.0
        %5617 = vmatmul.mubr.f32.gmra.mrb[0].mxu0 %v5216
        %v5618 = vpop.f32.mrb[0].mxu0
        %v5619 = vadd.f32 0.0, %v5618
        %v5620 = vpop.f32.mrb[0].mxu0
        %5621 = vmatprep.mubr.f32.mxu0 0.0
        %5622 = vmatmul.mubr.f32.gmra.mrb[0].mxu0 %v5218
        %v5623 = vpop.f32.mrb[0].mxu0
        %v5624 = vadd.f32 0.0, %v5623
        %v5625 = vpop.f32.mrb[0].mxu0
        %5626 = vmatprep.mubr.f32.mxu0 0.0
        %5627 = vmatmul.mubr.f32.gmra.mrb[0].mxu0 %v5220
        %v5628 = vpop.f32.mrb[0].mxu0
        %v5629 = vadd.f32 0.0, %v5628
        %v5630 = vpop.f32.mrb[0].mxu0
        %5631 = vmatprep.mubr.f32.mxu0 0.0
        %5632 = vmatmul.mubr.f32.gmra.mrb[0].mxu0 %v5222
        %v5633 = vpop.f32.mrb[0].mxu0
        %v5634 = vadd.f32 0.0, %v5633
        %v5635 = vpop.f32.mrb[0].mxu0
        %5636 = vmatprep.mubr.f32.mxu0 0.0
        %5637 = vmatmul.mubr.f32.gmra.mrb[0].mxu0 %v5224
        %v5638 = vpop.f32.mrb[0].mxu0
        %v5639 = vadd.f32 0.0, %v5638
        %v5640 = vpop.f32.mrb[0].mxu0
        %5641 = vmatprep.mubr.f32.mxu0 0.0
        %5642 = vmatmul.mubr.f32.gmra.mrb[0].mxu0 %v5226
        %v5643 = vpop.f32.mrb[0].mxu0
        %v5644 = vadd.f32 0.0, %v5643
        %v5645 = vpop.f32.mrb[0].mxu0
        %5646 = vmatprep.mubr.f32.mxu0 0.0
        %5647 = vmatmul.mubr.f32.gmra.mrb[0].mxu0 %v5228
        %v5648 = vpop.f32.mrb[0].mxu0
        %v5649 = vadd.f32 0.0, %v5648
        %v5650 = vpop.f32.mrb[0].mxu0
        %5651 = vmatprep.mubr.f32.mxu0 0.0
        %5652 = vmatmul.mubr.f32.gmra.mrb[0].mxu0 %v5230
        %v5653 = vpop.f32.mrb[0].mxu0
        %v5654 = vadd.f32 0.0, %v5653
        %v5655 = vpop.f32.mrb[0].mxu0
        %5656 = vmatprep.mubr.f32.mxu0 0.0
        %5657 = vmatmul.mubr.f32.gmra.mrb[0].mxu0 %v5232
        %v5658 = vpop.f32.mrb[0].mxu0
        %v5659 = vadd.f32 0.0, %v5658
        %v5660 = vpop.f32.mrb[0].mxu0
        %5661 = vmatprep.mubr.f32.mxu0 0.0
        %5662 = vmatmul.mubr.f32.gmra.mrb[0].mxu0 %v5234
        %v5663 = vpop.f32.mrb[0].mxu0
        %v5664 = vadd.f32 0.0, %v5663
        %v5665 = vpop.f32.mrb[0].mxu0
        %5666 = vmatprep.mubr.f32.mxu0 0.0
        %5667 = vmatmul.mubr.f32.gmra.mrb[0].mxu0 %v5236
        %v5668 = vpop.f32.mrb[0].mxu0
        %v5669 = vadd.f32 0.0, %v5668
        %v5670 = vpop.f32.mrb[0].mxu0
        %5671 = vmatprep.mubr.f32.mxu0 0.0
        %5672 = vmatmul.mubr.f32.gmra.mrb[0].mxu0 %v5238
        %v5673 = vpop.f32.mrb[0].mxu0
        %v5674 = vadd.f32 0.0, %v5673
        %v5675 = vpop.f32.mrb[0].mxu0
        %5676 = vmatprep.mubr.f32.mxu0 0.0
        %5677 = vmatmul.mubr.f32.gmra.mrb[0].mxu0 %v5240
        %v5678 = vpop.f32.mrb[0].mxu0
        %v5679 = vadd.f32 0.0, %v5678
        %v5680 = vpop.f32.mrb[0].mxu0
        %5681 = vmatprep.mubr.f32.mxu0 0.0
        %5682 = vmatmul.mubr.f32.gmra.mrb[0].mxu0 %v5242
        %v5683 = vpop.f32.mrb[0].mxu0
        %v5684 = vadd.f32 0.0, %v5683
        %v5685 = vpop.f32.mrb[0].mxu0
        %5686 = vmatprep.mubr.f32.mxu0 0.0
        %5687 = vmatmul.mubr.f32.gmra.mrb[0].mxu0 %v5244
        %v5688 = vpop.f32.mrb[0].mxu0
        %v5689 = vadd.f32 0.0, %v5688
        %v5690 = vpop.f32.mrb[0].mxu0
        %5691 = vmatprep.mubr.f32.mxu0 0.0
        %5692 = vmatmul.mubr.f32.gmra.mrb[0].mxu0 %v5246
        %v5693 = vpop.f32.mrb[0].mxu0
        %v5694 = vadd.f32 0.0, %v5693
        %v5695 = vpop.f32.mrb[0].mxu0
        %5696 = vmatprep.mubr.f32.mxu0 0.0
        %5697 = vmatmul.mubr.f32.gmra.mrb[0].mxu0 %v5248
        %v5698 = vpop.f32.mrb[0].mxu0
        %v5699 = vadd.f32 0.0, %v5698
        %v5700 = vpop.f32.mrb[0].mxu0
        %5701 = vmatprep.mubr.f32.mxu0 0.0
        %5702 = vmatmul.mubr.f32.gmra.mrb[0].mxu0 %v5250
        %v5703 = vpop.f32.mrb[0].mxu0
        %v5704 = vadd.f32 0.0, %v5703
        %v5705 = vpop.f32.mrb[0].mxu0
        %5706 = vdwg.mxu0
        %v5707 = vadd.f32 %v4855, %v5319
        %v5708 = vadd.f32 %v4856, %v5324
        %v5709 = vadd.f32 %v4857, %v5329
        %v5710 = vadd.f32 %v4858, %v5334
        %v5711 = vadd.f32 %v4859, %v5339
        %v5712 = vadd.f32 %v4860, %v5344
        %v5713 = vadd.f32 %v4861, %v5349
        %v5714 = vadd.f32 %v4862, %v5354
        %v5715 = vadd.f32 %v4863, %v5359
        %v5716 = vadd.f32 %v4864, %v5364
        %v5717 = vadd.f32 %v4865, %v5369
        %v5718 = vadd.f32 %v4866, %v5374
        %v5719 = vadd.f32 %v4867, %v5379
        %v5720 = vadd.f32 %v4868, %v5384
        %v5721 = vadd.f32 %v4869, %v5389
        %v5722 = vadd.f32 %v4870, %v5394
        %v5723 = vadd.f32 %v4871, %v5399
        %v5724 = vadd.f32 %v4872, %v5404
        %v5725 = vadd.f32 %v4873, %v5409
        %v5726 = vadd.f32 %v4874, %v5414
        %v5727 = vadd.f32 %v4875, %v5419
        %v5728 = vadd.f32 %v4876, %v5424
        %v5729 = vadd.f32 %v4877, %v5429
        %v5730 = vadd.f32 %v4878, %v5434
        %v5731 = vadd.f32 %v4879, %v5439
        %v5732 = vadd.f32 %v4880, %v5444
        %v5733 = vadd.f32 %v4881, %v5449
        %v5734 = vadd.f32 %v4882, %v5454
        %v5735 = vadd.f32 %v4883, %v5459
        %v5736 = vadd.f32 %v4884, %v5464
        %v5737 = vadd.f32 %v4885, %v5469
        %v5738 = vadd.f32 %v4886, %v5474
        %v5739 = vadd.f32 %v4887, %v5479
        %v5740 = vadd.f32 %v4888, %v5484
        %v5741 = vadd.f32 %v4889, %v5489
        %v5742 = vadd.f32 %v4890, %v5494
        %v5743 = vadd.f32 %v4891, %v5499
        %v5744 = vadd.f32 %v4892, %v5504
        %v5745 = vadd.f32 %v4893, %v5509
        %v5746 = vadd.f32 %v4894, %v5514
        %v5747 = vadd.f32 %v4895, %v5519
        %v5748 = vadd.f32 %v4896, %v5524
        %v5749 = vadd.f32 %v4897, %v5529
        %v5750 = vadd.f32 %v4898, %v5534
        %v5751 = vadd.f32 %v4899, %v5539
        %v5752 = vadd.f32 %v4900, %v5544
        %v5753 = vadd.f32 %v4901, %v5549
        %v5754 = vadd.f32 %v4902, %v5554
        %v5755 = vadd.f32 %v4903, %v5559
        %v5756 = vadd.f32 %v4904, %v5564
        %v5757 = vadd.f32 %v4905, %v5569
        %v5758 = vadd.f32 %v4906, %v5574
        %v5759 = vadd.f32 %v4907, %v5579
        %v5760 = vadd.f32 %v4908, %v5584
        %v5761 = vadd.f32 %v4909, %v5589
        %v5762 = vadd.f32 %v4910, %v5594
        %v5763 = vadd.f32 %v4911, %v5599
        %v5764 = vadd.f32 %v4912, %v5604
        %v5765 = vadd.f32 %v4913, %v5609
        %v5766 = vadd.f32 %v4914, %v5614
        %v5767 = vadd.f32 %v4915, %v5619
        %v5768 = vadd.f32 %v4916, %v5624
        %v5769 = vadd.f32 %v4917, %v5629
        %v5770 = vadd.f32 %v4918, %v5634
        %v5771 = vadd.f32 %v4919, %v5639
        %v5772 = vadd.f32 %v4920, %v5644
        %v5773 = vadd.f32 %v4921, %v5649
        %v5774 = vadd.f32 %v4922, %v5654
        %v5775 = vadd.f32 %v4923, %v5659
        %v5776 = vadd.f32 %v4924, %v5664
        %v5777 = vadd.f32 %v4925, %v5669
        %v5778 = vadd.f32 %v4926, %v5674
        %v5779 = vadd.f32 %v4927, %v5679
        %v5780 = vadd.f32 %v4928, %v5684
        %v5781 = vadd.f32 %v4929, %v5689
        %v5782 = vadd.f32 %v4930, %v5694
        %v5783 = vadd.f32 %v4931, %v5699
        %v5784 = vadd.f32 %v4932, %v5704
        %s5785 = scalar_lea.vmem [#allocation7], 192
        %v5786 = vld [vmem:[%s5785] sm:$0xff]
        %v5787 = vld [vmem:[%s5785 + $0x8] sm:$0xff]
        %v5788 = vld [vmem:[%s5785 + $0x10] sm:$0xff]
        %v5789 = vld [vmem:[%s5785 + $0x18] sm:$0xff]
        %v5793 = vrot.slane %v1206, 4
        %v5794 = vsel %vm4938, %v5094, %v5793
        %v5795 = vrot.slane %v1207, 4
        %v5796 = vsel %vm4938, %v5793, %v5795
        %v5797 = vrot.slane %v1208, 4
        %v5798 = vsel %vm4938, %v5795, %v5797
        %v5799 = vsel %vm1452, %v5794, 0
        %v5801 = vsel %vm1452, %v5796, 0
        %v5803 = vsel %vm1452, %v5798, 0
        %5805 = vmatprep.subr.mxu0 0.0
        %5806 = vmatpush1.msra.mxu0 %v5786
        %5807 = vmatprep.subr.mxu0 0.0
        %5808 = vmatpush1.msra.mxu0 %v5787
        %5809 = vmatprep.subr.mxu0 0.0
        %5810 = vmatpush1.msra.mxu0 %v5788
        %5811 = vmatprep.subr.mxu0 0.0
        %5812 = vmatpush1.msra.mxu0 %v5789
        %5813 = vmatprep.subr.mxu0 0.0
        %5814 = vmatpush1.msra.mxu0 0.0
        %5815 = vmatprep.subr.mxu0 0.0
        %5816 = vmatpush1.msra.mxu0 0.0
        %5817 = vmatprep.subr.mxu0 0.0
        %5818 = vmatpush1.msra.mxu0 0.0
        %5819 = vmatprep.subr.mxu0 0.0
        %5820 = vmatpush1.msra.mxu0 0.0
        %5821 = vmatprep.subr.mxu0 0.0
        %5822 = vmatpush1.msra.mxu0 0.0
        %5823 = vmatprep.subr.mxu0 0.0
        %5824 = vmatpush1.msra.mxu0 0.0
        %5825 = vmatprep.subr.mxu0 0.0
        %5826 = vmatpush1.msra.mxu0 0.0
        %5827 = vmatprep.subr.mxu0 0.0
        %5828 = vmatpush1.msra.mxu0 0.0
        %5829 = vmatprep.subr.mxu0 0.0
        %5830 = vmatpush1.msra.mxu0 0.0
        %5831 = vmatprep.subr.mxu0 0.0
        %5832 = vmatpush1.msra.mxu0 0.0
        %5833 = vmatprep.subr.mxu0 0.0
        %5834 = vmatpush1.msra.mxu0 0.0
        %5835 = vmatprep.subr.mxu0 0.0
        %5836 = vmatpush1.msra.mxu0 0.0
        %5837 = vmatprep.subr.mxu0 0.0
        %5838 = vmatpush1.msra.mxu0 0.0
        %5839 = vmatprep.subr.mxu0 0.0
        %5840 = vmatpush1.msra.mxu0 0.0
        %5841 = vmatprep.subr.mxu0 0.0
        %5842 = vmatpush1.msra.mxu0 0.0
        %5843 = vmatprep.subr.mxu0 0.0
        %5844 = vmatpush1.msra.mxu0 0.0
        %5845 = vmatprep.subr.mxu0 0.0
        %5846 = vmatpush1.msra.mxu0 0.0
        %5847 = vmatprep.subr.mxu0 0.0
        %5848 = vmatpush1.msra.mxu0 0.0
        %5849 = vmatprep.subr.mxu0 0.0
        %5850 = vmatpush1.msra.mxu0 0.0
        %5851 = vmatprep.subr.mxu0 0.0
        %5852 = vmatpush1.msra.mxu0 0.0
        %5853 = vmatprep.subr.mxu0 0.0
        %5854 = vmatpush1.msra.mxu0 0.0
        %5855 = vmatprep.subr.mxu0 0.0
        %5856 = vmatpush1.msra.mxu0 0.0
        %5857 = vmatprep.subr.mxu0 0.0
        %5858 = vmatpush1.msra.mxu0 0.0
        %5859 = vmatprep.subr.mxu0 0.0
        %5860 = vmatpush1.msra.mxu0 0.0
        %5861 = vmatprep.subr.mxu0 0.0
        %5862 = vmatpush1.msra.mxu0 0.0
        %5863 = vmatprep.subr.mxu0 0.0
        %5864 = vmatpush1.msra.mxu0 0.0
        %5865 = vmatprep.subr.mxu0 0.0
        %5866 = vmatpush1.msra.mxu0 0.0
        %5867 = vmatprep.subr.mxu0 0.0
        %5868 = vmatpush1.msra.mxu0 0.0
        %5869 = vmatprep.mubr.f32.mxu0 0.0
        %5870 = vmatmul.mubr.f32.gmra.mrb[0].mxu0 %v5102
        %v5871 = vpop.f32.mrb[0].mxu0
        %v5872 = vadd.f32 0.0, %v5871
        %v5873 = vpop.f32.mrb[0].mxu0
        %5874 = vmatprep.mubr.f32.mxu0 0.0
        %5875 = vmatmul.mubr.f32.gmra.mrb[0].mxu0 %v5104
        %v5876 = vpop.f32.mrb[0].mxu0
        %v5877 = vadd.f32 0.0, %v5876
        %v5878 = vpop.f32.mrb[0].mxu0
        %5879 = vmatprep.mubr.f32.mxu0 0.0
        %5880 = vmatmul.mubr.f32.gmra.mrb[0].mxu0 %v5106
        %v5881 = vpop.f32.mrb[0].mxu0
        %v5882 = vadd.f32 0.0, %v5881
        %v5883 = vpop.f32.mrb[0].mxu0
        %5884 = vmatprep.mubr.f32.mxu0 0.0
        %5885 = vmatmul.mubr.f32.gmra.mrb[0].mxu0 %v5108
        %v5886 = vpop.f32.mrb[0].mxu0
        %v5887 = vadd.f32 0.0, %v5886
        %v5888 = vpop.f32.mrb[0].mxu0
        %5889 = vmatprep.mubr.f32.mxu0 0.0
        %5890 = vmatmul.mubr.f32.gmra.mrb[0].mxu0 %v5110
        %v5891 = vpop.f32.mrb[0].mxu0
        %v5892 = vadd.f32 0.0, %v5891
        %v5893 = vpop.f32.mrb[0].mxu0
        %5894 = vmatprep.mubr.f32.mxu0 0.0
        %5895 = vmatmul.mubr.f32.gmra.mrb[0].mxu0 %v5112
        %v5896 = vpop.f32.mrb[0].mxu0
        %v5897 = vadd.f32 0.0, %v5896
        %v5898 = vpop.f32.mrb[0].mxu0
        %5899 = vmatprep.mubr.f32.mxu0 0.0
        %5900 = vmatmul.mubr.f32.gmra.mrb[0].mxu0 %v5114
        %v5901 = vpop.f32.mrb[0].mxu0
        %v5902 = vadd.f32 0.0, %v5901
        %v5903 = vpop.f32.mrb[0].mxu0
        %5904 = vmatprep.mubr.f32.mxu0 0.0
        %5905 = vmatmul.mubr.f32.gmra.mrb[0].mxu0 %v5116
        %v5906 = vpop.f32.mrb[0].mxu0
        %v5907 = vadd.f32 0.0, %v5906
        %v5908 = vpop.f32.mrb[0].mxu0
        %5909 = vmatprep.mubr.f32.mxu0 0.0
        %5910 = vmatmul.mubr.f32.gmra.mrb[0].mxu0 %v5118
        %v5911 = vpop.f32.mrb[0].mxu0
        %v5912 = vadd.f32 0.0, %v5911
        %v5913 = vpop.f32.mrb[0].mxu0
        %5914 = vmatprep.mubr.f32.mxu0 0.0
        %5915 = vmatmul.mubr.f32.gmra.mrb[0].mxu0 %v5120
        %v5916 = vpop.f32.mrb[0].mxu0
        %v5917 = vadd.f32 0.0, %v5916
        %v5918 = vpop.f32.mrb[0].mxu0
        %5919 = vmatprep.mubr.f32.mxu0 0.0
        %5920 = vmatmul.mubr.f32.gmra.mrb[0].mxu0 %v5122
        %v5921 = vpop.f32.mrb[0].mxu0
        %v5922 = vadd.f32 0.0, %v5921
        %v5923 = vpop.f32.mrb[0].mxu0
        %5924 = vmatprep.mubr.f32.mxu0 0.0
        %5925 = vmatmul.mubr.f32.gmra.mrb[0].mxu0 %v5124
        %v5926 = vpop.f32.mrb[0].mxu0
        %v5927 = vadd.f32 0.0, %v5926
        %v5928 = vpop.f32.mrb[0].mxu0
        %5929 = vmatprep.mubr.f32.mxu0 0.0
        %5930 = vmatmul.mubr.f32.gmra.mrb[0].mxu0 %v5126
        %v5931 = vpop.f32.mrb[0].mxu0
        %v5932 = vadd.f32 0.0, %v5931
        %v5933 = vpop.f32.mrb[0].mxu0
        %5934 = vmatprep.mubr.f32.mxu0 0.0
        %5935 = vmatmul.mubr.f32.gmra.mrb[0].mxu0 %v5128
        %v5936 = vpop.f32.mrb[0].mxu0
        %v5937 = vadd.f32 0.0, %v5936
        %v5938 = vpop.f32.mrb[0].mxu0
        %5939 = vmatprep.mubr.f32.mxu0 0.0
        %5940 = vmatmul.mubr.f32.gmra.mrb[0].mxu0 %v5130
        %v5941 = vpop.f32.mrb[0].mxu0
        %v5942 = vadd.f32 0.0, %v5941
        %v5943 = vpop.f32.mrb[0].mxu0
        %5944 = vmatprep.mubr.f32.mxu0 0.0
        %5945 = vmatmul.mubr.f32.gmra.mrb[0].mxu0 %v5132
        %v5946 = vpop.f32.mrb[0].mxu0
        %v5947 = vadd.f32 0.0, %v5946
        %v5948 = vpop.f32.mrb[0].mxu0
        %5949 = vmatprep.mubr.f32.mxu0 0.0
        %5950 = vmatmul.mubr.f32.gmra.mrb[0].mxu0 %v5134
        %v5951 = vpop.f32.mrb[0].mxu0
        %v5952 = vadd.f32 0.0, %v5951
        %v5953 = vpop.f32.mrb[0].mxu0
        %5954 = vmatprep.mubr.f32.mxu0 0.0
        %5955 = vmatmul.mubr.f32.gmra.mrb[0].mxu0 %v5136
        %v5956 = vpop.f32.mrb[0].mxu0
        %v5957 = vadd.f32 0.0, %v5956
        %v5958 = vpop.f32.mrb[0].mxu0
        %5959 = vmatprep.mubr.f32.mxu0 0.0
        %5960 = vmatmul.mubr.f32.gmra.mrb[0].mxu0 %v5138
        %v5961 = vpop.f32.mrb[0].mxu0
        %v5962 = vadd.f32 0.0, %v5961
        %v5963 = vpop.f32.mrb[0].mxu0
        %5964 = vmatprep.mubr.f32.mxu0 0.0
        %5965 = vmatmul.mubr.f32.gmra.mrb[0].mxu0 %v5140
        %v5966 = vpop.f32.mrb[0].mxu0
        %v5967 = vadd.f32 0.0, %v5966
        %v5968 = vpop.f32.mrb[0].mxu0
        %5969 = vmatprep.mubr.f32.mxu0 0.0
        %5970 = vmatmul.mubr.f32.gmra.mrb[0].mxu0 %v5142
        %v5971 = vpop.f32.mrb[0].mxu0
        %v5972 = vadd.f32 0.0, %v5971
        %v5973 = vpop.f32.mrb[0].mxu0
        %5974 = vmatprep.mubr.f32.mxu0 0.0
        %5975 = vmatmul.mubr.f32.gmra.mrb[0].mxu0 %v5144
        %v5976 = vpop.f32.mrb[0].mxu0
        %v5977 = vadd.f32 0.0, %v5976
        %v5978 = vpop.f32.mrb[0].mxu0
        %5979 = vmatprep.mubr.f32.mxu0 0.0
        %5980 = vmatmul.mubr.f32.gmra.mrb[0].mxu0 %v5146
        %v5981 = vpop.f32.mrb[0].mxu0
        %v5982 = vadd.f32 0.0, %v5981
        %v5983 = vpop.f32.mrb[0].mxu0
        %5984 = vmatprep.mubr.f32.mxu0 0.0
        %5985 = vmatmul.mubr.f32.gmra.mrb[0].mxu0 %v5148
        %v5986 = vpop.f32.mrb[0].mxu0
        %v5987 = vadd.f32 0.0, %v5986
        %v5988 = vpop.f32.mrb[0].mxu0
        %5989 = vmatprep.mubr.f32.mxu0 0.0
        %5990 = vmatmul.mubr.f32.gmra.mrb[0].mxu0 %v5150
        %v5991 = vpop.f32.mrb[0].mxu0
        %v5992 = vadd.f32 0.0, %v5991
        %v5993 = vpop.f32.mrb[0].mxu0
        %5994 = vmatprep.mubr.f32.mxu0 0.0
        %5995 = vmatmul.mubr.f32.gmra.mrb[0].mxu0 %v5152
        %v5996 = vpop.f32.mrb[0].mxu0
        %v5997 = vadd.f32 0.0, %v5996
        %v5998 = vpop.f32.mrb[0].mxu0
        %5999 = vmatprep.mubr.f32.mxu0 0.0
        %6000 = vmatmul.mubr.f32.gmra.mrb[0].mxu0 %v5154
        %v6001 = vpop.f32.mrb[0].mxu0
        %v6002 = vadd.f32 0.0, %v6001
        %v6003 = vpop.f32.mrb[0].mxu0
        %6004 = vmatprep.mubr.f32.mxu0 0.0
        %6005 = vmatmul.mubr.f32.gmra.mrb[0].mxu0 %v5156
        %v6006 = vpop.f32.mrb[0].mxu0
        %v6007 = vadd.f32 0.0, %v6006
        %v6008 = vpop.f32.mrb[0].mxu0
        %6009 = vmatprep.mubr.f32.mxu0 0.0
        %6010 = vmatmul.mubr.f32.gmra.mrb[0].mxu0 %v5158
        %v6011 = vpop.f32.mrb[0].mxu0
        %v6012 = vadd.f32 0.0, %v6011
        %v6013 = vpop.f32.mrb[0].mxu0
        %6014 = vmatprep.mubr.f32.mxu0 0.0
        %6015 = vmatmul.mubr.f32.gmra.mrb[0].mxu0 %v5160
        %v6016 = vpop.f32.mrb[0].mxu0
        %v6017 = vadd.f32 0.0, %v6016
        %v6018 = vpop.f32.mrb[0].mxu0
        %6019 = vmatprep.mubr.f32.mxu0 0.0
        %6020 = vmatmul.mubr.f32.gmra.mrb[0].mxu0 %v5162
        %v6021 = vpop.f32.mrb[0].mxu0
        %v6022 = vadd.f32 0.0, %v6021
        %v6023 = vpop.f32.mrb[0].mxu0
        %6024 = vmatprep.mubr.f32.mxu0 0.0
        %6025 = vmatmul.mubr.f32.gmra.mrb[0].mxu0 %v5164
        %v6026 = vpop.f32.mrb[0].mxu0
        %v6027 = vadd.f32 0.0, %v6026
        %v6028 = vpop.f32.mrb[0].mxu0
        %6029 = vmatprep.mubr.f32.mxu0 0.0
        %6030 = vmatmul.mubr.f32.gmra.mrb[0].mxu0 %v5166
        %v6031 = vpop.f32.mrb[0].mxu0
        %v6032 = vadd.f32 0.0, %v6031
        %v6033 = vpop.f32.mrb[0].mxu0
        %6034 = vmatprep.mubr.f32.mxu0 0.0
        %6035 = vmatmul.mubr.f32.gmra.mrb[0].mxu0 %v5168
        %v6036 = vpop.f32.mrb[0].mxu0
        %v6037 = vadd.f32 0.0, %v6036
        %v6038 = vpop.f32.mrb[0].mxu0
        %6039 = vmatprep.mubr.f32.mxu0 0.0
        %6040 = vmatmul.mubr.f32.gmra.mrb[0].mxu0 %v5170
        %v6041 = vpop.f32.mrb[0].mxu0
        %v6042 = vadd.f32 0.0, %v6041
        %v6043 = vpop.f32.mrb[0].mxu0
        %6044 = vmatprep.mubr.f32.mxu0 0.0
        %6045 = vmatmul.mubr.f32.gmra.mrb[0].mxu0 %v5172
        %v6046 = vpop.f32.mrb[0].mxu0
        %v6047 = vadd.f32 0.0, %v6046
        %v6048 = vpop.f32.mrb[0].mxu0
        %6049 = vmatprep.mubr.f32.mxu0 0.0
        %6050 = vmatmul.mubr.f32.gmra.mrb[0].mxu0 %v5174
        %v6051 = vpop.f32.mrb[0].mxu0
        %v6052 = vadd.f32 0.0, %v6051
        %v6053 = vpop.f32.mrb[0].mxu0
        %6054 = vmatprep.mubr.f32.mxu0 0.0
        %6055 = vmatmul.mubr.f32.gmra.mrb[0].mxu0 %v5176
        %v6056 = vpop.f32.mrb[0].mxu0
        %v6057 = vadd.f32 0.0, %v6056
        %v6058 = vpop.f32.mrb[0].mxu0
        %6059 = vmatprep.mubr.f32.mxu0 0.0
        %6060 = vmatmul.mubr.f32.gmra.mrb[0].mxu0 %v5178
        %v6061 = vpop.f32.mrb[0].mxu0
        %v6062 = vadd.f32 0.0, %v6061
        %v6063 = vpop.f32.mrb[0].mxu0
        %6064 = vmatprep.mubr.f32.mxu0 0.0
        %6065 = vmatmul.mubr.f32.gmra.mrb[0].mxu0 %v5180
        %v6066 = vpop.f32.mrb[0].mxu0
        %v6067 = vadd.f32 0.0, %v6066
        %v6068 = vpop.f32.mrb[0].mxu0
        %6069 = vmatprep.mubr.f32.mxu0 0.0
        %6070 = vmatmul.mubr.f32.gmra.mrb[0].mxu0 %v5182
        %v6071 = vpop.f32.mrb[0].mxu0
        %v6072 = vadd.f32 0.0, %v6071
        %v6073 = vpop.f32.mrb[0].mxu0
        %6074 = vmatprep.mubr.f32.mxu0 0.0
        %6075 = vmatmul.mubr.f32.gmra.mrb[0].mxu0 %v5184
        %v6076 = vpop.f32.mrb[0].mxu0
        %v6077 = vadd.f32 0.0, %v6076
        %v6078 = vpop.f32.mrb[0].mxu0
        %6079 = vmatprep.mubr.f32.mxu0 0.0
        %6080 = vmatmul.mubr.f32.gmra.mrb[0].mxu0 %v5186
        %v6081 = vpop.f32.mrb[0].mxu0
        %v6082 = vadd.f32 0.0, %v6081
        %v6083 = vpop.f32.mrb[0].mxu0
        %6084 = vmatprep.mubr.f32.mxu0 0.0
        %6085 = vmatmul.mubr.f32.gmra.mrb[0].mxu0 %v5188
        %v6086 = vpop.f32.mrb[0].mxu0
        %v6087 = vadd.f32 0.0, %v6086
        %v6088 = vpop.f32.mrb[0].mxu0
        %6089 = vmatprep.mubr.f32.mxu0 0.0
        %6090 = vmatmul.mubr.f32.gmra.mrb[0].mxu0 %v5190
        %v6091 = vpop.f32.mrb[0].mxu0
        %v6092 = vadd.f32 0.0, %v6091
        %v6093 = vpop.f32.mrb[0].mxu0
        %6094 = vmatprep.mubr.f32.mxu0 0.0
        %6095 = vmatmul.mubr.f32.gmra.mrb[0].mxu0 %v5192
        %v6096 = vpop.f32.mrb[0].mxu0
        %v6097 = vadd.f32 0.0, %v6096
        %v6098 = vpop.f32.mrb[0].mxu0
        %6099 = vmatprep.mubr.f32.mxu0 0.0
        %6100 = vmatmul.mubr.f32.gmra.mrb[0].mxu0 %v5194
        %v6101 = vpop.f32.mrb[0].mxu0
        %v6102 = vadd.f32 0.0, %v6101
        %v6103 = vpop.f32.mrb[0].mxu0
        %6104 = vmatprep.mubr.f32.mxu0 0.0
        %6105 = vmatmul.mubr.f32.gmra.mrb[0].mxu0 %v5196
        %v6106 = vpop.f32.mrb[0].mxu0
        %v6107 = vadd.f32 0.0, %v6106
        %v6108 = vpop.f32.mrb[0].mxu0
        %6109 = vmatprep.mubr.f32.mxu0 0.0
        %6110 = vmatmul.mubr.f32.gmra.mrb[0].mxu0 %v5198
        %v6111 = vpop.f32.mrb[0].mxu0
        %v6112 = vadd.f32 0.0, %v6111
        %v6113 = vpop.f32.mrb[0].mxu0
        %6114 = vmatprep.mubr.f32.mxu0 0.0
        %6115 = vmatmul.mubr.f32.gmra.mrb[0].mxu0 %v5200
        %v6116 = vpop.f32.mrb[0].mxu0
        %v6117 = vadd.f32 0.0, %v6116
        %v6118 = vpop.f32.mrb[0].mxu0
        %6119 = vmatprep.mubr.f32.mxu0 0.0
        %6120 = vmatmul.mubr.f32.gmra.mrb[0].mxu0 %v5202
        %v6121 = vpop.f32.mrb[0].mxu0
        %v6122 = vadd.f32 0.0, %v6121
        %v6123 = vpop.f32.mrb[0].mxu0
        %6124 = vmatprep.mubr.f32.mxu0 0.0
        %6125 = vmatmul.mubr.f32.gmra.mrb[0].mxu0 %v5204
        %v6126 = vpop.f32.mrb[0].mxu0
        %v6127 = vadd.f32 0.0, %v6126
        %v6128 = vpop.f32.mrb[0].mxu0
        %6129 = vmatprep.mubr.f32.mxu0 0.0
        %6130 = vmatmul.mubr.f32.gmra.mrb[0].mxu0 %v5206
        %v6131 = vpop.f32.mrb[0].mxu0
        %v6132 = vadd.f32 0.0, %v6131
        %v6133 = vpop.f32.mrb[0].mxu0
        %6134 = vmatprep.mubr.f32.mxu0 0.0
        %6135 = vmatmul.mubr.f32.gmra.mrb[0].mxu0 %v5208
        %v6136 = vpop.f32.mrb[0].mxu0
        %v6137 = vadd.f32 0.0, %v6136
        %v6138 = vpop.f32.mrb[0].mxu0
        %6139 = vmatprep.mubr.f32.mxu0 0.0
        %6140 = vmatmul.mubr.f32.gmra.mrb[0].mxu0 %v5210
        %v6141 = vpop.f32.mrb[0].mxu0
        %v6142 = vadd.f32 0.0, %v6141
        %v6143 = vpop.f32.mrb[0].mxu0
        %6144 = vmatprep.mubr.f32.mxu0 0.0
        %6145 = vmatmul.mubr.f32.gmra.mrb[0].mxu0 %v5212
        %v6146 = vpop.f32.mrb[0].mxu0
        %v6147 = vadd.f32 0.0, %v6146
        %v6148 = vpop.f32.mrb[0].mxu0
        %6149 = vmatprep.mubr.f32.mxu0 0.0
        %6150 = vmatmul.mubr.f32.gmra.mrb[0].mxu0 %v5214
        %v6151 = vpop.f32.mrb[0].mxu0
        %v6152 = vadd.f32 0.0, %v6151
        %v6153 = vpop.f32.mrb[0].mxu0
        %6154 = vmatprep.mubr.f32.mxu0 0.0
        %6155 = vmatmul.mubr.f32.gmra.mrb[0].mxu0 %v5216
        %v6156 = vpop.f32.mrb[0].mxu0
        %v6157 = vadd.f32 0.0, %v6156
        %v6158 = vpop.f32.mrb[0].mxu0
        %6159 = vmatprep.mubr.f32.mxu0 0.0
        %6160 = vmatmul.mubr.f32.gmra.mrb[0].mxu0 %v5218
        %v6161 = vpop.f32.mrb[0].mxu0
        %v6162 = vadd.f32 0.0, %v6161
        %v6163 = vpop.f32.mrb[0].mxu0
        %6164 = vmatprep.mubr.f32.mxu0 0.0
        %6165 = vmatmul.mubr.f32.gmra.mrb[0].mxu0 %v5220
        %v6166 = vpop.f32.mrb[0].mxu0
        %v6167 = vadd.f32 0.0, %v6166
        %v6168 = vpop.f32.mrb[0].mxu0
        %6169 = vmatprep.mubr.f32.mxu0 0.0
        %6170 = vmatmul.mubr.f32.gmra.mrb[0].mxu0 %v5222
        %v6171 = vpop.f32.mrb[0].mxu0
        %v6172 = vadd.f32 0.0, %v6171
        %v6173 = vpop.f32.mrb[0].mxu0
        %6174 = vmatprep.mubr.f32.mxu0 0.0
        %6175 = vmatmul.mubr.f32.gmra.mrb[0].mxu0 %v5224
        %v6176 = vpop.f32.mrb[0].mxu0
        %v6177 = vadd.f32 0.0, %v6176
        %v6178 = vpop.f32.mrb[0].mxu0
        %6179 = vmatprep.mubr.f32.mxu0 0.0
        %6180 = vmatmul.mubr.f32.gmra.mrb[0].mxu0 %v5226
        %v6181 = vpop.f32.mrb[0].mxu0
        %v6182 = vadd.f32 0.0, %v6181
        %v6183 = vpop.f32.mrb[0].mxu0
        %6184 = vmatprep.mubr.f32.mxu0 0.0
        %6185 = vmatmul.mubr.f32.gmra.mrb[0].mxu0 %v5228
        %v6186 = vpop.f32.mrb[0].mxu0
        %v6187 = vadd.f32 0.0, %v6186
        %v6188 = vpop.f32.mrb[0].mxu0
        %6189 = vmatprep.mubr.f32.mxu0 0.0
        %6190 = vmatmul.mubr.f32.gmra.mrb[0].mxu0 %v5230
        %v6191 = vpop.f32.mrb[0].mxu0
        %v6192 = vadd.f32 0.0, %v6191
        %v6193 = vpop.f32.mrb[0].mxu0
        %6194 = vmatprep.mubr.f32.mxu0 0.0
        %6195 = vmatmul.mubr.f32.gmra.mrb[0].mxu0 %v5232
        %v6196 = vpop.f32.mrb[0].mxu0
        %v6197 = vadd.f32 0.0, %v6196
        %v6198 = vpop.f32.mrb[0].mxu0
        %6199 = vmatprep.mubr.f32.mxu0 0.0
        %6200 = vmatmul.mubr.f32.gmra.mrb[0].mxu0 %v5234
        %v6201 = vpop.f32.mrb[0].mxu0
        %v6202 = vadd.f32 0.0, %v6201
        %v6203 = vpop.f32.mrb[0].mxu0
        %6204 = vmatprep.mubr.f32.mxu0 0.0
        %6205 = vmatmul.mubr.f32.gmra.mrb[0].mxu0 %v5236
        %v6206 = vpop.f32.mrb[0].mxu0
        %v6207 = vadd.f32 0.0, %v6206
        %v6208 = vpop.f32.mrb[0].mxu0
        %6209 = vmatprep.mubr.f32.mxu0 0.0
        %6210 = vmatmul.mubr.f32.gmra.mrb[0].mxu0 %v5238
        %v6211 = vpop.f32.mrb[0].mxu0
        %v6212 = vadd.f32 0.0, %v6211
        %v6213 = vpop.f32.mrb[0].mxu0
        %6214 = vmatprep.mubr.f32.mxu0 0.0
        %6215 = vmatmul.mubr.f32.gmra.mrb[0].mxu0 %v5240
        %v6216 = vpop.f32.mrb[0].mxu0
        %v6217 = vadd.f32 0.0, %v6216
        %v6218 = vpop.f32.mrb[0].mxu0
        %6219 = vmatprep.mubr.f32.mxu0 0.0
        %6220 = vmatmul.mubr.f32.gmra.mrb[0].mxu0 %v5242
        %v6221 = vpop.f32.mrb[0].mxu0
        %v6222 = vadd.f32 0.0, %v6221
        %v6223 = vpop.f32.mrb[0].mxu0
        %6224 = vmatprep.mubr.f32.mxu0 0.0
        %6225 = vmatmul.mubr.f32.gmra.mrb[0].mxu0 %v5244
        %v6226 = vpop.f32.mrb[0].mxu0
        %v6227 = vadd.f32 0.0, %v6226
        %v6228 = vpop.f32.mrb[0].mxu0
        %6229 = vmatprep.mubr.f32.mxu0 0.0
        %6230 = vmatmul.mubr.f32.gmra.mrb[0].mxu0 %v5246
        %v6231 = vpop.f32.mrb[0].mxu0
        %v6232 = vadd.f32 0.0, %v6231
        %v6233 = vpop.f32.mrb[0].mxu0
        %6234 = vmatprep.mubr.f32.mxu0 0.0
        %6235 = vmatmul.mubr.f32.gmra.mrb[0].mxu0 %v5248
        %v6236 = vpop.f32.mrb[0].mxu0
        %v6237 = vadd.f32 0.0, %v6236
        %v6238 = vpop.f32.mrb[0].mxu0
        %6239 = vmatprep.mubr.f32.mxu0 0.0
        %6240 = vmatmul.mubr.f32.gmra.mrb[0].mxu0 %v5250
        %v6241 = vpop.f32.mrb[0].mxu0
        %v6242 = vadd.f32 0.0, %v6241
        %v6243 = vpop.f32.mrb[0].mxu0
        %6244 = vmatprep.mubr.f32.mxu0 0.0
        %6245 = vmatmul.mubr.f32.gmra.mrb[0].mxu0 %v5799
        %v6246 = vpop.f32.mrb[0].mxu0
        %v6247 = vadd.f32 0.0, %v6246
        %v6248 = vpop.f32.mrb[0].mxu0
        %6249 = vmatprep.mubr.f32.mxu0 0.0
        %6250 = vmatmul.mubr.f32.gmra.mrb[0].mxu0 %v5801
        %v6251 = vpop.f32.mrb[0].mxu0
        %v6252 = vadd.f32 0.0, %v6251
        %v6253 = vpop.f32.mrb[0].mxu0
        %6254 = vmatprep.mubr.f32.mxu0 0.0
        %6255 = vmatmul.mubr.f32.gmra.mrb[0].mxu0 %v5803
        %v6256 = vpop.f32.mrb[0].mxu0
        %v6257 = vadd.f32 0.0, %v6256
        %v6258 = vpop.f32.mrb[0].mxu0
        %6259 = vdwg.mxu0
        %v6260 = vadd.f32 %v5707, %v5872
        %v6261 = vadd.f32 %v5708, %v5877
        %v6262 = vadd.f32 %v5709, %v5882
        %v6263 = vadd.f32 %v5710, %v5887
        %v6264 = vadd.f32 %v5711, %v5892
        %v6265 = vadd.f32 %v5712, %v5897
        %v6266 = vadd.f32 %v5713, %v5902
        %v6267 = vadd.f32 %v5714, %v5907
        %v6268 = vadd.f32 %v5715, %v5912
        %v6269 = vadd.f32 %v5716, %v5917
        %v6270 = vadd.f32 %v5717, %v5922
        %v6271 = vadd.f32 %v5718, %v5927
        %v6272 = vadd.f32 %v5719, %v5932
        %v6273 = vadd.f32 %v5720, %v5937
        %v6274 = vadd.f32 %v5721, %v5942
        %v6275 = vadd.f32 %v5722, %v5947
        %v6276 = vadd.f32 %v5723, %v5952
        %v6277 = vadd.f32 %v5724, %v5957
        %v6278 = vadd.f32 %v5725, %v5962
        %v6279 = vadd.f32 %v5726, %v5967
        %v6280 = vadd.f32 %v5727, %v5972
        %v6281 = vadd.f32 %v5728, %v5977
        %v6282 = vadd.f32 %v5729, %v5982
        %v6283 = vadd.f32 %v5730, %v5987
        %v6284 = vadd.f32 %v5731, %v5992
        %v6285 = vadd.f32 %v5732, %v5997
        %v6286 = vadd.f32 %v5733, %v6002
        %v6287 = vadd.f32 %v5734, %v6007
        %v6288 = vadd.f32 %v5735, %v6012
        %v6289 = vadd.f32 %v5736, %v6017
        %v6290 = vadd.f32 %v5737, %v6022
        %v6291 = vadd.f32 %v5738, %v6027
        %v6292 = vadd.f32 %v5739, %v6032
        %v6293 = vadd.f32 %v5740, %v6037
        %v6294 = vadd.f32 %v5741, %v6042
        %v6295 = vadd.f32 %v5742, %v6047
        %v6296 = vadd.f32 %v5743, %v6052
        %v6297 = vadd.f32 %v5744, %v6057
        %v6298 = vadd.f32 %v5745, %v6062
        %v6299 = vadd.f32 %v5746, %v6067
        %v6300 = vadd.f32 %v5747, %v6072
        %v6301 = vadd.f32 %v5748, %v6077
        %v6302 = vadd.f32 %v5749, %v6082
        %v6303 = vadd.f32 %v5750, %v6087
        %v6304 = vadd.f32 %v5751, %v6092
        %v6305 = vadd.f32 %v5752, %v6097
        %v6306 = vadd.f32 %v5753, %v6102
        %v6307 = vadd.f32 %v5754, %v6107
        %v6308 = vadd.f32 %v5755, %v6112
        %v6309 = vadd.f32 %v5756, %v6117
        %v6310 = vadd.f32 %v5757, %v6122
        %v6311 = vadd.f32 %v5758, %v6127
        %v6312 = vadd.f32 %v5759, %v6132
        %v6313 = vadd.f32 %v5760, %v6137
        %v6314 = vadd.f32 %v5761, %v6142
        %v6315 = vadd.f32 %v5762, %v6147
        %v6316 = vadd.f32 %v5763, %v6152
        %v6317 = vadd.f32 %v5764, %v6157
        %v6318 = vadd.f32 %v5765, %v6162
        %v6319 = vadd.f32 %v5766, %v6167
        %v6320 = vadd.f32 %v5767, %v6172
        %v6321 = vadd.f32 %v5768, %v6177
        %v6322 = vadd.f32 %v5769, %v6182
        %v6323 = vadd.f32 %v5770, %v6187
        %v6324 = vadd.f32 %v5771, %v6192
        %v6325 = vadd.f32 %v5772, %v6197
        %v6326 = vadd.f32 %v5773, %v6202
        %v6327 = vadd.f32 %v5774, %v6207
        %v6328 = vadd.f32 %v5775, %v6212
        %v6329 = vadd.f32 %v5776, %v6217
        %v6330 = vadd.f32 %v5777, %v6222
        %v6331 = vadd.f32 %v5778, %v6227
        %v6332 = vadd.f32 %v5779, %v6232
        %v6333 = vadd.f32 %v5780, %v6237
        %v6334 = vadd.f32 %v5781, %v6242
        %v6335 = vadd.f32 %v5782, %v6247
        %v6336 = vadd.f32 %v5783, %v6252
        %v6337 = vadd.f32 %v5784, %v6257
        %s6338 = scalar_lea.vmem [#allocation7], 224
        %v6339 = vld [vmem:[%s6338] sm:$0xff]
        %v6340 = vld [vmem:[%s6338 + $0x8] sm:$0xff]
        %v6341 = vld [vmem:[%s6338 + $0x10] sm:$0xff]
        %v6342 = vld [vmem:[%s6338 + $0x18] sm:$0xff]
        %vm6343 = vcmask 1042432
        %v6344 = vrot.slane %v1130, 5
        %v6345 = vrot.slane %v1131, 5
        %v6346 = vsel %vm6343, %v6344, %v6345
        %v6347 = vrot.slane %v1132, 5
        %v6348 = vsel %vm6343, %v6345, %v6347
        %v6349 = vrot.slane %v1133, 5
        %v6350 = vsel %vm6343, %v6347, %v6349
        %v6351 = vrot.slane %v1134, 5
        %v6352 = vsel %vm6343, %v6349, %v6351
        %v6353 = vrot.slane %v1135, 5
        %v6354 = vsel %vm6343, %v6351, %v6353
        %v6355 = vrot.slane %v1136, 5
        %v6356 = vsel %vm6343, %v6353, %v6355
        %v6357 = vrot.slane %v1137, 5
        %v6358 = vsel %vm6343, %v6355, %v6357
        %v6359 = vrot.slane %v1138, 5
        %v6360 = vsel %vm6343, %v6357, %v6359
        %v6361 = vrot.slane %v1139, 5
        %v6362 = vsel %vm6343, %v6359, %v6361
        %v6363 = vrot.slane %v1140, 5
        %v6364 = vsel %vm6343, %v6361, %v6363
        %v6365 = vrot.slane %v1141, 5
        %v6366 = vsel %vm6343, %v6363, %v6365
        %v6367 = vrot.slane %v1142, 5
        %v6368 = vsel %vm6343, %v6365, %v6367
        %v6369 = vrot.slane %v1143, 5
        %v6370 = vsel %vm6343, %v6367, %v6369
        %v6371 = vrot.slane %v1144, 5
        %v6372 = vsel %vm6343, %v6369, %v6371
        %v6373 = vrot.slane %v1145, 5
        %v6374 = vsel %vm6343, %v6371, %v6373
        %v6375 = vrot.slane %v1146, 5
        %v6376 = vsel %vm6343, %v6373, %v6375
        %v6377 = vrot.slane %v1147, 5
        %v6378 = vsel %vm6343, %v6375, %v6377
        %v6379 = vrot.slane %v1148, 5
        %v6380 = vsel %vm6343, %v6377, %v6379
        %v6381 = vrot.slane %v1149, 5
        %v6382 = vsel %vm6343, %v6379, %v6381
        %v6383 = vrot.slane %v1150, 5
        %v6384 = vsel %vm6343, %v6381, %v6383
        %v6385 = vrot.slane %v1151, 5
        %v6386 = vsel %vm6343, %v6383, %v6385
        %v6387 = vrot.slane %v1152, 5
        %v6388 = vsel %vm6343, %v6385, %v6387
        %v6389 = vrot.slane %v1153, 5
        %v6390 = vsel %vm6343, %v6387, %v6389
        %v6391 = vrot.slane %v1154, 5
        %v6392 = vsel %vm6343, %v6389, %v6391
        %v6393 = vrot.slane %v1155, 5
        %v6394 = vsel %vm6343, %v6391, %v6393
        %v6395 = vrot.slane %v1156, 5
        %v6396 = vsel %vm6343, %v6393, %v6395
        %v6397 = vrot.slane %v1157, 5
        %v6398 = vsel %vm6343, %v6395, %v6397
        %v6399 = vrot.slane %v1158, 5
        %v6400 = vsel %vm6343, %v6397, %v6399
        %v6401 = vrot.slane %v1159, 5
        %v6402 = vsel %vm6343, %v6399, %v6401
        %v6403 = vrot.slane %v1160, 5
        %v6404 = vsel %vm6343, %v6401, %v6403
        %v6405 = vrot.slane %v1161, 5
        %v6406 = vsel %vm6343, %v6403, %v6405
        %v6407 = vrot.slane %v1162, 5
        %v6408 = vsel %vm6343, %v6405, %v6407
        %v6409 = vrot.slane %v1163, 5
        %v6410 = vsel %vm6343, %v6407, %v6409
        %v6411 = vrot.slane %v1164, 5
        %v6412 = vsel %vm6343, %v6409, %v6411
        %v6413 = vrot.slane %v1165, 5
        %v6414 = vsel %vm6343, %v6411, %v6413
        %v6415 = vrot.slane %v1166, 5
        %v6416 = vsel %vm6343, %v6413, %v6415
        %v6417 = vrot.slane %v1167, 5
        %v6418 = vsel %vm6343, %v6415, %v6417
        %v6419 = vrot.slane %v1168, 5
        %v6420 = vsel %vm6343, %v6417, %v6419
        %v6421 = vrot.slane %v1169, 5
        %v6422 = vsel %vm6343, %v6419, %v6421
        %v6423 = vrot.slane %v1170, 5
        %v6424 = vsel %vm6343, %v6421, %v6423
        %v6425 = vrot.slane %v1171, 5
        %v6426 = vsel %vm6343, %v6423, %v6425
        %v6427 = vrot.slane %v1172, 5
        %v6428 = vsel %vm6343, %v6425, %v6427
        %v6429 = vrot.slane %v1173, 5
        %v6430 = vsel %vm6343, %v6427, %v6429
        %v6431 = vrot.slane %v1174, 5
        %v6432 = vsel %vm6343, %v6429, %v6431
        %v6433 = vrot.slane %v1175, 5
        %v6434 = vsel %vm6343, %v6431, %v6433
        %v6435 = vrot.slane %v1176, 5
        %v6436 = vsel %vm6343, %v6433, %v6435
        %v6437 = vrot.slane %v1177, 5
        %v6438 = vsel %vm6343, %v6435, %v6437
        %v6439 = vrot.slane %v1178, 5
        %v6440 = vsel %vm6343, %v6437, %v6439
        %v6441 = vrot.slane %v1179, 5
        %v6442 = vsel %vm6343, %v6439, %v6441
        %v6443 = vrot.slane %v1180, 5
        %v6444 = vsel %vm6343, %v6441, %v6443
        %v6445 = vrot.slane %v1181, 5
        %v6446 = vsel %vm6343, %v6443, %v6445
        %v6447 = vrot.slane %v1182, 5
        %v6448 = vsel %vm6343, %v6445, %v6447
        %v6449 = vrot.slane %v1183, 5
        %v6450 = vsel %vm6343, %v6447, %v6449
        %v6451 = vrot.slane %v1184, 5
        %v6452 = vsel %vm6343, %v6449, %v6451
        %v6453 = vrot.slane %v1185, 5
        %v6454 = vsel %vm6343, %v6451, %v6453
        %v6455 = vrot.slane %v1186, 5
        %v6456 = vsel %vm6343, %v6453, %v6455
        %v6457 = vrot.slane %v1187, 5
        %v6458 = vsel %vm6343, %v6455, %v6457
        %v6459 = vrot.slane %v1188, 5
        %v6460 = vsel %vm6343, %v6457, %v6459
        %v6461 = vrot.slane %v1189, 5
        %v6462 = vsel %vm6343, %v6459, %v6461
        %v6463 = vrot.slane %v1190, 5
        %v6464 = vsel %vm6343, %v6461, %v6463
        %v6465 = vrot.slane %v1191, 5
        %v6466 = vsel %vm6343, %v6463, %v6465
        %v6467 = vrot.slane %v1192, 5
        %v6468 = vsel %vm6343, %v6465, %v6467
        %v6469 = vrot.slane %v1193, 5
        %v6470 = vsel %vm6343, %v6467, %v6469
        %v6471 = vrot.slane %v1194, 5
        %v6472 = vsel %vm6343, %v6469, %v6471
        %v6473 = vrot.slane %v1195, 5
        %v6474 = vsel %vm6343, %v6471, %v6473
        %v6475 = vrot.slane %v1196, 5
        %v6476 = vsel %vm6343, %v6473, %v6475
        %v6477 = vrot.slane %v1197, 5
        %v6478 = vsel %vm6343, %v6475, %v6477
        %v6479 = vrot.slane %v1198, 5
        %v6480 = vsel %vm6343, %v6477, %v6479
        %v6481 = vrot.slane %v1199, 5
        %v6482 = vsel %vm6343, %v6479, %v6481
        %v6483 = vrot.slane %v1200, 5
        %v6484 = vsel %vm6343, %v6481, %v6483
        %v6485 = vrot.slane %v1201, 5
        %v6486 = vsel %vm6343, %v6483, %v6485
        %v6487 = vrot.slane %v1202, 5
        %v6488 = vsel %vm6343, %v6485, %v6487
        %v6489 = vrot.slane %v1203, 5
        %v6490 = vsel %vm6343, %v6487, %v6489
        %v6491 = vrot.slane %v1204, 5
        %v6492 = vsel %vm6343, %v6489, %v6491
        %v6493 = vrot.slane %v1205, 5
        %v6494 = vsel %vm6343, %v6491, %v6493
        %v6495 = vrot.slane %v1206, 5
        %v6496 = vsel %vm6343, %v6493, %v6495
        %v6497 = vrot.slane %v1207, 5
        %v6498 = vsel %vm6343, %v6495, %v6497
        %v6499 = vrot.slane %v1208, 5
        %v6500 = vsel %vm6343, %v6497, %v6499
        %v6501 = vsel %vm1452, %v6346, 0
        %v6503 = vsel %vm1452, %v6348, 0
        %v6505 = vsel %vm1452, %v6350, 0
        %v6507 = vsel %vm1452, %v6352, 0
        %v6509 = vsel %vm1452, %v6354, 0
        %v6511 = vsel %vm1452, %v6356, 0
        %v6513 = vsel %vm1452, %v6358, 0
        %v6515 = vsel %vm1452, %v6360, 0
        %v6517 = vsel %vm1452, %v6362, 0
        %v6519 = vsel %vm1452, %v6364, 0
        %v6521 = vsel %vm1452, %v6366, 0
        %v6523 = vsel %vm1452, %v6368, 0
        %v6525 = vsel %vm1452, %v6370, 0
        %v6527 = vsel %vm1452, %v6372, 0
        %v6529 = vsel %vm1452, %v6374, 0
        %v6531 = vsel %vm1452, %v6376, 0
        %v6533 = vsel %vm1452, %v6378, 0
        %v6535 = vsel %vm1452, %v6380, 0
        %v6537 = vsel %vm1452, %v6382, 0
        %v6539 = vsel %vm1452, %v6384, 0
        %v6541 = vsel %vm1452, %v6386, 0
        %v6543 = vsel %vm1452, %v6388, 0
        %v6545 = vsel %vm1452, %v6390, 0
        %v6547 = vsel %vm1452, %v6392, 0
        %v6549 = vsel %vm1452, %v6394, 0
        %v6551 = vsel %vm1452, %v6396, 0
        %v6553 = vsel %vm1452, %v6398, 0
        %v6555 = vsel %vm1452, %v6400, 0
        %v6557 = vsel %vm1452, %v6402, 0
        %v6559 = vsel %vm1452, %v6404, 0
        %v6561 = vsel %vm1452, %v6406, 0
        %v6563 = vsel %vm1452, %v6408, 0
        %v6565 = vsel %vm1452, %v6410, 0
        %v6567 = vsel %vm1452, %v6412, 0
        %v6569 = vsel %vm1452, %v6414, 0
        %v6571 = vsel %vm1452, %v6416, 0
        %v6573 = vsel %vm1452, %v6418, 0
        %v6575 = vsel %vm1452, %v6420, 0
        %v6577 = vsel %vm1452, %v6422, 0
        %v6579 = vsel %vm1452, %v6424, 0
        %v6581 = vsel %vm1452, %v6426, 0
        %v6583 = vsel %vm1452, %v6428, 0
        %v6585 = vsel %vm1452, %v6430, 0
        %v6587 = vsel %vm1452, %v6432, 0
        %v6589 = vsel %vm1452, %v6434, 0
        %v6591 = vsel %vm1452, %v6436, 0
        %v6593 = vsel %vm1452, %v6438, 0
        %v6595 = vsel %vm1452, %v6440, 0
        %v6597 = vsel %vm1452, %v6442, 0
        %v6599 = vsel %vm1452, %v6444, 0
        %v6601 = vsel %vm1452, %v6446, 0
        %v6603 = vsel %vm1452, %v6448, 0
        %v6605 = vsel %vm1452, %v6450, 0
        %v6607 = vsel %vm1452, %v6452, 0
        %v6609 = vsel %vm1452, %v6454, 0
        %v6611 = vsel %vm1452, %v6456, 0
        %v6613 = vsel %vm1452, %v6458, 0
        %v6615 = vsel %vm1452, %v6460, 0
        %v6617 = vsel %vm1452, %v6462, 0
        %v6619 = vsel %vm1452, %v6464, 0
        %v6621 = vsel %vm1452, %v6466, 0
        %v6623 = vsel %vm1452, %v6468, 0
        %v6625 = vsel %vm1452, %v6470, 0
        %v6627 = vsel %vm1452, %v6472, 0
        %v6629 = vsel %vm1452, %v6474, 0
        %v6631 = vsel %vm1452, %v6476, 0
        %v6633 = vsel %vm1452, %v6478, 0
        %v6635 = vsel %vm1452, %v6480, 0
        %v6637 = vsel %vm1452, %v6482, 0
        %v6639 = vsel %vm1452, %v6484, 0
        %v6641 = vsel %vm1452, %v6486, 0
        %v6643 = vsel %vm1452, %v6488, 0
        %v6645 = vsel %vm1452, %v6490, 0
        %v6647 = vsel %vm1452, %v6492, 0
        %v6649 = vsel %vm1452, %v6494, 0
        %v6651 = vsel %vm1452, %v6496, 0
        %v6653 = vsel %vm1452, %v6498, 0
        %v6655 = vsel %vm1452, %v6500, 0
        %6657 = vmatprep.subr.mxu0 0.0
        %6658 = vmatpush1.msra.mxu0 %v6339
        %6659 = vmatprep.subr.mxu0 0.0
        %6660 = vmatpush1.msra.mxu0 %v6340
        %6661 = vmatprep.subr.mxu0 0.0
        %6662 = vmatpush1.msra.mxu0 %v6341
        %6663 = vmatprep.subr.mxu0 0.0
        %6664 = vmatpush1.msra.mxu0 %v6342
        %6665 = vmatprep.subr.mxu0 0.0
        %6666 = vmatpush1.msra.mxu0 0.0
        %6667 = vmatprep.subr.mxu0 0.0
        %6668 = vmatpush1.msra.mxu0 0.0
        %6669 = vmatprep.subr.mxu0 0.0
        %6670 = vmatpush1.msra.mxu0 0.0
        %6671 = vmatprep.subr.mxu0 0.0
        %6672 = vmatpush1.msra.mxu0 0.0
        %6673 = vmatprep.subr.mxu0 0.0
        %6674 = vmatpush1.msra.mxu0 0.0
        %6675 = vmatprep.subr.mxu0 0.0
        %6676 = vmatpush1.msra.mxu0 0.0
        %6677 = vmatprep.subr.mxu0 0.0
        %6678 = vmatpush1.msra.mxu0 0.0
        %6679 = vmatprep.subr.mxu0 0.0
        %6680 = vmatpush1.msra.mxu0 0.0
        %6681 = vmatprep.subr.mxu0 0.0
        %6682 = vmatpush1.msra.mxu0 0.0
        %6683 = vmatprep.subr.mxu0 0.0
        %6684 = vmatpush1.msra.mxu0 0.0
        %6685 = vmatprep.subr.mxu0 0.0
        %6686 = vmatpush1.msra.mxu0 0.0
        %6687 = vmatprep.subr.mxu0 0.0
        %6688 = vmatpush1.msra.mxu0 0.0
        %6689 = vmatprep.subr.mxu0 0.0
        %6690 = vmatpush1.msra.mxu0 0.0
        %6691 = vmatprep.subr.mxu0 0.0
        %6692 = vmatpush1.msra.mxu0 0.0
        %6693 = vmatprep.subr.mxu0 0.0
        %6694 = vmatpush1.msra.mxu0 0.0
        %6695 = vmatprep.subr.mxu0 0.0
        %6696 = vmatpush1.msra.mxu0 0.0
        %6697 = vmatprep.subr.mxu0 0.0
        %6698 = vmatpush1.msra.mxu0 0.0
        %6699 = vmatprep.subr.mxu0 0.0
        %6700 = vmatpush1.msra.mxu0 0.0
        %6701 = vmatprep.subr.mxu0 0.0
        %6702 = vmatpush1.msra.mxu0 0.0
        %6703 = vmatprep.subr.mxu0 0.0
        %6704 = vmatpush1.msra.mxu0 0.0
        %6705 = vmatprep.subr.mxu0 0.0
        %6706 = vmatpush1.msra.mxu0 0.0
        %6707 = vmatprep.subr.mxu0 0.0
        %6708 = vmatpush1.msra.mxu0 0.0
        %6709 = vmatprep.subr.mxu0 0.0
        %6710 = vmatpush1.msra.mxu0 0.0
        %6711 = vmatprep.subr.mxu0 0.0
        %6712 = vmatpush1.msra.mxu0 0.0
        %6713 = vmatprep.subr.mxu0 0.0
        %6714 = vmatpush1.msra.mxu0 0.0
        %6715 = vmatprep.subr.mxu0 0.0
        %6716 = vmatpush1.msra.mxu0 0.0
        %6717 = vmatprep.subr.mxu0 0.0
        %6718 = vmatpush1.msra.mxu0 0.0
        %6719 = vmatprep.subr.mxu0 0.0
        %6720 = vmatpush1.msra.mxu0 0.0
        %6721 = vmatprep.mubr.f32.mxu0 0.0
        %6722 = vmatmul.mubr.f32.gmra.mrb[0].mxu0 %v6501
        %v6723 = vpop.f32.mrb[0].mxu0
        %v6724 = vadd.f32 0.0, %v6723
        %v6725 = vpop.f32.mrb[0].mxu0
        %6726 = vmatprep.mubr.f32.mxu0 0.0
        %6727 = vmatmul.mubr.f32.gmra.mrb[0].mxu0 %v6503
        %v6728 = vpop.f32.mrb[0].mxu0
        %v6729 = vadd.f32 0.0, %v6728
        %v6730 = vpop.f32.mrb[0].mxu0
        %6731 = vmatprep.mubr.f32.mxu0 0.0
        %6732 = vmatmul.mubr.f32.gmra.mrb[0].mxu0 %v6505
        %v6733 = vpop.f32.mrb[0].mxu0
        %v6734 = vadd.f32 0.0, %v6733
        %v6735 = vpop.f32.mrb[0].mxu0
        %6736 = vmatprep.mubr.f32.mxu0 0.0
        %6737 = vmatmul.mubr.f32.gmra.mrb[0].mxu0 %v6507
        %v6738 = vpop.f32.mrb[0].mxu0
        %v6739 = vadd.f32 0.0, %v6738
        %v6740 = vpop.f32.mrb[0].mxu0
        %6741 = vmatprep.mubr.f32.mxu0 0.0
        %6742 = vmatmul.mubr.f32.gmra.mrb[0].mxu0 %v6509
        %v6743 = vpop.f32.mrb[0].mxu0
        %v6744 = vadd.f32 0.0, %v6743
        %v6745 = vpop.f32.mrb[0].mxu0
        %6746 = vmatprep.mubr.f32.mxu0 0.0
        %6747 = vmatmul.mubr.f32.gmra.mrb[0].mxu0 %v6511
        %v6748 = vpop.f32.mrb[0].mxu0
        %v6749 = vadd.f32 0.0, %v6748
        %v6750 = vpop.f32.mrb[0].mxu0
        %6751 = vmatprep.mubr.f32.mxu0 0.0
        %6752 = vmatmul.mubr.f32.gmra.mrb[0].mxu0 %v6513
        %v6753 = vpop.f32.mrb[0].mxu0
        %v6754 = vadd.f32 0.0, %v6753
        %v6755 = vpop.f32.mrb[0].mxu0
        %6756 = vmatprep.mubr.f32.mxu0 0.0
        %6757 = vmatmul.mubr.f32.gmra.mrb[0].mxu0 %v6515
        %v6758 = vpop.f32.mrb[0].mxu0
        %v6759 = vadd.f32 0.0, %v6758
        %v6760 = vpop.f32.mrb[0].mxu0
        %6761 = vmatprep.mubr.f32.mxu0 0.0
        %6762 = vmatmul.mubr.f32.gmra.mrb[0].mxu0 %v6517
        %v6763 = vpop.f32.mrb[0].mxu0
        %v6764 = vadd.f32 0.0, %v6763
        %v6765 = vpop.f32.mrb[0].mxu0
        %6766 = vmatprep.mubr.f32.mxu0 0.0
        %6767 = vmatmul.mubr.f32.gmra.mrb[0].mxu0 %v6519
        %v6768 = vpop.f32.mrb[0].mxu0
        %v6769 = vadd.f32 0.0, %v6768
        %v6770 = vpop.f32.mrb[0].mxu0
        %6771 = vmatprep.mubr.f32.mxu0 0.0
        %6772 = vmatmul.mubr.f32.gmra.mrb[0].mxu0 %v6521
        %v6773 = vpop.f32.mrb[0].mxu0
        %v6774 = vadd.f32 0.0, %v6773
        %v6775 = vpop.f32.mrb[0].mxu0
        %6776 = vmatprep.mubr.f32.mxu0 0.0
        %6777 = vmatmul.mubr.f32.gmra.mrb[0].mxu0 %v6523
        %v6778 = vpop.f32.mrb[0].mxu0
        %v6779 = vadd.f32 0.0, %v6778
        %v6780 = vpop.f32.mrb[0].mxu0
        %6781 = vmatprep.mubr.f32.mxu0 0.0
        %6782 = vmatmul.mubr.f32.gmra.mrb[0].mxu0 %v6525
        %v6783 = vpop.f32.mrb[0].mxu0
        %v6784 = vadd.f32 0.0, %v6783
        %v6785 = vpop.f32.mrb[0].mxu0
        %6786 = vmatprep.mubr.f32.mxu0 0.0
        %6787 = vmatmul.mubr.f32.gmra.mrb[0].mxu0 %v6527
        %v6788 = vpop.f32.mrb[0].mxu0
        %v6789 = vadd.f32 0.0, %v6788
        %v6790 = vpop.f32.mrb[0].mxu0
        %6791 = vmatprep.mubr.f32.mxu0 0.0
        %6792 = vmatmul.mubr.f32.gmra.mrb[0].mxu0 %v6529
        %v6793 = vpop.f32.mrb[0].mxu0
        %v6794 = vadd.f32 0.0, %v6793
        %v6795 = vpop.f32.mrb[0].mxu0
        %6796 = vmatprep.mubr.f32.mxu0 0.0
        %6797 = vmatmul.mubr.f32.gmra.mrb[0].mxu0 %v6531
        %v6798 = vpop.f32.mrb[0].mxu0
        %v6799 = vadd.f32 0.0, %v6798
        %v6800 = vpop.f32.mrb[0].mxu0
        %6801 = vmatprep.mubr.f32.mxu0 0.0
        %6802 = vmatmul.mubr.f32.gmra.mrb[0].mxu0 %v6533
        %v6803 = vpop.f32.mrb[0].mxu0
        %v6804 = vadd.f32 0.0, %v6803
        %v6805 = vpop.f32.mrb[0].mxu0
        %6806 = vmatprep.mubr.f32.mxu0 0.0
        %6807 = vmatmul.mubr.f32.gmra.mrb[0].mxu0 %v6535
        %v6808 = vpop.f32.mrb[0].mxu0
        %v6809 = vadd.f32 0.0, %v6808
        %v6810 = vpop.f32.mrb[0].mxu0
        %6811 = vmatprep.mubr.f32.mxu0 0.0
        %6812 = vmatmul.mubr.f32.gmra.mrb[0].mxu0 %v6537
        %v6813 = vpop.f32.mrb[0].mxu0
        %v6814 = vadd.f32 0.0, %v6813
        %v6815 = vpop.f32.mrb[0].mxu0
        %6816 = vmatprep.mubr.f32.mxu0 0.0
        %6817 = vmatmul.mubr.f32.gmra.mrb[0].mxu0 %v6539
        %v6818 = vpop.f32.mrb[0].mxu0
        %v6819 = vadd.f32 0.0, %v6818
        %v6820 = vpop.f32.mrb[0].mxu0
        %6821 = vmatprep.mubr.f32.mxu0 0.0
        %6822 = vmatmul.mubr.f32.gmra.mrb[0].mxu0 %v6541
        %v6823 = vpop.f32.mrb[0].mxu0
        %v6824 = vadd.f32 0.0, %v6823
        %v6825 = vpop.f32.mrb[0].mxu0
        %6826 = vmatprep.mubr.f32.mxu0 0.0
        %6827 = vmatmul.mubr.f32.gmra.mrb[0].mxu0 %v6543
        %v6828 = vpop.f32.mrb[0].mxu0
        %v6829 = vadd.f32 0.0, %v6828
        %v6830 = vpop.f32.mrb[0].mxu0
        %6831 = vmatprep.mubr.f32.mxu0 0.0
        %6832 = vmatmul.mubr.f32.gmra.mrb[0].mxu0 %v6545
        %v6833 = vpop.f32.mrb[0].mxu0
        %v6834 = vadd.f32 0.0, %v6833
        %v6835 = vpop.f32.mrb[0].mxu0
        %6836 = vmatprep.mubr.f32.mxu0 0.0
        %6837 = vmatmul.mubr.f32.gmra.mrb[0].mxu0 %v6547
        %v6838 = vpop.f32.mrb[0].mxu0
        %v6839 = vadd.f32 0.0, %v6838
        %v6840 = vpop.f32.mrb[0].mxu0
        %6841 = vmatprep.mubr.f32.mxu0 0.0
        %6842 = vmatmul.mubr.f32.gmra.mrb[0].mxu0 %v6549
        %v6843 = vpop.f32.mrb[0].mxu0
        %v6844 = vadd.f32 0.0, %v6843
        %v6845 = vpop.f32.mrb[0].mxu0
        %6846 = vmatprep.mubr.f32.mxu0 0.0
        %6847 = vmatmul.mubr.f32.gmra.mrb[0].mxu0 %v6551
        %v6848 = vpop.f32.mrb[0].mxu0
        %v6849 = vadd.f32 0.0, %v6848
        %v6850 = vpop.f32.mrb[0].mxu0
        %6851 = vmatprep.mubr.f32.mxu0 0.0
        %6852 = vmatmul.mubr.f32.gmra.mrb[0].mxu0 %v6553
        %v6853 = vpop.f32.mrb[0].mxu0
        %v6854 = vadd.f32 0.0, %v6853
        %v6855 = vpop.f32.mrb[0].mxu0
        %6856 = vmatprep.mubr.f32.mxu0 0.0
        %6857 = vmatmul.mubr.f32.gmra.mrb[0].mxu0 %v6555
        %v6858 = vpop.f32.mrb[0].mxu0
        %v6859 = vadd.f32 0.0, %v6858
        %v6860 = vpop.f32.mrb[0].mxu0
        %6861 = vmatprep.mubr.f32.mxu0 0.0
        %6862 = vmatmul.mubr.f32.gmra.mrb[0].mxu0 %v6557
        %v6863 = vpop.f32.mrb[0].mxu0
        %v6864 = vadd.f32 0.0, %v6863
        %v6865 = vpop.f32.mrb[0].mxu0
        %6866 = vmatprep.mubr.f32.mxu0 0.0
        %6867 = vmatmul.mubr.f32.gmra.mrb[0].mxu0 %v6559
        %v6868 = vpop.f32.mrb[0].mxu0
        %v6869 = vadd.f32 0.0, %v6868
        %v6870 = vpop.f32.mrb[0].mxu0
        %6871 = vmatprep.mubr.f32.mxu0 0.0
        %6872 = vmatmul.mubr.f32.gmra.mrb[0].mxu0 %v6561
        %v6873 = vpop.f32.mrb[0].mxu0
        %v6874 = vadd.f32 0.0, %v6873
        %v6875 = vpop.f32.mrb[0].mxu0
        %6876 = vmatprep.mubr.f32.mxu0 0.0
        %6877 = vmatmul.mubr.f32.gmra.mrb[0].mxu0 %v6563
        %v6878 = vpop.f32.mrb[0].mxu0
        %v6879 = vadd.f32 0.0, %v6878
        %v6880 = vpop.f32.mrb[0].mxu0
        %6881 = vmatprep.mubr.f32.mxu0 0.0
        %6882 = vmatmul.mubr.f32.gmra.mrb[0].mxu0 %v6565
        %v6883 = vpop.f32.mrb[0].mxu0
        %v6884 = vadd.f32 0.0, %v6883
        %v6885 = vpop.f32.mrb[0].mxu0
        %6886 = vmatprep.mubr.f32.mxu0 0.0
        %6887 = vmatmul.mubr.f32.gmra.mrb[0].mxu0 %v6567
        %v6888 = vpop.f32.mrb[0].mxu0
        %v6889 = vadd.f32 0.0, %v6888
        %v6890 = vpop.f32.mrb[0].mxu0
        %6891 = vmatprep.mubr.f32.mxu0 0.0
        %6892 = vmatmul.mubr.f32.gmra.mrb[0].mxu0 %v6569
        %v6893 = vpop.f32.mrb[0].mxu0
        %v6894 = vadd.f32 0.0, %v6893
        %v6895 = vpop.f32.mrb[0].mxu0
        %6896 = vmatprep.mubr.f32.mxu0 0.0
        %6897 = vmatmul.mubr.f32.gmra.mrb[0].mxu0 %v6571
        %v6898 = vpop.f32.mrb[0].mxu0
        %v6899 = vadd.f32 0.0, %v6898
        %v6900 = vpop.f32.mrb[0].mxu0
        %6901 = vmatprep.mubr.f32.mxu0 0.0
        %6902 = vmatmul.mubr.f32.gmra.mrb[0].mxu0 %v6573
        %v6903 = vpop.f32.mrb[0].mxu0
        %v6904 = vadd.f32 0.0, %v6903
        %v6905 = vpop.f32.mrb[0].mxu0
        %6906 = vmatprep.mubr.f32.mxu0 0.0
        %6907 = vmatmul.mubr.f32.gmra.mrb[0].mxu0 %v6575
        %v6908 = vpop.f32.mrb[0].mxu0
        %v6909 = vadd.f32 0.0, %v6908
        %v6910 = vpop.f32.mrb[0].mxu0
        %6911 = vmatprep.mubr.f32.mxu0 0.0
        %6912 = vmatmul.mubr.f32.gmra.mrb[0].mxu0 %v6577
        %v6913 = vpop.f32.mrb[0].mxu0
        %v6914 = vadd.f32 0.0, %v6913
        %v6915 = vpop.f32.mrb[0].mxu0
        %6916 = vmatprep.mubr.f32.mxu0 0.0
        %6917 = vmatmul.mubr.f32.gmra.mrb[0].mxu0 %v6579
        %v6918 = vpop.f32.mrb[0].mxu0
        %v6919 = vadd.f32 0.0, %v6918
        %v6920 = vpop.f32.mrb[0].mxu0
        %6921 = vmatprep.mubr.f32.mxu0 0.0
        %6922 = vmatmul.mubr.f32.gmra.mrb[0].mxu0 %v6581
        %v6923 = vpop.f32.mrb[0].mxu0
        %v6924 = vadd.f32 0.0, %v6923
        %v6925 = vpop.f32.mrb[0].mxu0
        %6926 = vmatprep.mubr.f32.mxu0 0.0
        %6927 = vmatmul.mubr.f32.gmra.mrb[0].mxu0 %v6583
        %v6928 = vpop.f32.mrb[0].mxu0
        %v6929 = vadd.f32 0.0, %v6928
        %v6930 = vpop.f32.mrb[0].mxu0
        %6931 = vmatprep.mubr.f32.mxu0 0.0
        %6932 = vmatmul.mubr.f32.gmra.mrb[0].mxu0 %v6585
        %v6933 = vpop.f32.mrb[0].mxu0
        %v6934 = vadd.f32 0.0, %v6933
        %v6935 = vpop.f32.mrb[0].mxu0
        %6936 = vmatprep.mubr.f32.mxu0 0.0
        %6937 = vmatmul.mubr.f32.gmra.mrb[0].mxu0 %v6587
        %v6938 = vpop.f32.mrb[0].mxu0
        %v6939 = vadd.f32 0.0, %v6938
        %v6940 = vpop.f32.mrb[0].mxu0
        %6941 = vmatprep.mubr.f32.mxu0 0.0
        %6942 = vmatmul.mubr.f32.gmra.mrb[0].mxu0 %v6589
        %v6943 = vpop.f32.mrb[0].mxu0
        %v6944 = vadd.f32 0.0, %v6943
        %v6945 = vpop.f32.mrb[0].mxu0
        %6946 = vmatprep.mubr.f32.mxu0 0.0
        %6947 = vmatmul.mubr.f32.gmra.mrb[0].mxu0 %v6591
        %v6948 = vpop.f32.mrb[0].mxu0
        %v6949 = vadd.f32 0.0, %v6948
        %v6950 = vpop.f32.mrb[0].mxu0
        %6951 = vmatprep.mubr.f32.mxu0 0.0
        %6952 = vmatmul.mubr.f32.gmra.mrb[0].mxu0 %v6593
        %v6953 = vpop.f32.mrb[0].mxu0
        %v6954 = vadd.f32 0.0, %v6953
        %v6955 = vpop.f32.mrb[0].mxu0
        %6956 = vmatprep.mubr.f32.mxu0 0.0
        %6957 = vmatmul.mubr.f32.gmra.mrb[0].mxu0 %v6595
        %v6958 = vpop.f32.mrb[0].mxu0
        %v6959 = vadd.f32 0.0, %v6958
        %v6960 = vpop.f32.mrb[0].mxu0
        %6961 = vmatprep.mubr.f32.mxu0 0.0
        %6962 = vmatmul.mubr.f32.gmra.mrb[0].mxu0 %v6597
        %v6963 = vpop.f32.mrb[0].mxu0
        %v6964 = vadd.f32 0.0, %v6963
        %v6965 = vpop.f32.mrb[0].mxu0
        %6966 = vmatprep.mubr.f32.mxu0 0.0
        %6967 = vmatmul.mubr.f32.gmra.mrb[0].mxu0 %v6599
        %v6968 = vpop.f32.mrb[0].mxu0
        %v6969 = vadd.f32 0.0, %v6968
        %v6970 = vpop.f32.mrb[0].mxu0
        %6971 = vmatprep.mubr.f32.mxu0 0.0
        %6972 = vmatmul.mubr.f32.gmra.mrb[0].mxu0 %v6601
        %v6973 = vpop.f32.mrb[0].mxu0
        %v6974 = vadd.f32 0.0, %v6973
        %v6975 = vpop.f32.mrb[0].mxu0
        %6976 = vmatprep.mubr.f32.mxu0 0.0
        %6977 = vmatmul.mubr.f32.gmra.mrb[0].mxu0 %v6603
        %v6978 = vpop.f32.mrb[0].mxu0
        %v6979 = vadd.f32 0.0, %v6978
        %v6980 = vpop.f32.mrb[0].mxu0
        %6981 = vmatprep.mubr.f32.mxu0 0.0
        %6982 = vmatmul.mubr.f32.gmra.mrb[0].mxu0 %v6605
        %v6983 = vpop.f32.mrb[0].mxu0
        %v6984 = vadd.f32 0.0, %v6983
        %v6985 = vpop.f32.mrb[0].mxu0
        %6986 = vmatprep.mubr.f32.mxu0 0.0
        %6987 = vmatmul.mubr.f32.gmra.mrb[0].mxu0 %v6607
        %v6988 = vpop.f32.mrb[0].mxu0
        %v6989 = vadd.f32 0.0, %v6988
        %v6990 = vpop.f32.mrb[0].mxu0
        %6991 = vmatprep.mubr.f32.mxu0 0.0
        %6992 = vmatmul.mubr.f32.gmra.mrb[0].mxu0 %v6609
        %v6993 = vpop.f32.mrb[0].mxu0
        %v6994 = vadd.f32 0.0, %v6993
        %v6995 = vpop.f32.mrb[0].mxu0
        %6996 = vmatprep.mubr.f32.mxu0 0.0
        %6997 = vmatmul.mubr.f32.gmra.mrb[0].mxu0 %v6611
        %v6998 = vpop.f32.mrb[0].mxu0
        %v6999 = vadd.f32 0.0, %v6998
        %v7000 = vpop.f32.mrb[0].mxu0
        %7001 = vmatprep.mubr.f32.mxu0 0.0
        %7002 = vmatmul.mubr.f32.gmra.mrb[0].mxu0 %v6613
        %v7003 = vpop.f32.mrb[0].mxu0
        %v7004 = vadd.f32 0.0, %v7003
        %v7005 = vpop.f32.mrb[0].mxu0
        %7006 = vmatprep.mubr.f32.mxu0 0.0
        %7007 = vmatmul.mubr.f32.gmra.mrb[0].mxu0 %v6615
        %v7008 = vpop.f32.mrb[0].mxu0
        %v7009 = vadd.f32 0.0, %v7008
        %v7010 = vpop.f32.mrb[0].mxu0
        %7011 = vmatprep.mubr.f32.mxu0 0.0
        %7012 = vmatmul.mubr.f32.gmra.mrb[0].mxu0 %v6617
        %v7013 = vpop.f32.mrb[0].mxu0
        %v7014 = vadd.f32 0.0, %v7013
        %v7015 = vpop.f32.mrb[0].mxu0
        %7016 = vmatprep.mubr.f32.mxu0 0.0
        %7017 = vmatmul.mubr.f32.gmra.mrb[0].mxu0 %v6619
        %v7018 = vpop.f32.mrb[0].mxu0
        %v7019 = vadd.f32 0.0, %v7018
        %v7020 = vpop.f32.mrb[0].mxu0
        %7021 = vmatprep.mubr.f32.mxu0 0.0
        %7022 = vmatmul.mubr.f32.gmra.mrb[0].mxu0 %v6621
        %v7023 = vpop.f32.mrb[0].mxu0
        %v7024 = vadd.f32 0.0, %v7023
        %v7025 = vpop.f32.mrb[0].mxu0
        %7026 = vmatprep.mubr.f32.mxu0 0.0
        %7027 = vmatmul.mubr.f32.gmra.mrb[0].mxu0 %v6623
        %v7028 = vpop.f32.mrb[0].mxu0
        %v7029 = vadd.f32 0.0, %v7028
        %v7030 = vpop.f32.mrb[0].mxu0
        %7031 = vmatprep.mubr.f32.mxu0 0.0
        %7032 = vmatmul.mubr.f32.gmra.mrb[0].mxu0 %v6625
        %v7033 = vpop.f32.mrb[0].mxu0
        %v7034 = vadd.f32 0.0, %v7033
        %v7035 = vpop.f32.mrb[0].mxu0
        %7036 = vmatprep.mubr.f32.mxu0 0.0
        %7037 = vmatmul.mubr.f32.gmra.mrb[0].mxu0 %v6627
        %v7038 = vpop.f32.mrb[0].mxu0
        %v7039 = vadd.f32 0.0, %v7038
        %v7040 = vpop.f32.mrb[0].mxu0
        %7041 = vmatprep.mubr.f32.mxu0 0.0
        %7042 = vmatmul.mubr.f32.gmra.mrb[0].mxu0 %v6629
        %v7043 = vpop.f32.mrb[0].mxu0
        %v7044 = vadd.f32 0.0, %v7043
        %v7045 = vpop.f32.mrb[0].mxu0
        %7046 = vmatprep.mubr.f32.mxu0 0.0
        %7047 = vmatmul.mubr.f32.gmra.mrb[0].mxu0 %v6631
        %v7048 = vpop.f32.mrb[0].mxu0
        %v7049 = vadd.f32 0.0, %v7048
        %v7050 = vpop.f32.mrb[0].mxu0
        %7051 = vmatprep.mubr.f32.mxu0 0.0
        %7052 = vmatmul.mubr.f32.gmra.mrb[0].mxu0 %v6633
        %v7053 = vpop.f32.mrb[0].mxu0
        %v7054 = vadd.f32 0.0, %v7053
        %v7055 = vpop.f32.mrb[0].mxu0
        %7056 = vmatprep.mubr.f32.mxu0 0.0
        %7057 = vmatmul.mubr.f32.gmra.mrb[0].mxu0 %v6635
        %v7058 = vpop.f32.mrb[0].mxu0
        %v7059 = vadd.f32 0.0, %v7058
        %v7060 = vpop.f32.mrb[0].mxu0
        %7061 = vmatprep.mubr.f32.mxu0 0.0
        %7062 = vmatmul.mubr.f32.gmra.mrb[0].mxu0 %v6637
        %v7063 = vpop.f32.mrb[0].mxu0
        %v7064 = vadd.f32 0.0, %v7063
        %v7065 = vpop.f32.mrb[0].mxu0
        %7066 = vmatprep.mubr.f32.mxu0 0.0
        %7067 = vmatmul.mubr.f32.gmra.mrb[0].mxu0 %v6639
        %v7068 = vpop.f32.mrb[0].mxu0
        %v7069 = vadd.f32 0.0, %v7068
        %v7070 = vpop.f32.mrb[0].mxu0
        %7071 = vmatprep.mubr.f32.mxu0 0.0
        %7072 = vmatmul.mubr.f32.gmra.mrb[0].mxu0 %v6641
        %v7073 = vpop.f32.mrb[0].mxu0
        %v7074 = vadd.f32 0.0, %v7073
        %v7075 = vpop.f32.mrb[0].mxu0
        %7076 = vmatprep.mubr.f32.mxu0 0.0
        %7077 = vmatmul.mubr.f32.gmra.mrb[0].mxu0 %v6643
        %v7078 = vpop.f32.mrb[0].mxu0
        %v7079 = vadd.f32 0.0, %v7078
        %v7080 = vpop.f32.mrb[0].mxu0
        %7081 = vmatprep.mubr.f32.mxu0 0.0
        %7082 = vmatmul.mubr.f32.gmra.mrb[0].mxu0 %v6645
        %v7083 = vpop.f32.mrb[0].mxu0
        %v7084 = vadd.f32 0.0, %v7083
        %v7085 = vpop.f32.mrb[0].mxu0
        %7086 = vmatprep.mubr.f32.mxu0 0.0
        %7087 = vmatmul.mubr.f32.gmra.mrb[0].mxu0 %v6647
        %v7088 = vpop.f32.mrb[0].mxu0
        %v7089 = vadd.f32 0.0, %v7088
        %v7090 = vpop.f32.mrb[0].mxu0
        %7091 = vmatprep.mubr.f32.mxu0 0.0
        %7092 = vmatmul.mubr.f32.gmra.mrb[0].mxu0 %v6649
        %v7093 = vpop.f32.mrb[0].mxu0
        %v7094 = vadd.f32 0.0, %v7093
        %v7095 = vpop.f32.mrb[0].mxu0
        %7096 = vmatprep.mubr.f32.mxu0 0.0
        %7097 = vmatmul.mubr.f32.gmra.mrb[0].mxu0 %v6651
        %v7098 = vpop.f32.mrb[0].mxu0
        %v7099 = vadd.f32 0.0, %v7098
        %v7100 = vpop.f32.mrb[0].mxu0
        %7101 = vmatprep.mubr.f32.mxu0 0.0
        %7102 = vmatmul.mubr.f32.gmra.mrb[0].mxu0 %v6653
        %v7103 = vpop.f32.mrb[0].mxu0
        %v7104 = vadd.f32 0.0, %v7103
        %v7105 = vpop.f32.mrb[0].mxu0
        %7106 = vmatprep.mubr.f32.mxu0 0.0
        %7107 = vmatmul.mubr.f32.gmra.mrb[0].mxu0 %v6655
        %v7108 = vpop.f32.mrb[0].mxu0
        %v7109 = vadd.f32 0.0, %v7108
        %v7110 = vpop.f32.mrb[0].mxu0
        %7111 = vdwg.mxu0
        %v7112 = vadd.f32 %v6260, %v6724
        %v7113 = vadd.f32 %v6261, %v6729
        %v7114 = vadd.f32 %v6262, %v6734
        %v7115 = vadd.f32 %v6263, %v6739
        %v7116 = vadd.f32 %v6264, %v6744
        %v7117 = vadd.f32 %v6265, %v6749
        %v7118 = vadd.f32 %v6266, %v6754
        %v7119 = vadd.f32 %v6267, %v6759
        %v7120 = vadd.f32 %v6268, %v6764
        %v7121 = vadd.f32 %v6269, %v6769
        %v7122 = vadd.f32 %v6270, %v6774
        %v7123 = vadd.f32 %v6271, %v6779
        %v7124 = vadd.f32 %v6272, %v6784
        %v7125 = vadd.f32 %v6273, %v6789
        %v7126 = vadd.f32 %v6274, %v6794
        %v7127 = vadd.f32 %v6275, %v6799
        %v7128 = vadd.f32 %v6276, %v6804
        %v7129 = vadd.f32 %v6277, %v6809
        %v7130 = vadd.f32 %v6278, %v6814
        %v7131 = vadd.f32 %v6279, %v6819
        %v7132 = vadd.f32 %v6280, %v6824
        %v7133 = vadd.f32 %v6281, %v6829
        %v7134 = vadd.f32 %v6282, %v6834
        %v7135 = vadd.f32 %v6283, %v6839
        %v7136 = vadd.f32 %v6284, %v6844
        %v7137 = vadd.f32 %v6285, %v6849
        %v7138 = vadd.f32 %v6286, %v6854
        %v7139 = vadd.f32 %v6287, %v6859
        %v7140 = vadd.f32 %v6288, %v6864
        %v7141 = vadd.f32 %v6289, %v6869
        %v7142 = vadd.f32 %v6290, %v6874
        %v7143 = vadd.f32 %v6291, %v6879
        %v7144 = vadd.f32 %v6292, %v6884
        %v7145 = vadd.f32 %v6293, %v6889
        %v7146 = vadd.f32 %v6294, %v6894
        %v7147 = vadd.f32 %v6295, %v6899
        %v7148 = vadd.f32 %v6296, %v6904
        %v7149 = vadd.f32 %v6297, %v6909
        %v7150 = vadd.f32 %v6298, %v6914
        %v7151 = vadd.f32 %v6299, %v6919
        %v7152 = vadd.f32 %v6300, %v6924
        %v7153 = vadd.f32 %v6301, %v6929
        %v7154 = vadd.f32 %v6302, %v6934
        %v7155 = vadd.f32 %v6303, %v6939
        %v7156 = vadd.f32 %v6304, %v6944
        %v7157 = vadd.f32 %v6305, %v6949
        %v7158 = vadd.f32 %v6306, %v6954
        %v7159 = vadd.f32 %v6307, %v6959
        %v7160 = vadd.f32 %v6308, %v6964
        %v7161 = vadd.f32 %v6309, %v6969
        %v7162 = vadd.f32 %v6310, %v6974
        %v7163 = vadd.f32 %v6311, %v6979
        %v7164 = vadd.f32 %v6312, %v6984
        %v7165 = vadd.f32 %v6313, %v6989
        %v7166 = vadd.f32 %v6314, %v6994
        %v7167 = vadd.f32 %v6315, %v6999
        %v7168 = vadd.f32 %v6316, %v7004
        %v7169 = vadd.f32 %v6317, %v7009
        %v7170 = vadd.f32 %v6318, %v7014
        %v7171 = vadd.f32 %v6319, %v7019
        %v7172 = vadd.f32 %v6320, %v7024
        %v7173 = vadd.f32 %v6321, %v7029
        %v7174 = vadd.f32 %v6322, %v7034
        %v7175 = vadd.f32 %v6323, %v7039
        %v7176 = vadd.f32 %v6324, %v7044
        %v7177 = vadd.f32 %v6325, %v7049
        %v7178 = vadd.f32 %v6326, %v7054
        %v7179 = vadd.f32 %v6327, %v7059
        %v7180 = vadd.f32 %v6328, %v7064
        %v7181 = vadd.f32 %v6329, %v7069
        %v7182 = vadd.f32 %v6330, %v7074
        %v7183 = vadd.f32 %v6331, %v7079
        %v7184 = vadd.f32 %v6332, %v7084
        %v7185 = vadd.f32 %v6333, %v7089
        %v7186 = vadd.f32 %v6334, %v7094
        %v7187 = vadd.f32 %v6335, %v7099
        %v7188 = vadd.f32 %v6336, %v7104
        %v7189 = vadd.f32 %v6337, %v7109
        %s7190 = scalar_lea.vmem [#allocation7], 256
        %v7191 = vld [vmem:[%s7190] sm:$0xff]
        %v7192 = vld [vmem:[%s7190 + $0x8] sm:$0xff]
        %v7193 = vld [vmem:[%s7190 + $0x10] sm:$0xff]
        %v7194 = vld [vmem:[%s7190 + $0x18] sm:$0xff]
        %vm7195 = vcmask 1041408
        %v7196 = vrot.slane %v1130, 6
        %v7197 = vrot.slane %v1131, 6
        %v7198 = vsel %vm7195, %v7196, %v7197
        %v7199 = vrot.slane %v1132, 6
        %v7200 = vsel %vm7195, %v7197, %v7199
        %v7201 = vrot.slane %v1133, 6
        %v7202 = vsel %vm7195, %v7199, %v7201
        %v7203 = vrot.slane %v1134, 6
        %v7204 = vsel %vm7195, %v7201, %v7203
        %v7205 = vrot.slane %v1135, 6
        %v7206 = vsel %vm7195, %v7203, %v7205
        %v7207 = vrot.slane %v1136, 6
        %v7208 = vsel %vm7195, %v7205, %v7207
        %v7209 = vrot.slane %v1137, 6
        %v7210 = vsel %vm7195, %v7207, %v7209
        %v7211 = vrot.slane %v1138, 6
        %v7212 = vsel %vm7195, %v7209, %v7211
        %v7213 = vrot.slane %v1139, 6
        %v7214 = vsel %vm7195, %v7211, %v7213
        %v7215 = vrot.slane %v1140, 6
        %v7216 = vsel %vm7195, %v7213, %v7215
        %v7217 = vrot.slane %v1141, 6
        %v7218 = vsel %vm7195, %v7215, %v7217
        %v7219 = vrot.slane %v1142, 6
        %v7220 = vsel %vm7195, %v7217, %v7219
        %v7221 = vrot.slane %v1143, 6
        %v7222 = vsel %vm7195, %v7219, %v7221
        %v7223 = vrot.slane %v1144, 6
        %v7224 = vsel %vm7195, %v7221, %v7223
        %v7225 = vrot.slane %v1145, 6
        %v7226 = vsel %vm7195, %v7223, %v7225
        %v7227 = vrot.slane %v1146, 6
        %v7228 = vsel %vm7195, %v7225, %v7227
        %v7229 = vrot.slane %v1147, 6
        %v7230 = vsel %vm7195, %v7227, %v7229
        %v7231 = vrot.slane %v1148, 6
        %v7232 = vsel %vm7195, %v7229, %v7231
        %v7233 = vrot.slane %v1149, 6
        %v7234 = vsel %vm7195, %v7231, %v7233
        %v7235 = vrot.slane %v1150, 6
        %v7236 = vsel %vm7195, %v7233, %v7235
        %v7237 = vrot.slane %v1151, 6
        %v7238 = vsel %vm7195, %v7235, %v7237
        %v7239 = vrot.slane %v1152, 6
        %v7240 = vsel %vm7195, %v7237, %v7239
        %v7241 = vrot.slane %v1153, 6
        %v7242 = vsel %vm7195, %v7239, %v7241
        %v7243 = vrot.slane %v1154, 6
        %v7244 = vsel %vm7195, %v7241, %v7243
        %v7245 = vrot.slane %v1155, 6
        %v7246 = vsel %vm7195, %v7243, %v7245
        %v7247 = vrot.slane %v1156, 6
        %v7248 = vsel %vm7195, %v7245, %v7247
        %v7249 = vrot.slane %v1157, 6
        %v7250 = vsel %vm7195, %v7247, %v7249
        %v7251 = vrot.slane %v1158, 6
        %v7252 = vsel %vm7195, %v7249, %v7251
        %v7253 = vrot.slane %v1159, 6
        %v7254 = vsel %vm7195, %v7251, %v7253
        %v7255 = vrot.slane %v1160, 6
        %v7256 = vsel %vm7195, %v7253, %v7255
        %v7257 = vrot.slane %v1161, 6
        %v7258 = vsel %vm7195, %v7255, %v7257
        %v7259 = vrot.slane %v1162, 6
        %v7260 = vsel %vm7195, %v7257, %v7259
        %v7261 = vrot.slane %v1163, 6
        %v7262 = vsel %vm7195, %v7259, %v7261
        %v7263 = vrot.slane %v1164, 6
        %v7264 = vsel %vm7195, %v7261, %v7263
        %v7265 = vrot.slane %v1165, 6
        %v7266 = vsel %vm7195, %v7263, %v7265
        %v7267 = vrot.slane %v1166, 6
        %v7268 = vsel %vm7195, %v7265, %v7267
        %v7269 = vrot.slane %v1167, 6
        %v7270 = vsel %vm7195, %v7267, %v7269
        %v7271 = vrot.slane %v1168, 6
        %v7272 = vsel %vm7195, %v7269, %v7271
        %v7273 = vrot.slane %v1169, 6
        %v7274 = vsel %vm7195, %v7271, %v7273
        %v7275 = vrot.slane %v1170, 6
        %v7276 = vsel %vm7195, %v7273, %v7275
        %v7277 = vrot.slane %v1171, 6
        %v7278 = vsel %vm7195, %v7275, %v7277
        %v7279 = vrot.slane %v1172, 6
        %v7280 = vsel %vm7195, %v7277, %v7279
        %v7281 = vrot.slane %v1173, 6
        %v7282 = vsel %vm7195, %v7279, %v7281
        %v7283 = vrot.slane %v1174, 6
        %v7284 = vsel %vm7195, %v7281, %v7283
        %v7285 = vrot.slane %v1175, 6
        %v7286 = vsel %vm7195, %v7283, %v7285
        %v7287 = vrot.slane %v1176, 6
        %v7288 = vsel %vm7195, %v7285, %v7287
        %v7289 = vrot.slane %v1177, 6
        %v7290 = vsel %vm7195, %v7287, %v7289
        %v7291 = vrot.slane %v1178, 6
        %v7292 = vsel %vm7195, %v7289, %v7291
        %v7293 = vrot.slane %v1179, 6
        %v7294 = vsel %vm7195, %v7291, %v7293
        %v7295 = vrot.slane %v1180, 6
        %v7296 = vsel %vm7195, %v7293, %v7295
        %v7297 = vrot.slane %v1181, 6
        %v7298 = vsel %vm7195, %v7295, %v7297
        %v7299 = vrot.slane %v1182, 6
        %v7300 = vsel %vm7195, %v7297, %v7299
        %v7301 = vrot.slane %v1183, 6
        %v7302 = vsel %vm7195, %v7299, %v7301
        %v7303 = vrot.slane %v1184, 6
        %v7304 = vsel %vm7195, %v7301, %v7303
        %v7305 = vrot.slane %v1185, 6
        %v7306 = vsel %vm7195, %v7303, %v7305
        %v7307 = vrot.slane %v1186, 6
        %v7308 = vsel %vm7195, %v7305, %v7307
        %v7309 = vrot.slane %v1187, 6
        %v7310 = vsel %vm7195, %v7307, %v7309
        %v7311 = vrot.slane %v1188, 6
        %v7312 = vsel %vm7195, %v7309, %v7311
        %v7313 = vrot.slane %v1189, 6
        %v7314 = vsel %vm7195, %v7311, %v7313
        %v7315 = vrot.slane %v1190, 6
        %v7316 = vsel %vm7195, %v7313, %v7315
        %v7317 = vrot.slane %v1191, 6
        %v7318 = vsel %vm7195, %v7315, %v7317
        %v7319 = vrot.slane %v1192, 6
        %v7320 = vsel %vm7195, %v7317, %v7319
        %v7321 = vrot.slane %v1193, 6
        %v7322 = vsel %vm7195, %v7319, %v7321
        %v7323 = vrot.slane %v1194, 6
        %v7324 = vsel %vm7195, %v7321, %v7323
        %v7325 = vrot.slane %v1195, 6
        %v7326 = vsel %vm7195, %v7323, %v7325
        %v7327 = vrot.slane %v1196, 6
        %v7328 = vsel %vm7195, %v7325, %v7327
        %v7329 = vrot.slane %v1197, 6
        %v7330 = vsel %vm7195, %v7327, %v7329
        %v7331 = vrot.slane %v1198, 6
        %v7332 = vsel %vm7195, %v7329, %v7331
        %v7333 = vrot.slane %v1199, 6
        %v7334 = vsel %vm7195, %v7331, %v7333
        %v7335 = vrot.slane %v1200, 6
        %v7336 = vsel %vm7195, %v7333, %v7335
        %v7337 = vrot.slane %v1201, 6
        %v7338 = vsel %vm7195, %v7335, %v7337
        %v7339 = vrot.slane %v1202, 6
        %v7340 = vsel %vm7195, %v7337, %v7339
        %v7341 = vrot.slane %v1203, 6
        %v7342 = vsel %vm7195, %v7339, %v7341
        %v7343 = vrot.slane %v1204, 6
        %v7344 = vsel %vm7195, %v7341, %v7343
        %v7345 = vrot.slane %v1205, 6
        %v7346 = vsel %vm7195, %v7343, %v7345
        %v7347 = vrot.slane %v1206, 6
        %v7348 = vsel %vm7195, %v7345, %v7347
        %v7349 = vrot.slane %v1207, 6
        %v7350 = vsel %vm7195, %v7347, %v7349
        %v7351 = vrot.slane %v1208, 6
        %v7352 = vsel %vm7195, %v7349, %v7351
        %v7353 = vsel %vm1452, %v7198, 0
        %v7355 = vsel %vm1452, %v7200, 0
        %v7357 = vsel %vm1452, %v7202, 0
        %v7359 = vsel %vm1452, %v7204, 0
        %v7361 = vsel %vm1452, %v7206, 0
        %v7363 = vsel %vm1452, %v7208, 0
        %v7365 = vsel %vm1452, %v7210, 0
        %v7367 = vsel %vm1452, %v7212, 0
        %v7369 = vsel %vm1452, %v7214, 0
        %v7371 = vsel %vm1452, %v7216, 0
        %v7373 = vsel %vm1452, %v7218, 0
        %v7375 = vsel %vm1452, %v7220, 0
        %v7377 = vsel %vm1452, %v7222, 0
        %v7379 = vsel %vm1452, %v7224, 0
        %v7381 = vsel %vm1452, %v7226, 0
        %v7383 = vsel %vm1452, %v7228, 0
        %v7385 = vsel %vm1452, %v7230, 0
        %v7387 = vsel %vm1452, %v7232, 0
        %v7389 = vsel %vm1452, %v7234, 0
        %v7391 = vsel %vm1452, %v7236, 0
        %v7393 = vsel %vm1452, %v7238, 0
        %v7395 = vsel %vm1452, %v7240, 0
        %v7397 = vsel %vm1452, %v7242, 0
        %v7399 = vsel %vm1452, %v7244, 0
        %v7401 = vsel %vm1452, %v7246, 0
        %v7403 = vsel %vm1452, %v7248, 0
        %v7405 = vsel %vm1452, %v7250, 0
        %v7407 = vsel %vm1452, %v7252, 0
        %v7409 = vsel %vm1452, %v7254, 0
        %v7411 = vsel %vm1452, %v7256, 0
        %v7413 = vsel %vm1452, %v7258, 0
        %v7415 = vsel %vm1452, %v7260, 0
        %v7417 = vsel %vm1452, %v7262, 0
        %v7419 = vsel %vm1452, %v7264, 0
        %v7421 = vsel %vm1452, %v7266, 0
        %v7423 = vsel %vm1452, %v7268, 0
        %v7425 = vsel %vm1452, %v7270, 0
        %v7427 = vsel %vm1452, %v7272, 0
        %v7429 = vsel %vm1452, %v7274, 0
        %v7431 = vsel %vm1452, %v7276, 0
        %v7433 = vsel %vm1452, %v7278, 0
        %v7435 = vsel %vm1452, %v7280, 0
        %v7437 = vsel %vm1452, %v7282, 0
        %v7439 = vsel %vm1452, %v7284, 0
        %v7441 = vsel %vm1452, %v7286, 0
        %v7443 = vsel %vm1452, %v7288, 0
        %v7445 = vsel %vm1452, %v7290, 0
        %v7447 = vsel %vm1452, %v7292, 0
        %v7449 = vsel %vm1452, %v7294, 0
        %v7451 = vsel %vm1452, %v7296, 0
        %v7453 = vsel %vm1452, %v7298, 0
        %v7455 = vsel %vm1452, %v7300, 0
        %v7457 = vsel %vm1452, %v7302, 0
        %v7459 = vsel %vm1452, %v7304, 0
        %v7461 = vsel %vm1452, %v7306, 0
        %v7463 = vsel %vm1452, %v7308, 0
        %v7465 = vsel %vm1452, %v7310, 0
        %v7467 = vsel %vm1452, %v7312, 0
        %v7469 = vsel %vm1452, %v7314, 0
        %v7471 = vsel %vm1452, %v7316, 0
        %v7473 = vsel %vm1452, %v7318, 0
        %v7475 = vsel %vm1452, %v7320, 0
        %v7477 = vsel %vm1452, %v7322, 0
        %v7479 = vsel %vm1452, %v7324, 0
        %v7481 = vsel %vm1452, %v7326, 0
        %v7483 = vsel %vm1452, %v7328, 0
        %v7485 = vsel %vm1452, %v7330, 0
        %v7487 = vsel %vm1452, %v7332, 0
        %v7489 = vsel %vm1452, %v7334, 0
        %v7491 = vsel %vm1452, %v7336, 0
        %v7493 = vsel %vm1452, %v7338, 0
        %v7495 = vsel %vm1452, %v7340, 0
        %v7497 = vsel %vm1452, %v7342, 0
        %v7499 = vsel %vm1452, %v7344, 0
        %v7501 = vsel %vm1452, %v7346, 0
        %v7503 = vsel %vm1452, %v7348, 0
        %v7505 = vsel %vm1452, %v7350, 0
        %v7507 = vsel %vm1452, %v7352, 0
        %7509 = vmatprep.subr.mxu0 0.0
        %7510 = vmatpush1.msra.mxu0 %v7191
        %7511 = vmatprep.subr.mxu0 0.0
        %7512 = vmatpush1.msra.mxu0 %v7192
        %7513 = vmatprep.subr.mxu0 0.0
        %7514 = vmatpush1.msra.mxu0 %v7193
        %7515 = vmatprep.subr.mxu0 0.0
        %7516 = vmatpush1.msra.mxu0 %v7194
        %7517 = vmatprep.subr.mxu0 0.0
        %7518 = vmatpush1.msra.mxu0 0.0
        %7519 = vmatprep.subr.mxu0 0.0
        %7520 = vmatpush1.msra.mxu0 0.0
        %7521 = vmatprep.subr.mxu0 0.0
        %7522 = vmatpush1.msra.mxu0 0.0
        %7523 = vmatprep.subr.mxu0 0.0
        %7524 = vmatpush1.msra.mxu0 0.0
        %7525 = vmatprep.subr.mxu0 0.0
        %7526 = vmatpush1.msra.mxu0 0.0
        %7527 = vmatprep.subr.mxu0 0.0
        %7528 = vmatpush1.msra.mxu0 0.0
        %7529 = vmatprep.subr.mxu0 0.0
        %7530 = vmatpush1.msra.mxu0 0.0
        %7531 = vmatprep.subr.mxu0 0.0
        %7532 = vmatpush1.msra.mxu0 0.0
        %7533 = vmatprep.subr.mxu0 0.0
        %7534 = vmatpush1.msra.mxu0 0.0
        %7535 = vmatprep.subr.mxu0 0.0
        %7536 = vmatpush1.msra.mxu0 0.0
        %7537 = vmatprep.subr.mxu0 0.0
        %7538 = vmatpush1.msra.mxu0 0.0
        %7539 = vmatprep.subr.mxu0 0.0
        %7540 = vmatpush1.msra.mxu0 0.0
        %7541 = vmatprep.subr.mxu0 0.0
        %7542 = vmatpush1.msra.mxu0 0.0
        %7543 = vmatprep.subr.mxu0 0.0
        %7544 = vmatpush1.msra.mxu0 0.0
        %7545 = vmatprep.subr.mxu0 0.0
        %7546 = vmatpush1.msra.mxu0 0.0
        %7547 = vmatprep.subr.mxu0 0.0
        %7548 = vmatpush1.msra.mxu0 0.0
        %7549 = vmatprep.subr.mxu0 0.0
        %7550 = vmatpush1.msra.mxu0 0.0
        %7551 = vmatprep.subr.mxu0 0.0
        %7552 = vmatpush1.msra.mxu0 0.0
        %7553 = vmatprep.subr.mxu0 0.0
        %7554 = vmatpush1.msra.mxu0 0.0
        %7555 = vmatprep.subr.mxu0 0.0
        %7556 = vmatpush1.msra.mxu0 0.0
        %7557 = vmatprep.subr.mxu0 0.0
        %7558 = vmatpush1.msra.mxu0 0.0
        %7559 = vmatprep.subr.mxu0 0.0
        %7560 = vmatpush1.msra.mxu0 0.0
        %7561 = vmatprep.subr.mxu0 0.0
        %7562 = vmatpush1.msra.mxu0 0.0
        %7563 = vmatprep.subr.mxu0 0.0
        %7564 = vmatpush1.msra.mxu0 0.0
        %7565 = vmatprep.subr.mxu0 0.0
        %7566 = vmatpush1.msra.mxu0 0.0
        %7567 = vmatprep.subr.mxu0 0.0
        %7568 = vmatpush1.msra.mxu0 0.0
        %7569 = vmatprep.subr.mxu0 0.0
        %7570 = vmatpush1.msra.mxu0 0.0
        %7571 = vmatprep.subr.mxu0 0.0
        %7572 = vmatpush1.msra.mxu0 0.0
        %7573 = vmatprep.mubr.f32.mxu0 0.0
        %7574 = vmatmul.mubr.f32.gmra.mrb[0].mxu0 %v7353
        %v7575 = vpop.f32.mrb[0].mxu0
        %v7576 = vadd.f32 0.0, %v7575
        %v7577 = vpop.f32.mrb[0].mxu0
        %7578 = vmatprep.mubr.f32.mxu0 0.0
        %7579 = vmatmul.mubr.f32.gmra.mrb[0].mxu0 %v7355
        %v7580 = vpop.f32.mrb[0].mxu0
        %v7581 = vadd.f32 0.0, %v7580
        %v7582 = vpop.f32.mrb[0].mxu0
        %7583 = vmatprep.mubr.f32.mxu0 0.0
        %7584 = vmatmul.mubr.f32.gmra.mrb[0].mxu0 %v7357
        %v7585 = vpop.f32.mrb[0].mxu0
        %v7586 = vadd.f32 0.0, %v7585
        %v7587 = vpop.f32.mrb[0].mxu0
        %7588 = vmatprep.mubr.f32.mxu0 0.0
        %7589 = vmatmul.mubr.f32.gmra.mrb[0].mxu0 %v7359
        %v7590 = vpop.f32.mrb[0].mxu0
        %v7591 = vadd.f32 0.0, %v7590
        %v7592 = vpop.f32.mrb[0].mxu0
        %7593 = vmatprep.mubr.f32.mxu0 0.0
        %7594 = vmatmul.mubr.f32.gmra.mrb[0].mxu0 %v7361
        %v7595 = vpop.f32.mrb[0].mxu0
        %v7596 = vadd.f32 0.0, %v7595
        %v7597 = vpop.f32.mrb[0].mxu0
        %7598 = vmatprep.mubr.f32.mxu0 0.0
        %7599 = vmatmul.mubr.f32.gmra.mrb[0].mxu0 %v7363
        %v7600 = vpop.f32.mrb[0].mxu0
        %v7601 = vadd.f32 0.0, %v7600
        %v7602 = vpop.f32.mrb[0].mxu0
        %7603 = vmatprep.mubr.f32.mxu0 0.0
        %7604 = vmatmul.mubr.f32.gmra.mrb[0].mxu0 %v7365
        %v7605 = vpop.f32.mrb[0].mxu0
        %v7606 = vadd.f32 0.0, %v7605
        %v7607 = vpop.f32.mrb[0].mxu0
        %7608 = vmatprep.mubr.f32.mxu0 0.0
        %7609 = vmatmul.mubr.f32.gmra.mrb[0].mxu0 %v7367
        %v7610 = vpop.f32.mrb[0].mxu0
        %v7611 = vadd.f32 0.0, %v7610
        %v7612 = vpop.f32.mrb[0].mxu0
        %7613 = vmatprep.mubr.f32.mxu0 0.0
        %7614 = vmatmul.mubr.f32.gmra.mrb[0].mxu0 %v7369
        %v7615 = vpop.f32.mrb[0].mxu0
        %v7616 = vadd.f32 0.0, %v7615
        %v7617 = vpop.f32.mrb[0].mxu0
        %7618 = vmatprep.mubr.f32.mxu0 0.0
        %7619 = vmatmul.mubr.f32.gmra.mrb[0].mxu0 %v7371
        %v7620 = vpop.f32.mrb[0].mxu0
        %v7621 = vadd.f32 0.0, %v7620
        %v7622 = vpop.f32.mrb[0].mxu0
        %7623 = vmatprep.mubr.f32.mxu0 0.0
        %7624 = vmatmul.mubr.f32.gmra.mrb[0].mxu0 %v7373
        %v7625 = vpop.f32.mrb[0].mxu0
        %v7626 = vadd.f32 0.0, %v7625
        %v7627 = vpop.f32.mrb[0].mxu0
        %7628 = vmatprep.mubr.f32.mxu0 0.0
        %7629 = vmatmul.mubr.f32.gmra.mrb[0].mxu0 %v7375
        %v7630 = vpop.f32.mrb[0].mxu0
        %v7631 = vadd.f32 0.0, %v7630
        %v7632 = vpop.f32.mrb[0].mxu0
        %7633 = vmatprep.mubr.f32.mxu0 0.0
        %7634 = vmatmul.mubr.f32.gmra.mrb[0].mxu0 %v7377
        %v7635 = vpop.f32.mrb[0].mxu0
        %v7636 = vadd.f32 0.0, %v7635
        %v7637 = vpop.f32.mrb[0].mxu0
        %7638 = vmatprep.mubr.f32.mxu0 0.0
        %7639 = vmatmul.mubr.f32.gmra.mrb[0].mxu0 %v7379
        %v7640 = vpop.f32.mrb[0].mxu0
        %v7641 = vadd.f32 0.0, %v7640
        %v7642 = vpop.f32.mrb[0].mxu0
        %7643 = vmatprep.mubr.f32.mxu0 0.0
        %7644 = vmatmul.mubr.f32.gmra.mrb[0].mxu0 %v7381
        %v7645 = vpop.f32.mrb[0].mxu0
        %v7646 = vadd.f32 0.0, %v7645
        %v7647 = vpop.f32.mrb[0].mxu0
        %7648 = vmatprep.mubr.f32.mxu0 0.0
        %7649 = vmatmul.mubr.f32.gmra.mrb[0].mxu0 %v7383
        %v7650 = vpop.f32.mrb[0].mxu0
        %v7651 = vadd.f32 0.0, %v7650
        %v7652 = vpop.f32.mrb[0].mxu0
        %7653 = vmatprep.mubr.f32.mxu0 0.0
        %7654 = vmatmul.mubr.f32.gmra.mrb[0].mxu0 %v7385
        %v7655 = vpop.f32.mrb[0].mxu0
        %v7656 = vadd.f32 0.0, %v7655
        %v7657 = vpop.f32.mrb[0].mxu0
        %7658 = vmatprep.mubr.f32.mxu0 0.0
        %7659 = vmatmul.mubr.f32.gmra.mrb[0].mxu0 %v7387
        %v7660 = vpop.f32.mrb[0].mxu0
        %v7661 = vadd.f32 0.0, %v7660
        %v7662 = vpop.f32.mrb[0].mxu0
        %7663 = vmatprep.mubr.f32.mxu0 0.0
        %7664 = vmatmul.mubr.f32.gmra.mrb[0].mxu0 %v7389
        %v7665 = vpop.f32.mrb[0].mxu0
        %v7666 = vadd.f32 0.0, %v7665
        %v7667 = vpop.f32.mrb[0].mxu0
        %7668 = vmatprep.mubr.f32.mxu0 0.0
        %7669 = vmatmul.mubr.f32.gmra.mrb[0].mxu0 %v7391
        %v7670 = vpop.f32.mrb[0].mxu0
        %v7671 = vadd.f32 0.0, %v7670
        %v7672 = vpop.f32.mrb[0].mxu0
        %7673 = vmatprep.mubr.f32.mxu0 0.0
        %7674 = vmatmul.mubr.f32.gmra.mrb[0].mxu0 %v7393
        %v7675 = vpop.f32.mrb[0].mxu0
        %v7676 = vadd.f32 0.0, %v7675
        %v7677 = vpop.f32.mrb[0].mxu0
        %7678 = vmatprep.mubr.f32.mxu0 0.0
        %7679 = vmatmul.mubr.f32.gmra.mrb[0].mxu0 %v7395
        %v7680 = vpop.f32.mrb[0].mxu0
        %v7681 = vadd.f32 0.0, %v7680
        %v7682 = vpop.f32.mrb[0].mxu0
        %7683 = vmatprep.mubr.f32.mxu0 0.0
        %7684 = vmatmul.mubr.f32.gmra.mrb[0].mxu0 %v7397
        %v7685 = vpop.f32.mrb[0].mxu0
        %v7686 = vadd.f32 0.0, %v7685
        %v7687 = vpop.f32.mrb[0].mxu0
        %7688 = vmatprep.mubr.f32.mxu0 0.0
        %7689 = vmatmul.mubr.f32.gmra.mrb[0].mxu0 %v7399
        %v7690 = vpop.f32.mrb[0].mxu0
        %v7691 = vadd.f32 0.0, %v7690
        %v7692 = vpop.f32.mrb[0].mxu0
        %7693 = vmatprep.mubr.f32.mxu0 0.0
        %7694 = vmatmul.mubr.f32.gmra.mrb[0].mxu0 %v7401
        %v7695 = vpop.f32.mrb[0].mxu0
        %v7696 = vadd.f32 0.0, %v7695
        %v7697 = vpop.f32.mrb[0].mxu0
        %7698 = vmatprep.mubr.f32.mxu0 0.0
        %7699 = vmatmul.mubr.f32.gmra.mrb[0].mxu0 %v7403
        %v7700 = vpop.f32.mrb[0].mxu0
        %v7701 = vadd.f32 0.0, %v7700
        %v7702 = vpop.f32.mrb[0].mxu0
        %7703 = vmatprep.mubr.f32.mxu0 0.0
        %7704 = vmatmul.mubr.f32.gmra.mrb[0].mxu0 %v7405
        %v7705 = vpop.f32.mrb[0].mxu0
        %v7706 = vadd.f32 0.0, %v7705
        %v7707 = vpop.f32.mrb[0].mxu0
        %7708 = vmatprep.mubr.f32.mxu0 0.0
        %7709 = vmatmul.mubr.f32.gmra.mrb[0].mxu0 %v7407
        %v7710 = vpop.f32.mrb[0].mxu0
        %v7711 = vadd.f32 0.0, %v7710
        %v7712 = vpop.f32.mrb[0].mxu0
        %7713 = vmatprep.mubr.f32.mxu0 0.0
        %7714 = vmatmul.mubr.f32.gmra.mrb[0].mxu0 %v7409
        %v7715 = vpop.f32.mrb[0].mxu0
        %v7716 = vadd.f32 0.0, %v7715
        %v7717 = vpop.f32.mrb[0].mxu0
        %7718 = vmatprep.mubr.f32.mxu0 0.0
        %7719 = vmatmul.mubr.f32.gmra.mrb[0].mxu0 %v7411
        %v7720 = vpop.f32.mrb[0].mxu0
        %v7721 = vadd.f32 0.0, %v7720
        %v7722 = vpop.f32.mrb[0].mxu0
        %7723 = vmatprep.mubr.f32.mxu0 0.0
        %7724 = vmatmul.mubr.f32.gmra.mrb[0].mxu0 %v7413
        %v7725 = vpop.f32.mrb[0].mxu0
        %v7726 = vadd.f32 0.0, %v7725
        %v7727 = vpop.f32.mrb[0].mxu0
        %7728 = vmatprep.mubr.f32.mxu0 0.0
        %7729 = vmatmul.mubr.f32.gmra.mrb[0].mxu0 %v7415
        %v7730 = vpop.f32.mrb[0].mxu0
        %v7731 = vadd.f32 0.0, %v7730
        %v7732 = vpop.f32.mrb[0].mxu0
        %7733 = vmatprep.mubr.f32.mxu0 0.0
        %7734 = vmatmul.mubr.f32.gmra.mrb[0].mxu0 %v7417
        %v7735 = vpop.f32.mrb[0].mxu0
        %v7736 = vadd.f32 0.0, %v7735
        %v7737 = vpop.f32.mrb[0].mxu0
        %7738 = vmatprep.mubr.f32.mxu0 0.0
        %7739 = vmatmul.mubr.f32.gmra.mrb[0].mxu0 %v7419
        %v7740 = vpop.f32.mrb[0].mxu0
        %v7741 = vadd.f32 0.0, %v7740
        %v7742 = vpop.f32.mrb[0].mxu0
        %7743 = vmatprep.mubr.f32.mxu0 0.0
        %7744 = vmatmul.mubr.f32.gmra.mrb[0].mxu0 %v7421
        %v7745 = vpop.f32.mrb[0].mxu0
        %v7746 = vadd.f32 0.0, %v7745
        %v7747 = vpop.f32.mrb[0].mxu0
        %7748 = vmatprep.mubr.f32.mxu0 0.0
        %7749 = vmatmul.mubr.f32.gmra.mrb[0].mxu0 %v7423
        %v7750 = vpop.f32.mrb[0].mxu0
        %v7751 = vadd.f32 0.0, %v7750
        %v7752 = vpop.f32.mrb[0].mxu0
        %7753 = vmatprep.mubr.f32.mxu0 0.0
        %7754 = vmatmul.mubr.f32.gmra.mrb[0].mxu0 %v7425
        %v7755 = vpop.f32.mrb[0].mxu0
        %v7756 = vadd.f32 0.0, %v7755
        %v7757 = vpop.f32.mrb[0].mxu0
        %7758 = vmatprep.mubr.f32.mxu0 0.0
        %7759 = vmatmul.mubr.f32.gmra.mrb[0].mxu0 %v7427
        %v7760 = vpop.f32.mrb[0].mxu0
        %v7761 = vadd.f32 0.0, %v7760
        %v7762 = vpop.f32.mrb[0].mxu0
        %7763 = vmatprep.mubr.f32.mxu0 0.0
        %7764 = vmatmul.mubr.f32.gmra.mrb[0].mxu0 %v7429
        %v7765 = vpop.f32.mrb[0].mxu0
        %v7766 = vadd.f32 0.0, %v7765
        %v7767 = vpop.f32.mrb[0].mxu0
        %7768 = vmatprep.mubr.f32.mxu0 0.0
        %7769 = vmatmul.mubr.f32.gmra.mrb[0].mxu0 %v7431
        %v7770 = vpop.f32.mrb[0].mxu0
        %v7771 = vadd.f32 0.0, %v7770
        %v7772 = vpop.f32.mrb[0].mxu0
        %7773 = vmatprep.mubr.f32.mxu0 0.0
        %7774 = vmatmul.mubr.f32.gmra.mrb[0].mxu0 %v7433
        %v7775 = vpop.f32.mrb[0].mxu0
        %v7776 = vadd.f32 0.0, %v7775
        %v7777 = vpop.f32.mrb[0].mxu0
        %7778 = vmatprep.mubr.f32.mxu0 0.0
        %7779 = vmatmul.mubr.f32.gmra.mrb[0].mxu0 %v7435
        %v7780 = vpop.f32.mrb[0].mxu0
        %v7781 = vadd.f32 0.0, %v7780
        %v7782 = vpop.f32.mrb[0].mxu0
        %7783 = vmatprep.mubr.f32.mxu0 0.0
        %7784 = vmatmul.mubr.f32.gmra.mrb[0].mxu0 %v7437
        %v7785 = vpop.f32.mrb[0].mxu0
        %v7786 = vadd.f32 0.0, %v7785
        %v7787 = vpop.f32.mrb[0].mxu0
        %7788 = vmatprep.mubr.f32.mxu0 0.0
        %7789 = vmatmul.mubr.f32.gmra.mrb[0].mxu0 %v7439
        %v7790 = vpop.f32.mrb[0].mxu0
        %v7791 = vadd.f32 0.0, %v7790
        %v7792 = vpop.f32.mrb[0].mxu0
        %7793 = vmatprep.mubr.f32.mxu0 0.0
        %7794 = vmatmul.mubr.f32.gmra.mrb[0].mxu0 %v7441
        %v7795 = vpop.f32.mrb[0].mxu0
        %v7796 = vadd.f32 0.0, %v7795
        %v7797 = vpop.f32.mrb[0].mxu0
        %7798 = vmatprep.mubr.f32.mxu0 0.0
        %7799 = vmatmul.mubr.f32.gmra.mrb[0].mxu0 %v7443
        %v7800 = vpop.f32.mrb[0].mxu0
        %v7801 = vadd.f32 0.0, %v7800
        %v7802 = vpop.f32.mrb[0].mxu0
        %7803 = vmatprep.mubr.f32.mxu0 0.0
        %7804 = vmatmul.mubr.f32.gmra.mrb[0].mxu0 %v7445
        %v7805 = vpop.f32.mrb[0].mxu0
        %v7806 = vadd.f32 0.0, %v7805
        %v7807 = vpop.f32.mrb[0].mxu0
        %7808 = vmatprep.mubr.f32.mxu0 0.0
        %7809 = vmatmul.mubr.f32.gmra.mrb[0].mxu0 %v7447
        %v7810 = vpop.f32.mrb[0].mxu0
        %v7811 = vadd.f32 0.0, %v7810
        %v7812 = vpop.f32.mrb[0].mxu0
        %7813 = vmatprep.mubr.f32.mxu0 0.0
        %7814 = vmatmul.mubr.f32.gmra.mrb[0].mxu0 %v7449
        %v7815 = vpop.f32.mrb[0].mxu0
        %v7816 = vadd.f32 0.0, %v7815
        %v7817 = vpop.f32.mrb[0].mxu0
        %7818 = vmatprep.mubr.f32.mxu0 0.0
        %7819 = vmatmul.mubr.f32.gmra.mrb[0].mxu0 %v7451
        %v7820 = vpop.f32.mrb[0].mxu0
        %v7821 = vadd.f32 0.0, %v7820
        %v7822 = vpop.f32.mrb[0].mxu0
        %7823 = vmatprep.mubr.f32.mxu0 0.0
        %7824 = vmatmul.mubr.f32.gmra.mrb[0].mxu0 %v7453
        %v7825 = vpop.f32.mrb[0].mxu0
        %v7826 = vadd.f32 0.0, %v7825
        %v7827 = vpop.f32.mrb[0].mxu0
        %7828 = vmatprep.mubr.f32.mxu0 0.0
        %7829 = vmatmul.mubr.f32.gmra.mrb[0].mxu0 %v7455
        %v7830 = vpop.f32.mrb[0].mxu0
        %v7831 = vadd.f32 0.0, %v7830
        %v7832 = vpop.f32.mrb[0].mxu0
        %7833 = vmatprep.mubr.f32.mxu0 0.0
        %7834 = vmatmul.mubr.f32.gmra.mrb[0].mxu0 %v7457
        %v7835 = vpop.f32.mrb[0].mxu0
        %v7836 = vadd.f32 0.0, %v7835
        %v7837 = vpop.f32.mrb[0].mxu0
        %7838 = vmatprep.mubr.f32.mxu0 0.0
        %7839 = vmatmul.mubr.f32.gmra.mrb[0].mxu0 %v7459
        %v7840 = vpop.f32.mrb[0].mxu0
        %v7841 = vadd.f32 0.0, %v7840
        %v7842 = vpop.f32.mrb[0].mxu0
        %7843 = vmatprep.mubr.f32.mxu0 0.0
        %7844 = vmatmul.mubr.f32.gmra.mrb[0].mxu0 %v7461
        %v7845 = vpop.f32.mrb[0].mxu0
        %v7846 = vadd.f32 0.0, %v7845
        %v7847 = vpop.f32.mrb[0].mxu0
        %7848 = vmatprep.mubr.f32.mxu0 0.0
        %7849 = vmatmul.mubr.f32.gmra.mrb[0].mxu0 %v7463
        %v7850 = vpop.f32.mrb[0].mxu0
        %v7851 = vadd.f32 0.0, %v7850
        %v7852 = vpop.f32.mrb[0].mxu0
        %7853 = vmatprep.mubr.f32.mxu0 0.0
        %7854 = vmatmul.mubr.f32.gmra.mrb[0].mxu0 %v7465
        %v7855 = vpop.f32.mrb[0].mxu0
        %v7856 = vadd.f32 0.0, %v7855
        %v7857 = vpop.f32.mrb[0].mxu0
        %7858 = vmatprep.mubr.f32.mxu0 0.0
        %7859 = vmatmul.mubr.f32.gmra.mrb[0].mxu0 %v7467
        %v7860 = vpop.f32.mrb[0].mxu0
        %v7861 = vadd.f32 0.0, %v7860
        %v7862 = vpop.f32.mrb[0].mxu0
        %7863 = vmatprep.mubr.f32.mxu0 0.0
        %7864 = vmatmul.mubr.f32.gmra.mrb[0].mxu0 %v7469
        %v7865 = vpop.f32.mrb[0].mxu0
        %v7866 = vadd.f32 0.0, %v7865
        %v7867 = vpop.f32.mrb[0].mxu0
        %7868 = vmatprep.mubr.f32.mxu0 0.0
        %7869 = vmatmul.mubr.f32.gmra.mrb[0].mxu0 %v7471
        %v7870 = vpop.f32.mrb[0].mxu0
        %v7871 = vadd.f32 0.0, %v7870
        %v7872 = vpop.f32.mrb[0].mxu0
        %7873 = vmatprep.mubr.f32.mxu0 0.0
        %7874 = vmatmul.mubr.f32.gmra.mrb[0].mxu0 %v7473
        %v7875 = vpop.f32.mrb[0].mxu0
        %v7876 = vadd.f32 0.0, %v7875
        %v7877 = vpop.f32.mrb[0].mxu0
        %7878 = vmatprep.mubr.f32.mxu0 0.0
        %7879 = vmatmul.mubr.f32.gmra.mrb[0].mxu0 %v7475
        %v7880 = vpop.f32.mrb[0].mxu0
        %v7881 = vadd.f32 0.0, %v7880
        %v7882 = vpop.f32.mrb[0].mxu0
        %7883 = vmatprep.mubr.f32.mxu0 0.0
        %7884 = vmatmul.mubr.f32.gmra.mrb[0].mxu0 %v7477
        %v7885 = vpop.f32.mrb[0].mxu0
        %v7886 = vadd.f32 0.0, %v7885
        %v7887 = vpop.f32.mrb[0].mxu0
        %7888 = vmatprep.mubr.f32.mxu0 0.0
        %7889 = vmatmul.mubr.f32.gmra.mrb[0].mxu0 %v7479
        %v7890 = vpop.f32.mrb[0].mxu0
        %v7891 = vadd.f32 0.0, %v7890
        %v7892 = vpop.f32.mrb[0].mxu0
        %7893 = vmatprep.mubr.f32.mxu0 0.0
        %7894 = vmatmul.mubr.f32.gmra.mrb[0].mxu0 %v7481
        %v7895 = vpop.f32.mrb[0].mxu0
        %v7896 = vadd.f32 0.0, %v7895
        %v7897 = vpop.f32.mrb[0].mxu0
        %7898 = vmatprep.mubr.f32.mxu0 0.0
        %7899 = vmatmul.mubr.f32.gmra.mrb[0].mxu0 %v7483
        %v7900 = vpop.f32.mrb[0].mxu0
        %v7901 = vadd.f32 0.0, %v7900
        %v7902 = vpop.f32.mrb[0].mxu0
        %7903 = vmatprep.mubr.f32.mxu0 0.0
        %7904 = vmatmul.mubr.f32.gmra.mrb[0].mxu0 %v7485
        %v7905 = vpop.f32.mrb[0].mxu0
        %v7906 = vadd.f32 0.0, %v7905
        %v7907 = vpop.f32.mrb[0].mxu0
        %7908 = vmatprep.mubr.f32.mxu0 0.0
        %7909 = vmatmul.mubr.f32.gmra.mrb[0].mxu0 %v7487
        %v7910 = vpop.f32.mrb[0].mxu0
        %v7911 = vadd.f32 0.0, %v7910
        %v7912 = vpop.f32.mrb[0].mxu0
        %7913 = vmatprep.mubr.f32.mxu0 0.0
        %7914 = vmatmul.mubr.f32.gmra.mrb[0].mxu0 %v7489
        %v7915 = vpop.f32.mrb[0].mxu0
        %v7916 = vadd.f32 0.0, %v7915
        %v7917 = vpop.f32.mrb[0].mxu0
        %7918 = vmatprep.mubr.f32.mxu0 0.0
        %7919 = vmatmul.mubr.f32.gmra.mrb[0].mxu0 %v7491
        %v7920 = vpop.f32.mrb[0].mxu0
        %v7921 = vadd.f32 0.0, %v7920
        %v7922 = vpop.f32.mrb[0].mxu0
        %7923 = vmatprep.mubr.f32.mxu0 0.0
        %7924 = vmatmul.mubr.f32.gmra.mrb[0].mxu0 %v7493
        %v7925 = vpop.f32.mrb[0].mxu0
        %v7926 = vadd.f32 0.0, %v7925
        %v7927 = vpop.f32.mrb[0].mxu0
        %7928 = vmatprep.mubr.f32.mxu0 0.0
        %7929 = vmatmul.mubr.f32.gmra.mrb[0].mxu0 %v7495
        %v7930 = vpop.f32.mrb[0].mxu0
        %v7931 = vadd.f32 0.0, %v7930
        %v7932 = vpop.f32.mrb[0].mxu0
        %7933 = vmatprep.mubr.f32.mxu0 0.0
        %7934 = vmatmul.mubr.f32.gmra.mrb[0].mxu0 %v7497
        %v7935 = vpop.f32.mrb[0].mxu0
        %v7936 = vadd.f32 0.0, %v7935
        %v7937 = vpop.f32.mrb[0].mxu0
        %7938 = vmatprep.mubr.f32.mxu0 0.0
        %7939 = vmatmul.mubr.f32.gmra.mrb[0].mxu0 %v7499
        %v7940 = vpop.f32.mrb[0].mxu0
        %v7941 = vadd.f32 0.0, %v7940
        %v7942 = vpop.f32.mrb[0].mxu0
        %7943 = vmatprep.mubr.f32.mxu0 0.0
        %7944 = vmatmul.mubr.f32.gmra.mrb[0].mxu0 %v7501
        %v7945 = vpop.f32.mrb[0].mxu0
        %v7946 = vadd.f32 0.0, %v7945
        %v7947 = vpop.f32.mrb[0].mxu0
        %7948 = vmatprep.mubr.f32.mxu0 0.0
        %7949 = vmatmul.mubr.f32.gmra.mrb[0].mxu0 %v7503
        %v7950 = vpop.f32.mrb[0].mxu0
        %v7951 = vadd.f32 0.0, %v7950
        %v7952 = vpop.f32.mrb[0].mxu0
        %7953 = vmatprep.mubr.f32.mxu0 0.0
        %7954 = vmatmul.mubr.f32.gmra.mrb[0].mxu0 %v7505
        %v7955 = vpop.f32.mrb[0].mxu0
        %v7956 = vadd.f32 0.0, %v7955
        %v7957 = vpop.f32.mrb[0].mxu0
        %7958 = vmatprep.mubr.f32.mxu0 0.0
        %7959 = vmatmul.mubr.f32.gmra.mrb[0].mxu0 %v7507
        %v7960 = vpop.f32.mrb[0].mxu0
        %v7961 = vadd.f32 0.0, %v7960
        %v7962 = vpop.f32.mrb[0].mxu0
        %7963 = vdwg.mxu0
        %v7964 = vadd.f32 %v7112, %v7576
        %v7965 = vadd.f32 %v7113, %v7581
        %v7966 = vadd.f32 %v7114, %v7586
        %v7967 = vadd.f32 %v7115, %v7591
        %v7968 = vadd.f32 %v7116, %v7596
        %v7969 = vadd.f32 %v7117, %v7601
        %v7970 = vadd.f32 %v7118, %v7606
        %v7971 = vadd.f32 %v7119, %v7611
        %v7972 = vadd.f32 %v7120, %v7616
        %v7973 = vadd.f32 %v7121, %v7621
        %v7974 = vadd.f32 %v7122, %v7626
        %v7975 = vadd.f32 %v7123, %v7631
        %v7976 = vadd.f32 %v7124, %v7636
        %v7977 = vadd.f32 %v7125, %v7641
        %v7978 = vadd.f32 %v7126, %v7646
        %v7979 = vadd.f32 %v7127, %v7651
        %v7980 = vadd.f32 %v7128, %v7656
        %v7981 = vadd.f32 %v7129, %v7661
        %v7982 = vadd.f32 %v7130, %v7666
        %v7983 = vadd.f32 %v7131, %v7671
        %v7984 = vadd.f32 %v7132, %v7676
        %v7985 = vadd.f32 %v7133, %v7681
        %v7986 = vadd.f32 %v7134, %v7686
        %v7987 = vadd.f32 %v7135, %v7691
        %v7988 = vadd.f32 %v7136, %v7696
        %v7989 = vadd.f32 %v7137, %v7701
        %v7990 = vadd.f32 %v7138, %v7706
        %v7991 = vadd.f32 %v7139, %v7711
        %v7992 = vadd.f32 %v7140, %v7716
        %v7993 = vadd.f32 %v7141, %v7721
        %v7994 = vadd.f32 %v7142, %v7726
        %v7995 = vadd.f32 %v7143, %v7731
        %v7996 = vadd.f32 %v7144, %v7736
        %v7997 = vadd.f32 %v7145, %v7741
        %v7998 = vadd.f32 %v7146, %v7746
        %v7999 = vadd.f32 %v7147, %v7751
        %v8000 = vadd.f32 %v7148, %v7756
        %v8001 = vadd.f32 %v7149, %v7761
        %v8002 = vadd.f32 %v7150, %v7766
        %v8003 = vadd.f32 %v7151, %v7771
        %v8004 = vadd.f32 %v7152, %v7776
        %v8005 = vadd.f32 %v7153, %v7781
        %v8006 = vadd.f32 %v7154, %v7786
        %v8007 = vadd.f32 %v7155, %v7791
        %v8008 = vadd.f32 %v7156, %v7796
        %v8009 = vadd.f32 %v7157, %v7801
        %v8010 = vadd.f32 %v7158, %v7806
        %v8011 = vadd.f32 %v7159, %v7811
        %v8012 = vadd.f32 %v7160, %v7816
        %v8013 = vadd.f32 %v7161, %v7821
        %v8014 = vadd.f32 %v7162, %v7826
        %v8015 = vadd.f32 %v7163, %v7831
        %v8016 = vadd.f32 %v7164, %v7836
        %v8017 = vadd.f32 %v7165, %v7841
        %v8018 = vadd.f32 %v7166, %v7846
        %v8019 = vadd.f32 %v7167, %v7851
        %v8020 = vadd.f32 %v7168, %v7856
        %v8021 = vadd.f32 %v7169, %v7861
        %v8022 = vadd.f32 %v7170, %v7866
        %v8023 = vadd.f32 %v7171, %v7871
        %v8024 = vadd.f32 %v7172, %v7876
        %v8025 = vadd.f32 %v7173, %v7881
        %v8026 = vadd.f32 %v7174, %v7886
        %v8027 = vadd.f32 %v7175, %v7891
        %v8028 = vadd.f32 %v7176, %v7896
        %v8029 = vadd.f32 %v7177, %v7901
        %v8030 = vadd.f32 %v7178, %v7906
        %v8031 = vadd.f32 %v7179, %v7911
        %v8032 = vadd.f32 %v7180, %v7916
        %v8033 = vadd.f32 %v7181, %v7921
        %v8034 = vadd.f32 %v7182, %v7926
        %v8035 = vadd.f32 %v7183, %v7931
        %v8036 = vadd.f32 %v7184, %v7936
        %v8037 = vadd.f32 %v7185, %v7941
        %v8038 = vadd.f32 %v7186, %v7946
        %v8039 = vadd.f32 %v7187, %v7951
        %v8040 = vadd.f32 %v7188, %v7956
        %v8041 = vadd.f32 %v7189, %v7961
        %v8042 = vld [vmem:[#allocation8] sm:$0x1]
        %v8044 = vlaneseq
        %v8045 = vshrl.u32 %v8044, 7
        %v8046 = vsub.s32 0, %v8045
        %v8047 = vrot.slane %v8042, %v8046
        %v8049 = vadd.f32 %v7964, %v8047
        %v8050 = vadd.f32 %v7965, %v8047
        %v8051 = vadd.f32 %v7966, %v8047
        %v8052 = vadd.f32 %v7967, %v8047
        %v8053 = vadd.f32 %v7968, %v8047
        %v8054 = vadd.f32 %v7969, %v8047
        %v8055 = vadd.f32 %v7970, %v8047
        %v8056 = vadd.f32 %v7971, %v8047
        %v8057 = vadd.f32 %v7972, %v8047
        %v8058 = vadd.f32 %v7973, %v8047
        %v8059 = vadd.f32 %v7974, %v8047
        %v8060 = vadd.f32 %v7975, %v8047
        %v8061 = vadd.f32 %v7976, %v8047
        %v8062 = vadd.f32 %v7977, %v8047
        %v8063 = vadd.f32 %v7978, %v8047
        %v8064 = vadd.f32 %v7979, %v8047
        %v8065 = vadd.f32 %v7980, %v8047
        %v8066 = vadd.f32 %v7981, %v8047
        %v8067 = vadd.f32 %v7982, %v8047
        %v8068 = vadd.f32 %v7983, %v8047
        %v8069 = vadd.f32 %v7984, %v8047
        %v8070 = vadd.f32 %v7985, %v8047
        %v8071 = vadd.f32 %v7986, %v8047
        %v8072 = vadd.f32 %v7987, %v8047
        %v8073 = vadd.f32 %v7988, %v8047
        %v8074 = vadd.f32 %v7989, %v8047
        %v8075 = vadd.f32 %v7990, %v8047
        %v8076 = vadd.f32 %v7991, %v8047
        %v8077 = vadd.f32 %v7992, %v8047
        %v8078 = vadd.f32 %v7993, %v8047
        %v8079 = vadd.f32 %v7994, %v8047
        %v8080 = vadd.f32 %v7995, %v8047
        %v8081 = vadd.f32 %v7996, %v8047
        %v8082 = vadd.f32 %v7997, %v8047
        %v8083 = vadd.f32 %v7998, %v8047
        %v8084 = vadd.f32 %v7999, %v8047
        %v8085 = vadd.f32 %v8000, %v8047
        %v8086 = vadd.f32 %v8001, %v8047
        %v8087 = vadd.f32 %v8002, %v8047
        %v8088 = vadd.f32 %v8003, %v8047
        %v8089 = vadd.f32 %v8004, %v8047
        %v8090 = vadd.f32 %v8005, %v8047
        %v8091 = vadd.f32 %v8006, %v8047
        %v8092 = vadd.f32 %v8007, %v8047
        %v8093 = vadd.f32 %v8008, %v8047
        %v8094 = vadd.f32 %v8009, %v8047
        %v8095 = vadd.f32 %v8010, %v8047
        %v8096 = vadd.f32 %v8011, %v8047
        %v8097 = vadd.f32 %v8012, %v8047
        %v8098 = vadd.f32 %v8013, %v8047
        %v8099 = vadd.f32 %v8014, %v8047
        %v8100 = vadd.f32 %v8015, %v8047
        %v8101 = vadd.f32 %v8016, %v8047
        %v8102 = vadd.f32 %v8017, %v8047
        %v8103 = vadd.f32 %v8018, %v8047
        %v8104 = vadd.f32 %v8019, %v8047
        %v8105 = vadd.f32 %v8020, %v8047
        %v8106 = vadd.f32 %v8021, %v8047
        %v8107 = vadd.f32 %v8022, %v8047
        %v8108 = vadd.f32 %v8023, %v8047
        %v8109 = vadd.f32 %v8024, %v8047
        %v8110 = vadd.f32 %v8025, %v8047
        %v8111 = vadd.f32 %v8026, %v8047
        %v8112 = vadd.f32 %v8027, %v8047
        %v8113 = vadd.f32 %v8028, %v8047
        %v8114 = vadd.f32 %v8029, %v8047
        %v8115 = vadd.f32 %v8030, %v8047
        %v8116 = vadd.f32 %v8031, %v8047
        %v8117 = vadd.f32 %v8032, %v8047
        %v8118 = vadd.f32 %v8033, %v8047
        %v8119 = vadd.f32 %v8034, %v8047
        %v8120 = vadd.f32 %v8035, %v8047
        %v8121 = vadd.f32 %v8036, %v8047
        %v8122 = vadd.f32 %v8037, %v8047
        %v8123 = vadd.f32 %v8038, %v8047
        %v8124 = vadd.f32 %v8039, %v8047
        %v8125 = vadd.f32 %v8040, %v8047
        %v8126 = vadd.f32 %v8041, %v8047
        %v8127 = vmax.f32 %v8049, 0.0
        %v8128 = vmax.f32 %v8050, 0.0
        %v8129 = vmax.f32 %v8051, 0.0
        %v8130 = vmax.f32 %v8052, 0.0
        %v8131 = vmax.f32 %v8053, 0.0
        %v8132 = vmax.f32 %v8054, 0.0
        %v8133 = vmax.f32 %v8055, 0.0
        %v8134 = vmax.f32 %v8056, 0.0
        %v8135 = vmax.f32 %v8057, 0.0
        %v8136 = vmax.f32 %v8058, 0.0
        %v8137 = vmax.f32 %v8059, 0.0
        %v8138 = vmax.f32 %v8060, 0.0
        %v8139 = vmax.f32 %v8061, 0.0
        %v8140 = vmax.f32 %v8062, 0.0
        %v8141 = vmax.f32 %v8063, 0.0
        %v8142 = vmax.f32 %v8064, 0.0
        %v8143 = vmax.f32 %v8065, 0.0
        %v8144 = vmax.f32 %v8066, 0.0
        %v8145 = vmax.f32 %v8067, 0.0
        %v8146 = vmax.f32 %v8068, 0.0
        %v8147 = vmax.f32 %v8069, 0.0
        %v8148 = vmax.f32 %v8070, 0.0
        %v8149 = vmax.f32 %v8071, 0.0
        %v8150 = vmax.f32 %v8072, 0.0
        %v8151 = vmax.f32 %v8073, 0.0
        %v8152 = vmax.f32 %v8074, 0.0
        %v8153 = vmax.f32 %v8075, 0.0
        %v8154 = vmax.f32 %v8076, 0.0
        %v8155 = vmax.f32 %v8077, 0.0
        %v8156 = vmax.f32 %v8078, 0.0
        %v8157 = vmax.f32 %v8079, 0.0
        %v8158 = vmax.f32 %v8080, 0.0
        %v8159 = vmax.f32 %v8081, 0.0
        %v8160 = vmax.f32 %v8082, 0.0
        %v8161 = vmax.f32 %v8083, 0.0
        %v8162 = vmax.f32 %v8084, 0.0
        %v8163 = vmax.f32 %v8085, 0.0
        %v8164 = vmax.f32 %v8086, 0.0
        %v8165 = vmax.f32 %v8087, 0.0
        %v8166 = vmax.f32 %v8088, 0.0
        %v8167 = vmax.f32 %v8089, 0.0
        %v8168 = vmax.f32 %v8090, 0.0
        %v8169 = vmax.f32 %v8091, 0.0
        %v8170 = vmax.f32 %v8092, 0.0
        %v8171 = vmax.f32 %v8093, 0.0
        %v8172 = vmax.f32 %v8094, 0.0
        %v8173 = vmax.f32 %v8095, 0.0
        %v8174 = vmax.f32 %v8096, 0.0
        %v8175 = vmax.f32 %v8097, 0.0
        %v8176 = vmax.f32 %v8098, 0.0
        %v8177 = vmax.f32 %v8099, 0.0
        %v8178 = vmax.f32 %v8100, 0.0
        %v8179 = vmax.f32 %v8101, 0.0
        %v8180 = vmax.f32 %v8102, 0.0
        %v8181 = vmax.f32 %v8103, 0.0
        %v8182 = vmax.f32 %v8104, 0.0
        %v8183 = vmax.f32 %v8105, 0.0
        %v8184 = vmax.f32 %v8106, 0.0
        %v8185 = vmax.f32 %v8107, 0.0
        %v8186 = vmax.f32 %v8108, 0.0
        %v8187 = vmax.f32 %v8109, 0.0
        %v8188 = vmax.f32 %v8110, 0.0
        %v8189 = vmax.f32 %v8111, 0.0
        %v8190 = vmax.f32 %v8112, 0.0
        %v8191 = vmax.f32 %v8113, 0.0
        %v8192 = vmax.f32 %v8114, 0.0
        %v8193 = vmax.f32 %v8115, 0.0
        %v8194 = vmax.f32 %v8116, 0.0
        %v8195 = vmax.f32 %v8117, 0.0
        %v8196 = vmax.f32 %v8118, 0.0
        %v8197 = vmax.f32 %v8119, 0.0
        %v8198 = vmax.f32 %v8120, 0.0
        %v8199 = vmax.f32 %v8121, 0.0
        %v8200 = vmax.f32 %v8122, 0.0
        %v8201 = vmax.f32 %v8123, 0.0
        %v8202 = vmax.f32 %v8124, 0.0
        %v8203 = vmax.f32 %v8125, 0.0
        %v8204 = vmax.f32 %v8126, 0.0
        %v8280 = vrot.slane %v8130, 2
        %v8281 = vrot.slane %v8131, 2
        %v8282 = vsel %vm2680, %v8280, %v8281
        %v8283 = vrot.slane %v8132, 2
        %v8284 = vsel %vm2680, %v8281, %v8283
        %v8285 = vrot.slane %v8133, 2
        %v8286 = vsel %vm2680, %v8283, %v8285
        %v8287 = vrot.slane %v8134, 2
        %v8288 = vsel %vm2680, %v8285, %v8287
        %v8289 = vrot.slane %v8135, 2
        %v8290 = vsel %vm2680, %v8287, %v8289
        %v8291 = vrot.slane %v8136, 2
        %v8292 = vsel %vm2680, %v8289, %v8291
        %v8293 = vrot.slane %v8137, 2
        %v8294 = vsel %vm2680, %v8291, %v8293
        %v8295 = vrot.slane %v8138, 2
        %v8296 = vsel %vm2680, %v8293, %v8295
        %v8297 = vrot.slane %v8139, 2
        %v8298 = vsel %vm2680, %v8295, %v8297
        %v8299 = vrot.slane %v8140, 2
        %v8300 = vsel %vm2680, %v8297, %v8299
        %v8301 = vrot.slane %v8141, 2
        %v8302 = vsel %vm2680, %v8299, %v8301
        %v8303 = vrot.slane %v8142, 2
        %v8304 = vsel %vm2680, %v8301, %v8303
        %v8305 = vrot.slane %v8143, 2
        %v8306 = vsel %vm2680, %v8303, %v8305
        %v8307 = vrot.slane %v8144, 2
        %v8308 = vsel %vm2680, %v8305, %v8307
        %v8309 = vrot.slane %v8145, 2
        %v8310 = vsel %vm2680, %v8307, %v8309
        %v8311 = vrot.slane %v8146, 2
        %v8312 = vsel %vm2680, %v8309, %v8311
        %v8313 = vrot.slane %v8147, 2
        %v8314 = vsel %vm2680, %v8311, %v8313
        %v8315 = vrot.slane %v8148, 2
        %v8316 = vsel %vm2680, %v8313, %v8315
        %v8317 = vrot.slane %v8149, 2
        %v8318 = vsel %vm2680, %v8315, %v8317
        %v8319 = vrot.slane %v8150, 2
        %v8320 = vsel %vm2680, %v8317, %v8319
        %v8321 = vrot.slane %v8151, 2
        %v8322 = vsel %vm2680, %v8319, %v8321
        %v8323 = vrot.slane %v8152, 2
        %v8324 = vsel %vm2680, %v8321, %v8323
        %v8325 = vrot.slane %v8153, 2
        %v8326 = vsel %vm2680, %v8323, %v8325
        %v8327 = vrot.slane %v8154, 2
        %v8328 = vsel %vm2680, %v8325, %v8327
        %v8329 = vrot.slane %v8155, 2
        %v8330 = vsel %vm2680, %v8327, %v8329
        %v8331 = vrot.slane %v8156, 2
        %v8332 = vsel %vm2680, %v8329, %v8331
        %v8333 = vrot.slane %v8157, 2
        %v8334 = vsel %vm2680, %v8331, %v8333
        %v8335 = vrot.slane %v8158, 2
        %v8336 = vsel %vm2680, %v8333, %v8335
        %v8337 = vrot.slane %v8159, 2
        %v8338 = vsel %vm2680, %v8335, %v8337
        %v8339 = vrot.slane %v8160, 2
        %v8340 = vsel %vm2680, %v8337, %v8339
        %v8341 = vrot.slane %v8161, 2
        %v8342 = vsel %vm2680, %v8339, %v8341
        %v8343 = vrot.slane %v8162, 2
        %v8344 = vsel %vm2680, %v8341, %v8343
        %v8345 = vrot.slane %v8163, 2
        %v8346 = vsel %vm2680, %v8343, %v8345
        %v8347 = vrot.slane %v8164, 2
        %v8348 = vsel %vm2680, %v8345, %v8347
        %v8349 = vrot.slane %v8165, 2
        %v8350 = vsel %vm2680, %v8347, %v8349
        %v8351 = vrot.slane %v8166, 2
        %v8352 = vsel %vm2680, %v8349, %v8351
        %v8353 = vrot.slane %v8167, 2
        %v8354 = vsel %vm2680, %v8351, %v8353
        %v8355 = vrot.slane %v8168, 2
        %v8356 = vsel %vm2680, %v8353, %v8355
        %v8357 = vrot.slane %v8169, 2
        %v8358 = vsel %vm2680, %v8355, %v8357
        %v8359 = vrot.slane %v8170, 2
        %v8360 = vsel %vm2680, %v8357, %v8359
        %v8361 = vrot.slane %v8171, 2
        %v8362 = vsel %vm2680, %v8359, %v8361
        %v8363 = vrot.slane %v8172, 2
        %v8364 = vsel %vm2680, %v8361, %v8363
        %v8365 = vrot.slane %v8173, 2
        %v8366 = vsel %vm2680, %v8363, %v8365
        %v8367 = vrot.slane %v8174, 2
        %v8368 = vsel %vm2680, %v8365, %v8367
        %v8369 = vrot.slane %v8175, 2
        %v8370 = vsel %vm2680, %v8367, %v8369
        %v8371 = vrot.slane %v8176, 2
        %v8372 = vsel %vm2680, %v8369, %v8371
        %v8373 = vrot.slane %v8177, 2
        %v8374 = vsel %vm2680, %v8371, %v8373
        %v8375 = vrot.slane %v8178, 2
        %v8376 = vsel %vm2680, %v8373, %v8375
        %v8377 = vrot.slane %v8179, 2
        %v8378 = vsel %vm2680, %v8375, %v8377
        %v8379 = vrot.slane %v8180, 2
        %v8380 = vsel %vm2680, %v8377, %v8379
        %v8381 = vrot.slane %v8181, 2
        %v8382 = vsel %vm2680, %v8379, %v8381
        %v8383 = vrot.slane %v8182, 2
        %v8384 = vsel %vm2680, %v8381, %v8383
        %v8385 = vrot.slane %v8183, 2
        %v8386 = vsel %vm2680, %v8383, %v8385
        %v8387 = vrot.slane %v8184, 2
        %v8388 = vsel %vm2680, %v8385, %v8387
        %v8389 = vrot.slane %v8185, 2
        %v8390 = vsel %vm2680, %v8387, %v8389
        %v8391 = vrot.slane %v8186, 2
        %v8392 = vsel %vm2680, %v8389, %v8391
        %v8393 = vrot.slane %v8187, 2
        %v8394 = vsel %vm2680, %v8391, %v8393
        %v8395 = vrot.slane %v8188, 2
        %v8396 = vsel %vm2680, %v8393, %v8395
        %v8397 = vrot.slane %v8189, 2
        %v8398 = vsel %vm2680, %v8395, %v8397
        %v8399 = vrot.slane %v8190, 2
        %v8400 = vsel %vm2680, %v8397, %v8399
        %v8401 = vrot.slane %v8191, 2
        %v8402 = vsel %vm2680, %v8399, %v8401
        %v8403 = vrot.slane %v8192, 2
        %v8404 = vsel %vm2680, %v8401, %v8403
        %v8405 = vrot.slane %v8193, 2
        %v8406 = vsel %vm2680, %v8403, %v8405
        %v8407 = vrot.slane %v8194, 2
        %v8408 = vsel %vm2680, %v8405, %v8407
        %v8409 = vrot.slane %v8195, 2
        %v8410 = vsel %vm2680, %v8407, %v8409
        %v8411 = vrot.slane %v8196, 2
        %v8412 = vsel %vm2680, %v8409, %v8411
        %v8413 = vrot.slane %v8197, 2
        %v8414 = vsel %vm2680, %v8411, %v8413
        %v8415 = vrot.slane %v8198, 2
        %v8416 = vsel %vm2680, %v8413, %v8415
        %v8417 = vrot.slane %v8199, 2
        %v8418 = vsel %vm2680, %v8415, %v8417
        %v8419 = vrot.slane %v8200, 2
        %v8420 = vsel %vm2680, %v8417, %v8419
        %v8421 = vrot.slane %v8201, 2
        %v8422 = vsel %vm2680, %v8419, %v8421
        %v8423 = vrot.slane %v8202, 2
        %v8424 = vsel %vm2680, %v8421, %v8423
        %v8425 = vrot.slane %v8203, 2
        %v8426 = vsel %vm2680, %v8423, %v8425
        %v8427 = vrot.slane %v8204, 2
        %v8428 = vsel %vm2680, %v8425, %v8427
        %v8504 = vmax.f32 %v8127, %v8282
        %v8505 = vmax.f32 %v8128, %v8284
        %v8506 = vmax.f32 %v8129, %v8286
        %v8507 = vmax.f32 %v8130, %v8288
        %v8508 = vmax.f32 %v8131, %v8290
        %v8509 = vmax.f32 %v8132, %v8292
        %v8510 = vmax.f32 %v8133, %v8294
        %v8511 = vmax.f32 %v8134, %v8296
        %v8512 = vmax.f32 %v8135, %v8298
        %v8513 = vmax.f32 %v8136, %v8300
        %v8514 = vmax.f32 %v8137, %v8302
        %v8515 = vmax.f32 %v8138, %v8304
        %v8516 = vmax.f32 %v8139, %v8306
        %v8517 = vmax.f32 %v8140, %v8308
        %v8518 = vmax.f32 %v8141, %v8310
        %v8519 = vmax.f32 %v8142, %v8312
        %v8520 = vmax.f32 %v8143, %v8314
        %v8521 = vmax.f32 %v8144, %v8316
        %v8522 = vmax.f32 %v8145, %v8318
        %v8523 = vmax.f32 %v8146, %v8320
        %v8524 = vmax.f32 %v8147, %v8322
        %v8525 = vmax.f32 %v8148, %v8324
        %v8526 = vmax.f32 %v8149, %v8326
        %v8527 = vmax.f32 %v8150, %v8328
        %v8528 = vmax.f32 %v8151, %v8330
        %v8529 = vmax.f32 %v8152, %v8332
        %v8530 = vmax.f32 %v8153, %v8334
        %v8531 = vmax.f32 %v8154, %v8336
        %v8532 = vmax.f32 %v8155, %v8338
        %v8533 = vmax.f32 %v8156, %v8340
        %v8534 = vmax.f32 %v8157, %v8342
        %v8535 = vmax.f32 %v8158, %v8344
        %v8536 = vmax.f32 %v8159, %v8346
        %v8537 = vmax.f32 %v8160, %v8348
        %v8538 = vmax.f32 %v8161, %v8350
        %v8539 = vmax.f32 %v8162, %v8352
        %v8540 = vmax.f32 %v8163, %v8354
        %v8541 = vmax.f32 %v8164, %v8356
        %v8542 = vmax.f32 %v8165, %v8358
        %v8543 = vmax.f32 %v8166, %v8360
        %v8544 = vmax.f32 %v8167, %v8362
        %v8545 = vmax.f32 %v8168, %v8364
        %v8546 = vmax.f32 %v8169, %v8366
        %v8547 = vmax.f32 %v8170, %v8368
        %v8548 = vmax.f32 %v8171, %v8370
        %v8549 = vmax.f32 %v8172, %v8372
        %v8550 = vmax.f32 %v8173, %v8374
        %v8551 = vmax.f32 %v8174, %v8376
        %v8552 = vmax.f32 %v8175, %v8378
        %v8553 = vmax.f32 %v8176, %v8380
        %v8554 = vmax.f32 %v8177, %v8382
        %v8555 = vmax.f32 %v8178, %v8384
        %v8556 = vmax.f32 %v8179, %v8386
        %v8557 = vmax.f32 %v8180, %v8388
        %v8558 = vmax.f32 %v8181, %v8390
        %v8559 = vmax.f32 %v8182, %v8392
        %v8560 = vmax.f32 %v8183, %v8394
        %v8561 = vmax.f32 %v8184, %v8396
        %v8562 = vmax.f32 %v8185, %v8398
        %v8563 = vmax.f32 %v8186, %v8400
        %v8564 = vmax.f32 %v8187, %v8402
        %v8565 = vmax.f32 %v8188, %v8404
        %v8566 = vmax.f32 %v8189, %v8406
        %v8567 = vmax.f32 %v8190, %v8408
        %v8568 = vmax.f32 %v8191, %v8410
        %v8569 = vmax.f32 %v8192, %v8412
        %v8570 = vmax.f32 %v8193, %v8414
        %v8571 = vmax.f32 %v8194, %v8416
        %v8572 = vmax.f32 %v8195, %v8418
        %v8573 = vmax.f32 %v8196, %v8420
        %v8574 = vmax.f32 %v8197, %v8422
        %v8575 = vmax.f32 %v8198, %v8424
        %v8576 = vmax.f32 %v8199, %v8426
        %v8577 = vmax.f32 %v8200, %v8428
        %v8578 = vmax.f32 %v8201, %v8427
        %v8654 = vrot.slane %v8504, 1
        %v8655 = vrot.slane %v8505, 1
        %v8656 = vsel %vm1296, %v8654, %v8655
        %v8657 = vrot.slane %v8506, 1
        %v8658 = vsel %vm1296, %v8655, %v8657
        %v8659 = vrot.slane %v8507, 1
        %v8660 = vsel %vm1296, %v8657, %v8659
        %v8661 = vrot.slane %v8508, 1
        %v8662 = vsel %vm1296, %v8659, %v8661
        %v8663 = vrot.slane %v8509, 1
        %v8664 = vsel %vm1296, %v8661, %v8663
        %v8665 = vrot.slane %v8510, 1
        %v8666 = vsel %vm1296, %v8663, %v8665
        %v8667 = vrot.slane %v8511, 1
        %v8668 = vsel %vm1296, %v8665, %v8667
        %v8669 = vrot.slane %v8512, 1
        %v8670 = vsel %vm1296, %v8667, %v8669
        %v8671 = vrot.slane %v8513, 1
        %v8672 = vsel %vm1296, %v8669, %v8671
        %v8673 = vrot.slane %v8514, 1
        %v8674 = vsel %vm1296, %v8671, %v8673
        %v8675 = vrot.slane %v8515, 1
        %v8676 = vsel %vm1296, %v8673, %v8675
        %v8677 = vrot.slane %v8516, 1
        %v8678 = vsel %vm1296, %v8675, %v8677
        %v8679 = vrot.slane %v8517, 1
        %v8680 = vsel %vm1296, %v8677, %v8679
        %v8681 = vrot.slane %v8518, 1
        %v8682 = vsel %vm1296, %v8679, %v8681
        %v8683 = vrot.slane %v8519, 1
        %v8684 = vsel %vm1296, %v8681, %v8683
        %v8685 = vrot.slane %v8520, 1
        %v8686 = vsel %vm1296, %v8683, %v8685
        %v8687 = vrot.slane %v8521, 1
        %v8688 = vsel %vm1296, %v8685, %v8687
        %v8689 = vrot.slane %v8522, 1
        %v8690 = vsel %vm1296, %v8687, %v8689
        %v8691 = vrot.slane %v8523, 1
        %v8692 = vsel %vm1296, %v8689, %v8691
        %v8693 = vrot.slane %v8524, 1
        %v8694 = vsel %vm1296, %v8691, %v8693
        %v8695 = vrot.slane %v8525, 1
        %v8696 = vsel %vm1296, %v8693, %v8695
        %v8697 = vrot.slane %v8526, 1
        %v8698 = vsel %vm1296, %v8695, %v8697
        %v8699 = vrot.slane %v8527, 1
        %v8700 = vsel %vm1296, %v8697, %v8699
        %v8701 = vrot.slane %v8528, 1
        %v8702 = vsel %vm1296, %v8699, %v8701
        %v8703 = vrot.slane %v8529, 1
        %v8704 = vsel %vm1296, %v8701, %v8703
        %v8705 = vrot.slane %v8530, 1
        %v8706 = vsel %vm1296, %v8703, %v8705
        %v8707 = vrot.slane %v8531, 1
        %v8708 = vsel %vm1296, %v8705, %v8707
        %v8709 = vrot.slane %v8532, 1
        %v8710 = vsel %vm1296, %v8707, %v8709
        %v8711 = vrot.slane %v8533, 1
        %v8712 = vsel %vm1296, %v8709, %v8711
        %v8713 = vrot.slane %v8534, 1
        %v8714 = vsel %vm1296, %v8711, %v8713
        %v8715 = vrot.slane %v8535, 1
        %v8716 = vsel %vm1296, %v8713, %v8715
        %v8717 = vrot.slane %v8536, 1
        %v8718 = vsel %vm1296, %v8715, %v8717
        %v8719 = vrot.slane %v8537, 1
        %v8720 = vsel %vm1296, %v8717, %v8719
        %v8721 = vrot.slane %v8538, 1
        %v8722 = vsel %vm1296, %v8719, %v8721
        %v8723 = vrot.slane %v8539, 1
        %v8724 = vsel %vm1296, %v8721, %v8723
        %v8725 = vrot.slane %v8540, 1
        %v8726 = vsel %vm1296, %v8723, %v8725
        %v8727 = vrot.slane %v8541, 1
        %v8728 = vsel %vm1296, %v8725, %v8727
        %v8729 = vrot.slane %v8542, 1
        %v8730 = vsel %vm1296, %v8727, %v8729
        %v8731 = vrot.slane %v8543, 1
        %v8732 = vsel %vm1296, %v8729, %v8731
        %v8733 = vrot.slane %v8544, 1
        %v8734 = vsel %vm1296, %v8731, %v8733
        %v8735 = vrot.slane %v8545, 1
        %v8736 = vsel %vm1296, %v8733, %v8735
        %v8737 = vrot.slane %v8546, 1
        %v8738 = vsel %vm1296, %v8735, %v8737
        %v8739 = vrot.slane %v8547, 1
        %v8740 = vsel %vm1296, %v8737, %v8739
        %v8741 = vrot.slane %v8548, 1
        %v8742 = vsel %vm1296, %v8739, %v8741
        %v8743 = vrot.slane %v8549, 1
        %v8744 = vsel %vm1296, %v8741, %v8743
        %v8745 = vrot.slane %v8550, 1
        %v8746 = vsel %vm1296, %v8743, %v8745
        %v8747 = vrot.slane %v8551, 1
        %v8748 = vsel %vm1296, %v8745, %v8747
        %v8749 = vrot.slane %v8552, 1
        %v8750 = vsel %vm1296, %v8747, %v8749
        %v8751 = vrot.slane %v8553, 1
        %v8752 = vsel %vm1296, %v8749, %v8751
        %v8753 = vrot.slane %v8554, 1
        %v8754 = vsel %vm1296, %v8751, %v8753
        %v8755 = vrot.slane %v8555, 1
        %v8756 = vsel %vm1296, %v8753, %v8755
        %v8757 = vrot.slane %v8556, 1
        %v8758 = vsel %vm1296, %v8755, %v8757
        %v8759 = vrot.slane %v8557, 1
        %v8760 = vsel %vm1296, %v8757, %v8759
        %v8761 = vrot.slane %v8558, 1
        %v8762 = vsel %vm1296, %v8759, %v8761
        %v8763 = vrot.slane %v8559, 1
        %v8764 = vsel %vm1296, %v8761, %v8763
        %v8765 = vrot.slane %v8560, 1
        %v8766 = vsel %vm1296, %v8763, %v8765
        %v8767 = vrot.slane %v8561, 1
        %v8768 = vsel %vm1296, %v8765, %v8767
        %v8769 = vrot.slane %v8562, 1
        %v8770 = vsel %vm1296, %v8767, %v8769
        %v8771 = vrot.slane %v8563, 1
        %v8772 = vsel %vm1296, %v8769, %v8771
        %v8773 = vrot.slane %v8564, 1
        %v8774 = vsel %vm1296, %v8771, %v8773
        %v8775 = vrot.slane %v8565, 1
        %v8776 = vsel %vm1296, %v8773, %v8775
        %v8777 = vrot.slane %v8566, 1
        %v8778 = vsel %vm1296, %v8775, %v8777
        %v8779 = vrot.slane %v8567, 1
        %v8780 = vsel %vm1296, %v8777, %v8779
        %v8781 = vrot.slane %v8568, 1
        %v8782 = vsel %vm1296, %v8779, %v8781
        %v8783 = vrot.slane %v8569, 1
        %v8784 = vsel %vm1296, %v8781, %v8783
        %v8785 = vrot.slane %v8570, 1
        %v8786 = vsel %vm1296, %v8783, %v8785
        %v8787 = vrot.slane %v8571, 1
        %v8788 = vsel %vm1296, %v8785, %v8787
        %v8789 = vrot.slane %v8572, 1
        %v8790 = vsel %vm1296, %v8787, %v8789
        %v8791 = vrot.slane %v8573, 1
        %v8792 = vsel %vm1296, %v8789, %v8791
        %v8793 = vrot.slane %v8574, 1
        %v8794 = vsel %vm1296, %v8791, %v8793
        %v8795 = vrot.slane %v8575, 1
        %v8796 = vsel %vm1296, %v8793, %v8795
        %v8797 = vrot.slane %v8576, 1
        %v8798 = vsel %vm1296, %v8795, %v8797
        %v8799 = vrot.slane %v8577, 1
        %v8800 = vsel %vm1296, %v8797, %v8799
        %v8801 = vrot.slane %v8578, 1
        %v8802 = vsel %vm1296, %v8799, %v8801
        %v8878 = vmax.f32 %v8504, %v8656
        %v8879 = vmax.f32 %v8505, %v8658
        %v8880 = vmax.f32 %v8506, %v8660
        %v8881 = vmax.f32 %v8507, %v8662
        %v8882 = vmax.f32 %v8508, %v8664
        %v8883 = vmax.f32 %v8509, %v8666
        %v8884 = vmax.f32 %v8510, %v8668
        %v8885 = vmax.f32 %v8511, %v8670
        %v8886 = vmax.f32 %v8512, %v8672
        %v8887 = vmax.f32 %v8513, %v8674
        %v8888 = vmax.f32 %v8514, %v8676
        %v8889 = vmax.f32 %v8515, %v8678
        %v8890 = vmax.f32 %v8516, %v8680
        %v8891 = vmax.f32 %v8517, %v8682
        %v8892 = vmax.f32 %v8518, %v8684
        %v8893 = vmax.f32 %v8519, %v8686
        %v8894 = vmax.f32 %v8520, %v8688
        %v8895 = vmax.f32 %v8521, %v8690
        %v8896 = vmax.f32 %v8522, %v8692
        %v8897 = vmax.f32 %v8523, %v8694
        %v8898 = vmax.f32 %v8524, %v8696
        %v8899 = vmax.f32 %v8525, %v8698
        %v8900 = vmax.f32 %v8526, %v8700
        %v8901 = vmax.f32 %v8527, %v8702
        %v8902 = vmax.f32 %v8528, %v8704
        %v8903 = vmax.f32 %v8529, %v8706
        %v8904 = vmax.f32 %v8530, %v8708
        %v8905 = vmax.f32 %v8531, %v8710
        %v8906 = vmax.f32 %v8532, %v8712
        %v8907 = vmax.f32 %v8533, %v8714
        %v8908 = vmax.f32 %v8534, %v8716
        %v8909 = vmax.f32 %v8535, %v8718
        %v8910 = vmax.f32 %v8536, %v8720
        %v8911 = vmax.f32 %v8537, %v8722
        %v8912 = vmax.f32 %v8538, %v8724
        %v8913 = vmax.f32 %v8539, %v8726
        %v8914 = vmax.f32 %v8540, %v8728
        %v8915 = vmax.f32 %v8541, %v8730
        %v8916 = vmax.f32 %v8542, %v8732
        %v8917 = vmax.f32 %v8543, %v8734
        %v8918 = vmax.f32 %v8544, %v8736
        %v8919 = vmax.f32 %v8545, %v8738
        %v8920 = vmax.f32 %v8546, %v8740
        %v8921 = vmax.f32 %v8547, %v8742
        %v8922 = vmax.f32 %v8548, %v8744
        %v8923 = vmax.f32 %v8549, %v8746
        %v8924 = vmax.f32 %v8550, %v8748
        %v8925 = vmax.f32 %v8551, %v8750
        %v8926 = vmax.f32 %v8552, %v8752
        %v8927 = vmax.f32 %v8553, %v8754
        %v8928 = vmax.f32 %v8554, %v8756
        %v8929 = vmax.f32 %v8555, %v8758
        %v8930 = vmax.f32 %v8556, %v8760
        %v8931 = vmax.f32 %v8557, %v8762
        %v8932 = vmax.f32 %v8558, %v8764
        %v8933 = vmax.f32 %v8559, %v8766
        %v8934 = vmax.f32 %v8560, %v8768
        %v8935 = vmax.f32 %v8561, %v8770
        %v8936 = vmax.f32 %v8562, %v8772
        %v8937 = vmax.f32 %v8563, %v8774
        %v8938 = vmax.f32 %v8564, %v8776
        %v8939 = vmax.f32 %v8565, %v8778
        %v8940 = vmax.f32 %v8566, %v8780
        %v8941 = vmax.f32 %v8567, %v8782
        %v8942 = vmax.f32 %v8568, %v8784
        %v8943 = vmax.f32 %v8569, %v8786
        %v8944 = vmax.f32 %v8570, %v8788
        %v8945 = vmax.f32 %v8571, %v8790
        %v8946 = vmax.f32 %v8572, %v8792
        %v8947 = vmax.f32 %v8573, %v8794
        %v8948 = vmax.f32 %v8574, %v8796
        %v8949 = vmax.f32 %v8575, %v8798
        %v8950 = vmax.f32 %v8576, %v8800
        %v8951 = vmax.f32 %v8577, %v8802
        %v8952 = vmax.f32 %v8578, %v8801
        %vm8953 = vcmask 523264
        %8954 = vst.msk [vmem:[#allocation2] sm:$0xff] %vm8953, %v8878
        %8955 = vst.msk [vmem:[#allocation2 + $0x8] sm:$0xff] %vm8953, %v8879
        %8956 = vst.msk [vmem:[#allocation2 + $0x10] sm:$0xff] %vm8953, %v8880
        %8957 = vst.msk [vmem:[#allocation2 + $0x18] sm:$0xff] %vm8953, %v8881
        %8958 = vst.msk [vmem:[#allocation2 + $0x20] sm:$0xff] %vm8953, %v8882
        %8959 = vst.msk [vmem:[#allocation2 + $0x28] sm:$0xff] %vm8953, %v8883
        %8960 = vst.msk [vmem:[#allocation2 + $0x30] sm:$0xff] %vm8953, %v8884
        %8961 = vst.msk [vmem:[#allocation2 + $0x38] sm:$0xff] %vm8953, %v8885
        %8962 = vst.msk [vmem:[#allocation2 + $0x40] sm:$0xff] %vm8953, %v8886
        %8963 = vst.msk [vmem:[#allocation2 + $0x48] sm:$0xff] %vm8953, %v8887
        %8964 = vst.msk [vmem:[#allocation2 + $0x50] sm:$0xff] %vm8953, %v8888
        %8965 = vst.msk [vmem:[#allocation2 + $0x58] sm:$0xff] %vm8953, %v8889
        %8966 = vst.msk [vmem:[#allocation2 + $0x60] sm:$0xff] %vm8953, %v8890
        %8967 = vst.msk [vmem:[#allocation2 + $0x68] sm:$0xff] %vm8953, %v8891
        %8968 = vst.msk [vmem:[#allocation2 + $0x70] sm:$0xff] %vm8953, %v8892
        %8969 = vst.msk [vmem:[#allocation2 + $0x78] sm:$0xff] %vm8953, %v8893
        %8970 = vst.msk [vmem:[#allocation2 + $0x80] sm:$0xff] %vm8953, %v8894
        %8971 = vst.msk [vmem:[#allocation2 + $0x88] sm:$0xff] %vm8953, %v8895
        %8972 = vst.msk [vmem:[#allocation2 + $0x90] sm:$0xff] %vm8953, %v8896
        %8973 = vst.msk [vmem:[#allocation2 + $0x98] sm:$0xff] %vm8953, %v8897
        %8974 = vst.msk [vmem:[#allocation2 + $0xa0] sm:$0xff] %vm8953, %v8898
        %8975 = vst.msk [vmem:[#allocation2 + $0xa8] sm:$0xff] %vm8953, %v8899
        %8976 = vst.msk [vmem:[#allocation2 + $0xb0] sm:$0xff] %vm8953, %v8900
        %8977 = vst.msk [vmem:[#allocation2 + $0xb8] sm:$0xff] %vm8953, %v8901
        %8978 = vst.msk [vmem:[#allocation2 + $0xc0] sm:$0xff] %vm8953, %v8902
        %8979 = vst.msk [vmem:[#allocation2 + $0xc8] sm:$0xff] %vm8953, %v8903
        %8980 = vst.msk [vmem:[#allocation2 + $0xd0] sm:$0xff] %vm8953, %v8904
        %8981 = vst.msk [vmem:[#allocation2 + $0xd8] sm:$0xff] %vm8953, %v8905
        %8982 = vst.msk [vmem:[#allocation2 + $0xe0] sm:$0xff] %vm8953, %v8906
        %8983 = vst.msk [vmem:[#allocation2 + $0xe8] sm:$0xff] %vm8953, %v8907
        %8984 = vst.msk [vmem:[#allocation2 + $0xf0] sm:$0xff] %vm8953, %v8908
        %8985 = vst.msk [vmem:[#allocation2 + $0xf8] sm:$0xff] %vm8953, %v8909
        %8986 = vst.msk [vmem:[#allocation2 + $0x100] sm:$0xff] %vm8953, %v8910
        %8987 = vst.msk [vmem:[#allocation2 + $0x108] sm:$0xff] %vm8953, %v8911
        %8988 = vst.msk [vmem:[#allocation2 + $0x110] sm:$0xff] %vm8953, %v8912
        %8989 = vst.msk [vmem:[#allocation2 + $0x118] sm:$0xff] %vm8953, %v8913
        %8990 = vst.msk [vmem:[#allocation2 + $0x120] sm:$0xff] %vm8953, %v8914
        %8991 = vst.msk [vmem:[#allocation2 + $0x128] sm:$0xff] %vm8953, %v8915
        %8992 = vst.msk [vmem:[#allocation2 + $0x130] sm:$0xff] %vm8953, %v8916
        %8993 = vst.msk [vmem:[#allocation2 + $0x138] sm:$0xff] %vm8953, %v8917
        %8994 = vst.msk [vmem:[#allocation2 + $0x140] sm:$0xff] %vm8953, %v8918
        %8995 = vst.msk [vmem:[#allocation2 + $0x148] sm:$0xff] %vm8953, %v8919
        %8996 = vst.msk [vmem:[#allocation2 + $0x150] sm:$0xff] %vm8953, %v8920
        %8997 = vst.msk [vmem:[#allocation2 + $0x158] sm:$0xff] %vm8953, %v8921
        %8998 = vst.msk [vmem:[#allocation2 + $0x160] sm:$0xff] %vm8953, %v8922
        %8999 = vst.msk [vmem:[#allocation2 + $0x168] sm:$0xff] %vm8953, %v8923
        %9000 = vst.msk [vmem:[#allocation2 + $0x170] sm:$0xff] %vm8953, %v8924
        %9001 = vst.msk [vmem:[#allocation2 + $0x178] sm:$0xff] %vm8953, %v8925
        %9002 = vst.msk [vmem:[#allocation2 + $0x180] sm:$0xff] %vm8953, %v8926
        %9003 = vst.msk [vmem:[#allocation2 + $0x188] sm:$0xff] %vm8953, %v8927
        %9004 = vst.msk [vmem:[#allocation2 + $0x190] sm:$0xff] %vm8953, %v8928
        %9005 = vst.msk [vmem:[#allocation2 + $0x198] sm:$0xff] %vm8953, %v8929
        %9006 = vst.msk [vmem:[#allocation2 + $0x1a0] sm:$0xff] %vm8953, %v8930
        %9007 = vst.msk [vmem:[#allocation2 + $0x1a8] sm:$0xff] %vm8953, %v8931
        %9008 = vst.msk [vmem:[#allocation2 + $0x1b0] sm:$0xff] %vm8953, %v8932
        %9009 = vst.msk [vmem:[#allocation2 + $0x1b8] sm:$0xff] %vm8953, %v8933
        %9010 = vst.msk [vmem:[#allocation2 + $0x1c0] sm:$0xff] %vm8953, %v8934
        %9011 = vst.msk [vmem:[#allocation2 + $0x1c8] sm:$0xff] %vm8953, %v8935
        %9012 = vst.msk [vmem:[#allocation2 + $0x1d0] sm:$0xff] %vm8953, %v8936
        %9013 = vst.msk [vmem:[#allocation2 + $0x1d8] sm:$0xff] %vm8953, %v8937
        %9014 = vst.msk [vmem:[#allocation2 + $0x1e0] sm:$0xff] %vm8953, %v8938
        %9015 = vst.msk [vmem:[#allocation2 + $0x1e8] sm:$0xff] %vm8953, %v8939
        %9016 = vst.msk [vmem:[#allocation2 + $0x1f0] sm:$0xff] %vm8953, %v8940
        %9017 = vst.msk [vmem:[#allocation2 + $0x1f8] sm:$0xff] %vm8953, %v8941
        %9018 = vst.msk [vmem:[#allocation2 + $0x200] sm:$0xff] %vm8953, %v8942
        %9019 = vst.msk [vmem:[#allocation2 + $0x208] sm:$0xff] %vm8953, %v8943
        %9020 = vst.msk [vmem:[#allocation2 + $0x210] sm:$0xff] %vm8953, %v8944
        %9021 = vst.msk [vmem:[#allocation2 + $0x218] sm:$0xff] %vm8953, %v8945
        %9022 = vst.msk [vmem:[#allocation2 + $0x220] sm:$0xff] %vm8953, %v8946
        %9023 = vst.msk [vmem:[#allocation2 + $0x228] sm:$0xff] %vm8953, %v8947
        %9024 = vst.msk [vmem:[#allocation2 + $0x230] sm:$0xff] %vm8953, %v8948
        %9025 = vst.msk [vmem:[#allocation2 + $0x238] sm:$0xff] %vm8953, %v8949
        %9026 = vst.msk [vmem:[#allocation2 + $0x240] sm:$0xff] %vm8953, %v8950
        %9027 = vst.msk [vmem:[#allocation2 + $0x248] sm:$0xff] %vm8953, %v8951
        %vm9028 = vcmask 518144
        %9029 = vst.msk [vmem:[#allocation2 + $0x250] sm:$0x7] %vm9028, %v8952
        %v9030 = vld [vmem:[#allocation2] ss:$2 sm:$0xff]
        %s9031 = scalar_lea.vmem [#allocation2], 16
        %v9032 = vld [vmem:[%s9031] ss:$2 sm:$0xf]
        %9033 = vst.msk [vmem:[%s279] sm:$0xff] %vm8953, %v9030
        %vm9034 = vcmask 519168
        %9035 = vst.msk [vmem:[%s279 + $0x8] sm:$0xf] %vm9034, %v9032
        %s9036 = scalar_lea.vmem [#allocation2], 52
        %v9037 = vld [vmem:[%s9036] ss:$2 sm:$0xff]
        %s9038 = scalar_lea.vmem [#allocation2], 68
        %v9039 = vld [vmem:[%s9038] ss:$2 sm:$0xf]
        %9040 = vst.msk [vmem:[%s279 + $0xc] sm:$0xff] %vm8953, %v9037
        %9041 = vst.msk [vmem:[%s279 + $0x14] sm:$0xf] %vm9034, %v9039
        %s9042 = scalar_lea.vmem [#allocation2], 104
        %v9043 = vld [vmem:[%s9042] ss:$2 sm:$0xff]
        %s9044 = scalar_lea.vmem [#allocation2], 120
        %v9045 = vld [vmem:[%s9044] ss:$2 sm:$0xf]
        %9046 = vst.msk [vmem:[%s279 + $0x18] sm:$0xff] %vm8953, %v9043
        %9047 = vst.msk [vmem:[%s279 + $0x20] sm:$0xf] %vm9034, %v9045
        %s9048 = scalar_lea.vmem [#allocation2], 156
        %v9049 = vld [vmem:[%s9048] ss:$2 sm:$0xff]
        %s9050 = scalar_lea.vmem [#allocation2], 172
        %v9051 = vld [vmem:[%s9050] ss:$2 sm:$0xf]
        %9052 = vst.msk [vmem:[%s279 + $0x24] sm:$0xff] %vm8953, %v9049
        %9053 = vst.msk [vmem:[%s279 + $0x2c] sm:$0xf] %vm9034, %v9051
        %s9054 = scalar_lea.vmem [#allocation2], 208
        %v9055 = vld [vmem:[%s9054] ss:$2 sm:$0xff]
        %s9056 = scalar_lea.vmem [#allocation2], 224
        %v9057 = vld [vmem:[%s9056] ss:$2 sm:$0xf]
        %9058 = vst.msk [vmem:[%s279 + $0x30] sm:$0xff] %vm8953, %v9055
        %9059 = vst.msk [vmem:[%s279 + $0x38] sm:$0xf] %vm9034, %v9057
        %s9060 = scalar_lea.vmem [#allocation2], 260
        %v9061 = vld [vmem:[%s9060] ss:$2 sm:$0xff]
        %s9062 = scalar_lea.vmem [#allocation2], 276
        %v9063 = vld [vmem:[%s9062] ss:$2 sm:$0xf]
        %9064 = vst.msk [vmem:[%s279 + $0x3c] sm:$0xff] %vm8953, %v9061
        %9065 = vst.msk [vmem:[%s279 + $0x44] sm:$0xf] %vm9034, %v9063
        %s9066 = scalar_lea.vmem [#allocation2], 312
        %v9067 = vld [vmem:[%s9066] ss:$2 sm:$0xff]
        %s9068 = scalar_lea.vmem [#allocation2], 328
        %v9069 = vld [vmem:[%s9068] ss:$2 sm:$0xf]
        %9070 = vst.msk [vmem:[%s279 + $0x48] sm:$0xff] %vm8953, %v9067
        %9071 = vst.msk [vmem:[%s279 + $0x50] sm:$0xf] %vm9034, %v9069
        %s9072 = scalar_lea.vmem [#allocation2], 364
        %v9073 = vld [vmem:[%s9072] ss:$2 sm:$0xff]
        %s9074 = scalar_lea.vmem [#allocation2], 380
        %v9075 = vld [vmem:[%s9074] ss:$2 sm:$0xf]
        %9076 = vst.msk [vmem:[%s279 + $0x54] sm:$0xff] %vm8953, %v9073
        %9077 = vst.msk [vmem:[%s279 + $0x5c] sm:$0xf] %vm9034, %v9075
        %s9078 = scalar_lea.vmem [#allocation2], 416
        %v9079 = vld [vmem:[%s9078] ss:$2 sm:$0xff]
        %s9080 = scalar_lea.vmem [#allocation2], 432
        %v9081 = vld [vmem:[%s9080] ss:$2 sm:$0xf]
        %9082 = vst.msk [vmem:[%s279 + $0x60] sm:$0xff] %vm8953, %v9079
        %9083 = vst.msk [vmem:[%s279 + $0x68] sm:$0xf] %vm9034, %v9081
        %s9084 = scalar_lea.vmem [#allocation2], 468
        %v9085 = vld [vmem:[%s9084] ss:$2 sm:$0xff]
        %s9086 = scalar_lea.vmem [#allocation2], 484
        %v9087 = vld [vmem:[%s9086] ss:$2 sm:$0xf]
        %9088 = vst.msk [vmem:[%s279 + $0x6c] sm:$0xff] %vm8953, %v9085
        %9089 = vst.msk [vmem:[%s279 + $0x74] sm:$0xf] %vm9034, %v9087
        %s9090 = scalar_lea.vmem [#allocation2], 520
        %v9091 = vld [vmem:[%s9090] ss:$2 sm:$0xff]
        %s9092 = scalar_lea.vmem [#allocation2], 536
        %v9093 = vld [vmem:[%s9092] ss:$2 sm:$0xf]
        %9094 = vst.msk [vmem:[%s279 + $0x78] sm:$0xff] %vm8953, %v9091
        %9095 = vst.msk [vmem:[%s279 + $0x80] sm:$0xf] %vm9034, %v9093
        %s9096 = scalar_lea.vmem [#allocation2], 572
        %v9097 = vld [vmem:[%s9096] ss:$2 sm:$0xff]
        %s9098 = scalar_lea.vmem [#allocation2], 588
        %v9099 = vld [vmem:[%s9098] ss:$2 sm:$0xf]
        %9100 = vst.msk [vmem:[%s279 + $0x84] sm:$0xff] %vm8953, %v9097
        %9101 = vst.msk [vmem:[%s279 + $0x8c] sm:$0xf] %vm9034, %v9099
        %p9102 = scmp.lt.s32.totalorder %s19, 1
        %s9103 = scalar_select %p9102, %s19, 1
        %s9104 = smul.addr %s9103, 18
        %s9105 = smul.addr %s9104, 8
        %s9106 = scalar_lea.vmem %s5, %s9105
        // Predicated region
        $region57: #{net_forward.2} parent=39 // pred_check
          %p9107 = pneg %p147
        $region58: #{net_forward.2} parent=39 // pred_check_branch
          %9109 = sbr.rel (%p9107) target = $region60
        $region59: #{net_forward.2} parent=39 // pred_region
          _
        $region60: #{net_forward.2} parent=39 // pred_fallthru
          _
      $region40: #{net_forward.2} parent=5 // pred_fallthru
        _
      %p9110 = scmp.le.s32.totalorder 2, %s14
      // Predicated region
      $region61: #{net_forward.2} parent=5 // pred_check
        %p9111 = pneg %p9110
      $region62: #{net_forward.2} parent=5 // pred_check_branch
        %9113 = sbr.rel (%p9111) target = $region64
      $region63: #{net_forward.2} parent=5 // pred_region
        %s9114 = ssub.s32 %s14, 2
        // Predicated region
        $region65: #{net_forward.2} parent=63 // pred_check
          %p9115 = pneg %p153
        $region66: #{net_forward.2} parent=63 // pred_check_branch
          %9117 = sbr.rel (%p9115) target = $region68
        $region67: #{net_forward.2} parent=63 // pred_region
          %p9118 = scmp.lt.s32.totalorder %s20, 1
          %s9119 = scalar_select %p9118, %s20, 1
          %s9120 = smul.addr %s9119, 18
          %s9121 = smul.addr %s9120, 8
          %s9122 = scalar_lea.vmem %s5, %s9121
        $region68: #{net_forward.2} parent=63 // pred_fallthru
          _
      $region64: #{net_forward.2} parent=5 // pred_fallthru
        _
    $region6: #{net_forward.2} parent=1 // loop_footer
      %s18 = sadd.s32 1, %s14
    $region7: #{net_forward.2} parent=1 // loop_footer_branch
      %13 = sbr.rel target = $region3
    $region8: #{net_forward.2} parent=1 // loop_exit
      _
    %9123 = vsyncpa [#allocation4], 1
    %s9124 = scalar_lea.sflag [#allocation4], 1
    %9125 = vsyncpa %s9124, 1
    %9126 = vsyncpa [#allocation6], 1
    %9127 = vsyncpa [#allocation9], 1

</llo_original>
